<compile_context>
chip_gen: v6e
topology: v6e:2x2x1
jax: 0.10.0
libtpu: 0.0.40
codegen_flags: <defaults>
</compile_context>

<pallas_src>
import math
from functools import partial

import jax
import jax.numpy as jnp
from jax.experimental import pallas as pl
from jax.experimental.pallas import tpu as pltpu


def _round_up(x, m):
    return ((x + m - 1) // m) * m


# ----------------------------------------------------------------------------
# Fused kernel: point encoder + global max pool + head MLP + angle heads.
# grid = (B, n_tiles); the tile axis is the max-pool reduction ("arbitrary").
# ----------------------------------------------------------------------------
def _vtn_kernel(pts_ref,                       # (1, 3, tile_n)        f32
                w1_ref, b1_ref,                # (3, 64, 1), (64, 1)   f32
                w2t_ref, b2_ref,               # (128, 64) cdt, (128, 1) ew
                w3t_ref, b3_ref,               # (H, 128) cdt, (H, 1)  f32
                wf1t_ref, bf1_ref,             # (H, H) cdt, (H, 1)    f32
                wf2t_ref, bf2_ref,             # (H, H) cdt, (H, 1)    f32
                wht_ref, bh_ref,               # (2V, H) cdt, (2V, 1)  f32
                out_ref,                       # out: (1, 2V, 1)       f32
                acc_ref,                       # scratch: (H, 128)     f32
                *, n_lane_chunks, num_views, compute_dtype, ew_dtype,
                mxu_precision):
    t = pl.program_id(1)

    @pl.when(t == 0)
    def _():
        acc_ref[...] = jnp.full(acc_ref.shape, -jnp.inf, dtype=acc_ref.dtype)

    # ---- layer 1 (Cin=3): VPU broadcast multiply-adds (f32), ReLU after cast ---
    x = pts_ref[0]                                            # (3, tile_n)
    h = (w1_ref[0] * x[0:1, :]
         + w1_ref[1] * x[1:2, :]
         + w1_ref[2] * x[2:3, :]
         + b1_ref[...])                                       # (64, tile_n) f32
    h = jnp.maximum(h.astype(compute_dtype), 0)               # ReLU in compute dtype

    # ---- layer 2: MXU matmul, bias + ReLU in elementwise dtype -----------------
    h = jnp.dot(w2t_ref[...], h, preferred_element_type=jnp.float32,
                precision=mxu_precision)                      # (128, tile_n) f32
    h = jnp.maximum(h.astype(ew_dtype) + b2_ref[...], 0)      # bf16 VALU on v6e/v7x
    h = h.astype(compute_dtype)

    # ---- layer 3: MXU matmul only; bias + ReLU deferred past the max pool ------
    h = jnp.dot(w3t_ref[...], h, preferred_element_type=jnp.float32,
                precision=mxu_precision)                      # (H, tile_n) f32

    # ---- max pool over this tile: partial accumulators over 128-lane chunks ----
    n_par = min(4 if n_lane_chunks >= 8 else 1, n_lane_chunks)
    parts = [h[:, c * 128:(c + 1) * 128] for c in range(n_par)]
    for c in range(n_par, n_lane_chunks):
        parts[c % n_par] = jnp.maximum(parts[c % n_par],
                                       h[:, c * 128:(c + 1) * 128])
    m = parts[0]
    for p in parts[1:]:
        m = jnp.maximum(m, p)
    acc_ref[...] = jnp.maximum(acc_ref[...], m)

    # ---- last tile: finish the pool (deferred bias/ReLU) and run the fused head
    @pl.when(t == pl.num_programs(1) - 1)
    def _():
        g = jnp.max(acc_ref[...], axis=1, keepdims=True)      # (H, 1) f32
        g = jnp.maximum(g + b3_ref[...], 0.0)                 # deferred layer-3 bias+ReLU
        v = jnp.dot(wf1t_ref[...], g.astype(compute_dtype),
                    preferred_element_type=jnp.float32,
                    precision=mxu_precision) + bf1_ref[...]   # (H, 1)
        v = jnp.maximum(v, 0.0)
        v = jnp.dot(wf2t_ref[...], v.astype(compute_dtype),
                    preferred_element_type=jnp.float32,
                    precision=mxu_precision) + bf2_ref[...]   # (H, 1)
        v = jnp.maximum(v, 0.0)
        a = jnp.dot(wht_ref[...], v.astype(compute_dtype),
                    preferred_element_type=jnp.float32,
                    precision=mxu_precision) + bh_ref[...]    # (2V, 1)
        idx = jax.lax.broadcasted_iota(jnp.int32, a.shape, 0)
        scale = jnp.where(idx < num_views,
                          math.pi, math.pi / 3.0).astype(jnp.float32)
        out_ref[...] = (jnp.tanh(a) * scale)[None]            # (1, 2V, 1)


# ----------------------------------------------------------------------------
# Wrapper
# ----------------------------------------------------------------------------
def view_transformation_forward(points, params, *, tile_n=8192,
                                compute_dtype=jnp.bfloat16,
                                elementwise_dtype=None):
    """points: (B, N, 3) float32 -> (azimuths (B, V), elevations (B, V))."""
    points = points.astype(jnp.float32)
    B, N, _ = points.shape
    H = params["w3"].shape[1]
    V = params["waz"].shape[1]

    compute_dtype = jnp.dtype(compute_dtype)
    ew_dtype = jnp.dtype(elementwise_dtype) if elementwise_dtype is not None \
        else compute_dtype
    mxu_precision = (jax.lax.Precision.HIGHEST
                     if compute_dtype == jnp.dtype(jnp.float32) else None)

    # Pad N to a multiple of 128, then pick tile_n (128-multiple, <= 8192 cap)
    # that evenly divides the padded length — pad waste is < 128 points.
    n128 = _round_up(N, 128)
    max_tile = max(128, min(_round_up(int(tile_n), 128), 8192))
    n_tiles = -(-n128 // max_tile)
    tile_n = _round_up(-(-n128 // n_tiles), 128)
    n_pad = tile_n * n_tiles

    # Pad by replicating the last point: the global max-pool is invariant to
    # duplicated points, so no masking is required.
    if n_pad != N:
        tail = jnp.broadcast_to(points[:, -1:, :], (B, n_pad - N, 3))
        points = jnp.concatenate([points, tail], axis=1)

    # Channels-first, lane-dense layout (mirrors the module's transpose(1, 2)).
    pts_cf = jnp.transpose(points, (0, 2, 1))                 # (B, 3, n_pad)

    # Encoder weights: convs as (Cout, Cin) (transposed), biases as columns;
    # layer-1 weight stacked per input channel for the VPU path.
    w1cols = params["w1"].astype(jnp.float32)[:, :, None]     # (3, 64, 1)
    b1c = params["b1"].reshape(-1, 1).astype(jnp.float32)     # (64, 1)
    w2t = params["w2"].T.astype(compute_dtype)                # (128, 64)
    b2c = params["b2"].reshape(-1, 1).astype(ew_dtype)        # (128, 1)
    w3t = params["w3"].T.astype(compute_dtype)                # (H, 128)
    b3c = params["b3"].reshape(-1, 1).astype(jnp.float32)     # (H, 1)
    # Head weights, column-oriented (w.T @ g) so the fused head needs no transpose.
    wf1t = params["wf1"].T.astype(compute_dtype)              # (H, H)
    bf1c = params["bf1"].reshape(-1, 1).astype(jnp.float32)   # (H, 1)
    wf2t = params["wf2"].T.astype(compute_dtype)              # (H, H)
    bf2c = params["bf2"].reshape(-1, 1).astype(jnp.float32)   # (H, 1)
    wht = jnp.concatenate([params["waz"], params["wel"]],
                          axis=1).T.astype(compute_dtype)     # (2V, H)
    bhc = jnp.concatenate([params["baz"], params["bel"]],
                          axis=1).reshape(-1, 1).astype(jnp.float32)  # (2V, 1)

    weights = [w1cols, b1c, w2t, b2c, w3t, b3c,
               wf1t, bf1c, wf2t, bf2c, wht, bhc]

    def _const_spec(arr):
        nd = arr.ndim
        return pl.BlockSpec(arr.shape, lambda b, t, _nd=nd: (0,) * _nd)

    # Right-sized VMEM limit from actual per-tile buffer sizes (v7x: 64 MiB/TC).
    isz_c = compute_dtype.itemsize
    isz_e = ew_dtype.itemsize
    bytes_per_pt = (3 * 4 * 2                          # input tile, double-buffered
                    + 64 * (4 + isz_c)                 # layer-1 f32 + cast copy
                    + 128 * (4 + isz_e + isz_c)        # layer-2 acc + ew + cast
                    + H * 4)                           # layer-3 acc (f32)
    vmem_limit = int(min(max(bytes_per_pt * tile_n + (8 << 20), 16 << 20),
                         48 << 20))

    angles = pl.pallas_call(
        partial(_vtn_kernel,
                n_lane_chunks=tile_n // 128,
                num_views=V,
                compute_dtype=compute_dtype,
                ew_dtype=ew_dtype,
                mxu_precision=mxu_precision),
        grid_spec=pltpu.PrefetchScalarGridSpec(
            num_scalar_prefetch=0,
            grid=(B, n_tiles),
            in_specs=[pl.BlockSpec((1, 3, tile_n), lambda b, t: (b, 0, t))]
                     + [_const_spec(w) for w in weights],
            out_specs=pl.BlockSpec((1, 2 * V, 1), lambda b, t: (b, 0, 0)),
            scratch_shapes=[pltpu.VMEM((H, 128), jnp.float32)],
        ),
        out_shape=jax.ShapeDtypeStruct((B, 2 * V, 1), jnp.float32),
        compiler_params=pltpu.CompilerParams(
            dimension_semantics=("parallel", "arbitrary"),
            vmem_limit_bytes=vmem_limit),
    )(pts_cf, *weights)

    angles = angles.reshape(B, 2 * V)
    return angles[:, :V], angles[:, V:]


# ----------------------------------------------------------------------------
# Deterministic parameter construction (matches module shapes; BN folded)
# ----------------------------------------------------------------------------
def init_params(key, num_views=6, hidden_dim=128, head_weight_scale=0.0):
    eps = 1e-5
    keys = iter(jax.random.split(key, 32))

    def linear(fin, fout, wscale=None):
        if wscale is None:
            wscale = 1.0 / math.sqrt(fin)
        w = jax.random.normal(next(keys), (fin, fout), jnp.float32) * wscale
        b = jax.random.normal(next(keys), (1, fout), jnp.float32) * 0.01
        return w, b

    def conv_bn(fin, fout):
        # Conv1d(fin, fout, 1) weight folded with eval-mode BatchNorm1d(fout).
        w, b = linear(fin, fout)
        gamma = 0.5 + jax.random.uniform(next(keys), (fout,), jnp.float32)
        beta = jax.random.normal(next(keys), (fout,), jnp.float32) * 0.05
        r_mean = jax.random.normal(next(keys), (fout,), jnp.float32) * 0.05
        r_var = 0.5 + jax.random.uniform(next(keys), (fout,), jnp.float32)
        scale = gamma / jnp.sqrt(r_var + eps)
        w_f = w * scale[None, :]
        b_f = (b - r_mean[None, :]) * scale[None, :] + beta[None, :]
        return w_f, b_f

    p = {}
    p["w1"], p["b1"] = conv_bn(3, 64)
    p["w2"], p["b2"] = conv_bn(64, 128)
    p["w3"], p["b3"] = conv_bn(128, hidden_dim)
    p["wf1"], p["bf1"] = linear(hidden_dim, hidden_dim)
    p["wf2"], p["bf2"] = linear(hidden_dim, hidden_dim)

    # PyTorch init zeroes the head weights; allow a small nonzero scale so the
    # numerical test exercises the full pipeline.
    if head_weight_scale > 0.0:
        p["waz"] = jax.random.normal(next(keys), (hidden_dim, num_views),
                                     jnp.float32) * head_weight_scale
        p["wel"] = jax.random.normal(next(keys), (hidden_dim, num_views),
                                     jnp.float32) * head_weight_scale
    else:
        p["waz"] = jnp.zeros((hidden_dim, num_views), jnp.float32)
        p["wel"] = jnp.zeros((hidden_dim, num_views), jnp.float32)

    default_az = jnp.linspace(0.0, 360.0, num_views + 1)[:-1] * math.pi / 180.0
    default_el = jnp.array([0.0, 30.0, -30.0, 0.0, 0.0, 0.0],
                           jnp.float32)[:num_views] * math.pi / 180.0
    p["baz"] = default_az.astype(jnp.float32).reshape(1, num_views)
    p["bel"] = default_el.reshape(1, num_views)
    return p


# ----------------------------------------------------------------------------
# Pure-JAX reference (f32, matches the PyTorch forward semantics)
# ----------------------------------------------------------------------------
def reference_forward(points, p):
    h = jnp.maximum(points @ p["w1"] + p["b1"], 0.0)
    h = jnp.maximum(h @ p["w2"] + p["b2"], 0.0)
    h = jnp.maximum(h @ p["w3"] + p["b3"], 0.0)
    g = jnp.max(h, axis=1)                                   # (B, H)
    v = jnp.maximum(g @ p["wf1"] + p["bf1"], 0.0)
    v = jnp.maximum(v @ p["wf2"] + p["bf2"], 0.0)
    az = jnp.tanh(v @ p["waz"] + p["baz"]) * math.pi
    el = jnp.tanh(v @ p["wel"] + p["bel"]) * (math.pi / 3.0)
    return az, el


if __name__ == "__main__":
    B, N, V, H = 2, 1000, 6, 128
    key = jax.random.PRNGKey(0)
    k_pts, k_par = jax.random.split(key)

    points = jax.random.normal(k_pts, (B, N, 3), jnp.float32)
    params = init_params(k_par, num_views=V, hidden_dim=H, head_weight_scale=0.01)

    az_ref, el_ref = reference_forward(points, params)

    # f32 path, small tiles: exercises multi-tile max reduction + tail padding,
    # with HIGHEST matmul precision so the 1e-4 tolerance holds on all gens.
    az32, el32 = view_transformation_forward(points, params, tile_n=256,
                                             compute_dtype=jnp.float32)
    az32, el32 = jax.block_until_ready((az32, el32))
    assert az32.shape == (B, V) and el32.shape == (B, V)
    assert jnp.allclose(az32, az_ref, atol=1e-4, rtol=1e-4)
    assert jnp.allclose(el32, el_ref, atol=1e-4, rtol=1e-4)

    # Default path (v6e/v7x): bf16 MXU inputs + bf16 elementwise, f32 accumulation.
    az16, el16 = view_transformation_forward(points, params)
    az16, el16 = jax.block_until_ready((az16, el16))
    assert az16.shape == (B, V) and el16.shape == (B, V)
    assert jnp.allclose(az16, az_ref, atol=6e-2, rtol=6e-2)
    assert jnp.allclose(el16, el_ref, atol=6e-2, rtol=6e-2)

    # v5e-style path: bf16 MXU inputs but f32 elementwise math.
    az5e, el5e = view_transformation_forward(points, params,
                                             elementwise_dtype=jnp.float32)
    az5e, el5e = jax.block_until_ready((az5e, el5e))
    assert jnp.allclose(az5e, az_ref, atol=6e-2, rtol=6e-2)
    assert jnp.allclose(el5e, el_ref, atol=6e-2, rtol=6e-2)

    print("KERNEL_OK")
</pallas_src>

<mosaic_0001>
module attributes {stable_mosaic.version = 11 : i64} {
  func.func @_vtn_kernel(%arg0: i32, %arg1: i32, %arg2: memref<1x3x256xf32, #tpu.memory_space<vmem>>, %arg3: memref<3x64x1xf32, #tpu.memory_space<vmem>>, %arg4: memref<64x1xf32, #tpu.memory_space<vmem>>, %arg5: memref<128x64xf32, #tpu.memory_space<vmem>>, %arg6: memref<128x1xf32, #tpu.memory_space<vmem>>, %arg7: memref<128x128xf32, #tpu.memory_space<vmem>>, %arg8: memref<128x1xf32, #tpu.memory_space<vmem>>, %arg9: memref<128x128xf32, #tpu.memory_space<vmem>>, %arg10: memref<128x1xf32, #tpu.memory_space<vmem>>, %arg11: memref<128x128xf32, #tpu.memory_space<vmem>>, %arg12: memref<128x1xf32, #tpu.memory_space<vmem>>, %arg13: memref<12x128xf32, #tpu.memory_space<vmem>>, %arg14: memref<12x1xf32, #tpu.memory_space<vmem>>, %arg15: memref<1x12x1xf32, #tpu.memory_space<vmem>>, %arg16: memref<128x128xf32, #tpu.memory_space<vmem>>) attributes {dimension_semantics = [#tpu.dimension_semantics<parallel>, #tpu.dimension_semantics<arbitrary>], iteration_bounds = array<i64: 2, 4>, scalar_prefetch = 0 : i64, scratch_operands = 1 : i64, tpu.core_type = #tpu.core_type<tc>, window_params = [{transform_indices = @transform_0, window_bounds = array<i64: 1, 3, 256>}, {pipeline_mode = #tpu.pipeline_mode<synchronous>, transform_indices = @transform_1, window_bounds = array<i64: 3, 64, 1>}, {pipeline_mode = #tpu.pipeline_mode<synchronous>, transform_indices = @transform_2, window_bounds = array<i64: 64, 1>}, {pipeline_mode = #tpu.pipeline_mode<synchronous>, transform_indices = @transform_3, window_bounds = array<i64: 128, 64>}, {pipeline_mode = #tpu.pipeline_mode<synchronous>, transform_indices = @transform_4, window_bounds = array<i64: 128, 1>}, {pipeline_mode = #tpu.pipeline_mode<synchronous>, transform_indices = @transform_5, window_bounds = array<i64: 128, 128>}, {pipeline_mode = #tpu.pipeline_mode<synchronous>, transform_indices = @transform_6, window_bounds = array<i64: 128, 1>}, {pipeline_mode = #tpu.pipeline_mode<synchronous>, transform_indices = @transform_7, window_bounds = array<i64: 128, 128>}, {pipeline_mode = #tpu.pipeline_mode<synchronous>, transform_indices = @transform_8, window_bounds = array<i64: 128, 1>}, {pipeline_mode = #tpu.pipeline_mode<synchronous>, transform_indices = @transform_9, window_bounds = array<i64: 128, 128>}, {pipeline_mode = #tpu.pipeline_mode<synchronous>, transform_indices = @transform_10, window_bounds = array<i64: 128, 1>}, {pipeline_mode = #tpu.pipeline_mode<synchronous>, transform_indices = @transform_11, window_bounds = array<i64: 12, 128>}, {pipeline_mode = #tpu.pipeline_mode<synchronous>, transform_indices = @transform_12, window_bounds = array<i64: 12, 1>}, {transform_indices = @transform_13, window_bounds = array<i64: 1, 12, 1>}]} {
    %c0_i32 = arith.constant 0 : i32
    %0 = arith.cmpi eq, %arg1, %c0_i32 : i32
    %1 = arith.extui %0 : i1 to i32
    %c0_i32_0 = arith.constant 0 : i32
    %2 = arith.cmpi ne, %1, %c0_i32_0 : i32
    scf.if %2 {
      %cst_26 = arith.constant 0xFF800000 : f32
      %48 = vector.broadcast %cst_26 : f32 to vector<128x128xf32>
      %c0_27 = arith.constant 0 : index
      %c0_28 = arith.constant 0 : index
      %49 = vector.load %arg16[%c0_27, %c0_28] : memref<128x128xf32, #tpu.memory_space<vmem>>, vector<128x128xf32>
      tpu.vector_store %arg16[%c0_27, %c0_28], %48 {strides = array<i32>} : memref<128x128xf32, #tpu.memory_space<vmem>>, vector<128x128xf32>,
    } else {
    }
    %c0 = arith.constant 0 : index
    %c0_1 = arith.constant 0 : index
    %c0_2 = arith.constant 0 : index
    %3 = vector.load %arg2[%c0, %c0_1, %c0_2] : memref<1x3x256xf32, #tpu.memory_space<vmem>>, vector<1x3x256xf32>
    %4 = vector.shape_cast %3 : vector<1x3x256xf32> to vector<3x256xf32>
    %c0_3 = arith.constant 0 : index
    %c0_4 = arith.constant 0 : index
    %c0_5 = arith.constant 0 : index
    %5 = vector.load %arg3[%c0_3, %c0_4, %c0_5] : memref<3x64x1xf32, #tpu.memory_space<vmem>>, vector<1x64x1xf32>
    %6 = vector.shape_cast %5 : vector<1x64x1xf32> to vector<64x1xf32>
    %7 = vector.extract_strided_slice %4 {offsets = [0, 0], sizes = [1, 256], strides = [1, 1]} : vector<3x256xf32> to vector<1x256xf32>
    %8 = vector.broadcast %6 : vector<64x1xf32> to vector<64x256xf32>
    %9 = vector.broadcast %7 : vector<1x256xf32> to vector<64x256xf32>
    %10 = arith.mulf %8, %9 : vector<64x256xf32>
    %c1 = arith.constant 1 : index
    %c0_6 = arith.constant 0 : index
    %c0_7 = arith.constant 0 : index
    %11 = vector.load %arg3[%c1, %c0_6, %c0_7] : memref<3x64x1xf32, #tpu.memory_space<vmem>>, vector<1x64x1xf32>
    %12 = vector.shape_cast %11 : vector<1x64x1xf32> to vector<64x1xf32>
    %13 = vector.extract_strided_slice %4 {offsets = [1, 0], sizes = [1, 256], strides = [1, 1]} : vector<3x256xf32> to vector<1x256xf32>
    %14 = vector.broadcast %12 : vector<64x1xf32> to vector<64x256xf32>
    %15 = vector.broadcast %13 : vector<1x256xf32> to vector<64x256xf32>
    %16 = arith.mulf %14, %15 : vector<64x256xf32>
    %17 = arith.addf %10, %16 : vector<64x256xf32>
    %c2 = arith.constant 2 : index
    %c0_8 = arith.constant 0 : index
    %c0_9 = arith.constant 0 : index
    %18 = vector.load %arg3[%c2, %c0_8, %c0_9] : memref<3x64x1xf32, #tpu.memory_space<vmem>>, vector<1x64x1xf32>
    %19 = vector.shape_cast %18 : vector<1x64x1xf32> to vector<64x1xf32>
    %20 = vector.extract_strided_slice %4 {offsets = [2, 0], sizes = [1, 256], strides = [1, 1]} : vector<3x256xf32> to vector<1x256xf32>
    %21 = vector.broadcast %19 : vector<64x1xf32> to vector<64x256xf32>
    %22 = vector.broadcast %20 : vector<1x256xf32> to vector<64x256xf32>
    %23 = arith.mulf %21, %22 : vector<64x256xf32>
    %24 = arith.addf %17, %23 : vector<64x256xf32>
    %c0_10 = arith.constant 0 : index
    %c0_11 = arith.constant 0 : index
    %25 = vector.load %arg4[%c0_10, %c0_11] : memref<64x1xf32, #tpu.memory_space<vmem>>, vector<64x1xf32>
    %26 = vector.broadcast %25 : vector<64x1xf32> to vector<64x256xf32>
    %27 = arith.addf %24, %26 : vector<64x256xf32>
    %cst = arith.constant 0.000000e+00 : f32
    %28 = vector.broadcast %cst : f32 to vector<64x256xf32>
    %29 = arith.maximumf %27, %28 : vector<64x256xf32>
    %c0_12 = arith.constant 0 : index
    %c0_13 = arith.constant 0 : index
    %30 = vector.load %arg5[%c0_12, %c0_13] : memref<128x64xf32, #tpu.memory_space<vmem>>, vector<128x64xf32>
    %cst_14 = arith.constant dense<0.000000e+00> : vector<128x256xf32>
    %31 = tpu.matmul %30, %29, %cst_14 {dimension_numbers = #tpu.dot_dimension_numbers<[1], [0], [0], [1], [0, 0, 1, 1], [], []>, precision = #tpu.contract_precision<fp32>} : vector<128x64xf32>, vector<64x256xf32>, vector<128x256xf32> -> vector<128x256xf32>
    %c0_15 = arith.constant 0 : index
    %c0_16 = arith.constant 0 : index
    %32 = vector.load %arg6[%c0_15, %c0_16] : memref<128x1xf32, #tpu.memory_space<vmem>>, vector<128x1xf32>
    %33 = vector.broadcast %32 : vector<128x1xf32> to vector<128x256xf32>
    %34 = arith.addf %31, %33 : vector<128x256xf32>
    %cst_17 = arith.constant 0.000000e+00 : f32
    %35 = vector.broadcast %cst_17 : f32 to vector<128x256xf32>
    %36 = arith.maximumf %34, %35 : vector<128x256xf32>
    %c0_18 = arith.constant 0 : index
    %c0_19 = arith.constant 0 : index
    %37 = vector.load %arg7[%c0_18, %c0_19] : memref<128x128xf32, #tpu.memory_space<vmem>>, vector<128x128xf32>
    %cst_20 = arith.constant dense<0.000000e+00> : vector<128x256xf32>
    %38 = tpu.matmul %37, %36, %cst_20 {dimension_numbers = #tpu.dot_dimension_numbers<[1], [0], [0], [1], [0, 0, 1, 1], [], []>, precision = #tpu.contract_precision<fp32>} : vector<128x128xf32>, vector<128x256xf32>, vector<128x256xf32> -> vector<128x256xf32>
    %39 = vector.extract_strided_slice %38 {offsets = [0, 0], sizes = [128, 128], strides = [1, 1]} : vector<128x256xf32> to vector<128x128xf32>
    %40 = vector.extract_strided_slice %38 {offsets = [0, 128], sizes = [128, 128], strides = [1, 1]} : vector<128x256xf32> to vector<128x128xf32>
    %41 = arith.maximumf %39, %40 : vector<128x128xf32>
    %c0_21 = arith.constant 0 : index
    %c0_22 = arith.constant 0 : index
    %42 = vector.load %arg16[%c0_21, %c0_22] : memref<128x128xf32, #tpu.memory_space<vmem>>, vector<128x128xf32>
    %43 = arith.maximumf %42, %41 : vector<128x128xf32>
    %c0_23 = arith.constant 0 : index
    %c0_24 = arith.constant 0 : index
    %44 = vector.load %arg16[%c0_23, %c0_24] : memref<128x128xf32, #tpu.memory_space<vmem>>, vector<128x128xf32>
    tpu.vector_store %arg16[%c0_23, %c0_24], %43 {strides = array<i32>} : memref<128x128xf32, #tpu.memory_space<vmem>>, vector<128x128xf32>,
    %c3_i32 = arith.constant 3 : i32
    %45 = arith.cmpi eq, %arg1, %c3_i32 : i32
    %46 = arith.extui %45 : i1 to i32
    %c0_i32_25 = arith.constant 0 : i32
    %47 = arith.cmpi ne, %46, %c0_i32_25 : i32
    scf.if %47 {
      %c0_26 = arith.constant 0 : index
      %c0_27 = arith.constant 0 : index
      %48 = vector.load %arg16[%c0_26, %c0_27] : memref<128x128xf32, #tpu.memory_space<vmem>>, vector<128x128xf32>
      %cst_28 = arith.constant dense<0xFF800000> : vector<128xf32>
      %49 = vector.multi_reduction <maximumf>, %48, %cst_28 [1] : vector<128x128xf32> to vector<128xf32>
      %50 = vector.shape_cast %49 : vector<128xf32> to vector<128x1xf32>
      %c0_29 = arith.constant 0 : index
      %c0_30 = arith.constant 0 : index
      %51 = vector.load %arg8[%c0_29, %c0_30] : memref<128x1xf32, #tpu.memory_space<vmem>>, vector<128x1xf32>
      %52 = arith.addf %50, %51 : vector<128x1xf32>
      %cst_31 = arith.constant 0.000000e+00 : f32
      %53 = vector.broadcast %cst_31 : f32 to vector<128x1xf32>
      %54 = arith.maximumf %52, %53 : vector<128x1xf32>
      %c0_32 = arith.constant 0 : index
      %c0_33 = arith.constant 0 : index
      %55 = vector.load %arg9[%c0_32, %c0_33] : memref<128x128xf32, #tpu.memory_space<vmem>>, vector<128x128xf32>
      %cst_34 = arith.constant dense<0.000000e+00> : vector<128x1xf32>
      %56 = tpu.matmul %55, %54, %cst_34 {dimension_numbers = #tpu.dot_dimension_numbers<[1], [0], [0], [1], [0, 0, 1, 1], [], []>, precision = #tpu.contract_precision<fp32>} : vector<128x128xf32>, vector<128x1xf32>, vector<128x1xf32> -> vector<128x1xf32>
      %c0_35 = arith.constant 0 : index
      %c0_36 = arith.constant 0 : index
      %57 = vector.load %arg10[%c0_35, %c0_36] : memref<128x1xf32, #tpu.memory_space<vmem>>, vector<128x1xf32>
      %58 = arith.addf %56, %57 : vector<128x1xf32>
      %cst_37 = arith.constant 0.000000e+00 : f32
      %59 = vector.broadcast %cst_37 : f32 to vector<128x1xf32>
      %60 = arith.maximumf %58, %59 : vector<128x1xf32>
      %c0_38 = arith.constant 0 : index
      %c0_39 = arith.constant 0 : index
      %61 = vector.load %arg11[%c0_38, %c0_39] : memref<128x128xf32, #tpu.memory_space<vmem>>, vector<128x128xf32>
      %cst_40 = arith.constant dense<0.000000e+00> : vector<128x1xf32>
      %62 = tpu.matmul %61, %60, %cst_40 {dimension_numbers = #tpu.dot_dimension_numbers<[1], [0], [0], [1], [0, 0, 1, 1], [], []>, precision = #tpu.contract_precision<fp32>} : vector<128x128xf32>, vector<128x1xf32>, vector<128x1xf32> -> vector<128x1xf32>
      %c0_41 = arith.constant 0 : index
      %c0_42 = arith.constant 0 : index
      %63 = vector.load %arg12[%c0_41, %c0_42] : memref<128x1xf32, #tpu.memory_space<vmem>>, vector<128x1xf32>
      %64 = arith.addf %62, %63 : vector<128x1xf32>
      %cst_43 = arith.constant 0.000000e+00 : f32
      %65 = vector.broadcast %cst_43 : f32 to vector<128x1xf32>
      %66 = arith.maximumf %64, %65 : vector<128x1xf32>
      %c0_44 = arith.constant 0 : index
      %c0_45 = arith.constant 0 : index
      %67 = vector.load %arg13[%c0_44, %c0_45] : memref<12x128xf32, #tpu.memory_space<vmem>>, vector<12x128xf32>
      %cst_46 = arith.constant dense<0.000000e+00> : vector<12x1xf32>
      %68 = tpu.matmul %67, %66, %cst_46 {dimension_numbers = #tpu.dot_dimension_numbers<[1], [0], [0], [1], [0, 0, 1, 1], [], []>, precision = #tpu.contract_precision<fp32>} : vector<12x128xf32>, vector<128x1xf32>, vector<12x1xf32> -> vector<12x1xf32>
      %c0_47 = arith.constant 0 : index
      %c0_48 = arith.constant 0 : index
      %69 = vector.load %arg14[%c0_47, %c0_48] : memref<12x1xf32, #tpu.memory_space<vmem>>, vector<12x1xf32>
      %70 = arith.addf %68, %69 : vector<12x1xf32>
      %71 = tpu.iota {dimensions = array<i32: 0>} : vector<12x1xi32>
      %c6_i32 = arith.constant 6 : i32
      %72 = vector.broadcast %c6_i32 : i32 to vector<12x1xi32>
      %73 = arith.cmpi slt, %71, %72 : vector<12x1xi32>
      %cst_49 = arith.constant 3.14159274 : f32
      %cst_50 = arith.constant 1.04719758 : f32
      %74 = vector.broadcast %cst_49 : f32 to vector<12x1xf32>
      %75 = vector.broadcast %cst_50 : f32 to vector<12x1xf32>
      %76 = arith.select %73, %74, %75 : vector<12x1xi1>, vector<12x1xf32>
      %77 = math.tanh %70 : vector<12x1xf32>
      %78 = arith.mulf %77, %76 : vector<12x1xf32>
      %79 = vector.shape_cast %78 : vector<12x1xf32> to vector<1x12x1xf32>
      %c0_51 = arith.constant 0 : index
      %c0_52 = arith.constant 0 : index
      %c0_53 = arith.constant 0 : index
      %80 = vector.load %arg15[%c0_51, %c0_52, %c0_53] : memref<1x12x1xf32, #tpu.memory_space<vmem>>, vector<1x12x1xf32>
      tpu.vector_store %arg15[%c0_51, %c0_52, %c0_53], %79 {strides = array<i32>} : memref<1x12x1xf32, #tpu.memory_space<vmem>>, vector<1x12x1xf32>,
    } else {
    }
    return
  }
  func.func @transform_0(%arg0: i32, %arg1: i32) -> (i32, i32, i32) {
    %c0_i32 = arith.constant 0 : i32
    %c0_i32_0 = arith.constant 0 : i32
    return %arg0, %c0_i32, %arg1 : i32, i32, i32
  }
  func.func @transform_1(%arg0: i32, %arg1: i32) -> (i32, i32, i32) {
    %c0_i32 = arith.constant 0 : i32
    %c0_i32_0 = arith.constant 0 : i32
    %c0_i32_1 = arith.constant 0 : i32
    %c0_i32_2 = arith.constant 0 : i32
    return %c0_i32, %c0_i32_0, %c0_i32_1 : i32, i32, i32
  }
  func.func @transform_2(%arg0: i32, %arg1: i32) -> (i32, i32) {
    %c0_i32 = arith.constant 0 : i32
    %c0_i32_0 = arith.constant 0 : i32
    %c0_i32_1 = arith.constant 0 : i32
    return %c0_i32, %c0_i32_0 : i32, i32
  }
  func.func @transform_3(%arg0: i32, %arg1: i32) -> (i32, i32) {
    %c0_i32 = arith.constant 0 : i32
    %c0_i32_0 = arith.constant 0 : i32
    %c0_i32_1 = arith.constant 0 : i32
    return %c0_i32, %c0_i32_0 : i32, i32
  }
  func.func @transform_4(%arg0: i32, %arg1: i32) -> (i32, i32) {
    %c0_i32 = arith.constant 0 : i32
    %c0_i32_0 = arith.constant 0 : i32
    %c0_i32_1 = arith.constant 0 : i32
    return %c0_i32, %c0_i32_0 : i32, i32
  }
  func.func @transform_5(%arg0: i32, %arg1: i32) -> (i32, i32) {
    %c0_i32 = arith.constant 0 : i32
    %c0_i32_0 = arith.constant 0 : i32
    %c0_i32_1 = arith.constant 0 : i32
    return %c0_i32, %c0_i32_0 : i32, i32
  }
  func.func @transform_6(%arg0: i32, %arg1: i32) -> (i32, i32) {
    %c0_i32 = arith.constant 0 : i32
    %c0_i32_0 = arith.constant 0 : i32
    %c0_i32_1 = arith.constant 0 : i32
    return %c0_i32, %c0_i32_0 : i32, i32
  }
  func.func @transform_7(%arg0: i32, %arg1: i32) -> (i32, i32) {
    %c0_i32 = arith.constant 0 : i32
    %c0_i32_0 = arith.constant 0 : i32
    %c0_i32_1 = arith.constant 0 : i32
    return %c0_i32, %c0_i32_0 : i32, i32
  }
  func.func @transform_8(%arg0: i32, %arg1: i32) -> (i32, i32) {
    %c0_i32 = arith.constant 0 : i32
    %c0_i32_0 = arith.constant 0 : i32
    %c0_i32_1 = arith.constant 0 : i32
    return %c0_i32, %c0_i32_0 : i32, i32
  }
  func.func @transform_9(%arg0: i32, %arg1: i32) -> (i32, i32) {
    %c0_i32 = arith.constant 0 : i32
    %c0_i32_0 = arith.constant 0 : i32
    %c0_i32_1 = arith.constant 0 : i32
    return %c0_i32, %c0_i32_0 : i32, i32
  }
  func.func @transform_10(%arg0: i32, %arg1: i32) -> (i32, i32) {
    %c0_i32 = arith.constant 0 : i32
    %c0_i32_0 = arith.constant 0 : i32
    %c0_i32_1 = arith.constant 0 : i32
    return %c0_i32, %c0_i32_0 : i32, i32
  }
  func.func @transform_11(%arg0: i32, %arg1: i32) -> (i32, i32) {
    %c0_i32 = arith.constant 0 : i32
    %c0_i32_0 = arith.constant 0 : i32
    %c0_i32_1 = arith.constant 0 : i32
    return %c0_i32, %c0_i32_0 : i32, i32
  }
  func.func @transform_12(%arg0: i32, %arg1: i32) -> (i32, i32) {
    %c0_i32 = arith.constant 0 : i32
    %c0_i32_0 = arith.constant 0 : i32
    %c0_i32_1 = arith.constant 0 : i32
    return %c0_i32, %c0_i32_0 : i32, i32
  }
  func.func @transform_13(%arg0: i32, %arg1: i32) -> (i32, i32, i32) {
    %c0_i32 = arith.constant 0 : i32
    %c0_i32_0 = arith.constant 0 : i32
    %c0_i32_1 = arith.constant 0 : i32
    return %arg0, %c0_i32, %c0_i32_0 : i32, i32, i32
  }
}

</mosaic_0001>

<llo_original>
// kernel: tpu_custom_call.1
$region0: #{tpu_custom_call.1}
  #allocation0 [shape = 'u32[]', space=smem, size = 0x4, offset = 0x4, fixed_abs, tag = 'smem constant byte address 0x4 - core index']
  #allocation1 [shape = 'u32[144,128]{1,0:T(1,128)}', space=vmem, size = 0x12000, scoped, tag = 'internal scratch']
  #allocation2 [shape = 'f32[128,128]{1,0:T(8,128)}', space=vmem, size = 0x10000, scoped, tag = 'scratch operand']
  %s0 = inlined_call_operand.vmem [shape: f32[2,3,1024], index: 0, kind: input, shape index: {}]
  %s1 = inlined_call_operand.vmem [shape: f32[3,64,1], index: 1, kind: input, shape index: {}]
  %s2 = inlined_call_operand.vmem [shape: f32[64,1], index: 2, kind: input, shape index: {}]
  %s3 = inlined_call_operand.vmem [shape: f32[128,64], index: 3, kind: input, shape index: {}]
  %s4 = inlined_call_operand.vmem [shape: f32[128,1], index: 4, kind: input, shape index: {}]
  %s5 = inlined_call_operand.vmem [shape: f32[128,128], index: 5, kind: input, shape index: {}]
  %s6 = inlined_call_operand.vmem [shape: f32[128,1], index: 6, kind: input, shape index: {}]
  %s7 = inlined_call_operand.vmem [shape: f32[128,128], index: 7, kind: input, shape index: {}]
  %s8 = inlined_call_operand.vmem [shape: f32[128,1], index: 8, kind: input, shape index: {}]
  %s9 = inlined_call_operand.vmem [shape: f32[128,128], index: 9, kind: input, shape index: {}]
  %s10 = inlined_call_operand.vmem [shape: f32[128,1], index: 10, kind: input, shape index: {}]
  %s11 = inlined_call_operand.vmem [shape: f32[12,128], index: 11, kind: input, shape index: {}]
  %s12 = inlined_call_operand.vmem [shape: f32[12,1], index: 12, kind: input, shape index: {}]
  %s13 = inlined_call_operand.vmem [shape: f32[2,12,1], index: 13, kind: output, shape index: {}]
  %s14 = sld [smem:[#allocation0]]
  $region93: #{tpu_custom_call.1} parent=0
    _
  %s16 = ssub.s32 1, %s14
  %s17 = scalar_select 0, %s16, %s14
  loop: start=0, step=1, limit=10
  $region2: #{tpu_custom_call.1} parent=0 // loop_pre_header
    _
  $region3: #{tpu_custom_call.1} parent=0 // loop_header
    %s19 = sphi 0, %s23
    %p20 = scmp.ge.s32.totalorder %s19, 10
    %s26 = sphi 0, %s38
    %s27 = sphi 0, %s34
    %s28 = sphi 0, %s26
    %s29 = sphi 0, %s27
    %s30 = sphi 0, %s28
    %s31 = sphi 0, %s29
    %s43 = sphi 0, %s45
    %s46 = sphi 0, %s43
    %s47 = sphi 0, %s46
    %s63 = sphi 0, %s47
    %s67 = sphi 0, %s67
    %s69 = sphi 0, %s67
    %s70 = sphi 0, %s69
    %s84 = sphi 0, %s70
    %s88 = sphi 0, %s88
    %s90 = sphi 0, %s88
    %s91 = sphi 0, %s90
    %s105 = sphi 0, %s91
    %s109 = sphi 0, %s109
    %s111 = sphi 0, %s109
    %s112 = sphi 0, %s111
    %s126 = sphi 0, %s112
    %s130 = sphi 0, %s130
    %s132 = sphi 0, %s130
    %s133 = sphi 0, %s132
    %s147 = sphi 0, %s133
    %s151 = sphi 0, %s151
    %s153 = sphi 0, %s151
    %s154 = sphi 0, %s153
    %s168 = sphi 0, %s154
    %s172 = sphi 0, %s172
    %s174 = sphi 0, %s172
    %s175 = sphi 0, %s174
    %s189 = sphi 0, %s175
    %s193 = sphi 0, %s193
    %s195 = sphi 0, %s193
    %s196 = sphi 0, %s195
    %s210 = sphi 0, %s196
    %s214 = sphi 0, %s214
    %s216 = sphi 0, %s214
    %s217 = sphi 0, %s216
    %s231 = sphi 0, %s217
    %s235 = sphi 0, %s235
    %s237 = sphi 0, %s235
    %s238 = sphi 0, %s237
    %s252 = sphi 0, %s238
    %s256 = sphi 0, %s256
    %s258 = sphi 0, %s256
    %s259 = sphi 0, %s258
    %s273 = sphi 0, %s259
    %s277 = sphi 0, %s277
    %s279 = sphi 0, %s277
    %s280 = sphi 0, %s279
    %s294 = sphi 0, %s280
    %s298 = sphi 0, %s298
    %s300 = sphi 0, %s298
    %s301 = sphi 0, %s300
    %s315 = sphi 0, %s301
    %s321 = sphi 0, %s323
    %s324 = sphi 0, %s321
    %s325 = sphi 0, %s324
    %s341 = sphi 0, %s325
  $region4: #{tpu_custom_call.1} parent=0 // loop_header_branch
    %22 = sbr.rel (%p20) target = $region8
  $region5: #{tpu_custom_call.1} parent=0 // loop_body
    %s24 = ssub.s32 %s19, 1
    %s25 = ssub.s32 %s19, 2
    %s32 = sadd.s32 1, %s27
    %p33 = scmp.ge.s32.totalorder %s32, 4
    %s34 = scalar_select %p33, 0, %s32
    %s35 = sadd.s32 1, %s26
    %s36 = scalar_select %p33, %s35, %s26
    %p37 = scmp.ge.s32.totalorder %s36, 2
    %s38 = scalar_select %p37, 0, %s36
    %s39 = ssub.s32 %s26, %s38
    %s40 = ssub.s32 %s27, %s34
    %s41 = sor.u32 %s39, %s40
    %p42 = scmp.eq.s32.totalorder %s41, 0
    %s44 = sadd.s32 %s43, 1
    %s45 = scalar_select %p42, %s43, %s44
    %p48 = pneg %p42
    %p49 = scmp.eq.s32.totalorder %s19, 7
    %p50 = por %p48, %p49
    %p51 = scmp.ne.s32.totalorder %s43, %s46
    %p52 = scmp.eq.s32.totalorder %s19, 0
    %p53 = por %p51, %p52
    %p54 = scmp.ne.s32.totalorder %s43, %s46
    %p55 = scmp.eq.s32.totalorder %s24, 7
    %p56 = por %p54, %p55
    %p57 = scmp.ne.s32.totalorder %s46, %s47
    %p58 = scmp.eq.s32.totalorder %s24, 0
    %p59 = por %p57, %p58
    %p60 = scmp.ne.s32.totalorder %s46, %s47
    %p61 = scmp.eq.s32.totalorder %s25, 7
    %p62 = por %p60, %p61
    %p64 = scmp.ne.s32.totalorder %s47, %s63
    %p65 = scmp.eq.s32.totalorder %s25, 0
    %p66 = por %p64, %p65
    %s68 = sadd.s32 %s67, 1
    %p71 = scmp.eq.s32.totalorder %s19, 7
    %p72 = scmp.ne.s32.totalorder %s67, %s69
    %p73 = scmp.eq.s32.totalorder %s19, 0
    %p74 = por %p72, %p73
    %p75 = scmp.ne.s32.totalorder %s67, %s69
    %p76 = scmp.eq.s32.totalorder %s24, 7
    %p77 = por %p75, %p76
    %p78 = scmp.ne.s32.totalorder %s69, %s70
    %p79 = scmp.eq.s32.totalorder %s24, 0
    %p80 = por %p78, %p79
    %p81 = scmp.ne.s32.totalorder %s69, %s70
    %p82 = scmp.eq.s32.totalorder %s25, 7
    %p83 = por %p81, %p82
    %p85 = scmp.ne.s32.totalorder %s70, %s84
    %p86 = scmp.eq.s32.totalorder %s25, 0
    %p87 = por %p85, %p86
    %s89 = sadd.s32 %s88, 1
    %p92 = scmp.eq.s32.totalorder %s19, 7
    %p93 = scmp.ne.s32.totalorder %s88, %s90
    %p94 = scmp.eq.s32.totalorder %s19, 0
    %p95 = por %p93, %p94
    %p96 = scmp.ne.s32.totalorder %s88, %s90
    %p97 = scmp.eq.s32.totalorder %s24, 7
    %p98 = por %p96, %p97
    %p99 = scmp.ne.s32.totalorder %s90, %s91
    %p100 = scmp.eq.s32.totalorder %s24, 0
    %p101 = por %p99, %p100
    %p102 = scmp.ne.s32.totalorder %s90, %s91
    %p103 = scmp.eq.s32.totalorder %s25, 7
    %p104 = por %p102, %p103
    %p106 = scmp.ne.s32.totalorder %s91, %s105
    %p107 = scmp.eq.s32.totalorder %s25, 0
    %p108 = por %p106, %p107
    %s110 = sadd.s32 %s109, 1
    %p113 = scmp.eq.s32.totalorder %s19, 7
    %p114 = scmp.ne.s32.totalorder %s109, %s111
    %p115 = scmp.eq.s32.totalorder %s19, 0
    %p116 = por %p114, %p115
    %p117 = scmp.ne.s32.totalorder %s109, %s111
    %p118 = scmp.eq.s32.totalorder %s24, 7
    %p119 = por %p117, %p118
    %p120 = scmp.ne.s32.totalorder %s111, %s112
    %p121 = scmp.eq.s32.totalorder %s24, 0
    %p122 = por %p120, %p121
    %p123 = scmp.ne.s32.totalorder %s111, %s112
    %p124 = scmp.eq.s32.totalorder %s25, 7
    %p125 = por %p123, %p124
    %p127 = scmp.ne.s32.totalorder %s112, %s126
    %p128 = scmp.eq.s32.totalorder %s25, 0
    %p129 = por %p127, %p128
    %s131 = sadd.s32 %s130, 1
    %p134 = scmp.eq.s32.totalorder %s19, 7
    %p135 = scmp.ne.s32.totalorder %s130, %s132
    %p136 = scmp.eq.s32.totalorder %s19, 0
    %p137 = por %p135, %p136
    %p138 = scmp.ne.s32.totalorder %s130, %s132
    %p139 = scmp.eq.s32.totalorder %s24, 7
    %p140 = por %p138, %p139
    %p141 = scmp.ne.s32.totalorder %s132, %s133
    %p142 = scmp.eq.s32.totalorder %s24, 0
    %p143 = por %p141, %p142
    %p144 = scmp.ne.s32.totalorder %s132, %s133
    %p145 = scmp.eq.s32.totalorder %s25, 7
    %p146 = por %p144, %p145
    %p148 = scmp.ne.s32.totalorder %s133, %s147
    %p149 = scmp.eq.s32.totalorder %s25, 0
    %p150 = por %p148, %p149
    %s152 = sadd.s32 %s151, 1
    %p155 = scmp.eq.s32.totalorder %s19, 7
    %p156 = scmp.ne.s32.totalorder %s151, %s153
    %p157 = scmp.eq.s32.totalorder %s19, 0
    %p158 = por %p156, %p157
    %p159 = scmp.ne.s32.totalorder %s151, %s153
    %p160 = scmp.eq.s32.totalorder %s24, 7
    %p161 = por %p159, %p160
    %p162 = scmp.ne.s32.totalorder %s153, %s154
    %p163 = scmp.eq.s32.totalorder %s24, 0
    %p164 = por %p162, %p163
    %p165 = scmp.ne.s32.totalorder %s153, %s154
    %p166 = scmp.eq.s32.totalorder %s25, 7
    %p167 = por %p165, %p166
    %p169 = scmp.ne.s32.totalorder %s154, %s168
    %p170 = scmp.eq.s32.totalorder %s25, 0
    %p171 = por %p169, %p170
    %s173 = sadd.s32 %s172, 1
    %p176 = scmp.eq.s32.totalorder %s19, 7
    %p177 = scmp.ne.s32.totalorder %s172, %s174
    %p178 = scmp.eq.s32.totalorder %s19, 0
    %p179 = por %p177, %p178
    %p180 = scmp.ne.s32.totalorder %s172, %s174
    %p181 = scmp.eq.s32.totalorder %s24, 7
    %p182 = por %p180, %p181
    %p183 = scmp.ne.s32.totalorder %s174, %s175
    %p184 = scmp.eq.s32.totalorder %s24, 0
    %p185 = por %p183, %p184
    %p186 = scmp.ne.s32.totalorder %s174, %s175
    %p187 = scmp.eq.s32.totalorder %s25, 7
    %p188 = por %p186, %p187
    %p190 = scmp.ne.s32.totalorder %s175, %s189
    %p191 = scmp.eq.s32.totalorder %s25, 0
    %p192 = por %p190, %p191
    %s194 = sadd.s32 %s193, 1
    %p197 = scmp.eq.s32.totalorder %s19, 7
    %p198 = scmp.ne.s32.totalorder %s193, %s195
    %p199 = scmp.eq.s32.totalorder %s19, 0
    %p200 = por %p198, %p199
    %p201 = scmp.ne.s32.totalorder %s193, %s195
    %p202 = scmp.eq.s32.totalorder %s24, 7
    %p203 = por %p201, %p202
    %p204 = scmp.ne.s32.totalorder %s195, %s196
    %p205 = scmp.eq.s32.totalorder %s24, 0
    %p206 = por %p204, %p205
    %p207 = scmp.ne.s32.totalorder %s195, %s196
    %p208 = scmp.eq.s32.totalorder %s25, 7
    %p209 = por %p207, %p208
    %p211 = scmp.ne.s32.totalorder %s196, %s210
    %p212 = scmp.eq.s32.totalorder %s25, 0
    %p213 = por %p211, %p212
    %s215 = sadd.s32 %s214, 1
    %p218 = scmp.eq.s32.totalorder %s19, 7
    %p219 = scmp.ne.s32.totalorder %s214, %s216
    %p220 = scmp.eq.s32.totalorder %s19, 0
    %p221 = por %p219, %p220
    %p222 = scmp.ne.s32.totalorder %s214, %s216
    %p223 = scmp.eq.s32.totalorder %s24, 7
    %p224 = por %p222, %p223
    %p225 = scmp.ne.s32.totalorder %s216, %s217
    %p226 = scmp.eq.s32.totalorder %s24, 0
    %p227 = por %p225, %p226
    %p228 = scmp.ne.s32.totalorder %s216, %s217
    %p229 = scmp.eq.s32.totalorder %s25, 7
    %p230 = por %p228, %p229
    %p232 = scmp.ne.s32.totalorder %s217, %s231
    %p233 = scmp.eq.s32.totalorder %s25, 0
    %p234 = por %p232, %p233
    %s236 = sadd.s32 %s235, 1
    %p239 = scmp.eq.s32.totalorder %s19, 7
    %p240 = scmp.ne.s32.totalorder %s235, %s237
    %p241 = scmp.eq.s32.totalorder %s19, 0
    %p242 = por %p240, %p241
    %p243 = scmp.ne.s32.totalorder %s235, %s237
    %p244 = scmp.eq.s32.totalorder %s24, 7
    %p245 = por %p243, %p244
    %p246 = scmp.ne.s32.totalorder %s237, %s238
    %p247 = scmp.eq.s32.totalorder %s24, 0
    %p248 = por %p246, %p247
    %p249 = scmp.ne.s32.totalorder %s237, %s238
    %p250 = scmp.eq.s32.totalorder %s25, 7
    %p251 = por %p249, %p250
    %p253 = scmp.ne.s32.totalorder %s238, %s252
    %p254 = scmp.eq.s32.totalorder %s25, 0
    %p255 = por %p253, %p254
    %s257 = sadd.s32 %s256, 1
    %p260 = scmp.eq.s32.totalorder %s19, 7
    %p261 = scmp.ne.s32.totalorder %s256, %s258
    %p262 = scmp.eq.s32.totalorder %s19, 0
    %p263 = por %p261, %p262
    %p264 = scmp.ne.s32.totalorder %s256, %s258
    %p265 = scmp.eq.s32.totalorder %s24, 7
    %p266 = por %p264, %p265
    %p267 = scmp.ne.s32.totalorder %s258, %s259
    %p268 = scmp.eq.s32.totalorder %s24, 0
    %p269 = por %p267, %p268
    %p270 = scmp.ne.s32.totalorder %s258, %s259
    %p271 = scmp.eq.s32.totalorder %s25, 7
    %p272 = por %p270, %p271
    %p274 = scmp.ne.s32.totalorder %s259, %s273
    %p275 = scmp.eq.s32.totalorder %s25, 0
    %p276 = por %p274, %p275
    %s278 = sadd.s32 %s277, 1
    %p281 = scmp.eq.s32.totalorder %s19, 7
    %p282 = scmp.ne.s32.totalorder %s277, %s279
    %p283 = scmp.eq.s32.totalorder %s19, 0
    %p284 = por %p282, %p283
    %p285 = scmp.ne.s32.totalorder %s277, %s279
    %p286 = scmp.eq.s32.totalorder %s24, 7
    %p287 = por %p285, %p286
    %p288 = scmp.ne.s32.totalorder %s279, %s280
    %p289 = scmp.eq.s32.totalorder %s24, 0
    %p290 = por %p288, %p289
    %p291 = scmp.ne.s32.totalorder %s279, %s280
    %p292 = scmp.eq.s32.totalorder %s25, 7
    %p293 = por %p291, %p292
    %p295 = scmp.ne.s32.totalorder %s280, %s294
    %p296 = scmp.eq.s32.totalorder %s25, 0
    %p297 = por %p295, %p296
    %s299 = sadd.s32 %s298, 1
    %p302 = scmp.eq.s32.totalorder %s19, 7
    %p303 = scmp.ne.s32.totalorder %s298, %s300
    %p304 = scmp.eq.s32.totalorder %s19, 0
    %p305 = por %p303, %p304
    %p306 = scmp.ne.s32.totalorder %s298, %s300
    %p307 = scmp.eq.s32.totalorder %s24, 7
    %p308 = por %p306, %p307
    %p309 = scmp.ne.s32.totalorder %s300, %s301
    %p310 = scmp.eq.s32.totalorder %s24, 0
    %p311 = por %p309, %p310
    %p312 = scmp.ne.s32.totalorder %s300, %s301
    %p313 = scmp.eq.s32.totalorder %s25, 7
    %p314 = por %p312, %p313
    %p316 = scmp.ne.s32.totalorder %s301, %s315
    %p317 = scmp.eq.s32.totalorder %s25, 0
    %p318 = por %p316, %p317
    %s319 = ssub.s32 %s26, %s38
    %p320 = scmp.eq.s32.totalorder %s319, 0
    %s322 = sadd.s32 %s321, 1
    %s323 = scalar_select %p320, %s321, %s322
    %p326 = pneg %p320
    %p327 = scmp.eq.s32.totalorder %s19, 7
    %p328 = por %p326, %p327
    %p329 = scmp.ne.s32.totalorder %s321, %s324
    %p330 = scmp.eq.s32.totalorder %s19, 0
    %p331 = por %p329, %p330
    %p332 = scmp.ne.s32.totalorder %s321, %s324
    %p333 = scmp.eq.s32.totalorder %s24, 7
    %p334 = por %p332, %p333
    %p335 = scmp.ne.s32.totalorder %s324, %s325
    %p336 = scmp.eq.s32.totalorder %s24, 0
    %p337 = por %p335, %p336
    %p338 = scmp.ne.s32.totalorder %s324, %s325
    %p339 = scmp.eq.s32.totalorder %s25, 7
    %p340 = por %p338, %p339
    %p342 = scmp.ne.s32.totalorder %s325, %s341
    %p343 = scmp.eq.s32.totalorder %s25, 0
    %p344 = por %p342, %p343
    %p345 = scmp.le.s32.totalorder 1, %s19
    %p346 = scmp.lt.s32.totalorder %s19, 9
    %p347 = pnand %p345, %p346
    %p348 = pneg %p347
    // Predicated region
    $region9: #{tpu_custom_call.1} parent=5 // pred_check
      _
    $region10: #{tpu_custom_call.1} parent=5 // pred_check_branch
      %350 = sbr.rel (%p347) target = $region12
    $region11: #{tpu_custom_call.1} parent=5 // pred_region
      %s351 = ssub.s32 %s19, 1
      // Predicated region
      $region13: #{tpu_custom_call.1} parent=11 // pred_check
        %p352 = pneg %p80
      $region14: #{tpu_custom_call.1} parent=11 // pred_check_branch
        %354 = sbr.rel (%p352) target = $region16
      $region15: #{tpu_custom_call.1} parent=11 // pred_region
        _
      $region16: #{tpu_custom_call.1} parent=11 // pred_fallthru
        _
      // Predicated region
      $region17: #{tpu_custom_call.1} parent=11 // pred_check
        %p355 = pneg %p101
      $region18: #{tpu_custom_call.1} parent=11 // pred_check_branch
        %357 = sbr.rel (%p355) target = $region20
      $region19: #{tpu_custom_call.1} parent=11 // pred_region
        _
      $region20: #{tpu_custom_call.1} parent=11 // pred_fallthru
        _
      // Predicated region
      $region21: #{tpu_custom_call.1} parent=11 // pred_check
        %p358 = pneg %p122
      $region22: #{tpu_custom_call.1} parent=11 // pred_check_branch
        %360 = sbr.rel (%p358) target = $region24
      $region23: #{tpu_custom_call.1} parent=11 // pred_region
        _
      $region24: #{tpu_custom_call.1} parent=11 // pred_fallthru
        _
      // Predicated region
      $region25: #{tpu_custom_call.1} parent=11 // pred_check
        %p361 = pneg %p143
      $region26: #{tpu_custom_call.1} parent=11 // pred_check_branch
        %363 = sbr.rel (%p361) target = $region28
      $region27: #{tpu_custom_call.1} parent=11 // pred_region
        _
      $region28: #{tpu_custom_call.1} parent=11 // pred_fallthru
        _
      // Predicated region
      $region29: #{tpu_custom_call.1} parent=11 // pred_check
        %p364 = pneg %p164
      $region30: #{tpu_custom_call.1} parent=11 // pred_check_branch
        %366 = sbr.rel (%p364) target = $region32
      $region31: #{tpu_custom_call.1} parent=11 // pred_region
        _
      $region32: #{tpu_custom_call.1} parent=11 // pred_fallthru
        _
      // Predicated region
      $region33: #{tpu_custom_call.1} parent=11 // pred_check
        %p367 = pneg %p185
      $region34: #{tpu_custom_call.1} parent=11 // pred_check_branch
        %369 = sbr.rel (%p367) target = $region36
      $region35: #{tpu_custom_call.1} parent=11 // pred_region
        _
      $region36: #{tpu_custom_call.1} parent=11 // pred_fallthru
        _
      // Predicated region
      $region37: #{tpu_custom_call.1} parent=11 // pred_check
        %p370 = pneg %p206
      $region38: #{tpu_custom_call.1} parent=11 // pred_check_branch
        %372 = sbr.rel (%p370) target = $region40
      $region39: #{tpu_custom_call.1} parent=11 // pred_region
        _
      $region40: #{tpu_custom_call.1} parent=11 // pred_fallthru
        _
      // Predicated region
      $region41: #{tpu_custom_call.1} parent=11 // pred_check
        %p373 = pneg %p227
      $region42: #{tpu_custom_call.1} parent=11 // pred_check_branch
        %375 = sbr.rel (%p373) target = $region44
      $region43: #{tpu_custom_call.1} parent=11 // pred_region
        _
      $region44: #{tpu_custom_call.1} parent=11 // pred_fallthru
        _
      // Predicated region
      $region45: #{tpu_custom_call.1} parent=11 // pred_check
        %p376 = pneg %p248
      $region46: #{tpu_custom_call.1} parent=11 // pred_check_branch
        %378 = sbr.rel (%p376) target = $region48
      $region47: #{tpu_custom_call.1} parent=11 // pred_region
        _
      $region48: #{tpu_custom_call.1} parent=11 // pred_fallthru
        _
      // Predicated region
      $region49: #{tpu_custom_call.1} parent=11 // pred_check
        %p379 = pneg %p269
      $region50: #{tpu_custom_call.1} parent=11 // pred_check_branch
        %381 = sbr.rel (%p379) target = $region52
      $region51: #{tpu_custom_call.1} parent=11 // pred_region
        _
      $region52: #{tpu_custom_call.1} parent=11 // pred_fallthru
        _
      // Predicated region
      $region53: #{tpu_custom_call.1} parent=11 // pred_check
        %p382 = pneg %p290
      $region54: #{tpu_custom_call.1} parent=11 // pred_check_branch
        %384 = sbr.rel (%p382) target = $region56
      $region55: #{tpu_custom_call.1} parent=11 // pred_region
        _
      $region56: #{tpu_custom_call.1} parent=11 // pred_fallthru
        _
      // Predicated region
      $region57: #{tpu_custom_call.1} parent=11 // pred_check
        %p385 = pneg %p311
      $region58: #{tpu_custom_call.1} parent=11 // pred_check_branch
        %387 = sbr.rel (%p385) target = $region60
      $region59: #{tpu_custom_call.1} parent=11 // pred_region
        _
      $region60: #{tpu_custom_call.1} parent=11 // pred_fallthru
        _
    $region12: #{tpu_custom_call.1} parent=5 // pred_fallthru
      _
    %p388 = scmp.lt.s32.totalorder %s19, 8
    // Predicated region
    $region61: #{tpu_custom_call.1} parent=5 // pred_check
      %p389 = pneg %p388
    $region62: #{tpu_custom_call.1} parent=5 // pred_check_branch
      %391 = sbr.rel (%p389) target = $region64
    $region63: #{tpu_custom_call.1} parent=5 // pred_region
      // Predicated region
      $region65: #{tpu_custom_call.1} parent=63 // pred_check
        %p392 = pneg %p53
      $region66: #{tpu_custom_call.1} parent=63 // pred_check_branch
        %394 = sbr.rel (%p392) target = $region68
      $region67: #{tpu_custom_call.1} parent=63 // pred_region
        %s395 = smul.u32 2, %s27
        %p396 = scmp.lt.s32.totalorder %s26, 1
        %s397 = scalar_select %p396, %s26, 1
        %p398 = scmp.lt.s32.totalorder %s395, 7
        %s399 = scalar_select %p398, %s395, 7
        %s400 = smul.addr %s397, 8
        %s401 = sadd.s32 %s399, %s400
        %s402 = smul.addr %s401, 4
        %s403 = scalar_lea.vmem %s0, %s402
        %s404 = smul.u32 2, %s27
      $region68: #{tpu_custom_call.1} parent=63 // pred_fallthru
        _
    $region64: #{tpu_custom_call.1} parent=5 // pred_fallthru
      _
    %p405 = scmp.le.s32.totalorder 1, %s19
    %p406 = scmp.lt.s32.totalorder %s19, 9
    %p407 = pnand %p405, %p406
    %p408 = pneg %p407
    // Predicated region
    $region69: #{tpu_custom_call.1} parent=5 // pred_check
      _
    $region70: #{tpu_custom_call.1} parent=5 // pred_check_branch
      %410 = sbr.rel (%p407) target = $region72
    $region71: #{tpu_custom_call.1} parent=5 // pred_region
      %s411 = ssub.s32 %s19, 1
      %s412 = smul.u32 2, %s29
      %p413 = scmp.lt.s32.totalorder %s28, 1
      %s414 = scalar_select %p413, %s28, 1
      %p415 = scmp.lt.s32.totalorder %s412, 7
      %s416 = scalar_select %p415, %s412, 7
      %s417 = smul.addr %s414, 8
      %s418 = sadd.s32 %s416, %s417
      %s419 = smul.addr %s418, 4
      %s420 = scalar_lea.vmem %s0, %s419
      %p421 = pneg %p59
      %p422 = pneg %p56
      %p423 = pneg %p80
      %p424 = pneg %p77
      %p425 = pneg %p101
      %p426 = pneg %p98
      %p427 = pneg %p122
      %p428 = pneg %p119
      %p429 = pneg %p143
      %p430 = pneg %p140
      %p431 = pneg %p164
      %p432 = pneg %p161
      %p433 = pneg %p185
      %p434 = pneg %p182
      %p435 = pneg %p206
      %p436 = pneg %p203
      %p437 = pneg %p227
      %p438 = pneg %p224
      %p439 = pneg %p248
      %p440 = pneg %p245
      %p441 = pneg %p269
      %p442 = pneg %p266
      %p443 = pneg %p290
      %p444 = pneg %p287
      %p445 = pneg %p311
      %p446 = pneg %p308
      %p447 = pneg %p337
      %p448 = pneg %p334
      %p449 = scmp.lt.s32.totalorder %s28, 1
      %s450 = scalar_select %p449, %s28, 1
      %s451 = smul.addr %s450, 2
      %s452 = smul.addr %s451, 8
      %s453 = scalar_lea.vmem %s13, %s452
      %s454 = smul.u32 2, %s29
      %p455 = scmp.lt.s32.totalorder %s28, 1
      %s456 = scalar_select %p455, %s28, 1
      %p457 = scmp.lt.s32.totalorder %s454, 7
      %s458 = scalar_select %p457, %s454, 7
      %s459 = smul.addr %s456, 8
      %s460 = sadd.s32 %s458, %s459
      %s461 = smul.addr %s460, 4
      %s462 = scalar_lea.vmem %s0, %s461
      %s463 = smul.u32 2, %s29
      %p464 = scmp.lt.s32.totalorder %s28, 1
      %s465 = scalar_select %p464, %s28, 1
      %s466 = smul.addr %s465, 2
      %s467 = smul.addr %s466, 8
      %s468 = scalar_lea.vmem %s13, %s467
      %p469 = scmp.eq.s32.totalorder %s29, 0
      // Predicated region
      $region73: #{tpu_custom_call.1} parent=71 // pred_check
        %p470 = pneg %p469
      $region74: #{tpu_custom_call.1} parent=71 // pred_check_branch
        %472 = sbr.rel (%p470) target = $region76
      $region75: #{tpu_custom_call.1} parent=71 // pred_region
        %473 = vst [vmem:[#allocation2] sm:$0xff] -inf
        %474 = vst [vmem:[#allocation2 + $0x8] sm:$0xff] -inf
        %475 = vst [vmem:[#allocation2 + $0x10] sm:$0xff] -inf
        %476 = vst [vmem:[#allocation2 + $0x18] sm:$0xff] -inf
        %477 = vst [vmem:[#allocation2 + $0x20] sm:$0xff] -inf
        %478 = vst [vmem:[#allocation2 + $0x28] sm:$0xff] -inf
        %479 = vst [vmem:[#allocation2 + $0x30] sm:$0xff] -inf
        %480 = vst [vmem:[#allocation2 + $0x38] sm:$0xff] -inf
        %481 = vst [vmem:[#allocation2 + $0x40] sm:$0xff] -inf
        %482 = vst [vmem:[#allocation2 + $0x48] sm:$0xff] -inf
        %483 = vst [vmem:[#allocation2 + $0x50] sm:$0xff] -inf
        %484 = vst [vmem:[#allocation2 + $0x58] sm:$0xff] -inf
        %485 = vst [vmem:[#allocation2 + $0x60] sm:$0xff] -inf
        %486 = vst [vmem:[#allocation2 + $0x68] sm:$0xff] -inf
        %487 = vst [vmem:[#allocation2 + $0x70] sm:$0xff] -inf
        %488 = vst [vmem:[#allocation2 + $0x78] sm:$0xff] -inf
      $region76: #{tpu_custom_call.1} parent=71 // pred_fallthru
        _
      %v489 = vld [vmem:[%s462] sm:$0x77]
      %v490 = vld [vmem:[%s1] sm:$0xff]
      %v491 = vld [vmem:[%s1 + $0x8] sm:$0xff]
      %v492 = vld [vmem:[%s1 + $0x10] sm:$0xff]
      %v493 = vld [vmem:[%s1 + $0x18] sm:$0xff]
      %v494 = vld [vmem:[%s1 + $0x20] sm:$0xff]
      %v495 = vld [vmem:[%s1 + $0x28] sm:$0xff]
      %v496 = vld [vmem:[%s1 + $0x30] sm:$0xff]
      %v497 = vld [vmem:[%s1 + $0x38] sm:$0xff]
      %499 = vset.pattern.permute.xlu0 0
      %500 = vperm.xlu0 %499, %v490
      %v501 = vpop.permute.xlu0 %500
      %504 = vset.pattern.permute.xlu0 0
      %505 = vperm.xlu0 %504, %v491
      %v506 = vpop.permute.xlu0 %505
      %509 = vset.pattern.permute.xlu0 0
      %510 = vperm.xlu0 %509, %v492
      %v511 = vpop.permute.xlu0 %510
      %514 = vset.pattern.permute.xlu0 0
      %515 = vperm.xlu0 %514, %v493
      %v516 = vpop.permute.xlu0 %515
      %519 = vset.pattern.permute.xlu0 0
      %520 = vperm.xlu0 %519, %v494
      %v521 = vpop.permute.xlu0 %520
      %524 = vset.pattern.permute.xlu0 0
      %525 = vperm.xlu0 %524, %v495
      %v526 = vpop.permute.xlu0 %525
      %529 = vset.pattern.permute.xlu0 0
      %530 = vperm.xlu0 %529, %v496
      %v531 = vpop.permute.xlu0 %530
      %534 = vset.pattern.permute.xlu0 0
      %535 = vperm.xlu0 %534, %v497
      %v536 = vpop.permute.xlu0 %535
      %v539 = vlaneseq
      %v540 = vshrl.u32 %v539, 7
      %v541 = vsub.s32 0, %v540
      %v542 = vrot.slane %v489, %v541
      %v543 = vlaneseq
      %v544 = vshrl.u32 %v543, 7
      %v545 = vsub.s32 4, %v544
      %v546 = vrot.slane %v489, %v545
      %v549 = vlaneseq
      %v550 = vshrl.u32 %v549, 7
      %v551 = vsub.s32 0, %v550
      %v552 = vrot.slane %v542, %v551
      %v553 = vlaneseq
      %v554 = vshrl.u32 %v553, 7
      %v555 = vsub.s32 0, %v554
      %v556 = vrot.slane %v546, %v555
      %v557 = vmul.f32 %v501, %v552
      %v558 = vmul.f32 %v501, %v556
      %v559 = vmul.f32 %v506, %v552
      %v560 = vmul.f32 %v506, %v556
      %v561 = vmul.f32 %v511, %v552
      %v562 = vmul.f32 %v511, %v556
      %v563 = vmul.f32 %v516, %v552
      %v564 = vmul.f32 %v516, %v556
      %v565 = vmul.f32 %v521, %v552
      %v566 = vmul.f32 %v521, %v556
      %v567 = vmul.f32 %v526, %v552
      %v568 = vmul.f32 %v526, %v556
      %v569 = vmul.f32 %v531, %v552
      %v570 = vmul.f32 %v531, %v556
      %v571 = vmul.f32 %v536, %v552
      %v572 = vmul.f32 %v536, %v556
      %s573 = scalar_lea.vmem %s1, 64
      %v574 = vld [vmem:[%s573] sm:$0xff]
      %v575 = vld [vmem:[%s573 + $0x8] sm:$0xff]
      %v576 = vld [vmem:[%s573 + $0x10] sm:$0xff]
      %v577 = vld [vmem:[%s573 + $0x18] sm:$0xff]
      %v578 = vld [vmem:[%s573 + $0x20] sm:$0xff]
      %v579 = vld [vmem:[%s573 + $0x28] sm:$0xff]
      %v580 = vld [vmem:[%s573 + $0x30] sm:$0xff]
      %v581 = vld [vmem:[%s573 + $0x38] sm:$0xff]
      %583 = vset.pattern.permute.xlu0 0
      %584 = vperm.xlu0 %583, %v574
      %v585 = vpop.permute.xlu0 %584
      %588 = vset.pattern.permute.xlu0 0
      %589 = vperm.xlu0 %588, %v575
      %v590 = vpop.permute.xlu0 %589
      %593 = vset.pattern.permute.xlu0 0
      %594 = vperm.xlu0 %593, %v576
      %v595 = vpop.permute.xlu0 %594
      %598 = vset.pattern.permute.xlu0 0
      %599 = vperm.xlu0 %598, %v577
      %v600 = vpop.permute.xlu0 %599
      %603 = vset.pattern.permute.xlu0 0
      %604 = vperm.xlu0 %603, %v578
      %v605 = vpop.permute.xlu0 %604
      %608 = vset.pattern.permute.xlu0 0
      %609 = vperm.xlu0 %608, %v579
      %v610 = vpop.permute.xlu0 %609
      %613 = vset.pattern.permute.xlu0 0
      %614 = vperm.xlu0 %613, %v580
      %v615 = vpop.permute.xlu0 %614
      %618 = vset.pattern.permute.xlu0 0
      %619 = vperm.xlu0 %618, %v581
      %v620 = vpop.permute.xlu0 %619
      %v622 = vlaneseq
      %v623 = vshrl.u32 %v622, 7
      %v624 = vsub.s32 1, %v623
      %v625 = vrot.slane %v489, %v624
      %v626 = vlaneseq
      %v627 = vshrl.u32 %v626, 7
      %v628 = vsub.s32 5, %v627
      %v629 = vrot.slane %v489, %v628
      %v632 = vlaneseq
      %v633 = vshrl.u32 %v632, 7
      %v634 = vsub.s32 1, %v633
      %v635 = vrot.slane %v625, %v634
      %v636 = vlaneseq
      %v637 = vshrl.u32 %v636, 7
      %v638 = vsub.s32 1, %v637
      %v639 = vrot.slane %v629, %v638
      %v640 = vmul.f32 %v585, %v635
      %v641 = vmul.f32 %v585, %v639
      %v642 = vmul.f32 %v590, %v635
      %v643 = vmul.f32 %v590, %v639
      %v644 = vmul.f32 %v595, %v635
      %v645 = vmul.f32 %v595, %v639
      %v646 = vmul.f32 %v600, %v635
      %v647 = vmul.f32 %v600, %v639
      %v648 = vmul.f32 %v605, %v635
      %v649 = vmul.f32 %v605, %v639
      %v650 = vmul.f32 %v610, %v635
      %v651 = vmul.f32 %v610, %v639
      %v652 = vmul.f32 %v615, %v635
      %v653 = vmul.f32 %v615, %v639
      %v654 = vmul.f32 %v620, %v635
      %v655 = vmul.f32 %v620, %v639
      %v656 = vadd.f32 %v557, %v640
      %v657 = vadd.f32 %v558, %v641
      %v658 = vadd.f32 %v559, %v642
      %v659 = vadd.f32 %v560, %v643
      %v660 = vadd.f32 %v561, %v644
      %v661 = vadd.f32 %v562, %v645
      %v662 = vadd.f32 %v563, %v646
      %v663 = vadd.f32 %v564, %v647
      %v664 = vadd.f32 %v565, %v648
      %v665 = vadd.f32 %v566, %v649
      %v666 = vadd.f32 %v567, %v650
      %v667 = vadd.f32 %v568, %v651
      %v668 = vadd.f32 %v569, %v652
      %v669 = vadd.f32 %v570, %v653
      %v670 = vadd.f32 %v571, %v654
      %v671 = vadd.f32 %v572, %v655
      %s672 = scalar_lea.vmem %s1, 128
      %v673 = vld [vmem:[%s672] sm:$0xff]
      %v674 = vld [vmem:[%s672 + $0x8] sm:$0xff]
      %v675 = vld [vmem:[%s672 + $0x10] sm:$0xff]
      %v676 = vld [vmem:[%s672 + $0x18] sm:$0xff]
      %v677 = vld [vmem:[%s672 + $0x20] sm:$0xff]
      %v678 = vld [vmem:[%s672 + $0x28] sm:$0xff]
      %v679 = vld [vmem:[%s672 + $0x30] sm:$0xff]
      %v680 = vld [vmem:[%s672 + $0x38] sm:$0xff]
      %682 = vset.pattern.permute.xlu0 0
      %683 = vperm.xlu0 %682, %v673
      %v684 = vpop.permute.xlu0 %683
      %687 = vset.pattern.permute.xlu0 0
      %688 = vperm.xlu0 %687, %v674
      %v689 = vpop.permute.xlu0 %688
      %692 = vset.pattern.permute.xlu0 0
      %693 = vperm.xlu0 %692, %v675
      %v694 = vpop.permute.xlu0 %693
      %697 = vset.pattern.permute.xlu0 0
      %698 = vperm.xlu0 %697, %v676
      %v699 = vpop.permute.xlu0 %698
      %702 = vset.pattern.permute.xlu0 0
      %703 = vperm.xlu0 %702, %v677
      %v704 = vpop.permute.xlu0 %703
      %707 = vset.pattern.permute.xlu0 0
      %708 = vperm.xlu0 %707, %v678
      %v709 = vpop.permute.xlu0 %708
      %712 = vset.pattern.permute.xlu0 0
      %713 = vperm.xlu0 %712, %v679
      %v714 = vpop.permute.xlu0 %713
      %717 = vset.pattern.permute.xlu0 0
      %718 = vperm.xlu0 %717, %v680
      %v719 = vpop.permute.xlu0 %718
      %v721 = vlaneseq
      %v722 = vshrl.u32 %v721, 7
      %v723 = vsub.s32 2, %v722
      %v724 = vrot.slane %v489, %v723
      %v725 = vlaneseq
      %v726 = vshrl.u32 %v725, 7
      %v727 = vsub.s32 6, %v726
      %v728 = vrot.slane %v489, %v727
      %v731 = vlaneseq
      %v732 = vshrl.u32 %v731, 7
      %v733 = vsub.s32 2, %v732
      %v734 = vrot.slane %v724, %v733
      %v735 = vlaneseq
      %v736 = vshrl.u32 %v735, 7
      %v737 = vsub.s32 2, %v736
      %v738 = vrot.slane %v728, %v737
      %v739 = vmul.f32 %v684, %v734
      %v740 = vmul.f32 %v684, %v738
      %v741 = vmul.f32 %v689, %v734
      %v742 = vmul.f32 %v689, %v738
      %v743 = vmul.f32 %v694, %v734
      %v744 = vmul.f32 %v694, %v738
      %v745 = vmul.f32 %v699, %v734
      %v746 = vmul.f32 %v699, %v738
      %v747 = vmul.f32 %v704, %v734
      %v748 = vmul.f32 %v704, %v738
      %v749 = vmul.f32 %v709, %v734
      %v750 = vmul.f32 %v709, %v738
      %v751 = vmul.f32 %v714, %v734
      %v752 = vmul.f32 %v714, %v738
      %v753 = vmul.f32 %v719, %v734
      %v754 = vmul.f32 %v719, %v738
      %v755 = vadd.f32 %v656, %v739
      %v756 = vadd.f32 %v657, %v740
      %v757 = vadd.f32 %v658, %v741
      %v758 = vadd.f32 %v659, %v742
      %v759 = vadd.f32 %v660, %v743
      %v760 = vadd.f32 %v661, %v744
      %v761 = vadd.f32 %v662, %v745
      %v762 = vadd.f32 %v663, %v746
      %v763 = vadd.f32 %v664, %v747
      %v764 = vadd.f32 %v665, %v748
      %v765 = vadd.f32 %v666, %v749
      %v766 = vadd.f32 %v667, %v750
      %v767 = vadd.f32 %v668, %v751
      %v768 = vadd.f32 %v669, %v752
      %v769 = vadd.f32 %v670, %v753
      %v770 = vadd.f32 %v671, %v754
      %v771 = vld [vmem:[%s2] sm:$0xff]
      %v772 = vld [vmem:[%s2 + $0x8] sm:$0xff]
      %v773 = vld [vmem:[%s2 + $0x10] sm:$0xff]
      %v774 = vld [vmem:[%s2 + $0x18] sm:$0xff]
      %v775 = vld [vmem:[%s2 + $0x20] sm:$0xff]
      %v776 = vld [vmem:[%s2 + $0x28] sm:$0xff]
      %v777 = vld [vmem:[%s2 + $0x30] sm:$0xff]
      %v778 = vld [vmem:[%s2 + $0x38] sm:$0xff]
      %780 = vset.pattern.permute.xlu0 0
      %781 = vperm.xlu0 %780, %v771
      %v782 = vpop.permute.xlu0 %781
      %785 = vset.pattern.permute.xlu0 0
      %786 = vperm.xlu0 %785, %v772
      %v787 = vpop.permute.xlu0 %786
      %790 = vset.pattern.permute.xlu0 0
      %791 = vperm.xlu0 %790, %v773
      %v792 = vpop.permute.xlu0 %791
      %795 = vset.pattern.permute.xlu0 0
      %796 = vperm.xlu0 %795, %v774
      %v797 = vpop.permute.xlu0 %796
      %800 = vset.pattern.permute.xlu0 0
      %801 = vperm.xlu0 %800, %v775
      %v802 = vpop.permute.xlu0 %801
      %805 = vset.pattern.permute.xlu0 0
      %806 = vperm.xlu0 %805, %v776
      %v807 = vpop.permute.xlu0 %806
      %810 = vset.pattern.permute.xlu0 0
      %811 = vperm.xlu0 %810, %v777
      %v812 = vpop.permute.xlu0 %811
      %815 = vset.pattern.permute.xlu0 0
      %816 = vperm.xlu0 %815, %v778
      %v817 = vpop.permute.xlu0 %816
      %v819 = vadd.f32 %v755, %v782
      %v820 = vadd.f32 %v756, %v782
      %v821 = vadd.f32 %v757, %v787
      %v822 = vadd.f32 %v758, %v787
      %v823 = vadd.f32 %v759, %v792
      %v824 = vadd.f32 %v760, %v792
      %v825 = vadd.f32 %v761, %v797
      %v826 = vadd.f32 %v762, %v797
      %v827 = vadd.f32 %v763, %v802
      %v828 = vadd.f32 %v764, %v802
      %v829 = vadd.f32 %v765, %v807
      %v830 = vadd.f32 %v766, %v807
      %v831 = vadd.f32 %v767, %v812
      %v832 = vadd.f32 %v768, %v812
      %v833 = vadd.f32 %v769, %v817
      %v834 = vadd.f32 %v770, %v817
      %v835 = vmax.f32 %v819, 0.0
      %v836 = vmax.f32 %v820, 0.0
      %v837 = vmax.f32 %v821, 0.0
      %v838 = vmax.f32 %v822, 0.0
      %v839 = vmax.f32 %v823, 0.0
      %v840 = vmax.f32 %v824, 0.0
      %v841 = vmax.f32 %v825, 0.0
      %v842 = vmax.f32 %v826, 0.0
      %v843 = vmax.f32 %v827, 0.0
      %v844 = vmax.f32 %v828, 0.0
      %v845 = vmax.f32 %v829, 0.0
      %v846 = vmax.f32 %v830, 0.0
      %v847 = vmax.f32 %v831, 0.0
      %v848 = vmax.f32 %v832, 0.0
      %v849 = vmax.f32 %v833, 0.0
      %v850 = vmax.f32 %v834, 0.0
      %v851 = vld [vmem:[%s3] sm:$0xff]
      %v852 = vld [vmem:[%s3 + $0x8] sm:$0xff]
      %v853 = vld [vmem:[%s3 + $0x10] sm:$0xff]
      %v854 = vld [vmem:[%s3 + $0x18] sm:$0xff]
      %v855 = vld [vmem:[%s3 + $0x20] sm:$0xff]
      %v856 = vld [vmem:[%s3 + $0x28] sm:$0xff]
      %v857 = vld [vmem:[%s3 + $0x30] sm:$0xff]
      %v858 = vld [vmem:[%s3 + $0x38] sm:$0xff]
      %v859 = vld [vmem:[%s3 + $0x40] sm:$0xff]
      %v860 = vld [vmem:[%s3 + $0x48] sm:$0xff]
      %v861 = vld [vmem:[%s3 + $0x50] sm:$0xff]
      %v862 = vld [vmem:[%s3 + $0x58] sm:$0xff]
      %v863 = vld [vmem:[%s3 + $0x60] sm:$0xff]
      %v864 = vld [vmem:[%s3 + $0x68] sm:$0xff]
      %v865 = vld [vmem:[%s3 + $0x70] sm:$0xff]
      %v866 = vld [vmem:[%s3 + $0x78] sm:$0xff]
      %v867 = vld [vmem:[%s4] sm:$0xff]
      %v868 = vld [vmem:[%s4 + $0x8] sm:$0xff]
      %v869 = vld [vmem:[%s4 + $0x10] sm:$0xff]
      %v870 = vld [vmem:[%s4 + $0x18] sm:$0xff]
      %v871 = vld [vmem:[%s4 + $0x20] sm:$0xff]
      %v872 = vld [vmem:[%s4 + $0x28] sm:$0xff]
      %v873 = vld [vmem:[%s4 + $0x30] sm:$0xff]
      %v874 = vld [vmem:[%s4 + $0x38] sm:$0xff]
      %v875 = vld [vmem:[%s4 + $0x40] sm:$0xff]
      %v876 = vld [vmem:[%s4 + $0x48] sm:$0xff]
      %v877 = vld [vmem:[%s4 + $0x50] sm:$0xff]
      %v878 = vld [vmem:[%s4 + $0x58] sm:$0xff]
      %v879 = vld [vmem:[%s4 + $0x60] sm:$0xff]
      %v880 = vld [vmem:[%s4 + $0x68] sm:$0xff]
      %v881 = vld [vmem:[%s4 + $0x70] sm:$0xff]
      %v882 = vld [vmem:[%s4 + $0x78] sm:$0xff]
      %884 = vset.pattern.permute.xlu0 0
      %885 = vperm.xlu0 %884, %v867
      %v886 = vpop.permute.xlu0 %885
      %889 = vset.pattern.permute.xlu0 0
      %890 = vperm.xlu0 %889, %v868
      %v891 = vpop.permute.xlu0 %890
      %894 = vset.pattern.permute.xlu0 0
      %895 = vperm.xlu0 %894, %v869
      %v896 = vpop.permute.xlu0 %895
      %899 = vset.pattern.permute.xlu0 0
      %900 = vperm.xlu0 %899, %v870
      %v901 = vpop.permute.xlu0 %900
      %904 = vset.pattern.permute.xlu0 0
      %905 = vperm.xlu0 %904, %v871
      %v906 = vpop.permute.xlu0 %905
      %909 = vset.pattern.permute.xlu0 0
      %910 = vperm.xlu0 %909, %v872
      %v911 = vpop.permute.xlu0 %910
      %914 = vset.pattern.permute.xlu0 0
      %915 = vperm.xlu0 %914, %v873
      %v916 = vpop.permute.xlu0 %915
      %919 = vset.pattern.permute.xlu0 0
      %920 = vperm.xlu0 %919, %v874
      %v921 = vpop.permute.xlu0 %920
      %924 = vset.pattern.permute.xlu0 0
      %925 = vperm.xlu0 %924, %v875
      %v926 = vpop.permute.xlu0 %925
      %929 = vset.pattern.permute.xlu0 0
      %930 = vperm.xlu0 %929, %v876
      %v931 = vpop.permute.xlu0 %930
      %934 = vset.pattern.permute.xlu0 0
      %935 = vperm.xlu0 %934, %v877
      %v936 = vpop.permute.xlu0 %935
      %939 = vset.pattern.permute.xlu0 0
      %940 = vperm.xlu0 %939, %v878
      %v941 = vpop.permute.xlu0 %940
      %944 = vset.pattern.permute.xlu0 0
      %945 = vperm.xlu0 %944, %v879
      %v946 = vpop.permute.xlu0 %945
      %949 = vset.pattern.permute.xlu0 0
      %950 = vperm.xlu0 %949, %v880
      %v951 = vpop.permute.xlu0 %950
      %954 = vset.pattern.permute.xlu0 0
      %955 = vperm.xlu0 %954, %v881
      %v956 = vpop.permute.xlu0 %955
      %959 = vset.pattern.permute.xlu0 0
      %960 = vperm.xlu0 %959, %v882
      %v961 = vpop.permute.xlu0 %960
      %vm963 = vcmask 523264
      %v965 = vsel %vm963, %v851, 0
      %v968 = vsel %vm963, %v852, 0
      %v971 = vsel %vm963, %v853, 0
      %v974 = vsel %vm963, %v854, 0
      %v977 = vsel %vm963, %v855, 0
      %v980 = vsel %vm963, %v856, 0
      %v983 = vsel %vm963, %v857, 0
      %v986 = vsel %vm963, %v858, 0
      %v989 = vsel %vm963, %v859, 0
      %v992 = vsel %vm963, %v860, 0
      %v995 = vsel %vm963, %v861, 0
      %v998 = vsel %vm963, %v862, 0
      %v1001 = vsel %vm963, %v863, 0
      %v1004 = vsel %vm963, %v864, 0
      %v1007 = vsel %vm963, %v865, 0
      %v1010 = vsel %vm963, %v866, 0
      %1012 = vmatprep.subr.mxu0 0.0
      %1013 = vmatpush1.msra.mxu0 0.0
      %1014 = vmatprep.subr.mxu0 0.0
      %1015 = vmatpush1.msra.mxu0 0.0
      %1016 = vmatprep.subr.mxu0 0.0
      %1017 = vmatpush1.msra.mxu0 0.0
      %1018 = vmatprep.subr.mxu0 0.0
      %1019 = vmatpush1.msra.mxu0 0.0
      %1020 = vmatprep.subr.mxu0 0.0
      %1021 = vmatpush1.msra.mxu0 0.0
      %1022 = vmatprep.subr.mxu0 0.0
      %1023 = vmatpush1.msra.mxu0 0.0
      %1024 = vmatprep.subr.mxu0 0.0
      %1025 = vmatpush1.msra.mxu0 0.0
      %1026 = vmatprep.subr.mxu0 0.0
      %1027 = vmatpush1.msra.mxu0 0.0
      %v1028 = vand.u32 %v850, 4294901760
      %1029 = vmatprep.subr.mxu0 %v1028
      %v1030 = vand.u32 %v849, 4294901760
      %1031 = vmatpush1.msra.mxu0 %v1030
      %v1032 = vand.u32 %v848, 4294901760
      %1033 = vmatprep.subr.mxu0 %v1032
      %v1034 = vand.u32 %v847, 4294901760
      %1035 = vmatpush1.msra.mxu0 %v1034
      %v1036 = vand.u32 %v846, 4294901760
      %1037 = vmatprep.subr.mxu0 %v1036
      %v1038 = vand.u32 %v845, 4294901760
      %1039 = vmatpush1.msra.mxu0 %v1038
      %v1040 = vand.u32 %v844, 4294901760
      %1041 = vmatprep.subr.mxu0 %v1040
      %v1042 = vand.u32 %v843, 4294901760
      %1043 = vmatpush1.msra.mxu0 %v1042
      %v1044 = vand.u32 %v842, 4294901760
      %1045 = vmatprep.subr.mxu0 %v1044
      %v1046 = vand.u32 %v841, 4294901760
      %1047 = vmatpush1.msra.mxu0 %v1046
      %v1048 = vand.u32 %v840, 4294901760
      %1049 = vmatprep.subr.mxu0 %v1048
      %v1050 = vand.u32 %v839, 4294901760
      %1051 = vmatpush1.msra.mxu0 %v1050
      %v1052 = vand.u32 %v838, 4294901760
      %1053 = vmatprep.subr.mxu0 %v1052
      %v1054 = vand.u32 %v837, 4294901760
      %1055 = vmatpush1.msra.mxu0 %v1054
      %v1056 = vand.u32 %v836, 4294901760
      %1057 = vmatprep.subr.mxu0 %v1056
      %v1058 = vand.u32 %v835, 4294901760
      %1059 = vmatpush1.msra.mxu0 %v1058
      %1060 = vmatprep.subr.mxu0 0.0
      %1061 = vmatpush2.msra.mxu0 0.0
      %1062 = vmatprep.subr.mxu0 0.0
      %1063 = vmatpush2.msra.mxu0 0.0
      %1064 = vmatprep.subr.mxu0 0.0
      %1065 = vmatpush2.msra.mxu0 0.0
      %1066 = vmatprep.subr.mxu0 0.0
      %1067 = vmatpush2.msra.mxu0 0.0
      %1068 = vmatprep.subr.mxu0 0.0
      %1069 = vmatpush2.msra.mxu0 0.0
      %1070 = vmatprep.subr.mxu0 0.0
      %1071 = vmatpush2.msra.mxu0 0.0
      %1072 = vmatprep.subr.mxu0 0.0
      %1073 = vmatpush2.msra.mxu0 0.0
      %1074 = vmatprep.subr.mxu0 0.0
      %1075 = vmatpush2.msra.mxu0 0.0
      %1076 = vmatprep.subr.mxu0 0.0
      %1077 = vmatpush2.msra.mxu0 0.0
      %1078 = vmatprep.subr.mxu0 0.0
      %1079 = vmatpush2.msra.mxu0 0.0
      %1080 = vmatprep.subr.mxu0 0.0
      %1081 = vmatpush2.msra.mxu0 0.0
      %1082 = vmatprep.subr.mxu0 0.0
      %1083 = vmatpush2.msra.mxu0 0.0
      %1084 = vmatprep.subr.mxu0 0.0
      %1085 = vmatpush2.msra.mxu0 0.0
      %1086 = vmatprep.subr.mxu0 0.0
      %1087 = vmatpush2.msra.mxu0 0.0
      %1088 = vmatprep.subr.mxu0 0.0
      %1089 = vmatpush2.msra.mxu0 0.0
      %1090 = vmatprep.subr.mxu0 0.0
      %1091 = vmatpush2.msra.mxu0 0.0
      %1092 = vmatprep.mubr.f32.mxu0 0.0
      %v1093 = vand.u32 %v965, 4294901760
      %v1094 = vsub.f32 %v965, %v1093
      %v1095 = vand.u32 %v1094, 4294901760
      %v1096 = vsub.f32 %v1094, %v1095
      %v1097 = vand.u32 %v1096, 4294901760
      %1098 = vmatmul.mubr.f32.gmra.mxu0 %v1097
      %v1099 = vpop.f32.mrf.mxu0
      %v1100 = vadd.f32 %v886, %v1099
      %v1101 = vpop.f32.mrf.mxu0
      %v1102 = vadd.f32 %v886, %v1101
      %1103 = vmatprep.mubr.f32.mxu0 0.0
      %v1104 = vand.u32 %v968, 4294901760
      %v1105 = vsub.f32 %v968, %v1104
      %v1106 = vand.u32 %v1105, 4294901760
      %v1107 = vsub.f32 %v1105, %v1106
      %v1108 = vand.u32 %v1107, 4294901760
      %1109 = vmatmul.mubr.f32.gmra.mxu0 %v1108
      %v1110 = vpop.f32.mrf.mxu0
      %v1111 = vadd.f32 %v891, %v1110
      %v1112 = vpop.f32.mrf.mxu0
      %v1113 = vadd.f32 %v891, %v1112
      %1114 = vmatprep.mubr.f32.mxu0 0.0
      %v1115 = vand.u32 %v971, 4294901760
      %v1116 = vsub.f32 %v971, %v1115
      %v1117 = vand.u32 %v1116, 4294901760
      %v1118 = vsub.f32 %v1116, %v1117
      %v1119 = vand.u32 %v1118, 4294901760
      %1120 = vmatmul.mubr.f32.gmra.mxu0 %v1119
      %v1121 = vpop.f32.mrf.mxu0
      %v1122 = vadd.f32 %v896, %v1121
      %v1123 = vpop.f32.mrf.mxu0
      %v1124 = vadd.f32 %v896, %v1123
      %1125 = vmatprep.mubr.f32.mxu0 0.0
      %v1126 = vand.u32 %v974, 4294901760
      %v1127 = vsub.f32 %v974, %v1126
      %v1128 = vand.u32 %v1127, 4294901760
      %v1129 = vsub.f32 %v1127, %v1128
      %v1130 = vand.u32 %v1129, 4294901760
      %1131 = vmatmul.mubr.f32.gmra.mxu0 %v1130
      %v1132 = vpop.f32.mrf.mxu0
      %v1133 = vadd.f32 %v901, %v1132
      %v1134 = vpop.f32.mrf.mxu0
      %v1135 = vadd.f32 %v901, %v1134
      %1136 = vmatprep.mubr.f32.mxu0 0.0
      %v1137 = vand.u32 %v977, 4294901760
      %v1138 = vsub.f32 %v977, %v1137
      %v1139 = vand.u32 %v1138, 4294901760
      %v1140 = vsub.f32 %v1138, %v1139
      %v1141 = vand.u32 %v1140, 4294901760
      %1142 = vmatmul.mubr.f32.gmra.mxu0 %v1141
      %v1143 = vpop.f32.mrf.mxu0
      %v1144 = vadd.f32 %v906, %v1143
      %v1145 = vpop.f32.mrf.mxu0
      %v1146 = vadd.f32 %v906, %v1145
      %1147 = vmatprep.mubr.f32.mxu0 0.0
      %v1148 = vand.u32 %v980, 4294901760
      %v1149 = vsub.f32 %v980, %v1148
      %v1150 = vand.u32 %v1149, 4294901760
      %v1151 = vsub.f32 %v1149, %v1150
      %v1152 = vand.u32 %v1151, 4294901760
      %1153 = vmatmul.mubr.f32.gmra.mxu0 %v1152
      %v1154 = vpop.f32.mrf.mxu0
      %v1155 = vadd.f32 %v911, %v1154
      %v1156 = vpop.f32.mrf.mxu0
      %v1157 = vadd.f32 %v911, %v1156
      %1158 = vmatprep.mubr.f32.mxu0 0.0
      %v1159 = vand.u32 %v983, 4294901760
      %v1160 = vsub.f32 %v983, %v1159
      %v1161 = vand.u32 %v1160, 4294901760
      %v1162 = vsub.f32 %v1160, %v1161
      %v1163 = vand.u32 %v1162, 4294901760
      %1164 = vmatmul.mubr.f32.gmra.mxu0 %v1163
      %v1165 = vpop.f32.mrf.mxu0
      %v1166 = vadd.f32 %v916, %v1165
      %v1167 = vpop.f32.mrf.mxu0
      %v1168 = vadd.f32 %v916, %v1167
      %1169 = vmatprep.mubr.f32.mxu0 0.0
      %v1170 = vand.u32 %v986, 4294901760
      %v1171 = vsub.f32 %v986, %v1170
      %v1172 = vand.u32 %v1171, 4294901760
      %v1173 = vsub.f32 %v1171, %v1172
      %v1174 = vand.u32 %v1173, 4294901760
      %1175 = vmatmul.mubr.f32.gmra.mxu0 %v1174
      %v1176 = vpop.f32.mrf.mxu0
      %v1177 = vadd.f32 %v921, %v1176
      %v1178 = vpop.f32.mrf.mxu0
      %v1179 = vadd.f32 %v921, %v1178
      %1180 = vmatprep.mubr.f32.mxu0 0.0
      %v1181 = vand.u32 %v989, 4294901760
      %v1182 = vsub.f32 %v989, %v1181
      %v1183 = vand.u32 %v1182, 4294901760
      %v1184 = vsub.f32 %v1182, %v1183
      %v1185 = vand.u32 %v1184, 4294901760
      %1186 = vmatmul.mubr.f32.gmra.mxu0 %v1185
      %v1187 = vpop.f32.mrf.mxu0
      %v1188 = vadd.f32 %v926, %v1187
      %v1189 = vpop.f32.mrf.mxu0
      %v1190 = vadd.f32 %v926, %v1189
      %1191 = vmatprep.mubr.f32.mxu0 0.0
      %v1192 = vand.u32 %v992, 4294901760
      %v1193 = vsub.f32 %v992, %v1192
      %v1194 = vand.u32 %v1193, 4294901760
      %v1195 = vsub.f32 %v1193, %v1194
      %v1196 = vand.u32 %v1195, 4294901760
      %1197 = vmatmul.mubr.f32.gmra.mxu0 %v1196
      %v1198 = vpop.f32.mrf.mxu0
      %v1199 = vadd.f32 %v931, %v1198
      %v1200 = vpop.f32.mrf.mxu0
      %v1201 = vadd.f32 %v931, %v1200
      %1202 = vmatprep.mubr.f32.mxu0 0.0
      %v1203 = vand.u32 %v995, 4294901760
      %v1204 = vsub.f32 %v995, %v1203
      %v1205 = vand.u32 %v1204, 4294901760
      %v1206 = vsub.f32 %v1204, %v1205
      %v1207 = vand.u32 %v1206, 4294901760
      %1208 = vmatmul.mubr.f32.gmra.mxu0 %v1207
      %v1209 = vpop.f32.mrf.mxu0
      %v1210 = vadd.f32 %v936, %v1209
      %v1211 = vpop.f32.mrf.mxu0
      %v1212 = vadd.f32 %v936, %v1211
      %1213 = vmatprep.mubr.f32.mxu0 0.0
      %v1214 = vand.u32 %v998, 4294901760
      %v1215 = vsub.f32 %v998, %v1214
      %v1216 = vand.u32 %v1215, 4294901760
      %v1217 = vsub.f32 %v1215, %v1216
      %v1218 = vand.u32 %v1217, 4294901760
      %1219 = vmatmul.mubr.f32.gmra.mxu0 %v1218
      %v1220 = vpop.f32.mrf.mxu0
      %v1221 = vadd.f32 %v941, %v1220
      %v1222 = vpop.f32.mrf.mxu0
      %v1223 = vadd.f32 %v941, %v1222
      %1224 = vmatprep.mubr.f32.mxu0 0.0
      %v1225 = vand.u32 %v1001, 4294901760
      %v1226 = vsub.f32 %v1001, %v1225
      %v1227 = vand.u32 %v1226, 4294901760
      %v1228 = vsub.f32 %v1226, %v1227
      %v1229 = vand.u32 %v1228, 4294901760
      %1230 = vmatmul.mubr.f32.gmra.mxu0 %v1229
      %v1231 = vpop.f32.mrf.mxu0
      %v1232 = vadd.f32 %v946, %v1231
      %v1233 = vpop.f32.mrf.mxu0
      %v1234 = vadd.f32 %v946, %v1233
      %1235 = vmatprep.mubr.f32.mxu0 0.0
      %v1236 = vand.u32 %v1004, 4294901760
      %v1237 = vsub.f32 %v1004, %v1236
      %v1238 = vand.u32 %v1237, 4294901760
      %v1239 = vsub.f32 %v1237, %v1238
      %v1240 = vand.u32 %v1239, 4294901760
      %1241 = vmatmul.mubr.f32.gmra.mxu0 %v1240
      %v1242 = vpop.f32.mrf.mxu0
      %v1243 = vadd.f32 %v951, %v1242
      %v1244 = vpop.f32.mrf.mxu0
      %v1245 = vadd.f32 %v951, %v1244
      %1246 = vmatprep.mubr.f32.mxu0 0.0
      %v1247 = vand.u32 %v1007, 4294901760
      %v1248 = vsub.f32 %v1007, %v1247
      %v1249 = vand.u32 %v1248, 4294901760
      %v1250 = vsub.f32 %v1248, %v1249
      %v1251 = vand.u32 %v1250, 4294901760
      %1252 = vmatmul.mubr.f32.gmra.mxu0 %v1251
      %v1253 = vpop.f32.mrf.mxu0
      %v1254 = vadd.f32 %v956, %v1253
      %v1255 = vpop.f32.mrf.mxu0
      %v1256 = vadd.f32 %v956, %v1255
      %1257 = vmatprep.mubr.f32.mxu0 0.0
      %v1258 = vand.u32 %v1010, 4294901760
      %v1259 = vsub.f32 %v1010, %v1258
      %v1260 = vand.u32 %v1259, 4294901760
      %v1261 = vsub.f32 %v1259, %v1260
      %v1262 = vand.u32 %v1261, 4294901760
      %1263 = vmatmul.mubr.f32.gmra.mxu0 %v1262
      %v1264 = vpop.f32.mrf.mxu0
      %v1265 = vadd.f32 %v961, %v1264
      %v1266 = vpop.f32.mrf.mxu0
      %v1267 = vadd.f32 %v961, %v1266
      %1268 = vdwg.mxu0
      %1269 = vmatprep.subr.mxu0 0.0
      %1270 = vmatpush1.msra.mxu0 0.0
      %1271 = vmatprep.subr.mxu0 0.0
      %1272 = vmatpush1.msra.mxu0 0.0
      %1273 = vmatprep.subr.mxu0 0.0
      %1274 = vmatpush1.msra.mxu0 0.0
      %1275 = vmatprep.subr.mxu0 0.0
      %1276 = vmatpush1.msra.mxu0 0.0
      %1277 = vmatprep.subr.mxu0 0.0
      %1278 = vmatpush1.msra.mxu0 0.0
      %1279 = vmatprep.subr.mxu0 0.0
      %1280 = vmatpush1.msra.mxu0 0.0
      %1281 = vmatprep.subr.mxu0 0.0
      %1282 = vmatpush1.msra.mxu0 0.0
      %1283 = vmatprep.subr.mxu0 0.0
      %1284 = vmatpush1.msra.mxu0 0.0
      %v1285 = vand.u32 %v850, 4294901760
      %v1286 = vsub.f32 %v850, %v1285
      %v1287 = vand.u32 %v1286, 4294901760
      %v1288 = vsub.f32 %v1286, %v1287
      %v1289 = vand.u32 %v1288, 4294901760
      %1290 = vmatprep.subr.mxu0 %v1289
      %v1291 = vand.u32 %v849, 4294901760
      %v1292 = vsub.f32 %v849, %v1291
      %v1293 = vand.u32 %v1292, 4294901760
      %v1294 = vsub.f32 %v1292, %v1293
      %v1295 = vand.u32 %v1294, 4294901760
      %1296 = vmatpush1.msra.mxu0 %v1295
      %v1297 = vand.u32 %v848, 4294901760
      %v1298 = vsub.f32 %v848, %v1297
      %v1299 = vand.u32 %v1298, 4294901760
      %v1300 = vsub.f32 %v1298, %v1299
      %v1301 = vand.u32 %v1300, 4294901760
      %1302 = vmatprep.subr.mxu0 %v1301
      %v1303 = vand.u32 %v847, 4294901760
      %v1304 = vsub.f32 %v847, %v1303
      %v1305 = vand.u32 %v1304, 4294901760
      %v1306 = vsub.f32 %v1304, %v1305
      %v1307 = vand.u32 %v1306, 4294901760
      %1308 = vmatpush1.msra.mxu0 %v1307
      %v1309 = vand.u32 %v846, 4294901760
      %v1310 = vsub.f32 %v846, %v1309
      %v1311 = vand.u32 %v1310, 4294901760
      %v1312 = vsub.f32 %v1310, %v1311
      %v1313 = vand.u32 %v1312, 4294901760
      %1314 = vmatprep.subr.mxu0 %v1313
      %v1315 = vand.u32 %v845, 4294901760
      %v1316 = vsub.f32 %v845, %v1315
      %v1317 = vand.u32 %v1316, 4294901760
      %v1318 = vsub.f32 %v1316, %v1317
      %v1319 = vand.u32 %v1318, 4294901760
      %1320 = vmatpush1.msra.mxu0 %v1319
      %v1321 = vand.u32 %v844, 4294901760
      %v1322 = vsub.f32 %v844, %v1321
      %v1323 = vand.u32 %v1322, 4294901760
      %v1324 = vsub.f32 %v1322, %v1323
      %v1325 = vand.u32 %v1324, 4294901760
      %1326 = vmatprep.subr.mxu0 %v1325
      %v1327 = vand.u32 %v843, 4294901760
      %v1328 = vsub.f32 %v843, %v1327
      %v1329 = vand.u32 %v1328, 4294901760
      %v1330 = vsub.f32 %v1328, %v1329
      %v1331 = vand.u32 %v1330, 4294901760
      %1332 = vmatpush1.msra.mxu0 %v1331
      %v1333 = vand.u32 %v842, 4294901760
      %v1334 = vsub.f32 %v842, %v1333
      %v1335 = vand.u32 %v1334, 4294901760
      %v1336 = vsub.f32 %v1334, %v1335
      %v1337 = vand.u32 %v1336, 4294901760
      %1338 = vmatprep.subr.mxu0 %v1337
      %v1339 = vand.u32 %v841, 4294901760
      %v1340 = vsub.f32 %v841, %v1339
      %v1341 = vand.u32 %v1340, 4294901760
      %v1342 = vsub.f32 %v1340, %v1341
      %v1343 = vand.u32 %v1342, 4294901760
      %1344 = vmatpush1.msra.mxu0 %v1343
      %v1345 = vand.u32 %v840, 4294901760
      %v1346 = vsub.f32 %v840, %v1345
      %v1347 = vand.u32 %v1346, 4294901760
      %v1348 = vsub.f32 %v1346, %v1347
      %v1349 = vand.u32 %v1348, 4294901760
      %1350 = vmatprep.subr.mxu0 %v1349
      %v1351 = vand.u32 %v839, 4294901760
      %v1352 = vsub.f32 %v839, %v1351
      %v1353 = vand.u32 %v1352, 4294901760
      %v1354 = vsub.f32 %v1352, %v1353
      %v1355 = vand.u32 %v1354, 4294901760
      %1356 = vmatpush1.msra.mxu0 %v1355
      %v1357 = vand.u32 %v838, 4294901760
      %v1358 = vsub.f32 %v838, %v1357
      %v1359 = vand.u32 %v1358, 4294901760
      %v1360 = vsub.f32 %v1358, %v1359
      %v1361 = vand.u32 %v1360, 4294901760
      %1362 = vmatprep.subr.mxu0 %v1361
      %v1363 = vand.u32 %v837, 4294901760
      %v1364 = vsub.f32 %v837, %v1363
      %v1365 = vand.u32 %v1364, 4294901760
      %v1366 = vsub.f32 %v1364, %v1365
      %v1367 = vand.u32 %v1366, 4294901760
      %1368 = vmatpush1.msra.mxu0 %v1367
      %v1369 = vand.u32 %v836, 4294901760
      %v1370 = vsub.f32 %v836, %v1369
      %v1371 = vand.u32 %v1370, 4294901760
      %v1372 = vsub.f32 %v1370, %v1371
      %v1373 = vand.u32 %v1372, 4294901760
      %1374 = vmatprep.subr.mxu0 %v1373
      %v1375 = vand.u32 %v835, 4294901760
      %v1376 = vsub.f32 %v835, %v1375
      %v1377 = vand.u32 %v1376, 4294901760
      %v1378 = vsub.f32 %v1376, %v1377
      %v1379 = vand.u32 %v1378, 4294901760
      %1380 = vmatpush1.msra.mxu0 %v1379
      %1381 = vmatprep.subr.mxu0 0.0
      %1382 = vmatpush2.msra.mxu0 0.0
      %1383 = vmatprep.subr.mxu0 0.0
      %1384 = vmatpush2.msra.mxu0 0.0
      %1385 = vmatprep.subr.mxu0 0.0
      %1386 = vmatpush2.msra.mxu0 0.0
      %1387 = vmatprep.subr.mxu0 0.0
      %1388 = vmatpush2.msra.mxu0 0.0
      %1389 = vmatprep.subr.mxu0 0.0
      %1390 = vmatpush2.msra.mxu0 0.0
      %1391 = vmatprep.subr.mxu0 0.0
      %1392 = vmatpush2.msra.mxu0 0.0
      %1393 = vmatprep.subr.mxu0 0.0
      %1394 = vmatpush2.msra.mxu0 0.0
      %1395 = vmatprep.subr.mxu0 0.0
      %1396 = vmatpush2.msra.mxu0 0.0
      %1397 = vmatprep.subr.mxu0 0.0
      %1398 = vmatpush2.msra.mxu0 0.0
      %1399 = vmatprep.subr.mxu0 0.0
      %1400 = vmatpush2.msra.mxu0 0.0
      %1401 = vmatprep.subr.mxu0 0.0
      %1402 = vmatpush2.msra.mxu0 0.0
      %1403 = vmatprep.subr.mxu0 0.0
      %1404 = vmatpush2.msra.mxu0 0.0
      %1405 = vmatprep.subr.mxu0 0.0
      %1406 = vmatpush2.msra.mxu0 0.0
      %1407 = vmatprep.subr.mxu0 0.0
      %1408 = vmatpush2.msra.mxu0 0.0
      %1409 = vmatprep.subr.mxu0 0.0
      %1410 = vmatpush2.msra.mxu0 0.0
      %1411 = vmatprep.subr.mxu0 0.0
      %1412 = vmatpush2.msra.mxu0 0.0
      %1413 = vmatprep.mubr.f32.mxu0 0.0
      %v1414 = vand.u32 %v965, 4294901760
      %1415 = vmatmul.mubr.f32.gmra.mxu0 %v1414
      %v1416 = vpop.f32.mrf.mxu0
      %v1417 = vadd.f32 %v1100, %v1416
      %v1418 = vpop.f32.mrf.mxu0
      %v1419 = vadd.f32 %v1102, %v1418
      %1420 = vmatprep.mubr.f32.mxu0 0.0
      %v1421 = vand.u32 %v968, 4294901760
      %1422 = vmatmul.mubr.f32.gmra.mxu0 %v1421
      %v1423 = vpop.f32.mrf.mxu0
      %v1424 = vadd.f32 %v1111, %v1423
      %v1425 = vpop.f32.mrf.mxu0
      %v1426 = vadd.f32 %v1113, %v1425
      %1427 = vmatprep.mubr.f32.mxu0 0.0
      %v1428 = vand.u32 %v971, 4294901760
      %1429 = vmatmul.mubr.f32.gmra.mxu0 %v1428
      %v1430 = vpop.f32.mrf.mxu0
      %v1431 = vadd.f32 %v1122, %v1430
      %v1432 = vpop.f32.mrf.mxu0
      %v1433 = vadd.f32 %v1124, %v1432
      %1434 = vmatprep.mubr.f32.mxu0 0.0
      %v1435 = vand.u32 %v974, 4294901760
      %1436 = vmatmul.mubr.f32.gmra.mxu0 %v1435
      %v1437 = vpop.f32.mrf.mxu0
      %v1438 = vadd.f32 %v1133, %v1437
      %v1439 = vpop.f32.mrf.mxu0
      %v1440 = vadd.f32 %v1135, %v1439
      %1441 = vmatprep.mubr.f32.mxu0 0.0
      %v1442 = vand.u32 %v977, 4294901760
      %1443 = vmatmul.mubr.f32.gmra.mxu0 %v1442
      %v1444 = vpop.f32.mrf.mxu0
      %v1445 = vadd.f32 %v1144, %v1444
      %v1446 = vpop.f32.mrf.mxu0
      %v1447 = vadd.f32 %v1146, %v1446
      %1448 = vmatprep.mubr.f32.mxu0 0.0
      %v1449 = vand.u32 %v980, 4294901760
      %1450 = vmatmul.mubr.f32.gmra.mxu0 %v1449
      %v1451 = vpop.f32.mrf.mxu0
      %v1452 = vadd.f32 %v1155, %v1451
      %v1453 = vpop.f32.mrf.mxu0
      %v1454 = vadd.f32 %v1157, %v1453
      %1455 = vmatprep.mubr.f32.mxu0 0.0
      %v1456 = vand.u32 %v983, 4294901760
      %1457 = vmatmul.mubr.f32.gmra.mxu0 %v1456
      %v1458 = vpop.f32.mrf.mxu0
      %v1459 = vadd.f32 %v1166, %v1458
      %v1460 = vpop.f32.mrf.mxu0
      %v1461 = vadd.f32 %v1168, %v1460
      %1462 = vmatprep.mubr.f32.mxu0 0.0
      %v1463 = vand.u32 %v986, 4294901760
      %1464 = vmatmul.mubr.f32.gmra.mxu0 %v1463
      %v1465 = vpop.f32.mrf.mxu0
      %v1466 = vadd.f32 %v1177, %v1465
      %v1467 = vpop.f32.mrf.mxu0
      %v1468 = vadd.f32 %v1179, %v1467
      %1469 = vmatprep.mubr.f32.mxu0 0.0
      %v1470 = vand.u32 %v989, 4294901760
      %1471 = vmatmul.mubr.f32.gmra.mxu0 %v1470
      %v1472 = vpop.f32.mrf.mxu0
      %v1473 = vadd.f32 %v1188, %v1472
      %v1474 = vpop.f32.mrf.mxu0
      %v1475 = vadd.f32 %v1190, %v1474
      %1476 = vmatprep.mubr.f32.mxu0 0.0
      %v1477 = vand.u32 %v992, 4294901760
      %1478 = vmatmul.mubr.f32.gmra.mxu0 %v1477
      %v1479 = vpop.f32.mrf.mxu0
      %v1480 = vadd.f32 %v1199, %v1479
      %v1481 = vpop.f32.mrf.mxu0
      %v1482 = vadd.f32 %v1201, %v1481
      %1483 = vmatprep.mubr.f32.mxu0 0.0
      %v1484 = vand.u32 %v995, 4294901760
      %1485 = vmatmul.mubr.f32.gmra.mxu0 %v1484
      %v1486 = vpop.f32.mrf.mxu0
      %v1487 = vadd.f32 %v1210, %v1486
      %v1488 = vpop.f32.mrf.mxu0
      %v1489 = vadd.f32 %v1212, %v1488
      %1490 = vmatprep.mubr.f32.mxu0 0.0
      %v1491 = vand.u32 %v998, 4294901760
      %1492 = vmatmul.mubr.f32.gmra.mxu0 %v1491
      %v1493 = vpop.f32.mrf.mxu0
      %v1494 = vadd.f32 %v1221, %v1493
      %v1495 = vpop.f32.mrf.mxu0
      %v1496 = vadd.f32 %v1223, %v1495
      %1497 = vmatprep.mubr.f32.mxu0 0.0
      %v1498 = vand.u32 %v1001, 4294901760
      %1499 = vmatmul.mubr.f32.gmra.mxu0 %v1498
      %v1500 = vpop.f32.mrf.mxu0
      %v1501 = vadd.f32 %v1232, %v1500
      %v1502 = vpop.f32.mrf.mxu0
      %v1503 = vadd.f32 %v1234, %v1502
      %1504 = vmatprep.mubr.f32.mxu0 0.0
      %v1505 = vand.u32 %v1004, 4294901760
      %1506 = vmatmul.mubr.f32.gmra.mxu0 %v1505
      %v1507 = vpop.f32.mrf.mxu0
      %v1508 = vadd.f32 %v1243, %v1507
      %v1509 = vpop.f32.mrf.mxu0
      %v1510 = vadd.f32 %v1245, %v1509
      %1511 = vmatprep.mubr.f32.mxu0 0.0
      %v1512 = vand.u32 %v1007, 4294901760
      %1513 = vmatmul.mubr.f32.gmra.mxu0 %v1512
      %v1514 = vpop.f32.mrf.mxu0
      %v1515 = vadd.f32 %v1254, %v1514
      %v1516 = vpop.f32.mrf.mxu0
      %v1517 = vadd.f32 %v1256, %v1516
      %1518 = vmatprep.mubr.f32.mxu0 0.0
      %v1519 = vand.u32 %v1010, 4294901760
      %1520 = vmatmul.mubr.f32.gmra.mxu0 %v1519
      %v1521 = vpop.f32.mrf.mxu0
      %v1522 = vadd.f32 %v1265, %v1521
      %v1523 = vpop.f32.mrf.mxu0
      %v1524 = vadd.f32 %v1267, %v1523
      %1525 = vdwg.mxu0
      %1526 = vmatprep.subr.mxu0 0.0
      %1527 = vmatpush1.msra.mxu0 0.0
      %1528 = vmatprep.subr.mxu0 0.0
      %1529 = vmatpush1.msra.mxu0 0.0
      %1530 = vmatprep.subr.mxu0 0.0
      %1531 = vmatpush1.msra.mxu0 0.0
      %1532 = vmatprep.subr.mxu0 0.0
      %1533 = vmatpush1.msra.mxu0 0.0
      %1534 = vmatprep.subr.mxu0 0.0
      %1535 = vmatpush1.msra.mxu0 0.0
      %1536 = vmatprep.subr.mxu0 0.0
      %1537 = vmatpush1.msra.mxu0 0.0
      %1538 = vmatprep.subr.mxu0 0.0
      %1539 = vmatpush1.msra.mxu0 0.0
      %1540 = vmatprep.subr.mxu0 0.0
      %1541 = vmatpush1.msra.mxu0 0.0
      %v1542 = vand.u32 %v850, 4294901760
      %v1543 = vsub.f32 %v850, %v1542
      %1544 = vmatprep.subr.mxu0 %v1543
      %v1545 = vand.u32 %v849, 4294901760
      %v1546 = vsub.f32 %v849, %v1545
      %1547 = vmatpush1.msra.mxu0 %v1546
      %v1548 = vand.u32 %v848, 4294901760
      %v1549 = vsub.f32 %v848, %v1548
      %1550 = vmatprep.subr.mxu0 %v1549
      %v1551 = vand.u32 %v847, 4294901760
      %v1552 = vsub.f32 %v847, %v1551
      %1553 = vmatpush1.msra.mxu0 %v1552
      %v1554 = vand.u32 %v846, 4294901760
      %v1555 = vsub.f32 %v846, %v1554
      %1556 = vmatprep.subr.mxu0 %v1555
      %v1557 = vand.u32 %v845, 4294901760
      %v1558 = vsub.f32 %v845, %v1557
      %1559 = vmatpush1.msra.mxu0 %v1558
      %v1560 = vand.u32 %v844, 4294901760
      %v1561 = vsub.f32 %v844, %v1560
      %1562 = vmatprep.subr.mxu0 %v1561
      %v1563 = vand.u32 %v843, 4294901760
      %v1564 = vsub.f32 %v843, %v1563
      %1565 = vmatpush1.msra.mxu0 %v1564
      %v1566 = vand.u32 %v842, 4294901760
      %v1567 = vsub.f32 %v842, %v1566
      %1568 = vmatprep.subr.mxu0 %v1567
      %v1569 = vand.u32 %v841, 4294901760
      %v1570 = vsub.f32 %v841, %v1569
      %1571 = vmatpush1.msra.mxu0 %v1570
      %v1572 = vand.u32 %v840, 4294901760
      %v1573 = vsub.f32 %v840, %v1572
      %1574 = vmatprep.subr.mxu0 %v1573
      %v1575 = vand.u32 %v839, 4294901760
      %v1576 = vsub.f32 %v839, %v1575
      %1577 = vmatpush1.msra.mxu0 %v1576
      %v1578 = vand.u32 %v838, 4294901760
      %v1579 = vsub.f32 %v838, %v1578
      %1580 = vmatprep.subr.mxu0 %v1579
      %v1581 = vand.u32 %v837, 4294901760
      %v1582 = vsub.f32 %v837, %v1581
      %1583 = vmatpush1.msra.mxu0 %v1582
      %v1584 = vand.u32 %v836, 4294901760
      %v1585 = vsub.f32 %v836, %v1584
      %1586 = vmatprep.subr.mxu0 %v1585
      %v1587 = vand.u32 %v835, 4294901760
      %v1588 = vsub.f32 %v835, %v1587
      %1589 = vmatpush1.msra.mxu0 %v1588
      %1590 = vmatprep.subr.mxu0 0.0
      %1591 = vmatpush2.msra.mxu0 0.0
      %1592 = vmatprep.subr.mxu0 0.0
      %1593 = vmatpush2.msra.mxu0 0.0
      %1594 = vmatprep.subr.mxu0 0.0
      %1595 = vmatpush2.msra.mxu0 0.0
      %1596 = vmatprep.subr.mxu0 0.0
      %1597 = vmatpush2.msra.mxu0 0.0
      %1598 = vmatprep.subr.mxu0 0.0
      %1599 = vmatpush2.msra.mxu0 0.0
      %1600 = vmatprep.subr.mxu0 0.0
      %1601 = vmatpush2.msra.mxu0 0.0
      %1602 = vmatprep.subr.mxu0 0.0
      %1603 = vmatpush2.msra.mxu0 0.0
      %1604 = vmatprep.subr.mxu0 0.0
      %1605 = vmatpush2.msra.mxu0 0.0
      %1606 = vmatprep.subr.mxu0 0.0
      %1607 = vmatpush2.msra.mxu0 0.0
      %1608 = vmatprep.subr.mxu0 0.0
      %1609 = vmatpush2.msra.mxu0 0.0
      %1610 = vmatprep.subr.mxu0 0.0
      %1611 = vmatpush2.msra.mxu0 0.0
      %1612 = vmatprep.subr.mxu0 0.0
      %1613 = vmatpush2.msra.mxu0 0.0
      %1614 = vmatprep.subr.mxu0 0.0
      %1615 = vmatpush2.msra.mxu0 0.0
      %1616 = vmatprep.subr.mxu0 0.0
      %1617 = vmatpush2.msra.mxu0 0.0
      %1618 = vmatprep.subr.mxu0 0.0
      %1619 = vmatpush2.msra.mxu0 0.0
      %1620 = vmatprep.subr.mxu0 0.0
      %1621 = vmatpush2.msra.mxu0 0.0
      %1622 = vmatprep.mubr.f32.mxu0 0.0
      %v1623 = vand.u32 %v965, 4294901760
      %v1624 = vsub.f32 %v965, %v1623
      %1625 = vmatmul.mubr.f32.gmra.mxu0 %v1624
      %v1626 = vpop.f32.mrf.mxu0
      %v1627 = vadd.f32 %v1417, %v1626
      %v1628 = vpop.f32.mrf.mxu0
      %v1629 = vadd.f32 %v1419, %v1628
      %1630 = vmatprep.mubr.f32.mxu0 0.0
      %v1631 = vand.u32 %v968, 4294901760
      %v1632 = vsub.f32 %v968, %v1631
      %1633 = vmatmul.mubr.f32.gmra.mxu0 %v1632
      %v1634 = vpop.f32.mrf.mxu0
      %v1635 = vadd.f32 %v1424, %v1634
      %v1636 = vpop.f32.mrf.mxu0
      %v1637 = vadd.f32 %v1426, %v1636
      %1638 = vmatprep.mubr.f32.mxu0 0.0
      %v1639 = vand.u32 %v971, 4294901760
      %v1640 = vsub.f32 %v971, %v1639
      %1641 = vmatmul.mubr.f32.gmra.mxu0 %v1640
      %v1642 = vpop.f32.mrf.mxu0
      %v1643 = vadd.f32 %v1431, %v1642
      %v1644 = vpop.f32.mrf.mxu0
      %v1645 = vadd.f32 %v1433, %v1644
      %1646 = vmatprep.mubr.f32.mxu0 0.0
      %v1647 = vand.u32 %v974, 4294901760
      %v1648 = vsub.f32 %v974, %v1647
      %1649 = vmatmul.mubr.f32.gmra.mxu0 %v1648
      %v1650 = vpop.f32.mrf.mxu0
      %v1651 = vadd.f32 %v1438, %v1650
      %v1652 = vpop.f32.mrf.mxu0
      %v1653 = vadd.f32 %v1440, %v1652
      %1654 = vmatprep.mubr.f32.mxu0 0.0
      %v1655 = vand.u32 %v977, 4294901760
      %v1656 = vsub.f32 %v977, %v1655
      %1657 = vmatmul.mubr.f32.gmra.mxu0 %v1656
      %v1658 = vpop.f32.mrf.mxu0
      %v1659 = vadd.f32 %v1445, %v1658
      %v1660 = vpop.f32.mrf.mxu0
      %v1661 = vadd.f32 %v1447, %v1660
      %1662 = vmatprep.mubr.f32.mxu0 0.0
      %v1663 = vand.u32 %v980, 4294901760
      %v1664 = vsub.f32 %v980, %v1663
      %1665 = vmatmul.mubr.f32.gmra.mxu0 %v1664
      %v1666 = vpop.f32.mrf.mxu0
      %v1667 = vadd.f32 %v1452, %v1666
      %v1668 = vpop.f32.mrf.mxu0
      %v1669 = vadd.f32 %v1454, %v1668
      %1670 = vmatprep.mubr.f32.mxu0 0.0
      %v1671 = vand.u32 %v983, 4294901760
      %v1672 = vsub.f32 %v983, %v1671
      %1673 = vmatmul.mubr.f32.gmra.mxu0 %v1672
      %v1674 = vpop.f32.mrf.mxu0
      %v1675 = vadd.f32 %v1459, %v1674
      %v1676 = vpop.f32.mrf.mxu0
      %v1677 = vadd.f32 %v1461, %v1676
      %1678 = vmatprep.mubr.f32.mxu0 0.0
      %v1679 = vand.u32 %v986, 4294901760
      %v1680 = vsub.f32 %v986, %v1679
      %1681 = vmatmul.mubr.f32.gmra.mxu0 %v1680
      %v1682 = vpop.f32.mrf.mxu0
      %v1683 = vadd.f32 %v1466, %v1682
      %v1684 = vpop.f32.mrf.mxu0
      %v1685 = vadd.f32 %v1468, %v1684
      %1686 = vmatprep.mubr.f32.mxu0 0.0
      %v1687 = vand.u32 %v989, 4294901760
      %v1688 = vsub.f32 %v989, %v1687
      %1689 = vmatmul.mubr.f32.gmra.mxu0 %v1688
      %v1690 = vpop.f32.mrf.mxu0
      %v1691 = vadd.f32 %v1473, %v1690
      %v1692 = vpop.f32.mrf.mxu0
      %v1693 = vadd.f32 %v1475, %v1692
      %1694 = vmatprep.mubr.f32.mxu0 0.0
      %v1695 = vand.u32 %v992, 4294901760
      %v1696 = vsub.f32 %v992, %v1695
      %1697 = vmatmul.mubr.f32.gmra.mxu0 %v1696
      %v1698 = vpop.f32.mrf.mxu0
      %v1699 = vadd.f32 %v1480, %v1698
      %v1700 = vpop.f32.mrf.mxu0
      %v1701 = vadd.f32 %v1482, %v1700
      %1702 = vmatprep.mubr.f32.mxu0 0.0
      %v1703 = vand.u32 %v995, 4294901760
      %v1704 = vsub.f32 %v995, %v1703
      %1705 = vmatmul.mubr.f32.gmra.mxu0 %v1704
      %v1706 = vpop.f32.mrf.mxu0
      %v1707 = vadd.f32 %v1487, %v1706
      %v1708 = vpop.f32.mrf.mxu0
      %v1709 = vadd.f32 %v1489, %v1708
      %1710 = vmatprep.mubr.f32.mxu0 0.0
      %v1711 = vand.u32 %v998, 4294901760
      %v1712 = vsub.f32 %v998, %v1711
      %1713 = vmatmul.mubr.f32.gmra.mxu0 %v1712
      %v1714 = vpop.f32.mrf.mxu0
      %v1715 = vadd.f32 %v1494, %v1714
      %v1716 = vpop.f32.mrf.mxu0
      %v1717 = vadd.f32 %v1496, %v1716
      %1718 = vmatprep.mubr.f32.mxu0 0.0
      %v1719 = vand.u32 %v1001, 4294901760
      %v1720 = vsub.f32 %v1001, %v1719
      %1721 = vmatmul.mubr.f32.gmra.mxu0 %v1720
      %v1722 = vpop.f32.mrf.mxu0
      %v1723 = vadd.f32 %v1501, %v1722
      %v1724 = vpop.f32.mrf.mxu0
      %v1725 = vadd.f32 %v1503, %v1724
      %1726 = vmatprep.mubr.f32.mxu0 0.0
      %v1727 = vand.u32 %v1004, 4294901760
      %v1728 = vsub.f32 %v1004, %v1727
      %1729 = vmatmul.mubr.f32.gmra.mxu0 %v1728
      %v1730 = vpop.f32.mrf.mxu0
      %v1731 = vadd.f32 %v1508, %v1730
      %v1732 = vpop.f32.mrf.mxu0
      %v1733 = vadd.f32 %v1510, %v1732
      %1734 = vmatprep.mubr.f32.mxu0 0.0
      %v1735 = vand.u32 %v1007, 4294901760
      %v1736 = vsub.f32 %v1007, %v1735
      %1737 = vmatmul.mubr.f32.gmra.mxu0 %v1736
      %v1738 = vpop.f32.mrf.mxu0
      %v1739 = vadd.f32 %v1515, %v1738
      %v1740 = vpop.f32.mrf.mxu0
      %v1741 = vadd.f32 %v1517, %v1740
      %1742 = vmatprep.mubr.f32.mxu0 0.0
      %v1743 = vand.u32 %v1010, 4294901760
      %v1744 = vsub.f32 %v1010, %v1743
      %1745 = vmatmul.mubr.f32.gmra.mxu0 %v1744
      %v1746 = vpop.f32.mrf.mxu0
      %v1747 = vadd.f32 %v1522, %v1746
      %v1748 = vpop.f32.mrf.mxu0
      %v1749 = vadd.f32 %v1524, %v1748
      %1750 = vdwg.mxu0
      %1751 = vmatprep.subr.mxu0 0.0
      %1752 = vmatpush1.msra.mxu0 0.0
      %1753 = vmatprep.subr.mxu0 0.0
      %1754 = vmatpush1.msra.mxu0 0.0
      %1755 = vmatprep.subr.mxu0 0.0
      %1756 = vmatpush1.msra.mxu0 0.0
      %1757 = vmatprep.subr.mxu0 0.0
      %1758 = vmatpush1.msra.mxu0 0.0
      %1759 = vmatprep.subr.mxu0 0.0
      %1760 = vmatpush1.msra.mxu0 0.0
      %1761 = vmatprep.subr.mxu0 0.0
      %1762 = vmatpush1.msra.mxu0 0.0
      %1763 = vmatprep.subr.mxu0 0.0
      %1764 = vmatpush1.msra.mxu0 0.0
      %1765 = vmatprep.subr.mxu0 0.0
      %1766 = vmatpush1.msra.mxu0 0.0
      %v1767 = vand.u32 %v850, 4294901760
      %1768 = vmatprep.subr.mxu0 %v1767
      %v1769 = vand.u32 %v849, 4294901760
      %1770 = vmatpush1.msra.mxu0 %v1769
      %v1771 = vand.u32 %v848, 4294901760
      %1772 = vmatprep.subr.mxu0 %v1771
      %v1773 = vand.u32 %v847, 4294901760
      %1774 = vmatpush1.msra.mxu0 %v1773
      %v1775 = vand.u32 %v846, 4294901760
      %1776 = vmatprep.subr.mxu0 %v1775
      %v1777 = vand.u32 %v845, 4294901760
      %1778 = vmatpush1.msra.mxu0 %v1777
      %v1779 = vand.u32 %v844, 4294901760
      %1780 = vmatprep.subr.mxu0 %v1779
      %v1781 = vand.u32 %v843, 4294901760
      %1782 = vmatpush1.msra.mxu0 %v1781
      %v1783 = vand.u32 %v842, 4294901760
      %1784 = vmatprep.subr.mxu0 %v1783
      %v1785 = vand.u32 %v841, 4294901760
      %1786 = vmatpush1.msra.mxu0 %v1785
      %v1787 = vand.u32 %v840, 4294901760
      %1788 = vmatprep.subr.mxu0 %v1787
      %v1789 = vand.u32 %v839, 4294901760
      %1790 = vmatpush1.msra.mxu0 %v1789
      %v1791 = vand.u32 %v838, 4294901760
      %1792 = vmatprep.subr.mxu0 %v1791
      %v1793 = vand.u32 %v837, 4294901760
      %1794 = vmatpush1.msra.mxu0 %v1793
      %v1795 = vand.u32 %v836, 4294901760
      %1796 = vmatprep.subr.mxu0 %v1795
      %v1797 = vand.u32 %v835, 4294901760
      %1798 = vmatpush1.msra.mxu0 %v1797
      %1799 = vmatprep.subr.mxu0 0.0
      %1800 = vmatpush2.msra.mxu0 0.0
      %1801 = vmatprep.subr.mxu0 0.0
      %1802 = vmatpush2.msra.mxu0 0.0
      %1803 = vmatprep.subr.mxu0 0.0
      %1804 = vmatpush2.msra.mxu0 0.0
      %1805 = vmatprep.subr.mxu0 0.0
      %1806 = vmatpush2.msra.mxu0 0.0
      %1807 = vmatprep.subr.mxu0 0.0
      %1808 = vmatpush2.msra.mxu0 0.0
      %1809 = vmatprep.subr.mxu0 0.0
      %1810 = vmatpush2.msra.mxu0 0.0
      %1811 = vmatprep.subr.mxu0 0.0
      %1812 = vmatpush2.msra.mxu0 0.0
      %1813 = vmatprep.subr.mxu0 0.0
      %1814 = vmatpush2.msra.mxu0 0.0
      %1815 = vmatprep.subr.mxu0 0.0
      %1816 = vmatpush2.msra.mxu0 0.0
      %1817 = vmatprep.subr.mxu0 0.0
      %1818 = vmatpush2.msra.mxu0 0.0
      %1819 = vmatprep.subr.mxu0 0.0
      %1820 = vmatpush2.msra.mxu0 0.0
      %1821 = vmatprep.subr.mxu0 0.0
      %1822 = vmatpush2.msra.mxu0 0.0
      %1823 = vmatprep.subr.mxu0 0.0
      %1824 = vmatpush2.msra.mxu0 0.0
      %1825 = vmatprep.subr.mxu0 0.0
      %1826 = vmatpush2.msra.mxu0 0.0
      %1827 = vmatprep.subr.mxu0 0.0
      %1828 = vmatpush2.msra.mxu0 0.0
      %1829 = vmatprep.subr.mxu0 0.0
      %1830 = vmatpush2.msra.mxu0 0.0
      %1831 = vmatprep.mubr.f32.mxu0 0.0
      %v1832 = vand.u32 %v965, 4294901760
      %v1833 = vsub.f32 %v965, %v1832
      %v1834 = vand.u32 %v1833, 4294901760
      %1835 = vmatmul.mubr.f32.gmra.mxu0 %v1834
      %v1836 = vpop.f32.mrf.mxu0
      %v1837 = vadd.f32 %v1627, %v1836
      %v1838 = vpop.f32.mrf.mxu0
      %v1839 = vadd.f32 %v1629, %v1838
      %1840 = vmatprep.mubr.f32.mxu0 0.0
      %v1841 = vand.u32 %v968, 4294901760
      %v1842 = vsub.f32 %v968, %v1841
      %v1843 = vand.u32 %v1842, 4294901760
      %1844 = vmatmul.mubr.f32.gmra.mxu0 %v1843
      %v1845 = vpop.f32.mrf.mxu0
      %v1846 = vadd.f32 %v1635, %v1845
      %v1847 = vpop.f32.mrf.mxu0
      %v1848 = vadd.f32 %v1637, %v1847
      %1849 = vmatprep.mubr.f32.mxu0 0.0
      %v1850 = vand.u32 %v971, 4294901760
      %v1851 = vsub.f32 %v971, %v1850
      %v1852 = vand.u32 %v1851, 4294901760
      %1853 = vmatmul.mubr.f32.gmra.mxu0 %v1852
      %v1854 = vpop.f32.mrf.mxu0
      %v1855 = vadd.f32 %v1643, %v1854
      %v1856 = vpop.f32.mrf.mxu0
      %v1857 = vadd.f32 %v1645, %v1856
      %1858 = vmatprep.mubr.f32.mxu0 0.0
      %v1859 = vand.u32 %v974, 4294901760
      %v1860 = vsub.f32 %v974, %v1859
      %v1861 = vand.u32 %v1860, 4294901760
      %1862 = vmatmul.mubr.f32.gmra.mxu0 %v1861
      %v1863 = vpop.f32.mrf.mxu0
      %v1864 = vadd.f32 %v1651, %v1863
      %v1865 = vpop.f32.mrf.mxu0
      %v1866 = vadd.f32 %v1653, %v1865
      %1867 = vmatprep.mubr.f32.mxu0 0.0
      %v1868 = vand.u32 %v977, 4294901760
      %v1869 = vsub.f32 %v977, %v1868
      %v1870 = vand.u32 %v1869, 4294901760
      %1871 = vmatmul.mubr.f32.gmra.mxu0 %v1870
      %v1872 = vpop.f32.mrf.mxu0
      %v1873 = vadd.f32 %v1659, %v1872
      %v1874 = vpop.f32.mrf.mxu0
      %v1875 = vadd.f32 %v1661, %v1874
      %1876 = vmatprep.mubr.f32.mxu0 0.0
      %v1877 = vand.u32 %v980, 4294901760
      %v1878 = vsub.f32 %v980, %v1877
      %v1879 = vand.u32 %v1878, 4294901760
      %1880 = vmatmul.mubr.f32.gmra.mxu0 %v1879
      %v1881 = vpop.f32.mrf.mxu0
      %v1882 = vadd.f32 %v1667, %v1881
      %v1883 = vpop.f32.mrf.mxu0
      %v1884 = vadd.f32 %v1669, %v1883
      %1885 = vmatprep.mubr.f32.mxu0 0.0
      %v1886 = vand.u32 %v983, 4294901760
      %v1887 = vsub.f32 %v983, %v1886
      %v1888 = vand.u32 %v1887, 4294901760
      %1889 = vmatmul.mubr.f32.gmra.mxu0 %v1888
      %v1890 = vpop.f32.mrf.mxu0
      %v1891 = vadd.f32 %v1675, %v1890
      %v1892 = vpop.f32.mrf.mxu0
      %v1893 = vadd.f32 %v1677, %v1892
      %1894 = vmatprep.mubr.f32.mxu0 0.0
      %v1895 = vand.u32 %v986, 4294901760
      %v1896 = vsub.f32 %v986, %v1895
      %v1897 = vand.u32 %v1896, 4294901760
      %1898 = vmatmul.mubr.f32.gmra.mxu0 %v1897
      %v1899 = vpop.f32.mrf.mxu0
      %v1900 = vadd.f32 %v1683, %v1899
      %v1901 = vpop.f32.mrf.mxu0
      %v1902 = vadd.f32 %v1685, %v1901
      %1903 = vmatprep.mubr.f32.mxu0 0.0
      %v1904 = vand.u32 %v989, 4294901760
      %v1905 = vsub.f32 %v989, %v1904
      %v1906 = vand.u32 %v1905, 4294901760
      %1907 = vmatmul.mubr.f32.gmra.mxu0 %v1906
      %v1908 = vpop.f32.mrf.mxu0
      %v1909 = vadd.f32 %v1691, %v1908
      %v1910 = vpop.f32.mrf.mxu0
      %v1911 = vadd.f32 %v1693, %v1910
      %1912 = vmatprep.mubr.f32.mxu0 0.0
      %v1913 = vand.u32 %v992, 4294901760
      %v1914 = vsub.f32 %v992, %v1913
      %v1915 = vand.u32 %v1914, 4294901760
      %1916 = vmatmul.mubr.f32.gmra.mxu0 %v1915
      %v1917 = vpop.f32.mrf.mxu0
      %v1918 = vadd.f32 %v1699, %v1917
      %v1919 = vpop.f32.mrf.mxu0
      %v1920 = vadd.f32 %v1701, %v1919
      %1921 = vmatprep.mubr.f32.mxu0 0.0
      %v1922 = vand.u32 %v995, 4294901760
      %v1923 = vsub.f32 %v995, %v1922
      %v1924 = vand.u32 %v1923, 4294901760
      %1925 = vmatmul.mubr.f32.gmra.mxu0 %v1924
      %v1926 = vpop.f32.mrf.mxu0
      %v1927 = vadd.f32 %v1707, %v1926
      %v1928 = vpop.f32.mrf.mxu0
      %v1929 = vadd.f32 %v1709, %v1928
      %1930 = vmatprep.mubr.f32.mxu0 0.0
      %v1931 = vand.u32 %v998, 4294901760
      %v1932 = vsub.f32 %v998, %v1931
      %v1933 = vand.u32 %v1932, 4294901760
      %1934 = vmatmul.mubr.f32.gmra.mxu0 %v1933
      %v1935 = vpop.f32.mrf.mxu0
      %v1936 = vadd.f32 %v1715, %v1935
      %v1937 = vpop.f32.mrf.mxu0
      %v1938 = vadd.f32 %v1717, %v1937
      %1939 = vmatprep.mubr.f32.mxu0 0.0
      %v1940 = vand.u32 %v1001, 4294901760
      %v1941 = vsub.f32 %v1001, %v1940
      %v1942 = vand.u32 %v1941, 4294901760
      %1943 = vmatmul.mubr.f32.gmra.mxu0 %v1942
      %v1944 = vpop.f32.mrf.mxu0
      %v1945 = vadd.f32 %v1723, %v1944
      %v1946 = vpop.f32.mrf.mxu0
      %v1947 = vadd.f32 %v1725, %v1946
      %1948 = vmatprep.mubr.f32.mxu0 0.0
      %v1949 = vand.u32 %v1004, 4294901760
      %v1950 = vsub.f32 %v1004, %v1949
      %v1951 = vand.u32 %v1950, 4294901760
      %1952 = vmatmul.mubr.f32.gmra.mxu0 %v1951
      %v1953 = vpop.f32.mrf.mxu0
      %v1954 = vadd.f32 %v1731, %v1953
      %v1955 = vpop.f32.mrf.mxu0
      %v1956 = vadd.f32 %v1733, %v1955
      %1957 = vmatprep.mubr.f32.mxu0 0.0
      %v1958 = vand.u32 %v1007, 4294901760
      %v1959 = vsub.f32 %v1007, %v1958
      %v1960 = vand.u32 %v1959, 4294901760
      %1961 = vmatmul.mubr.f32.gmra.mxu0 %v1960
      %v1962 = vpop.f32.mrf.mxu0
      %v1963 = vadd.f32 %v1739, %v1962
      %v1964 = vpop.f32.mrf.mxu0
      %v1965 = vadd.f32 %v1741, %v1964
      %1966 = vmatprep.mubr.f32.mxu0 0.0
      %v1967 = vand.u32 %v1010, 4294901760
      %v1968 = vsub.f32 %v1010, %v1967
      %v1969 = vand.u32 %v1968, 4294901760
      %1970 = vmatmul.mubr.f32.gmra.mxu0 %v1969
      %v1971 = vpop.f32.mrf.mxu0
      %v1972 = vadd.f32 %v1747, %v1971
      %v1973 = vpop.f32.mrf.mxu0
      %v1974 = vadd.f32 %v1749, %v1973
      %1975 = vdwg.mxu0
      %1976 = vmatprep.subr.mxu0 0.0
      %1977 = vmatpush1.msra.mxu0 0.0
      %1978 = vmatprep.subr.mxu0 0.0
      %1979 = vmatpush1.msra.mxu0 0.0
      %1980 = vmatprep.subr.mxu0 0.0
      %1981 = vmatpush1.msra.mxu0 0.0
      %1982 = vmatprep.subr.mxu0 0.0
      %1983 = vmatpush1.msra.mxu0 0.0
      %1984 = vmatprep.subr.mxu0 0.0
      %1985 = vmatpush1.msra.mxu0 0.0
      %1986 = vmatprep.subr.mxu0 0.0
      %1987 = vmatpush1.msra.mxu0 0.0
      %1988 = vmatprep.subr.mxu0 0.0
      %1989 = vmatpush1.msra.mxu0 0.0
      %1990 = vmatprep.subr.mxu0 0.0
      %1991 = vmatpush1.msra.mxu0 0.0
      %v1992 = vand.u32 %v850, 4294901760
      %v1993 = vsub.f32 %v850, %v1992
      %v1994 = vand.u32 %v1993, 4294901760
      %1995 = vmatprep.subr.mxu0 %v1994
      %v1996 = vand.u32 %v849, 4294901760
      %v1997 = vsub.f32 %v849, %v1996
      %v1998 = vand.u32 %v1997, 4294901760
      %1999 = vmatpush1.msra.mxu0 %v1998
      %v2000 = vand.u32 %v848, 4294901760
      %v2001 = vsub.f32 %v848, %v2000
      %v2002 = vand.u32 %v2001, 4294901760
      %2003 = vmatprep.subr.mxu0 %v2002
      %v2004 = vand.u32 %v847, 4294901760
      %v2005 = vsub.f32 %v847, %v2004
      %v2006 = vand.u32 %v2005, 4294901760
      %2007 = vmatpush1.msra.mxu0 %v2006
      %v2008 = vand.u32 %v846, 4294901760
      %v2009 = vsub.f32 %v846, %v2008
      %v2010 = vand.u32 %v2009, 4294901760
      %2011 = vmatprep.subr.mxu0 %v2010
      %v2012 = vand.u32 %v845, 4294901760
      %v2013 = vsub.f32 %v845, %v2012
      %v2014 = vand.u32 %v2013, 4294901760
      %2015 = vmatpush1.msra.mxu0 %v2014
      %v2016 = vand.u32 %v844, 4294901760
      %v2017 = vsub.f32 %v844, %v2016
      %v2018 = vand.u32 %v2017, 4294901760
      %2019 = vmatprep.subr.mxu0 %v2018
      %v2020 = vand.u32 %v843, 4294901760
      %v2021 = vsub.f32 %v843, %v2020
      %v2022 = vand.u32 %v2021, 4294901760
      %2023 = vmatpush1.msra.mxu0 %v2022
      %v2024 = vand.u32 %v842, 4294901760
      %v2025 = vsub.f32 %v842, %v2024
      %v2026 = vand.u32 %v2025, 4294901760
      %2027 = vmatprep.subr.mxu0 %v2026
      %v2028 = vand.u32 %v841, 4294901760
      %v2029 = vsub.f32 %v841, %v2028
      %v2030 = vand.u32 %v2029, 4294901760
      %2031 = vmatpush1.msra.mxu0 %v2030
      %v2032 = vand.u32 %v840, 4294901760
      %v2033 = vsub.f32 %v840, %v2032
      %v2034 = vand.u32 %v2033, 4294901760
      %2035 = vmatprep.subr.mxu0 %v2034
      %v2036 = vand.u32 %v839, 4294901760
      %v2037 = vsub.f32 %v839, %v2036
      %v2038 = vand.u32 %v2037, 4294901760
      %2039 = vmatpush1.msra.mxu0 %v2038
      %v2040 = vand.u32 %v838, 4294901760
      %v2041 = vsub.f32 %v838, %v2040
      %v2042 = vand.u32 %v2041, 4294901760
      %2043 = vmatprep.subr.mxu0 %v2042
      %v2044 = vand.u32 %v837, 4294901760
      %v2045 = vsub.f32 %v837, %v2044
      %v2046 = vand.u32 %v2045, 4294901760
      %2047 = vmatpush1.msra.mxu0 %v2046
      %v2048 = vand.u32 %v836, 4294901760
      %v2049 = vsub.f32 %v836, %v2048
      %v2050 = vand.u32 %v2049, 4294901760
      %2051 = vmatprep.subr.mxu0 %v2050
      %v2052 = vand.u32 %v835, 4294901760
      %v2053 = vsub.f32 %v835, %v2052
      %v2054 = vand.u32 %v2053, 4294901760
      %2055 = vmatpush1.msra.mxu0 %v2054
      %2056 = vmatprep.subr.mxu0 0.0
      %2057 = vmatpush2.msra.mxu0 0.0
      %2058 = vmatprep.subr.mxu0 0.0
      %2059 = vmatpush2.msra.mxu0 0.0
      %2060 = vmatprep.subr.mxu0 0.0
      %2061 = vmatpush2.msra.mxu0 0.0
      %2062 = vmatprep.subr.mxu0 0.0
      %2063 = vmatpush2.msra.mxu0 0.0
      %2064 = vmatprep.subr.mxu0 0.0
      %2065 = vmatpush2.msra.mxu0 0.0
      %2066 = vmatprep.subr.mxu0 0.0
      %2067 = vmatpush2.msra.mxu0 0.0
      %2068 = vmatprep.subr.mxu0 0.0
      %2069 = vmatpush2.msra.mxu0 0.0
      %2070 = vmatprep.subr.mxu0 0.0
      %2071 = vmatpush2.msra.mxu0 0.0
      %2072 = vmatprep.subr.mxu0 0.0
      %2073 = vmatpush2.msra.mxu0 0.0
      %2074 = vmatprep.subr.mxu0 0.0
      %2075 = vmatpush2.msra.mxu0 0.0
      %2076 = vmatprep.subr.mxu0 0.0
      %2077 = vmatpush2.msra.mxu0 0.0
      %2078 = vmatprep.subr.mxu0 0.0
      %2079 = vmatpush2.msra.mxu0 0.0
      %2080 = vmatprep.subr.mxu0 0.0
      %2081 = vmatpush2.msra.mxu0 0.0
      %2082 = vmatprep.subr.mxu0 0.0
      %2083 = vmatpush2.msra.mxu0 0.0
      %2084 = vmatprep.subr.mxu0 0.0
      %2085 = vmatpush2.msra.mxu0 0.0
      %2086 = vmatprep.subr.mxu0 0.0
      %2087 = vmatpush2.msra.mxu0 0.0
      %2088 = vmatprep.mubr.f32.mxu0 0.0
      %v2089 = vand.u32 %v965, 4294901760
      %2090 = vmatmul.mubr.f32.gmra.mxu0 %v2089
      %v2091 = vpop.f32.mrf.mxu0
      %v2092 = vadd.f32 %v1837, %v2091
      %v2093 = vpop.f32.mrf.mxu0
      %v2094 = vadd.f32 %v1839, %v2093
      %2095 = vmatprep.mubr.f32.mxu0 0.0
      %v2096 = vand.u32 %v968, 4294901760
      %2097 = vmatmul.mubr.f32.gmra.mxu0 %v2096
      %v2098 = vpop.f32.mrf.mxu0
      %v2099 = vadd.f32 %v1846, %v2098
      %v2100 = vpop.f32.mrf.mxu0
      %v2101 = vadd.f32 %v1848, %v2100
      %2102 = vmatprep.mubr.f32.mxu0 0.0
      %v2103 = vand.u32 %v971, 4294901760
      %2104 = vmatmul.mubr.f32.gmra.mxu0 %v2103
      %v2105 = vpop.f32.mrf.mxu0
      %v2106 = vadd.f32 %v1855, %v2105
      %v2107 = vpop.f32.mrf.mxu0
      %v2108 = vadd.f32 %v1857, %v2107
      %2109 = vmatprep.mubr.f32.mxu0 0.0
      %v2110 = vand.u32 %v974, 4294901760
      %2111 = vmatmul.mubr.f32.gmra.mxu0 %v2110
      %v2112 = vpop.f32.mrf.mxu0
      %v2113 = vadd.f32 %v1864, %v2112
      %v2114 = vpop.f32.mrf.mxu0
      %v2115 = vadd.f32 %v1866, %v2114
      %2116 = vmatprep.mubr.f32.mxu0 0.0
      %v2117 = vand.u32 %v977, 4294901760
      %2118 = vmatmul.mubr.f32.gmra.mxu0 %v2117
      %v2119 = vpop.f32.mrf.mxu0
      %v2120 = vadd.f32 %v1873, %v2119
      %v2121 = vpop.f32.mrf.mxu0
      %v2122 = vadd.f32 %v1875, %v2121
      %2123 = vmatprep.mubr.f32.mxu0 0.0
      %v2124 = vand.u32 %v980, 4294901760
      %2125 = vmatmul.mubr.f32.gmra.mxu0 %v2124
      %v2126 = vpop.f32.mrf.mxu0
      %v2127 = vadd.f32 %v1882, %v2126
      %v2128 = vpop.f32.mrf.mxu0
      %v2129 = vadd.f32 %v1884, %v2128
      %2130 = vmatprep.mubr.f32.mxu0 0.0
      %v2131 = vand.u32 %v983, 4294901760
      %2132 = vmatmul.mubr.f32.gmra.mxu0 %v2131
      %v2133 = vpop.f32.mrf.mxu0
      %v2134 = vadd.f32 %v1891, %v2133
      %v2135 = vpop.f32.mrf.mxu0
      %v2136 = vadd.f32 %v1893, %v2135
      %2137 = vmatprep.mubr.f32.mxu0 0.0
      %v2138 = vand.u32 %v986, 4294901760
      %2139 = vmatmul.mubr.f32.gmra.mxu0 %v2138
      %v2140 = vpop.f32.mrf.mxu0
      %v2141 = vadd.f32 %v1900, %v2140
      %v2142 = vpop.f32.mrf.mxu0
      %v2143 = vadd.f32 %v1902, %v2142
      %2144 = vmatprep.mubr.f32.mxu0 0.0
      %v2145 = vand.u32 %v989, 4294901760
      %2146 = vmatmul.mubr.f32.gmra.mxu0 %v2145
      %v2147 = vpop.f32.mrf.mxu0
      %v2148 = vadd.f32 %v1909, %v2147
      %v2149 = vpop.f32.mrf.mxu0
      %v2150 = vadd.f32 %v1911, %v2149
      %2151 = vmatprep.mubr.f32.mxu0 0.0
      %v2152 = vand.u32 %v992, 4294901760
      %2153 = vmatmul.mubr.f32.gmra.mxu0 %v2152
      %v2154 = vpop.f32.mrf.mxu0
      %v2155 = vadd.f32 %v1918, %v2154
      %v2156 = vpop.f32.mrf.mxu0
      %v2157 = vadd.f32 %v1920, %v2156
      %2158 = vmatprep.mubr.f32.mxu0 0.0
      %v2159 = vand.u32 %v995, 4294901760
      %2160 = vmatmul.mubr.f32.gmra.mxu0 %v2159
      %v2161 = vpop.f32.mrf.mxu0
      %v2162 = vadd.f32 %v1927, %v2161
      %v2163 = vpop.f32.mrf.mxu0
      %v2164 = vadd.f32 %v1929, %v2163
      %2165 = vmatprep.mubr.f32.mxu0 0.0
      %v2166 = vand.u32 %v998, 4294901760
      %2167 = vmatmul.mubr.f32.gmra.mxu0 %v2166
      %v2168 = vpop.f32.mrf.mxu0
      %v2169 = vadd.f32 %v1936, %v2168
      %v2170 = vpop.f32.mrf.mxu0
      %v2171 = vadd.f32 %v1938, %v2170
      %2172 = vmatprep.mubr.f32.mxu0 0.0
      %v2173 = vand.u32 %v1001, 4294901760
      %2174 = vmatmul.mubr.f32.gmra.mxu0 %v2173
      %v2175 = vpop.f32.mrf.mxu0
      %v2176 = vadd.f32 %v1945, %v2175
      %v2177 = vpop.f32.mrf.mxu0
      %v2178 = vadd.f32 %v1947, %v2177
      %2179 = vmatprep.mubr.f32.mxu0 0.0
      %v2180 = vand.u32 %v1004, 4294901760
      %2181 = vmatmul.mubr.f32.gmra.mxu0 %v2180
      %v2182 = vpop.f32.mrf.mxu0
      %v2183 = vadd.f32 %v1954, %v2182
      %v2184 = vpop.f32.mrf.mxu0
      %v2185 = vadd.f32 %v1956, %v2184
      %2186 = vmatprep.mubr.f32.mxu0 0.0
      %v2187 = vand.u32 %v1007, 4294901760
      %2188 = vmatmul.mubr.f32.gmra.mxu0 %v2187
      %v2189 = vpop.f32.mrf.mxu0
      %v2190 = vadd.f32 %v1963, %v2189
      %v2191 = vpop.f32.mrf.mxu0
      %v2192 = vadd.f32 %v1965, %v2191
      %2193 = vmatprep.mubr.f32.mxu0 0.0
      %v2194 = vand.u32 %v1010, 4294901760
      %2195 = vmatmul.mubr.f32.gmra.mxu0 %v2194
      %v2196 = vpop.f32.mrf.mxu0
      %v2197 = vadd.f32 %v1972, %v2196
      %v2198 = vpop.f32.mrf.mxu0
      %v2199 = vadd.f32 %v1974, %v2198
      %2200 = vdwg.mxu0
      %2201 = vmatprep.subr.mxu0 0.0
      %2202 = vmatpush1.msra.mxu0 0.0
      %2203 = vmatprep.subr.mxu0 0.0
      %2204 = vmatpush1.msra.mxu0 0.0
      %2205 = vmatprep.subr.mxu0 0.0
      %2206 = vmatpush1.msra.mxu0 0.0
      %2207 = vmatprep.subr.mxu0 0.0
      %2208 = vmatpush1.msra.mxu0 0.0
      %2209 = vmatprep.subr.mxu0 0.0
      %2210 = vmatpush1.msra.mxu0 0.0
      %2211 = vmatprep.subr.mxu0 0.0
      %2212 = vmatpush1.msra.mxu0 0.0
      %2213 = vmatprep.subr.mxu0 0.0
      %2214 = vmatpush1.msra.mxu0 0.0
      %2215 = vmatprep.subr.mxu0 0.0
      %2216 = vmatpush1.msra.mxu0 0.0
      %v2217 = vand.u32 %v850, 4294901760
      %2218 = vmatprep.subr.mxu0 %v2217
      %v2219 = vand.u32 %v849, 4294901760
      %2220 = vmatpush1.msra.mxu0 %v2219
      %v2221 = vand.u32 %v848, 4294901760
      %2222 = vmatprep.subr.mxu0 %v2221
      %v2223 = vand.u32 %v847, 4294901760
      %2224 = vmatpush1.msra.mxu0 %v2223
      %v2225 = vand.u32 %v846, 4294901760
      %2226 = vmatprep.subr.mxu0 %v2225
      %v2227 = vand.u32 %v845, 4294901760
      %2228 = vmatpush1.msra.mxu0 %v2227
      %v2229 = vand.u32 %v844, 4294901760
      %2230 = vmatprep.subr.mxu0 %v2229
      %v2231 = vand.u32 %v843, 4294901760
      %2232 = vmatpush1.msra.mxu0 %v2231
      %v2233 = vand.u32 %v842, 4294901760
      %2234 = vmatprep.subr.mxu0 %v2233
      %v2235 = vand.u32 %v841, 4294901760
      %2236 = vmatpush1.msra.mxu0 %v2235
      %v2237 = vand.u32 %v840, 4294901760
      %2238 = vmatprep.subr.mxu0 %v2237
      %v2239 = vand.u32 %v839, 4294901760
      %2240 = vmatpush1.msra.mxu0 %v2239
      %v2241 = vand.u32 %v838, 4294901760
      %2242 = vmatprep.subr.mxu0 %v2241
      %v2243 = vand.u32 %v837, 4294901760
      %2244 = vmatpush1.msra.mxu0 %v2243
      %v2245 = vand.u32 %v836, 4294901760
      %2246 = vmatprep.subr.mxu0 %v2245
      %v2247 = vand.u32 %v835, 4294901760
      %2248 = vmatpush1.msra.mxu0 %v2247
      %2249 = vmatprep.subr.mxu0 0.0
      %2250 = vmatpush2.msra.mxu0 0.0
      %2251 = vmatprep.subr.mxu0 0.0
      %2252 = vmatpush2.msra.mxu0 0.0
      %2253 = vmatprep.subr.mxu0 0.0
      %2254 = vmatpush2.msra.mxu0 0.0
      %2255 = vmatprep.subr.mxu0 0.0
      %2256 = vmatpush2.msra.mxu0 0.0
      %2257 = vmatprep.subr.mxu0 0.0
      %2258 = vmatpush2.msra.mxu0 0.0
      %2259 = vmatprep.subr.mxu0 0.0
      %2260 = vmatpush2.msra.mxu0 0.0
      %2261 = vmatprep.subr.mxu0 0.0
      %2262 = vmatpush2.msra.mxu0 0.0
      %2263 = vmatprep.subr.mxu0 0.0
      %2264 = vmatpush2.msra.mxu0 0.0
      %2265 = vmatprep.subr.mxu0 0.0
      %2266 = vmatpush2.msra.mxu0 0.0
      %2267 = vmatprep.subr.mxu0 0.0
      %2268 = vmatpush2.msra.mxu0 0.0
      %2269 = vmatprep.subr.mxu0 0.0
      %2270 = vmatpush2.msra.mxu0 0.0
      %2271 = vmatprep.subr.mxu0 0.0
      %2272 = vmatpush2.msra.mxu0 0.0
      %2273 = vmatprep.subr.mxu0 0.0
      %2274 = vmatpush2.msra.mxu0 0.0
      %2275 = vmatprep.subr.mxu0 0.0
      %2276 = vmatpush2.msra.mxu0 0.0
      %2277 = vmatprep.subr.mxu0 0.0
      %2278 = vmatpush2.msra.mxu0 0.0
      %2279 = vmatprep.subr.mxu0 0.0
      %2280 = vmatpush2.msra.mxu0 0.0
      %2281 = vmatprep.mubr.f32.mxu0 0.0
      %v2282 = vand.u32 %v965, 4294901760
      %2283 = vmatmul.mubr.f32.gmra.mxu0 %v2282
      %v2284 = vpop.f32.mrf.mxu0
      %v2285 = vadd.f32 %v2092, %v2284
      %v2286 = vpop.f32.mrf.mxu0
      %v2287 = vadd.f32 %v2094, %v2286
      %2288 = vmatprep.mubr.f32.mxu0 0.0
      %v2289 = vand.u32 %v968, 4294901760
      %2290 = vmatmul.mubr.f32.gmra.mxu0 %v2289
      %v2291 = vpop.f32.mrf.mxu0
      %v2292 = vadd.f32 %v2099, %v2291
      %v2293 = vpop.f32.mrf.mxu0
      %v2294 = vadd.f32 %v2101, %v2293
      %2295 = vmatprep.mubr.f32.mxu0 0.0
      %v2296 = vand.u32 %v971, 4294901760
      %2297 = vmatmul.mubr.f32.gmra.mxu0 %v2296
      %v2298 = vpop.f32.mrf.mxu0
      %v2299 = vadd.f32 %v2106, %v2298
      %v2300 = vpop.f32.mrf.mxu0
      %v2301 = vadd.f32 %v2108, %v2300
      %2302 = vmatprep.mubr.f32.mxu0 0.0
      %v2303 = vand.u32 %v974, 4294901760
      %2304 = vmatmul.mubr.f32.gmra.mxu0 %v2303
      %v2305 = vpop.f32.mrf.mxu0
      %v2306 = vadd.f32 %v2113, %v2305
      %v2307 = vpop.f32.mrf.mxu0
      %v2308 = vadd.f32 %v2115, %v2307
      %2309 = vmatprep.mubr.f32.mxu0 0.0
      %v2310 = vand.u32 %v977, 4294901760
      %2311 = vmatmul.mubr.f32.gmra.mxu0 %v2310
      %v2312 = vpop.f32.mrf.mxu0
      %v2313 = vadd.f32 %v2120, %v2312
      %v2314 = vpop.f32.mrf.mxu0
      %v2315 = vadd.f32 %v2122, %v2314
      %2316 = vmatprep.mubr.f32.mxu0 0.0
      %v2317 = vand.u32 %v980, 4294901760
      %2318 = vmatmul.mubr.f32.gmra.mxu0 %v2317
      %v2319 = vpop.f32.mrf.mxu0
      %v2320 = vadd.f32 %v2127, %v2319
      %v2321 = vpop.f32.mrf.mxu0
      %v2322 = vadd.f32 %v2129, %v2321
      %2323 = vmatprep.mubr.f32.mxu0 0.0
      %v2324 = vand.u32 %v983, 4294901760
      %2325 = vmatmul.mubr.f32.gmra.mxu0 %v2324
      %v2326 = vpop.f32.mrf.mxu0
      %v2327 = vadd.f32 %v2134, %v2326
      %v2328 = vpop.f32.mrf.mxu0
      %v2329 = vadd.f32 %v2136, %v2328
      %2330 = vmatprep.mubr.f32.mxu0 0.0
      %v2331 = vand.u32 %v986, 4294901760
      %2332 = vmatmul.mubr.f32.gmra.mxu0 %v2331
      %v2333 = vpop.f32.mrf.mxu0
      %v2334 = vadd.f32 %v2141, %v2333
      %v2335 = vpop.f32.mrf.mxu0
      %v2336 = vadd.f32 %v2143, %v2335
      %2337 = vmatprep.mubr.f32.mxu0 0.0
      %v2338 = vand.u32 %v989, 4294901760
      %2339 = vmatmul.mubr.f32.gmra.mxu0 %v2338
      %v2340 = vpop.f32.mrf.mxu0
      %v2341 = vadd.f32 %v2148, %v2340
      %v2342 = vpop.f32.mrf.mxu0
      %v2343 = vadd.f32 %v2150, %v2342
      %2344 = vmatprep.mubr.f32.mxu0 0.0
      %v2345 = vand.u32 %v992, 4294901760
      %2346 = vmatmul.mubr.f32.gmra.mxu0 %v2345
      %v2347 = vpop.f32.mrf.mxu0
      %v2348 = vadd.f32 %v2155, %v2347
      %v2349 = vpop.f32.mrf.mxu0
      %v2350 = vadd.f32 %v2157, %v2349
      %2351 = vmatprep.mubr.f32.mxu0 0.0
      %v2352 = vand.u32 %v995, 4294901760
      %2353 = vmatmul.mubr.f32.gmra.mxu0 %v2352
      %v2354 = vpop.f32.mrf.mxu0
      %v2355 = vadd.f32 %v2162, %v2354
      %v2356 = vpop.f32.mrf.mxu0
      %v2357 = vadd.f32 %v2164, %v2356
      %2358 = vmatprep.mubr.f32.mxu0 0.0
      %v2359 = vand.u32 %v998, 4294901760
      %2360 = vmatmul.mubr.f32.gmra.mxu0 %v2359
      %v2361 = vpop.f32.mrf.mxu0
      %v2362 = vadd.f32 %v2169, %v2361
      %v2363 = vpop.f32.mrf.mxu0
      %v2364 = vadd.f32 %v2171, %v2363
      %2365 = vmatprep.mubr.f32.mxu0 0.0
      %v2366 = vand.u32 %v1001, 4294901760
      %2367 = vmatmul.mubr.f32.gmra.mxu0 %v2366
      %v2368 = vpop.f32.mrf.mxu0
      %v2369 = vadd.f32 %v2176, %v2368
      %v2370 = vpop.f32.mrf.mxu0
      %v2371 = vadd.f32 %v2178, %v2370
      %2372 = vmatprep.mubr.f32.mxu0 0.0
      %v2373 = vand.u32 %v1004, 4294901760
      %2374 = vmatmul.mubr.f32.gmra.mxu0 %v2373
      %v2375 = vpop.f32.mrf.mxu0
      %v2376 = vadd.f32 %v2183, %v2375
      %v2377 = vpop.f32.mrf.mxu0
      %v2378 = vadd.f32 %v2185, %v2377
      %2379 = vmatprep.mubr.f32.mxu0 0.0
      %v2380 = vand.u32 %v1007, 4294901760
      %2381 = vmatmul.mubr.f32.gmra.mxu0 %v2380
      %v2382 = vpop.f32.mrf.mxu0
      %v2383 = vadd.f32 %v2190, %v2382
      %v2384 = vpop.f32.mrf.mxu0
      %v2385 = vadd.f32 %v2192, %v2384
      %2386 = vmatprep.mubr.f32.mxu0 0.0
      %v2387 = vand.u32 %v1010, 4294901760
      %2388 = vmatmul.mubr.f32.gmra.mxu0 %v2387
      %v2389 = vpop.f32.mrf.mxu0
      %v2390 = vadd.f32 %v2197, %v2389
      %v2391 = vpop.f32.mrf.mxu0
      %v2392 = vadd.f32 %v2199, %v2391
      %2393 = vdwg.mxu0
      %v2394 = vmax.f32 %v2285, 0.0
      %v2395 = vmax.f32 %v2287, 0.0
      %v2396 = vmax.f32 %v2292, 0.0
      %v2397 = vmax.f32 %v2294, 0.0
      %v2398 = vmax.f32 %v2299, 0.0
      %v2399 = vmax.f32 %v2301, 0.0
      %v2400 = vmax.f32 %v2306, 0.0
      %v2401 = vmax.f32 %v2308, 0.0
      %v2402 = vmax.f32 %v2313, 0.0
      %v2403 = vmax.f32 %v2315, 0.0
      %v2404 = vmax.f32 %v2320, 0.0
      %v2405 = vmax.f32 %v2322, 0.0
      %v2406 = vmax.f32 %v2327, 0.0
      %v2407 = vmax.f32 %v2329, 0.0
      %v2408 = vmax.f32 %v2334, 0.0
      %v2409 = vmax.f32 %v2336, 0.0
      %v2410 = vmax.f32 %v2341, 0.0
      %v2411 = vmax.f32 %v2343, 0.0
      %v2412 = vmax.f32 %v2348, 0.0
      %v2413 = vmax.f32 %v2350, 0.0
      %v2414 = vmax.f32 %v2355, 0.0
      %v2415 = vmax.f32 %v2357, 0.0
      %v2416 = vmax.f32 %v2362, 0.0
      %v2417 = vmax.f32 %v2364, 0.0
      %v2418 = vmax.f32 %v2369, 0.0
      %v2419 = vmax.f32 %v2371, 0.0
      %v2420 = vmax.f32 %v2376, 0.0
      %v2421 = vmax.f32 %v2378, 0.0
      %v2422 = vmax.f32 %v2383, 0.0
      %v2423 = vmax.f32 %v2385, 0.0
      %v2424 = vmax.f32 %v2390, 0.0
      %v2425 = vmax.f32 %v2392, 0.0
      %v2426 = vld [vmem:[%s5] sm:$0xff]
      %v2427 = vld [vmem:[%s5 + $0x8] sm:$0xff]
      %v2428 = vld [vmem:[%s5 + $0x10] sm:$0xff]
      %v2429 = vld [vmem:[%s5 + $0x18] sm:$0xff]
      %v2430 = vld [vmem:[%s5 + $0x20] sm:$0xff]
      %v2431 = vld [vmem:[%s5 + $0x28] sm:$0xff]
      %v2432 = vld [vmem:[%s5 + $0x30] sm:$0xff]
      %v2433 = vld [vmem:[%s5 + $0x38] sm:$0xff]
      %v2434 = vld [vmem:[%s5 + $0x40] sm:$0xff]
      %v2435 = vld [vmem:[%s5 + $0x48] sm:$0xff]
      %v2436 = vld [vmem:[%s5 + $0x50] sm:$0xff]
      %v2437 = vld [vmem:[%s5 + $0x58] sm:$0xff]
      %v2438 = vld [vmem:[%s5 + $0x60] sm:$0xff]
      %v2439 = vld [vmem:[%s5 + $0x68] sm:$0xff]
      %v2440 = vld [vmem:[%s5 + $0x70] sm:$0xff]
      %v2441 = vld [vmem:[%s5 + $0x78] sm:$0xff]
      %v2442 = vand.u32 %v2425, 4294901760
      %2443 = vmatprep.subr.mxu0 %v2442
      %v2444 = vand.u32 %v2424, 4294901760
      %2445 = vmatpush1.msra.mxu0 %v2444
      %v2446 = vand.u32 %v2423, 4294901760
      %2447 = vmatprep.subr.mxu0 %v2446
      %v2448 = vand.u32 %v2422, 4294901760
      %2449 = vmatpush1.msra.mxu0 %v2448
      %v2450 = vand.u32 %v2421, 4294901760
      %2451 = vmatprep.subr.mxu0 %v2450
      %v2452 = vand.u32 %v2420, 4294901760
      %2453 = vmatpush1.msra.mxu0 %v2452
      %v2454 = vand.u32 %v2419, 4294901760
      %2455 = vmatprep.subr.mxu0 %v2454
      %v2456 = vand.u32 %v2418, 4294901760
      %2457 = vmatpush1.msra.mxu0 %v2456
      %v2458 = vand.u32 %v2417, 4294901760
      %2459 = vmatprep.subr.mxu0 %v2458
      %v2460 = vand.u32 %v2416, 4294901760
      %2461 = vmatpush1.msra.mxu0 %v2460
      %v2462 = vand.u32 %v2415, 4294901760
      %2463 = vmatprep.subr.mxu0 %v2462
      %v2464 = vand.u32 %v2414, 4294901760
      %2465 = vmatpush1.msra.mxu0 %v2464
      %v2466 = vand.u32 %v2413, 4294901760
      %2467 = vmatprep.subr.mxu0 %v2466
      %v2468 = vand.u32 %v2412, 4294901760
      %2469 = vmatpush1.msra.mxu0 %v2468
      %v2470 = vand.u32 %v2411, 4294901760
      %2471 = vmatprep.subr.mxu0 %v2470
      %v2472 = vand.u32 %v2410, 4294901760
      %2473 = vmatpush1.msra.mxu0 %v2472
      %v2474 = vand.u32 %v2409, 4294901760
      %2475 = vmatprep.subr.mxu0 %v2474
      %v2476 = vand.u32 %v2408, 4294901760
      %2477 = vmatpush1.msra.mxu0 %v2476
      %v2478 = vand.u32 %v2407, 4294901760
      %2479 = vmatprep.subr.mxu0 %v2478
      %v2480 = vand.u32 %v2406, 4294901760
      %2481 = vmatpush1.msra.mxu0 %v2480
      %v2482 = vand.u32 %v2405, 4294901760
      %2483 = vmatprep.subr.mxu0 %v2482
      %v2484 = vand.u32 %v2404, 4294901760
      %2485 = vmatpush1.msra.mxu0 %v2484
      %v2486 = vand.u32 %v2403, 4294901760
      %2487 = vmatprep.subr.mxu0 %v2486
      %v2488 = vand.u32 %v2402, 4294901760
      %2489 = vmatpush1.msra.mxu0 %v2488
      %v2490 = vand.u32 %v2401, 4294901760
      %2491 = vmatprep.subr.mxu0 %v2490
      %v2492 = vand.u32 %v2400, 4294901760
      %2493 = vmatpush1.msra.mxu0 %v2492
      %v2494 = vand.u32 %v2399, 4294901760
      %2495 = vmatprep.subr.mxu0 %v2494
      %v2496 = vand.u32 %v2398, 4294901760
      %2497 = vmatpush1.msra.mxu0 %v2496
      %v2498 = vand.u32 %v2397, 4294901760
      %2499 = vmatprep.subr.mxu0 %v2498
      %v2500 = vand.u32 %v2396, 4294901760
      %2501 = vmatpush1.msra.mxu0 %v2500
      %v2502 = vand.u32 %v2395, 4294901760
      %2503 = vmatprep.subr.mxu0 %v2502
      %v2504 = vand.u32 %v2394, 4294901760
      %2505 = vmatpush1.msra.mxu0 %v2504
      %2506 = vmatprep.subr.mxu0 0.0
      %2507 = vmatpush2.msra.mxu0 0.0
      %2508 = vmatprep.subr.mxu0 0.0
      %2509 = vmatpush2.msra.mxu0 0.0
      %2510 = vmatprep.subr.mxu0 0.0
      %2511 = vmatpush2.msra.mxu0 0.0
      %2512 = vmatprep.subr.mxu0 0.0
      %2513 = vmatpush2.msra.mxu0 0.0
      %2514 = vmatprep.subr.mxu0 0.0
      %2515 = vmatpush2.msra.mxu0 0.0
      %2516 = vmatprep.subr.mxu0 0.0
      %2517 = vmatpush2.msra.mxu0 0.0
      %2518 = vmatprep.subr.mxu0 0.0
      %2519 = vmatpush2.msra.mxu0 0.0
      %2520 = vmatprep.subr.mxu0 0.0
      %2521 = vmatpush2.msra.mxu0 0.0
      %2522 = vmatprep.subr.mxu0 0.0
      %2523 = vmatpush2.msra.mxu0 0.0
      %2524 = vmatprep.subr.mxu0 0.0
      %2525 = vmatpush2.msra.mxu0 0.0
      %2526 = vmatprep.subr.mxu0 0.0
      %2527 = vmatpush2.msra.mxu0 0.0
      %2528 = vmatprep.subr.mxu0 0.0
      %2529 = vmatpush2.msra.mxu0 0.0
      %2530 = vmatprep.subr.mxu0 0.0
      %2531 = vmatpush2.msra.mxu0 0.0
      %2532 = vmatprep.subr.mxu0 0.0
      %2533 = vmatpush2.msra.mxu0 0.0
      %2534 = vmatprep.subr.mxu0 0.0
      %2535 = vmatpush2.msra.mxu0 0.0
      %2536 = vmatprep.subr.mxu0 0.0
      %2537 = vmatpush2.msra.mxu0 0.0
      %2538 = vmatprep.mubr.f32.mxu0 0.0
      %v2539 = vand.u32 %v2426, 4294901760
      %v2540 = vsub.f32 %v2426, %v2539
      %v2541 = vand.u32 %v2540, 4294901760
      %v2542 = vsub.f32 %v2540, %v2541
      %v2543 = vand.u32 %v2542, 4294901760
      %2544 = vmatmul.mubr.f32.gmra.mxu0 %v2543
      %v2545 = vpop.f32.mrf.mxu0
      %v2546 = vadd.f32 0.0, %v2545
      %v2547 = vpop.f32.mrf.mxu0
      %v2548 = vadd.f32 0.0, %v2547
      %2549 = vmatprep.mubr.f32.mxu0 0.0
      %v2550 = vand.u32 %v2427, 4294901760
      %v2551 = vsub.f32 %v2427, %v2550
      %v2552 = vand.u32 %v2551, 4294901760
      %v2553 = vsub.f32 %v2551, %v2552
      %v2554 = vand.u32 %v2553, 4294901760
      %2555 = vmatmul.mubr.f32.gmra.mxu0 %v2554
      %v2556 = vpop.f32.mrf.mxu0
      %v2557 = vadd.f32 0.0, %v2556
      %v2558 = vpop.f32.mrf.mxu0
      %v2559 = vadd.f32 0.0, %v2558
      %2560 = vmatprep.mubr.f32.mxu0 0.0
      %v2561 = vand.u32 %v2428, 4294901760
      %v2562 = vsub.f32 %v2428, %v2561
      %v2563 = vand.u32 %v2562, 4294901760
      %v2564 = vsub.f32 %v2562, %v2563
      %v2565 = vand.u32 %v2564, 4294901760
      %2566 = vmatmul.mubr.f32.gmra.mxu0 %v2565
      %v2567 = vpop.f32.mrf.mxu0
      %v2568 = vadd.f32 0.0, %v2567
      %v2569 = vpop.f32.mrf.mxu0
      %v2570 = vadd.f32 0.0, %v2569
      %2571 = vmatprep.mubr.f32.mxu0 0.0
      %v2572 = vand.u32 %v2429, 4294901760
      %v2573 = vsub.f32 %v2429, %v2572
      %v2574 = vand.u32 %v2573, 4294901760
      %v2575 = vsub.f32 %v2573, %v2574
      %v2576 = vand.u32 %v2575, 4294901760
      %2577 = vmatmul.mubr.f32.gmra.mxu0 %v2576
      %v2578 = vpop.f32.mrf.mxu0
      %v2579 = vadd.f32 0.0, %v2578
      %v2580 = vpop.f32.mrf.mxu0
      %v2581 = vadd.f32 0.0, %v2580
      %2582 = vmatprep.mubr.f32.mxu0 0.0
      %v2583 = vand.u32 %v2430, 4294901760
      %v2584 = vsub.f32 %v2430, %v2583
      %v2585 = vand.u32 %v2584, 4294901760
      %v2586 = vsub.f32 %v2584, %v2585
      %v2587 = vand.u32 %v2586, 4294901760
      %2588 = vmatmul.mubr.f32.gmra.mxu0 %v2587
      %v2589 = vpop.f32.mrf.mxu0
      %v2590 = vadd.f32 0.0, %v2589
      %v2591 = vpop.f32.mrf.mxu0
      %v2592 = vadd.f32 0.0, %v2591
      %2593 = vmatprep.mubr.f32.mxu0 0.0
      %v2594 = vand.u32 %v2431, 4294901760
      %v2595 = vsub.f32 %v2431, %v2594
      %v2596 = vand.u32 %v2595, 4294901760
      %v2597 = vsub.f32 %v2595, %v2596
      %v2598 = vand.u32 %v2597, 4294901760
      %2599 = vmatmul.mubr.f32.gmra.mxu0 %v2598
      %v2600 = vpop.f32.mrf.mxu0
      %v2601 = vadd.f32 0.0, %v2600
      %v2602 = vpop.f32.mrf.mxu0
      %v2603 = vadd.f32 0.0, %v2602
      %2604 = vmatprep.mubr.f32.mxu0 0.0
      %v2605 = vand.u32 %v2432, 4294901760
      %v2606 = vsub.f32 %v2432, %v2605
      %v2607 = vand.u32 %v2606, 4294901760
      %v2608 = vsub.f32 %v2606, %v2607
      %v2609 = vand.u32 %v2608, 4294901760
      %2610 = vmatmul.mubr.f32.gmra.mxu0 %v2609
      %v2611 = vpop.f32.mrf.mxu0
      %v2612 = vadd.f32 0.0, %v2611
      %v2613 = vpop.f32.mrf.mxu0
      %v2614 = vadd.f32 0.0, %v2613
      %2615 = vmatprep.mubr.f32.mxu0 0.0
      %v2616 = vand.u32 %v2433, 4294901760
      %v2617 = vsub.f32 %v2433, %v2616
      %v2618 = vand.u32 %v2617, 4294901760
      %v2619 = vsub.f32 %v2617, %v2618
      %v2620 = vand.u32 %v2619, 4294901760
      %2621 = vmatmul.mubr.f32.gmra.mxu0 %v2620
      %v2622 = vpop.f32.mrf.mxu0
      %v2623 = vadd.f32 0.0, %v2622
      %v2624 = vpop.f32.mrf.mxu0
      %v2625 = vadd.f32 0.0, %v2624
      %2626 = vmatprep.mubr.f32.mxu0 0.0
      %v2627 = vand.u32 %v2434, 4294901760
      %v2628 = vsub.f32 %v2434, %v2627
      %v2629 = vand.u32 %v2628, 4294901760
      %v2630 = vsub.f32 %v2628, %v2629
      %v2631 = vand.u32 %v2630, 4294901760
      %2632 = vmatmul.mubr.f32.gmra.mxu0 %v2631
      %v2633 = vpop.f32.mrf.mxu0
      %v2634 = vadd.f32 0.0, %v2633
      %v2635 = vpop.f32.mrf.mxu0
      %v2636 = vadd.f32 0.0, %v2635
      %2637 = vmatprep.mubr.f32.mxu0 0.0
      %v2638 = vand.u32 %v2435, 4294901760
      %v2639 = vsub.f32 %v2435, %v2638
      %v2640 = vand.u32 %v2639, 4294901760
      %v2641 = vsub.f32 %v2639, %v2640
      %v2642 = vand.u32 %v2641, 4294901760
      %2643 = vmatmul.mubr.f32.gmra.mxu0 %v2642
      %v2644 = vpop.f32.mrf.mxu0
      %v2645 = vadd.f32 0.0, %v2644
      %v2646 = vpop.f32.mrf.mxu0
      %v2647 = vadd.f32 0.0, %v2646
      %2648 = vmatprep.mubr.f32.mxu0 0.0
      %v2649 = vand.u32 %v2436, 4294901760
      %v2650 = vsub.f32 %v2436, %v2649
      %v2651 = vand.u32 %v2650, 4294901760
      %v2652 = vsub.f32 %v2650, %v2651
      %v2653 = vand.u32 %v2652, 4294901760
      %2654 = vmatmul.mubr.f32.gmra.mxu0 %v2653
      %v2655 = vpop.f32.mrf.mxu0
      %v2656 = vadd.f32 0.0, %v2655
      %v2657 = vpop.f32.mrf.mxu0
      %v2658 = vadd.f32 0.0, %v2657
      %2659 = vmatprep.mubr.f32.mxu0 0.0
      %v2660 = vand.u32 %v2437, 4294901760
      %v2661 = vsub.f32 %v2437, %v2660
      %v2662 = vand.u32 %v2661, 4294901760
      %v2663 = vsub.f32 %v2661, %v2662
      %v2664 = vand.u32 %v2663, 4294901760
      %2665 = vmatmul.mubr.f32.gmra.mxu0 %v2664
      %v2666 = vpop.f32.mrf.mxu0
      %v2667 = vadd.f32 0.0, %v2666
      %v2668 = vpop.f32.mrf.mxu0
      %v2669 = vadd.f32 0.0, %v2668
      %2670 = vmatprep.mubr.f32.mxu0 0.0
      %v2671 = vand.u32 %v2438, 4294901760
      %v2672 = vsub.f32 %v2438, %v2671
      %v2673 = vand.u32 %v2672, 4294901760
      %v2674 = vsub.f32 %v2672, %v2673
      %v2675 = vand.u32 %v2674, 4294901760
      %2676 = vmatmul.mubr.f32.gmra.mxu0 %v2675
      %v2677 = vpop.f32.mrf.mxu0
      %v2678 = vadd.f32 0.0, %v2677
      %v2679 = vpop.f32.mrf.mxu0
      %v2680 = vadd.f32 0.0, %v2679
      %2681 = vmatprep.mubr.f32.mxu0 0.0
      %v2682 = vand.u32 %v2439, 4294901760
      %v2683 = vsub.f32 %v2439, %v2682
      %v2684 = vand.u32 %v2683, 4294901760
      %v2685 = vsub.f32 %v2683, %v2684
      %v2686 = vand.u32 %v2685, 4294901760
      %2687 = vmatmul.mubr.f32.gmra.mxu0 %v2686
      %v2688 = vpop.f32.mrf.mxu0
      %v2689 = vadd.f32 0.0, %v2688
      %v2690 = vpop.f32.mrf.mxu0
      %v2691 = vadd.f32 0.0, %v2690
      %2692 = vmatprep.mubr.f32.mxu0 0.0
      %v2693 = vand.u32 %v2440, 4294901760
      %v2694 = vsub.f32 %v2440, %v2693
      %v2695 = vand.u32 %v2694, 4294901760
      %v2696 = vsub.f32 %v2694, %v2695
      %v2697 = vand.u32 %v2696, 4294901760
      %2698 = vmatmul.mubr.f32.gmra.mxu0 %v2697
      %v2699 = vpop.f32.mrf.mxu0
      %v2700 = vadd.f32 0.0, %v2699
      %v2701 = vpop.f32.mrf.mxu0
      %v2702 = vadd.f32 0.0, %v2701
      %2703 = vmatprep.mubr.f32.mxu0 0.0
      %v2704 = vand.u32 %v2441, 4294901760
      %v2705 = vsub.f32 %v2441, %v2704
      %v2706 = vand.u32 %v2705, 4294901760
      %v2707 = vsub.f32 %v2705, %v2706
      %v2708 = vand.u32 %v2707, 4294901760
      %2709 = vmatmul.mubr.f32.gmra.mxu0 %v2708
      %v2710 = vpop.f32.mrf.mxu0
      %v2711 = vadd.f32 0.0, %v2710
      %v2712 = vpop.f32.mrf.mxu0
      %v2713 = vadd.f32 0.0, %v2712
      %2714 = vdwg.mxu0
      %v2715 = vand.u32 %v2425, 4294901760
      %v2716 = vsub.f32 %v2425, %v2715
      %v2717 = vand.u32 %v2716, 4294901760
      %v2718 = vsub.f32 %v2716, %v2717
      %v2719 = vand.u32 %v2718, 4294901760
      %2720 = vmatprep.subr.mxu0 %v2719
      %v2721 = vand.u32 %v2424, 4294901760
      %v2722 = vsub.f32 %v2424, %v2721
      %v2723 = vand.u32 %v2722, 4294901760
      %v2724 = vsub.f32 %v2722, %v2723
      %v2725 = vand.u32 %v2724, 4294901760
      %2726 = vmatpush1.msra.mxu0 %v2725
      %v2727 = vand.u32 %v2423, 4294901760
      %v2728 = vsub.f32 %v2423, %v2727
      %v2729 = vand.u32 %v2728, 4294901760
      %v2730 = vsub.f32 %v2728, %v2729
      %v2731 = vand.u32 %v2730, 4294901760
      %2732 = vmatprep.subr.mxu0 %v2731
      %v2733 = vand.u32 %v2422, 4294901760
      %v2734 = vsub.f32 %v2422, %v2733
      %v2735 = vand.u32 %v2734, 4294901760
      %v2736 = vsub.f32 %v2734, %v2735
      %v2737 = vand.u32 %v2736, 4294901760
      %2738 = vmatpush1.msra.mxu0 %v2737
      %v2739 = vand.u32 %v2421, 4294901760
      %v2740 = vsub.f32 %v2421, %v2739
      %v2741 = vand.u32 %v2740, 4294901760
      %v2742 = vsub.f32 %v2740, %v2741
      %v2743 = vand.u32 %v2742, 4294901760
      %2744 = vmatprep.subr.mxu0 %v2743
      %v2745 = vand.u32 %v2420, 4294901760
      %v2746 = vsub.f32 %v2420, %v2745
      %v2747 = vand.u32 %v2746, 4294901760
      %v2748 = vsub.f32 %v2746, %v2747
      %v2749 = vand.u32 %v2748, 4294901760
      %2750 = vmatpush1.msra.mxu0 %v2749
      %v2751 = vand.u32 %v2419, 4294901760
      %v2752 = vsub.f32 %v2419, %v2751
      %v2753 = vand.u32 %v2752, 4294901760
      %v2754 = vsub.f32 %v2752, %v2753
      %v2755 = vand.u32 %v2754, 4294901760
      %2756 = vmatprep.subr.mxu0 %v2755
      %v2757 = vand.u32 %v2418, 4294901760
      %v2758 = vsub.f32 %v2418, %v2757
      %v2759 = vand.u32 %v2758, 4294901760
      %v2760 = vsub.f32 %v2758, %v2759
      %v2761 = vand.u32 %v2760, 4294901760
      %2762 = vmatpush1.msra.mxu0 %v2761
      %v2763 = vand.u32 %v2417, 4294901760
      %v2764 = vsub.f32 %v2417, %v2763
      %v2765 = vand.u32 %v2764, 4294901760
      %v2766 = vsub.f32 %v2764, %v2765
      %v2767 = vand.u32 %v2766, 4294901760
      %2768 = vmatprep.subr.mxu0 %v2767
      %v2769 = vand.u32 %v2416, 4294901760
      %v2770 = vsub.f32 %v2416, %v2769
      %v2771 = vand.u32 %v2770, 4294901760
      %v2772 = vsub.f32 %v2770, %v2771
      %v2773 = vand.u32 %v2772, 4294901760
      %2774 = vmatpush1.msra.mxu0 %v2773
      %v2775 = vand.u32 %v2415, 4294901760
      %v2776 = vsub.f32 %v2415, %v2775
      %v2777 = vand.u32 %v2776, 4294901760
      %v2778 = vsub.f32 %v2776, %v2777
      %v2779 = vand.u32 %v2778, 4294901760
      %2780 = vmatprep.subr.mxu0 %v2779
      %v2781 = vand.u32 %v2414, 4294901760
      %v2782 = vsub.f32 %v2414, %v2781
      %v2783 = vand.u32 %v2782, 4294901760
      %v2784 = vsub.f32 %v2782, %v2783
      %v2785 = vand.u32 %v2784, 4294901760
      %2786 = vmatpush1.msra.mxu0 %v2785
      %v2787 = vand.u32 %v2413, 4294901760
      %v2788 = vsub.f32 %v2413, %v2787
      %v2789 = vand.u32 %v2788, 4294901760
      %v2790 = vsub.f32 %v2788, %v2789
      %v2791 = vand.u32 %v2790, 4294901760
      %2792 = vmatprep.subr.mxu0 %v2791
      %v2793 = vand.u32 %v2412, 4294901760
      %v2794 = vsub.f32 %v2412, %v2793
      %v2795 = vand.u32 %v2794, 4294901760
      %v2796 = vsub.f32 %v2794, %v2795
      %v2797 = vand.u32 %v2796, 4294901760
      %2798 = vmatpush1.msra.mxu0 %v2797
      %v2799 = vand.u32 %v2411, 4294901760
      %v2800 = vsub.f32 %v2411, %v2799
      %v2801 = vand.u32 %v2800, 4294901760
      %v2802 = vsub.f32 %v2800, %v2801
      %v2803 = vand.u32 %v2802, 4294901760
      %2804 = vmatprep.subr.mxu0 %v2803
      %v2805 = vand.u32 %v2410, 4294901760
      %v2806 = vsub.f32 %v2410, %v2805
      %v2807 = vand.u32 %v2806, 4294901760
      %v2808 = vsub.f32 %v2806, %v2807
      %v2809 = vand.u32 %v2808, 4294901760
      %2810 = vmatpush1.msra.mxu0 %v2809
      %v2811 = vand.u32 %v2409, 4294901760
      %v2812 = vsub.f32 %v2409, %v2811
      %v2813 = vand.u32 %v2812, 4294901760
      %v2814 = vsub.f32 %v2812, %v2813
      %v2815 = vand.u32 %v2814, 4294901760
      %2816 = vmatprep.subr.mxu0 %v2815
      %v2817 = vand.u32 %v2408, 4294901760
      %v2818 = vsub.f32 %v2408, %v2817
      %v2819 = vand.u32 %v2818, 4294901760
      %v2820 = vsub.f32 %v2818, %v2819
      %v2821 = vand.u32 %v2820, 4294901760
      %2822 = vmatpush1.msra.mxu0 %v2821
      %v2823 = vand.u32 %v2407, 4294901760
      %v2824 = vsub.f32 %v2407, %v2823
      %v2825 = vand.u32 %v2824, 4294901760
      %v2826 = vsub.f32 %v2824, %v2825
      %v2827 = vand.u32 %v2826, 4294901760
      %2828 = vmatprep.subr.mxu0 %v2827
      %v2829 = vand.u32 %v2406, 4294901760
      %v2830 = vsub.f32 %v2406, %v2829
      %v2831 = vand.u32 %v2830, 4294901760
      %v2832 = vsub.f32 %v2830, %v2831
      %v2833 = vand.u32 %v2832, 4294901760
      %2834 = vmatpush1.msra.mxu0 %v2833
      %v2835 = vand.u32 %v2405, 4294901760
      %v2836 = vsub.f32 %v2405, %v2835
      %v2837 = vand.u32 %v2836, 4294901760
      %v2838 = vsub.f32 %v2836, %v2837
      %v2839 = vand.u32 %v2838, 4294901760
      %2840 = vmatprep.subr.mxu0 %v2839
      %v2841 = vand.u32 %v2404, 4294901760
      %v2842 = vsub.f32 %v2404, %v2841
      %v2843 = vand.u32 %v2842, 4294901760
      %v2844 = vsub.f32 %v2842, %v2843
      %v2845 = vand.u32 %v2844, 4294901760
      %2846 = vmatpush1.msra.mxu0 %v2845
      %v2847 = vand.u32 %v2403, 4294901760
      %v2848 = vsub.f32 %v2403, %v2847
      %v2849 = vand.u32 %v2848, 4294901760
      %v2850 = vsub.f32 %v2848, %v2849
      %v2851 = vand.u32 %v2850, 4294901760
      %2852 = vmatprep.subr.mxu0 %v2851
      %v2853 = vand.u32 %v2402, 4294901760
      %v2854 = vsub.f32 %v2402, %v2853
      %v2855 = vand.u32 %v2854, 4294901760
      %v2856 = vsub.f32 %v2854, %v2855
      %v2857 = vand.u32 %v2856, 4294901760
      %2858 = vmatpush1.msra.mxu0 %v2857
      %v2859 = vand.u32 %v2401, 4294901760
      %v2860 = vsub.f32 %v2401, %v2859
      %v2861 = vand.u32 %v2860, 4294901760
      %v2862 = vsub.f32 %v2860, %v2861
      %v2863 = vand.u32 %v2862, 4294901760
      %2864 = vmatprep.subr.mxu0 %v2863
      %v2865 = vand.u32 %v2400, 4294901760
      %v2866 = vsub.f32 %v2400, %v2865
      %v2867 = vand.u32 %v2866, 4294901760
      %v2868 = vsub.f32 %v2866, %v2867
      %v2869 = vand.u32 %v2868, 4294901760
      %2870 = vmatpush1.msra.mxu0 %v2869
      %v2871 = vand.u32 %v2399, 4294901760
      %v2872 = vsub.f32 %v2399, %v2871
      %v2873 = vand.u32 %v2872, 4294901760
      %v2874 = vsub.f32 %v2872, %v2873
      %v2875 = vand.u32 %v2874, 4294901760
      %2876 = vmatprep.subr.mxu0 %v2875
      %v2877 = vand.u32 %v2398, 4294901760
      %v2878 = vsub.f32 %v2398, %v2877
      %v2879 = vand.u32 %v2878, 4294901760
      %v2880 = vsub.f32 %v2878, %v2879
      %v2881 = vand.u32 %v2880, 4294901760
      %2882 = vmatpush1.msra.mxu0 %v2881
      %v2883 = vand.u32 %v2397, 4294901760
      %v2884 = vsub.f32 %v2397, %v2883
      %v2885 = vand.u32 %v2884, 4294901760
      %v2886 = vsub.f32 %v2884, %v2885
      %v2887 = vand.u32 %v2886, 4294901760
      %2888 = vmatprep.subr.mxu0 %v2887
      %v2889 = vand.u32 %v2396, 4294901760
      %v2890 = vsub.f32 %v2396, %v2889
      %v2891 = vand.u32 %v2890, 4294901760
      %v2892 = vsub.f32 %v2890, %v2891
      %v2893 = vand.u32 %v2892, 4294901760
      %2894 = vmatpush1.msra.mxu0 %v2893
      %v2895 = vand.u32 %v2395, 4294901760
      %v2896 = vsub.f32 %v2395, %v2895
      %v2897 = vand.u32 %v2896, 4294901760
      %v2898 = vsub.f32 %v2896, %v2897
      %v2899 = vand.u32 %v2898, 4294901760
      %2900 = vmatprep.subr.mxu0 %v2899
      %v2901 = vand.u32 %v2394, 4294901760
      %v2902 = vsub.f32 %v2394, %v2901
      %v2903 = vand.u32 %v2902, 4294901760
      %v2904 = vsub.f32 %v2902, %v2903
      %v2905 = vand.u32 %v2904, 4294901760
      %2906 = vmatpush1.msra.mxu0 %v2905
      %2907 = vmatprep.subr.mxu0 0.0
      %2908 = vmatpush2.msra.mxu0 0.0
      %2909 = vmatprep.subr.mxu0 0.0
      %2910 = vmatpush2.msra.mxu0 0.0
      %2911 = vmatprep.subr.mxu0 0.0
      %2912 = vmatpush2.msra.mxu0 0.0
      %2913 = vmatprep.subr.mxu0 0.0
      %2914 = vmatpush2.msra.mxu0 0.0
      %2915 = vmatprep.subr.mxu0 0.0
      %2916 = vmatpush2.msra.mxu0 0.0
      %2917 = vmatprep.subr.mxu0 0.0
      %2918 = vmatpush2.msra.mxu0 0.0
      %2919 = vmatprep.subr.mxu0 0.0
      %2920 = vmatpush2.msra.mxu0 0.0
      %2921 = vmatprep.subr.mxu0 0.0
      %2922 = vmatpush2.msra.mxu0 0.0
      %2923 = vmatprep.subr.mxu0 0.0
      %2924 = vmatpush2.msra.mxu0 0.0
      %2925 = vmatprep.subr.mxu0 0.0
      %2926 = vmatpush2.msra.mxu0 0.0
      %2927 = vmatprep.subr.mxu0 0.0
      %2928 = vmatpush2.msra.mxu0 0.0
      %2929 = vmatprep.subr.mxu0 0.0
      %2930 = vmatpush2.msra.mxu0 0.0
      %2931 = vmatprep.subr.mxu0 0.0
      %2932 = vmatpush2.msra.mxu0 0.0
      %2933 = vmatprep.subr.mxu0 0.0
      %2934 = vmatpush2.msra.mxu0 0.0
      %2935 = vmatprep.subr.mxu0 0.0
      %2936 = vmatpush2.msra.mxu0 0.0
      %2937 = vmatprep.subr.mxu0 0.0
      %2938 = vmatpush2.msra.mxu0 0.0
      %2939 = vmatprep.mubr.f32.mxu0 0.0
      %v2940 = vand.u32 %v2426, 4294901760
      %2941 = vmatmul.mubr.f32.gmra.mxu0 %v2940
      %v2942 = vpop.f32.mrf.mxu0
      %v2943 = vadd.f32 %v2546, %v2942
      %v2944 = vpop.f32.mrf.mxu0
      %v2945 = vadd.f32 %v2548, %v2944
      %2946 = vmatprep.mubr.f32.mxu0 0.0
      %v2947 = vand.u32 %v2427, 4294901760
      %2948 = vmatmul.mubr.f32.gmra.mxu0 %v2947
      %v2949 = vpop.f32.mrf.mxu0
      %v2950 = vadd.f32 %v2557, %v2949
      %v2951 = vpop.f32.mrf.mxu0
      %v2952 = vadd.f32 %v2559, %v2951
      %2953 = vmatprep.mubr.f32.mxu0 0.0
      %v2954 = vand.u32 %v2428, 4294901760
      %2955 = vmatmul.mubr.f32.gmra.mxu0 %v2954
      %v2956 = vpop.f32.mrf.mxu0
      %v2957 = vadd.f32 %v2568, %v2956
      %v2958 = vpop.f32.mrf.mxu0
      %v2959 = vadd.f32 %v2570, %v2958
      %2960 = vmatprep.mubr.f32.mxu0 0.0
      %v2961 = vand.u32 %v2429, 4294901760
      %2962 = vmatmul.mubr.f32.gmra.mxu0 %v2961
      %v2963 = vpop.f32.mrf.mxu0
      %v2964 = vadd.f32 %v2579, %v2963
      %v2965 = vpop.f32.mrf.mxu0
      %v2966 = vadd.f32 %v2581, %v2965
      %2967 = vmatprep.mubr.f32.mxu0 0.0
      %v2968 = vand.u32 %v2430, 4294901760
      %2969 = vmatmul.mubr.f32.gmra.mxu0 %v2968
      %v2970 = vpop.f32.mrf.mxu0
      %v2971 = vadd.f32 %v2590, %v2970
      %v2972 = vpop.f32.mrf.mxu0
      %v2973 = vadd.f32 %v2592, %v2972
      %2974 = vmatprep.mubr.f32.mxu0 0.0
      %v2975 = vand.u32 %v2431, 4294901760
      %2976 = vmatmul.mubr.f32.gmra.mxu0 %v2975
      %v2977 = vpop.f32.mrf.mxu0
      %v2978 = vadd.f32 %v2601, %v2977
      %v2979 = vpop.f32.mrf.mxu0
      %v2980 = vadd.f32 %v2603, %v2979
      %2981 = vmatprep.mubr.f32.mxu0 0.0
      %v2982 = vand.u32 %v2432, 4294901760
      %2983 = vmatmul.mubr.f32.gmra.mxu0 %v2982
      %v2984 = vpop.f32.mrf.mxu0
      %v2985 = vadd.f32 %v2612, %v2984
      %v2986 = vpop.f32.mrf.mxu0
      %v2987 = vadd.f32 %v2614, %v2986
      %2988 = vmatprep.mubr.f32.mxu0 0.0
      %v2989 = vand.u32 %v2433, 4294901760
      %2990 = vmatmul.mubr.f32.gmra.mxu0 %v2989
      %v2991 = vpop.f32.mrf.mxu0
      %v2992 = vadd.f32 %v2623, %v2991
      %v2993 = vpop.f32.mrf.mxu0
      %v2994 = vadd.f32 %v2625, %v2993
      %2995 = vmatprep.mubr.f32.mxu0 0.0
      %v2996 = vand.u32 %v2434, 4294901760
      %2997 = vmatmul.mubr.f32.gmra.mxu0 %v2996
      %v2998 = vpop.f32.mrf.mxu0
      %v2999 = vadd.f32 %v2634, %v2998
      %v3000 = vpop.f32.mrf.mxu0
      %v3001 = vadd.f32 %v2636, %v3000
      %3002 = vmatprep.mubr.f32.mxu0 0.0
      %v3003 = vand.u32 %v2435, 4294901760
      %3004 = vmatmul.mubr.f32.gmra.mxu0 %v3003
      %v3005 = vpop.f32.mrf.mxu0
      %v3006 = vadd.f32 %v2645, %v3005
      %v3007 = vpop.f32.mrf.mxu0
      %v3008 = vadd.f32 %v2647, %v3007
      %3009 = vmatprep.mubr.f32.mxu0 0.0
      %v3010 = vand.u32 %v2436, 4294901760
      %3011 = vmatmul.mubr.f32.gmra.mxu0 %v3010
      %v3012 = vpop.f32.mrf.mxu0
      %v3013 = vadd.f32 %v2656, %v3012
      %v3014 = vpop.f32.mrf.mxu0
      %v3015 = vadd.f32 %v2658, %v3014
      %3016 = vmatprep.mubr.f32.mxu0 0.0
      %v3017 = vand.u32 %v2437, 4294901760
      %3018 = vmatmul.mubr.f32.gmra.mxu0 %v3017
      %v3019 = vpop.f32.mrf.mxu0
      %v3020 = vadd.f32 %v2667, %v3019
      %v3021 = vpop.f32.mrf.mxu0
      %v3022 = vadd.f32 %v2669, %v3021
      %3023 = vmatprep.mubr.f32.mxu0 0.0
      %v3024 = vand.u32 %v2438, 4294901760
      %3025 = vmatmul.mubr.f32.gmra.mxu0 %v3024
      %v3026 = vpop.f32.mrf.mxu0
      %v3027 = vadd.f32 %v2678, %v3026
      %v3028 = vpop.f32.mrf.mxu0
      %v3029 = vadd.f32 %v2680, %v3028
      %3030 = vmatprep.mubr.f32.mxu0 0.0
      %v3031 = vand.u32 %v2439, 4294901760
      %3032 = vmatmul.mubr.f32.gmra.mxu0 %v3031
      %v3033 = vpop.f32.mrf.mxu0
      %v3034 = vadd.f32 %v2689, %v3033
      %v3035 = vpop.f32.mrf.mxu0
      %v3036 = vadd.f32 %v2691, %v3035
      %3037 = vmatprep.mubr.f32.mxu0 0.0
      %v3038 = vand.u32 %v2440, 4294901760
      %3039 = vmatmul.mubr.f32.gmra.mxu0 %v3038
      %v3040 = vpop.f32.mrf.mxu0
      %v3041 = vadd.f32 %v2700, %v3040
      %v3042 = vpop.f32.mrf.mxu0
      %v3043 = vadd.f32 %v2702, %v3042
      %3044 = vmatprep.mubr.f32.mxu0 0.0
      %v3045 = vand.u32 %v2441, 4294901760
      %3046 = vmatmul.mubr.f32.gmra.mxu0 %v3045
      %v3047 = vpop.f32.mrf.mxu0
      %v3048 = vadd.f32 %v2711, %v3047
      %v3049 = vpop.f32.mrf.mxu0
      %v3050 = vadd.f32 %v2713, %v3049
      %3051 = vdwg.mxu0
      %v3052 = vand.u32 %v2425, 4294901760
      %v3053 = vsub.f32 %v2425, %v3052
      %3054 = vmatprep.subr.mxu0 %v3053
      %v3055 = vand.u32 %v2424, 4294901760
      %v3056 = vsub.f32 %v2424, %v3055
      %3057 = vmatpush1.msra.mxu0 %v3056
      %v3058 = vand.u32 %v2423, 4294901760
      %v3059 = vsub.f32 %v2423, %v3058
      %3060 = vmatprep.subr.mxu0 %v3059
      %v3061 = vand.u32 %v2422, 4294901760
      %v3062 = vsub.f32 %v2422, %v3061
      %3063 = vmatpush1.msra.mxu0 %v3062
      %v3064 = vand.u32 %v2421, 4294901760
      %v3065 = vsub.f32 %v2421, %v3064
      %3066 = vmatprep.subr.mxu0 %v3065
      %v3067 = vand.u32 %v2420, 4294901760
      %v3068 = vsub.f32 %v2420, %v3067
      %3069 = vmatpush1.msra.mxu0 %v3068
      %v3070 = vand.u32 %v2419, 4294901760
      %v3071 = vsub.f32 %v2419, %v3070
      %3072 = vmatprep.subr.mxu0 %v3071
      %v3073 = vand.u32 %v2418, 4294901760
      %v3074 = vsub.f32 %v2418, %v3073
      %3075 = vmatpush1.msra.mxu0 %v3074
      %v3076 = vand.u32 %v2417, 4294901760
      %v3077 = vsub.f32 %v2417, %v3076
      %3078 = vmatprep.subr.mxu0 %v3077
      %v3079 = vand.u32 %v2416, 4294901760
      %v3080 = vsub.f32 %v2416, %v3079
      %3081 = vmatpush1.msra.mxu0 %v3080
      %v3082 = vand.u32 %v2415, 4294901760
      %v3083 = vsub.f32 %v2415, %v3082
      %3084 = vmatprep.subr.mxu0 %v3083
      %v3085 = vand.u32 %v2414, 4294901760
      %v3086 = vsub.f32 %v2414, %v3085
      %3087 = vmatpush1.msra.mxu0 %v3086
      %v3088 = vand.u32 %v2413, 4294901760
      %v3089 = vsub.f32 %v2413, %v3088
      %3090 = vmatprep.subr.mxu0 %v3089
      %v3091 = vand.u32 %v2412, 4294901760
      %v3092 = vsub.f32 %v2412, %v3091
      %3093 = vmatpush1.msra.mxu0 %v3092
      %v3094 = vand.u32 %v2411, 4294901760
      %v3095 = vsub.f32 %v2411, %v3094
      %3096 = vmatprep.subr.mxu0 %v3095
      %v3097 = vand.u32 %v2410, 4294901760
      %v3098 = vsub.f32 %v2410, %v3097
      %3099 = vmatpush1.msra.mxu0 %v3098
      %v3100 = vand.u32 %v2409, 4294901760
      %v3101 = vsub.f32 %v2409, %v3100
      %3102 = vmatprep.subr.mxu0 %v3101
      %v3103 = vand.u32 %v2408, 4294901760
      %v3104 = vsub.f32 %v2408, %v3103
      %3105 = vmatpush1.msra.mxu0 %v3104
      %v3106 = vand.u32 %v2407, 4294901760
      %v3107 = vsub.f32 %v2407, %v3106
      %3108 = vmatprep.subr.mxu0 %v3107
      %v3109 = vand.u32 %v2406, 4294901760
      %v3110 = vsub.f32 %v2406, %v3109
      %3111 = vmatpush1.msra.mxu0 %v3110
      %v3112 = vand.u32 %v2405, 4294901760
      %v3113 = vsub.f32 %v2405, %v3112
      %3114 = vmatprep.subr.mxu0 %v3113
      %v3115 = vand.u32 %v2404, 4294901760
      %v3116 = vsub.f32 %v2404, %v3115
      %3117 = vmatpush1.msra.mxu0 %v3116
      %v3118 = vand.u32 %v2403, 4294901760
      %v3119 = vsub.f32 %v2403, %v3118
      %3120 = vmatprep.subr.mxu0 %v3119
      %v3121 = vand.u32 %v2402, 4294901760
      %v3122 = vsub.f32 %v2402, %v3121
      %3123 = vmatpush1.msra.mxu0 %v3122
      %v3124 = vand.u32 %v2401, 4294901760
      %v3125 = vsub.f32 %v2401, %v3124
      %3126 = vmatprep.subr.mxu0 %v3125
      %v3127 = vand.u32 %v2400, 4294901760
      %v3128 = vsub.f32 %v2400, %v3127
      %3129 = vmatpush1.msra.mxu0 %v3128
      %v3130 = vand.u32 %v2399, 4294901760
      %v3131 = vsub.f32 %v2399, %v3130
      %3132 = vmatprep.subr.mxu0 %v3131
      %v3133 = vand.u32 %v2398, 4294901760
      %v3134 = vsub.f32 %v2398, %v3133
      %3135 = vmatpush1.msra.mxu0 %v3134
      %v3136 = vand.u32 %v2397, 4294901760
      %v3137 = vsub.f32 %v2397, %v3136
      %3138 = vmatprep.subr.mxu0 %v3137
      %v3139 = vand.u32 %v2396, 4294901760
      %v3140 = vsub.f32 %v2396, %v3139
      %3141 = vmatpush1.msra.mxu0 %v3140
      %v3142 = vand.u32 %v2395, 4294901760
      %v3143 = vsub.f32 %v2395, %v3142
      %3144 = vmatprep.subr.mxu0 %v3143
      %v3145 = vand.u32 %v2394, 4294901760
      %v3146 = vsub.f32 %v2394, %v3145
      %3147 = vmatpush1.msra.mxu0 %v3146
      %3148 = vmatprep.subr.mxu0 0.0
      %3149 = vmatpush2.msra.mxu0 0.0
      %3150 = vmatprep.subr.mxu0 0.0
      %3151 = vmatpush2.msra.mxu0 0.0
      %3152 = vmatprep.subr.mxu0 0.0
      %3153 = vmatpush2.msra.mxu0 0.0
      %3154 = vmatprep.subr.mxu0 0.0
      %3155 = vmatpush2.msra.mxu0 0.0
      %3156 = vmatprep.subr.mxu0 0.0
      %3157 = vmatpush2.msra.mxu0 0.0
      %3158 = vmatprep.subr.mxu0 0.0
      %3159 = vmatpush2.msra.mxu0 0.0
      %3160 = vmatprep.subr.mxu0 0.0
      %3161 = vmatpush2.msra.mxu0 0.0
      %3162 = vmatprep.subr.mxu0 0.0
      %3163 = vmatpush2.msra.mxu0 0.0
      %3164 = vmatprep.subr.mxu0 0.0
      %3165 = vmatpush2.msra.mxu0 0.0
      %3166 = vmatprep.subr.mxu0 0.0
      %3167 = vmatpush2.msra.mxu0 0.0
      %3168 = vmatprep.subr.mxu0 0.0
      %3169 = vmatpush2.msra.mxu0 0.0
      %3170 = vmatprep.subr.mxu0 0.0
      %3171 = vmatpush2.msra.mxu0 0.0
      %3172 = vmatprep.subr.mxu0 0.0
      %3173 = vmatpush2.msra.mxu0 0.0
      %3174 = vmatprep.subr.mxu0 0.0
      %3175 = vmatpush2.msra.mxu0 0.0
      %3176 = vmatprep.subr.mxu0 0.0
      %3177 = vmatpush2.msra.mxu0 0.0
      %3178 = vmatprep.subr.mxu0 0.0
      %3179 = vmatpush2.msra.mxu0 0.0
      %3180 = vmatprep.mubr.f32.mxu0 0.0
      %v3181 = vand.u32 %v2426, 4294901760
      %v3182 = vsub.f32 %v2426, %v3181
      %3183 = vmatmul.mubr.f32.gmra.mxu0 %v3182
      %v3184 = vpop.f32.mrf.mxu0
      %v3185 = vadd.f32 %v2943, %v3184
      %v3186 = vpop.f32.mrf.mxu0
      %v3187 = vadd.f32 %v2945, %v3186
      %3188 = vmatprep.mubr.f32.mxu0 0.0
      %v3189 = vand.u32 %v2427, 4294901760
      %v3190 = vsub.f32 %v2427, %v3189
      %3191 = vmatmul.mubr.f32.gmra.mxu0 %v3190
      %v3192 = vpop.f32.mrf.mxu0
      %v3193 = vadd.f32 %v2950, %v3192
      %v3194 = vpop.f32.mrf.mxu0
      %v3195 = vadd.f32 %v2952, %v3194
      %3196 = vmatprep.mubr.f32.mxu0 0.0
      %v3197 = vand.u32 %v2428, 4294901760
      %v3198 = vsub.f32 %v2428, %v3197
      %3199 = vmatmul.mubr.f32.gmra.mxu0 %v3198
      %v3200 = vpop.f32.mrf.mxu0
      %v3201 = vadd.f32 %v2957, %v3200
      %v3202 = vpop.f32.mrf.mxu0
      %v3203 = vadd.f32 %v2959, %v3202
      %3204 = vmatprep.mubr.f32.mxu0 0.0
      %v3205 = vand.u32 %v2429, 4294901760
      %v3206 = vsub.f32 %v2429, %v3205
      %3207 = vmatmul.mubr.f32.gmra.mxu0 %v3206
      %v3208 = vpop.f32.mrf.mxu0
      %v3209 = vadd.f32 %v2964, %v3208
      %v3210 = vpop.f32.mrf.mxu0
      %v3211 = vadd.f32 %v2966, %v3210
      %3212 = vmatprep.mubr.f32.mxu0 0.0
      %v3213 = vand.u32 %v2430, 4294901760
      %v3214 = vsub.f32 %v2430, %v3213
      %3215 = vmatmul.mubr.f32.gmra.mxu0 %v3214
      %v3216 = vpop.f32.mrf.mxu0
      %v3217 = vadd.f32 %v2971, %v3216
      %v3218 = vpop.f32.mrf.mxu0
      %v3219 = vadd.f32 %v2973, %v3218
      %3220 = vmatprep.mubr.f32.mxu0 0.0
      %v3221 = vand.u32 %v2431, 4294901760
      %v3222 = vsub.f32 %v2431, %v3221
      %3223 = vmatmul.mubr.f32.gmra.mxu0 %v3222
      %v3224 = vpop.f32.mrf.mxu0
      %v3225 = vadd.f32 %v2978, %v3224
      %v3226 = vpop.f32.mrf.mxu0
      %v3227 = vadd.f32 %v2980, %v3226
      %3228 = vmatprep.mubr.f32.mxu0 0.0
      %v3229 = vand.u32 %v2432, 4294901760
      %v3230 = vsub.f32 %v2432, %v3229
      %3231 = vmatmul.mubr.f32.gmra.mxu0 %v3230
      %v3232 = vpop.f32.mrf.mxu0
      %v3233 = vadd.f32 %v2985, %v3232
      %v3234 = vpop.f32.mrf.mxu0
      %v3235 = vadd.f32 %v2987, %v3234
      %3236 = vmatprep.mubr.f32.mxu0 0.0
      %v3237 = vand.u32 %v2433, 4294901760
      %v3238 = vsub.f32 %v2433, %v3237
      %3239 = vmatmul.mubr.f32.gmra.mxu0 %v3238
      %v3240 = vpop.f32.mrf.mxu0
      %v3241 = vadd.f32 %v2992, %v3240
      %v3242 = vpop.f32.mrf.mxu0
      %v3243 = vadd.f32 %v2994, %v3242
      %3244 = vmatprep.mubr.f32.mxu0 0.0
      %v3245 = vand.u32 %v2434, 4294901760
      %v3246 = vsub.f32 %v2434, %v3245
      %3247 = vmatmul.mubr.f32.gmra.mxu0 %v3246
      %v3248 = vpop.f32.mrf.mxu0
      %v3249 = vadd.f32 %v2999, %v3248
      %v3250 = vpop.f32.mrf.mxu0
      %v3251 = vadd.f32 %v3001, %v3250
      %3252 = vmatprep.mubr.f32.mxu0 0.0
      %v3253 = vand.u32 %v2435, 4294901760
      %v3254 = vsub.f32 %v2435, %v3253
      %3255 = vmatmul.mubr.f32.gmra.mxu0 %v3254
      %v3256 = vpop.f32.mrf.mxu0
      %v3257 = vadd.f32 %v3006, %v3256
      %v3258 = vpop.f32.mrf.mxu0
      %v3259 = vadd.f32 %v3008, %v3258
      %3260 = vmatprep.mubr.f32.mxu0 0.0
      %v3261 = vand.u32 %v2436, 4294901760
      %v3262 = vsub.f32 %v2436, %v3261
      %3263 = vmatmul.mubr.f32.gmra.mxu0 %v3262
      %v3264 = vpop.f32.mrf.mxu0
      %v3265 = vadd.f32 %v3013, %v3264
      %v3266 = vpop.f32.mrf.mxu0
      %v3267 = vadd.f32 %v3015, %v3266
      %3268 = vmatprep.mubr.f32.mxu0 0.0
      %v3269 = vand.u32 %v2437, 4294901760
      %v3270 = vsub.f32 %v2437, %v3269
      %3271 = vmatmul.mubr.f32.gmra.mxu0 %v3270
      %v3272 = vpop.f32.mrf.mxu0
      %v3273 = vadd.f32 %v3020, %v3272
      %v3274 = vpop.f32.mrf.mxu0
      %v3275 = vadd.f32 %v3022, %v3274
      %3276 = vmatprep.mubr.f32.mxu0 0.0
      %v3277 = vand.u32 %v2438, 4294901760
      %v3278 = vsub.f32 %v2438, %v3277
      %3279 = vmatmul.mubr.f32.gmra.mxu0 %v3278
      %v3280 = vpop.f32.mrf.mxu0
      %v3281 = vadd.f32 %v3027, %v3280
      %v3282 = vpop.f32.mrf.mxu0
      %v3283 = vadd.f32 %v3029, %v3282
      %3284 = vmatprep.mubr.f32.mxu0 0.0
      %v3285 = vand.u32 %v2439, 4294901760
      %v3286 = vsub.f32 %v2439, %v3285
      %3287 = vmatmul.mubr.f32.gmra.mxu0 %v3286
      %v3288 = vpop.f32.mrf.mxu0
      %v3289 = vadd.f32 %v3034, %v3288
      %v3290 = vpop.f32.mrf.mxu0
      %v3291 = vadd.f32 %v3036, %v3290
      %3292 = vmatprep.mubr.f32.mxu0 0.0
      %v3293 = vand.u32 %v2440, 4294901760
      %v3294 = vsub.f32 %v2440, %v3293
      %3295 = vmatmul.mubr.f32.gmra.mxu0 %v3294
      %v3296 = vpop.f32.mrf.mxu0
      %v3297 = vadd.f32 %v3041, %v3296
      %v3298 = vpop.f32.mrf.mxu0
      %v3299 = vadd.f32 %v3043, %v3298
      %3300 = vmatprep.mubr.f32.mxu0 0.0
      %v3301 = vand.u32 %v2441, 4294901760
      %v3302 = vsub.f32 %v2441, %v3301
      %3303 = vmatmul.mubr.f32.gmra.mxu0 %v3302
      %v3304 = vpop.f32.mrf.mxu0
      %v3305 = vadd.f32 %v3048, %v3304
      %v3306 = vpop.f32.mrf.mxu0
      %v3307 = vadd.f32 %v3050, %v3306
      %3308 = vdwg.mxu0
      %v3309 = vand.u32 %v2425, 4294901760
      %3310 = vmatprep.subr.mxu0 %v3309
      %v3311 = vand.u32 %v2424, 4294901760
      %3312 = vmatpush1.msra.mxu0 %v3311
      %v3313 = vand.u32 %v2423, 4294901760
      %3314 = vmatprep.subr.mxu0 %v3313
      %v3315 = vand.u32 %v2422, 4294901760
      %3316 = vmatpush1.msra.mxu0 %v3315
      %v3317 = vand.u32 %v2421, 4294901760
      %3318 = vmatprep.subr.mxu0 %v3317
      %v3319 = vand.u32 %v2420, 4294901760
      %3320 = vmatpush1.msra.mxu0 %v3319
      %v3321 = vand.u32 %v2419, 4294901760
      %3322 = vmatprep.subr.mxu0 %v3321
      %v3323 = vand.u32 %v2418, 4294901760
      %3324 = vmatpush1.msra.mxu0 %v3323
      %v3325 = vand.u32 %v2417, 4294901760
      %3326 = vmatprep.subr.mxu0 %v3325
      %v3327 = vand.u32 %v2416, 4294901760
      %3328 = vmatpush1.msra.mxu0 %v3327
      %v3329 = vand.u32 %v2415, 4294901760
      %3330 = vmatprep.subr.mxu0 %v3329
      %v3331 = vand.u32 %v2414, 4294901760
      %3332 = vmatpush1.msra.mxu0 %v3331
      %v3333 = vand.u32 %v2413, 4294901760
      %3334 = vmatprep.subr.mxu0 %v3333
      %v3335 = vand.u32 %v2412, 4294901760
      %3336 = vmatpush1.msra.mxu0 %v3335
      %v3337 = vand.u32 %v2411, 4294901760
      %3338 = vmatprep.subr.mxu0 %v3337
      %v3339 = vand.u32 %v2410, 4294901760
      %3340 = vmatpush1.msra.mxu0 %v3339
      %v3341 = vand.u32 %v2409, 4294901760
      %3342 = vmatprep.subr.mxu0 %v3341
      %v3343 = vand.u32 %v2408, 4294901760
      %3344 = vmatpush1.msra.mxu0 %v3343
      %v3345 = vand.u32 %v2407, 4294901760
      %3346 = vmatprep.subr.mxu0 %v3345
      %v3347 = vand.u32 %v2406, 4294901760
      %3348 = vmatpush1.msra.mxu0 %v3347
      %v3349 = vand.u32 %v2405, 4294901760
      %3350 = vmatprep.subr.mxu0 %v3349
      %v3351 = vand.u32 %v2404, 4294901760
      %3352 = vmatpush1.msra.mxu0 %v3351
      %v3353 = vand.u32 %v2403, 4294901760
      %3354 = vmatprep.subr.mxu0 %v3353
      %v3355 = vand.u32 %v2402, 4294901760
      %3356 = vmatpush1.msra.mxu0 %v3355
      %v3357 = vand.u32 %v2401, 4294901760
      %3358 = vmatprep.subr.mxu0 %v3357
      %v3359 = vand.u32 %v2400, 4294901760
      %3360 = vmatpush1.msra.mxu0 %v3359
      %v3361 = vand.u32 %v2399, 4294901760
      %3362 = vmatprep.subr.mxu0 %v3361
      %v3363 = vand.u32 %v2398, 4294901760
      %3364 = vmatpush1.msra.mxu0 %v3363
      %v3365 = vand.u32 %v2397, 4294901760
      %3366 = vmatprep.subr.mxu0 %v3365
      %v3367 = vand.u32 %v2396, 4294901760
      %3368 = vmatpush1.msra.mxu0 %v3367
      %v3369 = vand.u32 %v2395, 4294901760
      %3370 = vmatprep.subr.mxu0 %v3369
      %v3371 = vand.u32 %v2394, 4294901760
      %3372 = vmatpush1.msra.mxu0 %v3371
      %3373 = vmatprep.subr.mxu0 0.0
      %3374 = vmatpush2.msra.mxu0 0.0
      %3375 = vmatprep.subr.mxu0 0.0
      %3376 = vmatpush2.msra.mxu0 0.0
      %3377 = vmatprep.subr.mxu0 0.0
      %3378 = vmatpush2.msra.mxu0 0.0
      %3379 = vmatprep.subr.mxu0 0.0
      %3380 = vmatpush2.msra.mxu0 0.0
      %3381 = vmatprep.subr.mxu0 0.0
      %3382 = vmatpush2.msra.mxu0 0.0
      %3383 = vmatprep.subr.mxu0 0.0
      %3384 = vmatpush2.msra.mxu0 0.0
      %3385 = vmatprep.subr.mxu0 0.0
      %3386 = vmatpush2.msra.mxu0 0.0
      %3387 = vmatprep.subr.mxu0 0.0
      %3388 = vmatpush2.msra.mxu0 0.0
      %3389 = vmatprep.subr.mxu0 0.0
      %3390 = vmatpush2.msra.mxu0 0.0
      %3391 = vmatprep.subr.mxu0 0.0
      %3392 = vmatpush2.msra.mxu0 0.0
      %3393 = vmatprep.subr.mxu0 0.0
      %3394 = vmatpush2.msra.mxu0 0.0
      %3395 = vmatprep.subr.mxu0 0.0
      %3396 = vmatpush2.msra.mxu0 0.0
      %3397 = vmatprep.subr.mxu0 0.0
      %3398 = vmatpush2.msra.mxu0 0.0
      %3399 = vmatprep.subr.mxu0 0.0
      %3400 = vmatpush2.msra.mxu0 0.0
      %3401 = vmatprep.subr.mxu0 0.0
      %3402 = vmatpush2.msra.mxu0 0.0
      %3403 = vmatprep.subr.mxu0 0.0
      %3404 = vmatpush2.msra.mxu0 0.0
      %3405 = vmatprep.mubr.f32.mxu0 0.0
      %v3406 = vand.u32 %v2426, 4294901760
      %v3407 = vsub.f32 %v2426, %v3406
      %v3408 = vand.u32 %v3407, 4294901760
      %3409 = vmatmul.mubr.f32.gmra.mxu0 %v3408
      %v3410 = vpop.f32.mrf.mxu0
      %v3411 = vadd.f32 %v3185, %v3410
      %v3412 = vpop.f32.mrf.mxu0
      %v3413 = vadd.f32 %v3187, %v3412
      %3414 = vmatprep.mubr.f32.mxu0 0.0
      %v3415 = vand.u32 %v2427, 4294901760
      %v3416 = vsub.f32 %v2427, %v3415
      %v3417 = vand.u32 %v3416, 4294901760
      %3418 = vmatmul.mubr.f32.gmra.mxu0 %v3417
      %v3419 = vpop.f32.mrf.mxu0
      %v3420 = vadd.f32 %v3193, %v3419
      %v3421 = vpop.f32.mrf.mxu0
      %v3422 = vadd.f32 %v3195, %v3421
      %3423 = vmatprep.mubr.f32.mxu0 0.0
      %v3424 = vand.u32 %v2428, 4294901760
      %v3425 = vsub.f32 %v2428, %v3424
      %v3426 = vand.u32 %v3425, 4294901760
      %3427 = vmatmul.mubr.f32.gmra.mxu0 %v3426
      %v3428 = vpop.f32.mrf.mxu0
      %v3429 = vadd.f32 %v3201, %v3428
      %v3430 = vpop.f32.mrf.mxu0
      %v3431 = vadd.f32 %v3203, %v3430
      %3432 = vmatprep.mubr.f32.mxu0 0.0
      %v3433 = vand.u32 %v2429, 4294901760
      %v3434 = vsub.f32 %v2429, %v3433
      %v3435 = vand.u32 %v3434, 4294901760
      %3436 = vmatmul.mubr.f32.gmra.mxu0 %v3435
      %v3437 = vpop.f32.mrf.mxu0
      %v3438 = vadd.f32 %v3209, %v3437
      %v3439 = vpop.f32.mrf.mxu0
      %v3440 = vadd.f32 %v3211, %v3439
      %3441 = vmatprep.mubr.f32.mxu0 0.0
      %v3442 = vand.u32 %v2430, 4294901760
      %v3443 = vsub.f32 %v2430, %v3442
      %v3444 = vand.u32 %v3443, 4294901760
      %3445 = vmatmul.mubr.f32.gmra.mxu0 %v3444
      %v3446 = vpop.f32.mrf.mxu0
      %v3447 = vadd.f32 %v3217, %v3446
      %v3448 = vpop.f32.mrf.mxu0
      %v3449 = vadd.f32 %v3219, %v3448
      %3450 = vmatprep.mubr.f32.mxu0 0.0
      %v3451 = vand.u32 %v2431, 4294901760
      %v3452 = vsub.f32 %v2431, %v3451
      %v3453 = vand.u32 %v3452, 4294901760
      %3454 = vmatmul.mubr.f32.gmra.mxu0 %v3453
      %v3455 = vpop.f32.mrf.mxu0
      %v3456 = vadd.f32 %v3225, %v3455
      %v3457 = vpop.f32.mrf.mxu0
      %v3458 = vadd.f32 %v3227, %v3457
      %3459 = vmatprep.mubr.f32.mxu0 0.0
      %v3460 = vand.u32 %v2432, 4294901760
      %v3461 = vsub.f32 %v2432, %v3460
      %v3462 = vand.u32 %v3461, 4294901760
      %3463 = vmatmul.mubr.f32.gmra.mxu0 %v3462
      %v3464 = vpop.f32.mrf.mxu0
      %v3465 = vadd.f32 %v3233, %v3464
      %v3466 = vpop.f32.mrf.mxu0
      %v3467 = vadd.f32 %v3235, %v3466
      %3468 = vmatprep.mubr.f32.mxu0 0.0
      %v3469 = vand.u32 %v2433, 4294901760
      %v3470 = vsub.f32 %v2433, %v3469
      %v3471 = vand.u32 %v3470, 4294901760
      %3472 = vmatmul.mubr.f32.gmra.mxu0 %v3471
      %v3473 = vpop.f32.mrf.mxu0
      %v3474 = vadd.f32 %v3241, %v3473
      %v3475 = vpop.f32.mrf.mxu0
      %v3476 = vadd.f32 %v3243, %v3475
      %3477 = vmatprep.mubr.f32.mxu0 0.0
      %v3478 = vand.u32 %v2434, 4294901760
      %v3479 = vsub.f32 %v2434, %v3478
      %v3480 = vand.u32 %v3479, 4294901760
      %3481 = vmatmul.mubr.f32.gmra.mxu0 %v3480
      %v3482 = vpop.f32.mrf.mxu0
      %v3483 = vadd.f32 %v3249, %v3482
      %v3484 = vpop.f32.mrf.mxu0
      %v3485 = vadd.f32 %v3251, %v3484
      %3486 = vmatprep.mubr.f32.mxu0 0.0
      %v3487 = vand.u32 %v2435, 4294901760
      %v3488 = vsub.f32 %v2435, %v3487
      %v3489 = vand.u32 %v3488, 4294901760
      %3490 = vmatmul.mubr.f32.gmra.mxu0 %v3489
      %v3491 = vpop.f32.mrf.mxu0
      %v3492 = vadd.f32 %v3257, %v3491
      %v3493 = vpop.f32.mrf.mxu0
      %v3494 = vadd.f32 %v3259, %v3493
      %3495 = vmatprep.mubr.f32.mxu0 0.0
      %v3496 = vand.u32 %v2436, 4294901760
      %v3497 = vsub.f32 %v2436, %v3496
      %v3498 = vand.u32 %v3497, 4294901760
      %3499 = vmatmul.mubr.f32.gmra.mxu0 %v3498
      %v3500 = vpop.f32.mrf.mxu0
      %v3501 = vadd.f32 %v3265, %v3500
      %v3502 = vpop.f32.mrf.mxu0
      %v3503 = vadd.f32 %v3267, %v3502
      %3504 = vmatprep.mubr.f32.mxu0 0.0
      %v3505 = vand.u32 %v2437, 4294901760
      %v3506 = vsub.f32 %v2437, %v3505
      %v3507 = vand.u32 %v3506, 4294901760
      %3508 = vmatmul.mubr.f32.gmra.mxu0 %v3507
      %v3509 = vpop.f32.mrf.mxu0
      %v3510 = vadd.f32 %v3273, %v3509
      %v3511 = vpop.f32.mrf.mxu0
      %v3512 = vadd.f32 %v3275, %v3511
      %3513 = vmatprep.mubr.f32.mxu0 0.0
      %v3514 = vand.u32 %v2438, 4294901760
      %v3515 = vsub.f32 %v2438, %v3514
      %v3516 = vand.u32 %v3515, 4294901760
      %3517 = vmatmul.mubr.f32.gmra.mxu0 %v3516
      %v3518 = vpop.f32.mrf.mxu0
      %v3519 = vadd.f32 %v3281, %v3518
      %v3520 = vpop.f32.mrf.mxu0
      %v3521 = vadd.f32 %v3283, %v3520
      %3522 = vmatprep.mubr.f32.mxu0 0.0
      %v3523 = vand.u32 %v2439, 4294901760
      %v3524 = vsub.f32 %v2439, %v3523
      %v3525 = vand.u32 %v3524, 4294901760
      %3526 = vmatmul.mubr.f32.gmra.mxu0 %v3525
      %v3527 = vpop.f32.mrf.mxu0
      %v3528 = vadd.f32 %v3289, %v3527
      %v3529 = vpop.f32.mrf.mxu0
      %v3530 = vadd.f32 %v3291, %v3529
      %3531 = vmatprep.mubr.f32.mxu0 0.0
      %v3532 = vand.u32 %v2440, 4294901760
      %v3533 = vsub.f32 %v2440, %v3532
      %v3534 = vand.u32 %v3533, 4294901760
      %3535 = vmatmul.mubr.f32.gmra.mxu0 %v3534
      %v3536 = vpop.f32.mrf.mxu0
      %v3537 = vadd.f32 %v3297, %v3536
      %v3538 = vpop.f32.mrf.mxu0
      %v3539 = vadd.f32 %v3299, %v3538
      %3540 = vmatprep.mubr.f32.mxu0 0.0
      %v3541 = vand.u32 %v2441, 4294901760
      %v3542 = vsub.f32 %v2441, %v3541
      %v3543 = vand.u32 %v3542, 4294901760
      %3544 = vmatmul.mubr.f32.gmra.mxu0 %v3543
      %v3545 = vpop.f32.mrf.mxu0
      %v3546 = vadd.f32 %v3305, %v3545
      %v3547 = vpop.f32.mrf.mxu0
      %v3548 = vadd.f32 %v3307, %v3547
      %3549 = vdwg.mxu0
      %v3550 = vand.u32 %v2425, 4294901760
      %v3551 = vsub.f32 %v2425, %v3550
      %v3552 = vand.u32 %v3551, 4294901760
      %3553 = vmatprep.subr.mxu0 %v3552
      %v3554 = vand.u32 %v2424, 4294901760
      %v3555 = vsub.f32 %v2424, %v3554
      %v3556 = vand.u32 %v3555, 4294901760
      %3557 = vmatpush1.msra.mxu0 %v3556
      %v3558 = vand.u32 %v2423, 4294901760
      %v3559 = vsub.f32 %v2423, %v3558
      %v3560 = vand.u32 %v3559, 4294901760
      %3561 = vmatprep.subr.mxu0 %v3560
      %v3562 = vand.u32 %v2422, 4294901760
      %v3563 = vsub.f32 %v2422, %v3562
      %v3564 = vand.u32 %v3563, 4294901760
      %3565 = vmatpush1.msra.mxu0 %v3564
      %v3566 = vand.u32 %v2421, 4294901760
      %v3567 = vsub.f32 %v2421, %v3566
      %v3568 = vand.u32 %v3567, 4294901760
      %3569 = vmatprep.subr.mxu0 %v3568
      %v3570 = vand.u32 %v2420, 4294901760
      %v3571 = vsub.f32 %v2420, %v3570
      %v3572 = vand.u32 %v3571, 4294901760
      %3573 = vmatpush1.msra.mxu0 %v3572
      %v3574 = vand.u32 %v2419, 4294901760
      %v3575 = vsub.f32 %v2419, %v3574
      %v3576 = vand.u32 %v3575, 4294901760
      %3577 = vmatprep.subr.mxu0 %v3576
      %v3578 = vand.u32 %v2418, 4294901760
      %v3579 = vsub.f32 %v2418, %v3578
      %v3580 = vand.u32 %v3579, 4294901760
      %3581 = vmatpush1.msra.mxu0 %v3580
      %v3582 = vand.u32 %v2417, 4294901760
      %v3583 = vsub.f32 %v2417, %v3582
      %v3584 = vand.u32 %v3583, 4294901760
      %3585 = vmatprep.subr.mxu0 %v3584
      %v3586 = vand.u32 %v2416, 4294901760
      %v3587 = vsub.f32 %v2416, %v3586
      %v3588 = vand.u32 %v3587, 4294901760
      %3589 = vmatpush1.msra.mxu0 %v3588
      %v3590 = vand.u32 %v2415, 4294901760
      %v3591 = vsub.f32 %v2415, %v3590
      %v3592 = vand.u32 %v3591, 4294901760
      %3593 = vmatprep.subr.mxu0 %v3592
      %v3594 = vand.u32 %v2414, 4294901760
      %v3595 = vsub.f32 %v2414, %v3594
      %v3596 = vand.u32 %v3595, 4294901760
      %3597 = vmatpush1.msra.mxu0 %v3596
      %v3598 = vand.u32 %v2413, 4294901760
      %v3599 = vsub.f32 %v2413, %v3598
      %v3600 = vand.u32 %v3599, 4294901760
      %3601 = vmatprep.subr.mxu0 %v3600
      %v3602 = vand.u32 %v2412, 4294901760
      %v3603 = vsub.f32 %v2412, %v3602
      %v3604 = vand.u32 %v3603, 4294901760
      %3605 = vmatpush1.msra.mxu0 %v3604
      %v3606 = vand.u32 %v2411, 4294901760
      %v3607 = vsub.f32 %v2411, %v3606
      %v3608 = vand.u32 %v3607, 4294901760
      %3609 = vmatprep.subr.mxu0 %v3608
      %v3610 = vand.u32 %v2410, 4294901760
      %v3611 = vsub.f32 %v2410, %v3610
      %v3612 = vand.u32 %v3611, 4294901760
      %3613 = vmatpush1.msra.mxu0 %v3612
      %v3614 = vand.u32 %v2409, 4294901760
      %v3615 = vsub.f32 %v2409, %v3614
      %v3616 = vand.u32 %v3615, 4294901760
      %3617 = vmatprep.subr.mxu0 %v3616
      %v3618 = vand.u32 %v2408, 4294901760
      %v3619 = vsub.f32 %v2408, %v3618
      %v3620 = vand.u32 %v3619, 4294901760
      %3621 = vmatpush1.msra.mxu0 %v3620
      %v3622 = vand.u32 %v2407, 4294901760
      %v3623 = vsub.f32 %v2407, %v3622
      %v3624 = vand.u32 %v3623, 4294901760
      %3625 = vmatprep.subr.mxu0 %v3624
      %v3626 = vand.u32 %v2406, 4294901760
      %v3627 = vsub.f32 %v2406, %v3626
      %v3628 = vand.u32 %v3627, 4294901760
      %3629 = vmatpush1.msra.mxu0 %v3628
      %v3630 = vand.u32 %v2405, 4294901760
      %v3631 = vsub.f32 %v2405, %v3630
      %v3632 = vand.u32 %v3631, 4294901760
      %3633 = vmatprep.subr.mxu0 %v3632
      %v3634 = vand.u32 %v2404, 4294901760
      %v3635 = vsub.f32 %v2404, %v3634
      %v3636 = vand.u32 %v3635, 4294901760
      %3637 = vmatpush1.msra.mxu0 %v3636
      %v3638 = vand.u32 %v2403, 4294901760
      %v3639 = vsub.f32 %v2403, %v3638
      %v3640 = vand.u32 %v3639, 4294901760
      %3641 = vmatprep.subr.mxu0 %v3640
      %v3642 = vand.u32 %v2402, 4294901760
      %v3643 = vsub.f32 %v2402, %v3642
      %v3644 = vand.u32 %v3643, 4294901760
      %3645 = vmatpush1.msra.mxu0 %v3644
      %v3646 = vand.u32 %v2401, 4294901760
      %v3647 = vsub.f32 %v2401, %v3646
      %v3648 = vand.u32 %v3647, 4294901760
      %3649 = vmatprep.subr.mxu0 %v3648
      %v3650 = vand.u32 %v2400, 4294901760
      %v3651 = vsub.f32 %v2400, %v3650
      %v3652 = vand.u32 %v3651, 4294901760
      %3653 = vmatpush1.msra.mxu0 %v3652
      %v3654 = vand.u32 %v2399, 4294901760
      %v3655 = vsub.f32 %v2399, %v3654
      %v3656 = vand.u32 %v3655, 4294901760
      %3657 = vmatprep.subr.mxu0 %v3656
      %v3658 = vand.u32 %v2398, 4294901760
      %v3659 = vsub.f32 %v2398, %v3658
      %v3660 = vand.u32 %v3659, 4294901760
      %3661 = vmatpush1.msra.mxu0 %v3660
      %v3662 = vand.u32 %v2397, 4294901760
      %v3663 = vsub.f32 %v2397, %v3662
      %v3664 = vand.u32 %v3663, 4294901760
      %3665 = vmatprep.subr.mxu0 %v3664
      %v3666 = vand.u32 %v2396, 4294901760
      %v3667 = vsub.f32 %v2396, %v3666
      %v3668 = vand.u32 %v3667, 4294901760
      %3669 = vmatpush1.msra.mxu0 %v3668
      %v3670 = vand.u32 %v2395, 4294901760
      %v3671 = vsub.f32 %v2395, %v3670
      %v3672 = vand.u32 %v3671, 4294901760
      %3673 = vmatprep.subr.mxu0 %v3672
      %v3674 = vand.u32 %v2394, 4294901760
      %v3675 = vsub.f32 %v2394, %v3674
      %v3676 = vand.u32 %v3675, 4294901760
      %3677 = vmatpush1.msra.mxu0 %v3676
      %3678 = vmatprep.subr.mxu0 0.0
      %3679 = vmatpush2.msra.mxu0 0.0
      %3680 = vmatprep.subr.mxu0 0.0
      %3681 = vmatpush2.msra.mxu0 0.0
      %3682 = vmatprep.subr.mxu0 0.0
      %3683 = vmatpush2.msra.mxu0 0.0
      %3684 = vmatprep.subr.mxu0 0.0
      %3685 = vmatpush2.msra.mxu0 0.0
      %3686 = vmatprep.subr.mxu0 0.0
      %3687 = vmatpush2.msra.mxu0 0.0
      %3688 = vmatprep.subr.mxu0 0.0
      %3689 = vmatpush2.msra.mxu0 0.0
      %3690 = vmatprep.subr.mxu0 0.0
      %3691 = vmatpush2.msra.mxu0 0.0
      %3692 = vmatprep.subr.mxu0 0.0
      %3693 = vmatpush2.msra.mxu0 0.0
      %3694 = vmatprep.subr.mxu0 0.0
      %3695 = vmatpush2.msra.mxu0 0.0
      %3696 = vmatprep.subr.mxu0 0.0
      %3697 = vmatpush2.msra.mxu0 0.0
      %3698 = vmatprep.subr.mxu0 0.0
      %3699 = vmatpush2.msra.mxu0 0.0
      %3700 = vmatprep.subr.mxu0 0.0
      %3701 = vmatpush2.msra.mxu0 0.0
      %3702 = vmatprep.subr.mxu0 0.0
      %3703 = vmatpush2.msra.mxu0 0.0
      %3704 = vmatprep.subr.mxu0 0.0
      %3705 = vmatpush2.msra.mxu0 0.0
      %3706 = vmatprep.subr.mxu0 0.0
      %3707 = vmatpush2.msra.mxu0 0.0
      %3708 = vmatprep.subr.mxu0 0.0
      %3709 = vmatpush2.msra.mxu0 0.0
      %3710 = vmatprep.mubr.f32.mxu0 0.0
      %v3711 = vand.u32 %v2426, 4294901760
      %3712 = vmatmul.mubr.f32.gmra.mxu0 %v3711
      %v3713 = vpop.f32.mrf.mxu0
      %v3714 = vadd.f32 %v3411, %v3713
      %v3715 = vpop.f32.mrf.mxu0
      %v3716 = vadd.f32 %v3413, %v3715
      %3717 = vmatprep.mubr.f32.mxu0 0.0
      %v3718 = vand.u32 %v2427, 4294901760
      %3719 = vmatmul.mubr.f32.gmra.mxu0 %v3718
      %v3720 = vpop.f32.mrf.mxu0
      %v3721 = vadd.f32 %v3420, %v3720
      %v3722 = vpop.f32.mrf.mxu0
      %v3723 = vadd.f32 %v3422, %v3722
      %3724 = vmatprep.mubr.f32.mxu0 0.0
      %v3725 = vand.u32 %v2428, 4294901760
      %3726 = vmatmul.mubr.f32.gmra.mxu0 %v3725
      %v3727 = vpop.f32.mrf.mxu0
      %v3728 = vadd.f32 %v3429, %v3727
      %v3729 = vpop.f32.mrf.mxu0
      %v3730 = vadd.f32 %v3431, %v3729
      %3731 = vmatprep.mubr.f32.mxu0 0.0
      %v3732 = vand.u32 %v2429, 4294901760
      %3733 = vmatmul.mubr.f32.gmra.mxu0 %v3732
      %v3734 = vpop.f32.mrf.mxu0
      %v3735 = vadd.f32 %v3438, %v3734
      %v3736 = vpop.f32.mrf.mxu0
      %v3737 = vadd.f32 %v3440, %v3736
      %3738 = vmatprep.mubr.f32.mxu0 0.0
      %v3739 = vand.u32 %v2430, 4294901760
      %3740 = vmatmul.mubr.f32.gmra.mxu0 %v3739
      %v3741 = vpop.f32.mrf.mxu0
      %v3742 = vadd.f32 %v3447, %v3741
      %v3743 = vpop.f32.mrf.mxu0
      %v3744 = vadd.f32 %v3449, %v3743
      %3745 = vmatprep.mubr.f32.mxu0 0.0
      %v3746 = vand.u32 %v2431, 4294901760
      %3747 = vmatmul.mubr.f32.gmra.mxu0 %v3746
      %v3748 = vpop.f32.mrf.mxu0
      %v3749 = vadd.f32 %v3456, %v3748
      %v3750 = vpop.f32.mrf.mxu0
      %v3751 = vadd.f32 %v3458, %v3750
      %3752 = vmatprep.mubr.f32.mxu0 0.0
      %v3753 = vand.u32 %v2432, 4294901760
      %3754 = vmatmul.mubr.f32.gmra.mxu0 %v3753
      %v3755 = vpop.f32.mrf.mxu0
      %v3756 = vadd.f32 %v3465, %v3755
      %v3757 = vpop.f32.mrf.mxu0
      %v3758 = vadd.f32 %v3467, %v3757
      %3759 = vmatprep.mubr.f32.mxu0 0.0
      %v3760 = vand.u32 %v2433, 4294901760
      %3761 = vmatmul.mubr.f32.gmra.mxu0 %v3760
      %v3762 = vpop.f32.mrf.mxu0
      %v3763 = vadd.f32 %v3474, %v3762
      %v3764 = vpop.f32.mrf.mxu0
      %v3765 = vadd.f32 %v3476, %v3764
      %3766 = vmatprep.mubr.f32.mxu0 0.0
      %v3767 = vand.u32 %v2434, 4294901760
      %3768 = vmatmul.mubr.f32.gmra.mxu0 %v3767
      %v3769 = vpop.f32.mrf.mxu0
      %v3770 = vadd.f32 %v3483, %v3769
      %v3771 = vpop.f32.mrf.mxu0
      %v3772 = vadd.f32 %v3485, %v3771
      %3773 = vmatprep.mubr.f32.mxu0 0.0
      %v3774 = vand.u32 %v2435, 4294901760
      %3775 = vmatmul.mubr.f32.gmra.mxu0 %v3774
      %v3776 = vpop.f32.mrf.mxu0
      %v3777 = vadd.f32 %v3492, %v3776
      %v3778 = vpop.f32.mrf.mxu0
      %v3779 = vadd.f32 %v3494, %v3778
      %3780 = vmatprep.mubr.f32.mxu0 0.0
      %v3781 = vand.u32 %v2436, 4294901760
      %3782 = vmatmul.mubr.f32.gmra.mxu0 %v3781
      %v3783 = vpop.f32.mrf.mxu0
      %v3784 = vadd.f32 %v3501, %v3783
      %v3785 = vpop.f32.mrf.mxu0
      %v3786 = vadd.f32 %v3503, %v3785
      %3787 = vmatprep.mubr.f32.mxu0 0.0
      %v3788 = vand.u32 %v2437, 4294901760
      %3789 = vmatmul.mubr.f32.gmra.mxu0 %v3788
      %v3790 = vpop.f32.mrf.mxu0
      %v3791 = vadd.f32 %v3510, %v3790
      %v3792 = vpop.f32.mrf.mxu0
      %v3793 = vadd.f32 %v3512, %v3792
      %3794 = vmatprep.mubr.f32.mxu0 0.0
      %v3795 = vand.u32 %v2438, 4294901760
      %3796 = vmatmul.mubr.f32.gmra.mxu0 %v3795
      %v3797 = vpop.f32.mrf.mxu0
      %v3798 = vadd.f32 %v3519, %v3797
      %v3799 = vpop.f32.mrf.mxu0
      %v3800 = vadd.f32 %v3521, %v3799
      %3801 = vmatprep.mubr.f32.mxu0 0.0
      %v3802 = vand.u32 %v2439, 4294901760
      %3803 = vmatmul.mubr.f32.gmra.mxu0 %v3802
      %v3804 = vpop.f32.mrf.mxu0
      %v3805 = vadd.f32 %v3528, %v3804
      %v3806 = vpop.f32.mrf.mxu0
      %v3807 = vadd.f32 %v3530, %v3806
      %3808 = vmatprep.mubr.f32.mxu0 0.0
      %v3809 = vand.u32 %v2440, 4294901760
      %3810 = vmatmul.mubr.f32.gmra.mxu0 %v3809
      %v3811 = vpop.f32.mrf.mxu0
      %v3812 = vadd.f32 %v3537, %v3811
      %v3813 = vpop.f32.mrf.mxu0
      %v3814 = vadd.f32 %v3539, %v3813
      %3815 = vmatprep.mubr.f32.mxu0 0.0
      %v3816 = vand.u32 %v2441, 4294901760
      %3817 = vmatmul.mubr.f32.gmra.mxu0 %v3816
      %v3818 = vpop.f32.mrf.mxu0
      %v3819 = vadd.f32 %v3546, %v3818
      %v3820 = vpop.f32.mrf.mxu0
      %v3821 = vadd.f32 %v3548, %v3820
      %3822 = vdwg.mxu0
      %v3823 = vand.u32 %v2425, 4294901760
      %3824 = vmatprep.subr.mxu0 %v3823
      %v3825 = vand.u32 %v2424, 4294901760
      %3826 = vmatpush1.msra.mxu0 %v3825
      %v3827 = vand.u32 %v2423, 4294901760
      %3828 = vmatprep.subr.mxu0 %v3827
      %v3829 = vand.u32 %v2422, 4294901760
      %3830 = vmatpush1.msra.mxu0 %v3829
      %v3831 = vand.u32 %v2421, 4294901760
      %3832 = vmatprep.subr.mxu0 %v3831
      %v3833 = vand.u32 %v2420, 4294901760
      %3834 = vmatpush1.msra.mxu0 %v3833
      %v3835 = vand.u32 %v2419, 4294901760
      %3836 = vmatprep.subr.mxu0 %v3835
      %v3837 = vand.u32 %v2418, 4294901760
      %3838 = vmatpush1.msra.mxu0 %v3837
      %v3839 = vand.u32 %v2417, 4294901760
      %3840 = vmatprep.subr.mxu0 %v3839
      %v3841 = vand.u32 %v2416, 4294901760
      %3842 = vmatpush1.msra.mxu0 %v3841
      %v3843 = vand.u32 %v2415, 4294901760
      %3844 = vmatprep.subr.mxu0 %v3843
      %v3845 = vand.u32 %v2414, 4294901760
      %3846 = vmatpush1.msra.mxu0 %v3845
      %v3847 = vand.u32 %v2413, 4294901760
      %3848 = vmatprep.subr.mxu0 %v3847
      %v3849 = vand.u32 %v2412, 4294901760
      %3850 = vmatpush1.msra.mxu0 %v3849
      %v3851 = vand.u32 %v2411, 4294901760
      %3852 = vmatprep.subr.mxu0 %v3851
      %v3853 = vand.u32 %v2410, 4294901760
      %3854 = vmatpush1.msra.mxu0 %v3853
      %v3855 = vand.u32 %v2409, 4294901760
      %3856 = vmatprep.subr.mxu0 %v3855
      %v3857 = vand.u32 %v2408, 4294901760
      %3858 = vmatpush1.msra.mxu0 %v3857
      %v3859 = vand.u32 %v2407, 4294901760
      %3860 = vmatprep.subr.mxu0 %v3859
      %v3861 = vand.u32 %v2406, 4294901760
      %3862 = vmatpush1.msra.mxu0 %v3861
      %v3863 = vand.u32 %v2405, 4294901760
      %3864 = vmatprep.subr.mxu0 %v3863
      %v3865 = vand.u32 %v2404, 4294901760
      %3866 = vmatpush1.msra.mxu0 %v3865
      %v3867 = vand.u32 %v2403, 4294901760
      %3868 = vmatprep.subr.mxu0 %v3867
      %v3869 = vand.u32 %v2402, 4294901760
      %3870 = vmatpush1.msra.mxu0 %v3869
      %v3871 = vand.u32 %v2401, 4294901760
      %3872 = vmatprep.subr.mxu0 %v3871
      %v3873 = vand.u32 %v2400, 4294901760
      %3874 = vmatpush1.msra.mxu0 %v3873
      %v3875 = vand.u32 %v2399, 4294901760
      %3876 = vmatprep.subr.mxu0 %v3875
      %v3877 = vand.u32 %v2398, 4294901760
      %3878 = vmatpush1.msra.mxu0 %v3877
      %v3879 = vand.u32 %v2397, 4294901760
      %3880 = vmatprep.subr.mxu0 %v3879
      %v3881 = vand.u32 %v2396, 4294901760
      %3882 = vmatpush1.msra.mxu0 %v3881
      %v3883 = vand.u32 %v2395, 4294901760
      %3884 = vmatprep.subr.mxu0 %v3883
      %v3885 = vand.u32 %v2394, 4294901760
      %3886 = vmatpush1.msra.mxu0 %v3885
      %3887 = vmatprep.subr.mxu0 0.0
      %3888 = vmatpush2.msra.mxu0 0.0
      %3889 = vmatprep.subr.mxu0 0.0
      %3890 = vmatpush2.msra.mxu0 0.0
      %3891 = vmatprep.subr.mxu0 0.0
      %3892 = vmatpush2.msra.mxu0 0.0
      %3893 = vmatprep.subr.mxu0 0.0
      %3894 = vmatpush2.msra.mxu0 0.0
      %3895 = vmatprep.subr.mxu0 0.0
      %3896 = vmatpush2.msra.mxu0 0.0
      %3897 = vmatprep.subr.mxu0 0.0
      %3898 = vmatpush2.msra.mxu0 0.0
      %3899 = vmatprep.subr.mxu0 0.0
      %3900 = vmatpush2.msra.mxu0 0.0
      %3901 = vmatprep.subr.mxu0 0.0
      %3902 = vmatpush2.msra.mxu0 0.0
      %3903 = vmatprep.subr.mxu0 0.0
      %3904 = vmatpush2.msra.mxu0 0.0
      %3905 = vmatprep.subr.mxu0 0.0
      %3906 = vmatpush2.msra.mxu0 0.0
      %3907 = vmatprep.subr.mxu0 0.0
      %3908 = vmatpush2.msra.mxu0 0.0
      %3909 = vmatprep.subr.mxu0 0.0
      %3910 = vmatpush2.msra.mxu0 0.0
      %3911 = vmatprep.subr.mxu0 0.0
      %3912 = vmatpush2.msra.mxu0 0.0
      %3913 = vmatprep.subr.mxu0 0.0
      %3914 = vmatpush2.msra.mxu0 0.0
      %3915 = vmatprep.subr.mxu0 0.0
      %3916 = vmatpush2.msra.mxu0 0.0
      %3917 = vmatprep.subr.mxu0 0.0
      %3918 = vmatpush2.msra.mxu0 0.0
      %3919 = vmatprep.mubr.f32.mxu0 0.0
      %v3920 = vand.u32 %v2426, 4294901760
      %3921 = vmatmul.mubr.f32.gmra.mxu0 %v3920
      %v3922 = vpop.f32.mrf.mxu0
      %v3923 = vadd.f32 %v3714, %v3922
      %v3924 = vpop.f32.mrf.mxu0
      %v3925 = vadd.f32 %v3716, %v3924
      %3926 = vmatprep.mubr.f32.mxu0 0.0
      %v3927 = vand.u32 %v2427, 4294901760
      %3928 = vmatmul.mubr.f32.gmra.mxu0 %v3927
      %v3929 = vpop.f32.mrf.mxu0
      %v3930 = vadd.f32 %v3721, %v3929
      %v3931 = vpop.f32.mrf.mxu0
      %v3932 = vadd.f32 %v3723, %v3931
      %3933 = vmatprep.mubr.f32.mxu0 0.0
      %v3934 = vand.u32 %v2428, 4294901760
      %3935 = vmatmul.mubr.f32.gmra.mxu0 %v3934
      %v3936 = vpop.f32.mrf.mxu0
      %v3937 = vadd.f32 %v3728, %v3936
      %v3938 = vpop.f32.mrf.mxu0
      %v3939 = vadd.f32 %v3730, %v3938
      %3940 = vmatprep.mubr.f32.mxu0 0.0
      %v3941 = vand.u32 %v2429, 4294901760
      %3942 = vmatmul.mubr.f32.gmra.mxu0 %v3941
      %v3943 = vpop.f32.mrf.mxu0
      %v3944 = vadd.f32 %v3735, %v3943
      %v3945 = vpop.f32.mrf.mxu0
      %v3946 = vadd.f32 %v3737, %v3945
      %3947 = vmatprep.mubr.f32.mxu0 0.0
      %v3948 = vand.u32 %v2430, 4294901760
      %3949 = vmatmul.mubr.f32.gmra.mxu0 %v3948
      %v3950 = vpop.f32.mrf.mxu0
      %v3951 = vadd.f32 %v3742, %v3950
      %v3952 = vpop.f32.mrf.mxu0
      %v3953 = vadd.f32 %v3744, %v3952
      %3954 = vmatprep.mubr.f32.mxu0 0.0
      %v3955 = vand.u32 %v2431, 4294901760
      %3956 = vmatmul.mubr.f32.gmra.mxu0 %v3955
      %v3957 = vpop.f32.mrf.mxu0
      %v3958 = vadd.f32 %v3749, %v3957
      %v3959 = vpop.f32.mrf.mxu0
      %v3960 = vadd.f32 %v3751, %v3959
      %3961 = vmatprep.mubr.f32.mxu0 0.0
      %v3962 = vand.u32 %v2432, 4294901760
      %3963 = vmatmul.mubr.f32.gmra.mxu0 %v3962
      %v3964 = vpop.f32.mrf.mxu0
      %v3965 = vadd.f32 %v3756, %v3964
      %v3966 = vpop.f32.mrf.mxu0
      %v3967 = vadd.f32 %v3758, %v3966
      %3968 = vmatprep.mubr.f32.mxu0 0.0
      %v3969 = vand.u32 %v2433, 4294901760
      %3970 = vmatmul.mubr.f32.gmra.mxu0 %v3969
      %v3971 = vpop.f32.mrf.mxu0
      %v3972 = vadd.f32 %v3763, %v3971
      %v3973 = vpop.f32.mrf.mxu0
      %v3974 = vadd.f32 %v3765, %v3973
      %3975 = vmatprep.mubr.f32.mxu0 0.0
      %v3976 = vand.u32 %v2434, 4294901760
      %3977 = vmatmul.mubr.f32.gmra.mxu0 %v3976
      %v3978 = vpop.f32.mrf.mxu0
      %v3979 = vadd.f32 %v3770, %v3978
      %v3980 = vpop.f32.mrf.mxu0
      %v3981 = vadd.f32 %v3772, %v3980
      %3982 = vmatprep.mubr.f32.mxu0 0.0
      %v3983 = vand.u32 %v2435, 4294901760
      %3984 = vmatmul.mubr.f32.gmra.mxu0 %v3983
      %v3985 = vpop.f32.mrf.mxu0
      %v3986 = vadd.f32 %v3777, %v3985
      %v3987 = vpop.f32.mrf.mxu0
      %v3988 = vadd.f32 %v3779, %v3987
      %3989 = vmatprep.mubr.f32.mxu0 0.0
      %v3990 = vand.u32 %v2436, 4294901760
      %3991 = vmatmul.mubr.f32.gmra.mxu0 %v3990
      %v3992 = vpop.f32.mrf.mxu0
      %v3993 = vadd.f32 %v3784, %v3992
      %v3994 = vpop.f32.mrf.mxu0
      %v3995 = vadd.f32 %v3786, %v3994
      %3996 = vmatprep.mubr.f32.mxu0 0.0
      %v3997 = vand.u32 %v2437, 4294901760
      %3998 = vmatmul.mubr.f32.gmra.mxu0 %v3997
      %v3999 = vpop.f32.mrf.mxu0
      %v4000 = vadd.f32 %v3791, %v3999
      %v4001 = vpop.f32.mrf.mxu0
      %v4002 = vadd.f32 %v3793, %v4001
      %4003 = vmatprep.mubr.f32.mxu0 0.0
      %v4004 = vand.u32 %v2438, 4294901760
      %4005 = vmatmul.mubr.f32.gmra.mxu0 %v4004
      %v4006 = vpop.f32.mrf.mxu0
      %v4007 = vadd.f32 %v3798, %v4006
      %v4008 = vpop.f32.mrf.mxu0
      %v4009 = vadd.f32 %v3800, %v4008
      %4010 = vmatprep.mubr.f32.mxu0 0.0
      %v4011 = vand.u32 %v2439, 4294901760
      %4012 = vmatmul.mubr.f32.gmra.mxu0 %v4011
      %v4013 = vpop.f32.mrf.mxu0
      %v4014 = vadd.f32 %v3805, %v4013
      %v4015 = vpop.f32.mrf.mxu0
      %v4016 = vadd.f32 %v3807, %v4015
      %4017 = vmatprep.mubr.f32.mxu0 0.0
      %v4018 = vand.u32 %v2440, 4294901760
      %4019 = vmatmul.mubr.f32.gmra.mxu0 %v4018
      %v4020 = vpop.f32.mrf.mxu0
      %v4021 = vadd.f32 %v3812, %v4020
      %v4022 = vpop.f32.mrf.mxu0
      %v4023 = vadd.f32 %v3814, %v4022
      %4024 = vmatprep.mubr.f32.mxu0 0.0
      %v4025 = vand.u32 %v2441, 4294901760
      %4026 = vmatmul.mubr.f32.gmra.mxu0 %v4025
      %v4027 = vpop.f32.mrf.mxu0
      %v4028 = vadd.f32 %v3819, %v4027
      %v4029 = vpop.f32.mrf.mxu0
      %v4030 = vadd.f32 %v3821, %v4029
      %4031 = vdwg.mxu0
      %v4032 = vmax.f32 %v3923, %v3925
      %v4033 = vmax.f32 %v3930, %v3932
      %v4034 = vmax.f32 %v3937, %v3939
      %v4035 = vmax.f32 %v3944, %v3946
      %v4036 = vmax.f32 %v3951, %v3953
      %v4037 = vmax.f32 %v3958, %v3960
      %v4038 = vmax.f32 %v3965, %v3967
      %v4039 = vmax.f32 %v3972, %v3974
      %v4040 = vmax.f32 %v3979, %v3981
      %v4041 = vmax.f32 %v3986, %v3988
      %v4042 = vmax.f32 %v3993, %v3995
      %v4043 = vmax.f32 %v4000, %v4002
      %v4044 = vmax.f32 %v4007, %v4009
      %v4045 = vmax.f32 %v4014, %v4016
      %v4046 = vmax.f32 %v4021, %v4023
      %v4047 = vmax.f32 %v4028, %v4030
      %v4048 = vld [vmem:[#allocation2] sm:$0xff]
      %v4049 = vld [vmem:[#allocation2 + $0x8] sm:$0xff]
      %v4050 = vld [vmem:[#allocation2 + $0x10] sm:$0xff]
      %v4051 = vld [vmem:[#allocation2 + $0x18] sm:$0xff]
      %v4052 = vld [vmem:[#allocation2 + $0x20] sm:$0xff]
      %v4053 = vld [vmem:[#allocation2 + $0x28] sm:$0xff]
      %v4054 = vld [vmem:[#allocation2 + $0x30] sm:$0xff]
      %v4055 = vld [vmem:[#allocation2 + $0x38] sm:$0xff]
      %v4056 = vld [vmem:[#allocation2 + $0x40] sm:$0xff]
      %v4057 = vld [vmem:[#allocation2 + $0x48] sm:$0xff]
      %v4058 = vld [vmem:[#allocation2 + $0x50] sm:$0xff]
      %v4059 = vld [vmem:[#allocation2 + $0x58] sm:$0xff]
      %v4060 = vld [vmem:[#allocation2 + $0x60] sm:$0xff]
      %v4061 = vld [vmem:[#allocation2 + $0x68] sm:$0xff]
      %v4062 = vld [vmem:[#allocation2 + $0x70] sm:$0xff]
      %v4063 = vld [vmem:[#allocation2 + $0x78] sm:$0xff]
      %v4064 = vmax.f32 %v4048, %v4032
      %v4065 = vmax.f32 %v4049, %v4033
      %v4066 = vmax.f32 %v4050, %v4034
      %v4067 = vmax.f32 %v4051, %v4035
      %v4068 = vmax.f32 %v4052, %v4036
      %v4069 = vmax.f32 %v4053, %v4037
      %v4070 = vmax.f32 %v4054, %v4038
      %v4071 = vmax.f32 %v4055, %v4039
      %v4072 = vmax.f32 %v4056, %v4040
      %v4073 = vmax.f32 %v4057, %v4041
      %v4074 = vmax.f32 %v4058, %v4042
      %v4075 = vmax.f32 %v4059, %v4043
      %v4076 = vmax.f32 %v4060, %v4044
      %v4077 = vmax.f32 %v4061, %v4045
      %v4078 = vmax.f32 %v4062, %v4046
      %v4079 = vmax.f32 %v4063, %v4047
      %4080 = vst [vmem:[#allocation2] sm:$0xff] %v4064
      %4081 = vst [vmem:[#allocation2 + $0x8] sm:$0xff] %v4065
      %4082 = vst [vmem:[#allocation2 + $0x10] sm:$0xff] %v4066
      %4083 = vst [vmem:[#allocation2 + $0x18] sm:$0xff] %v4067
      %4084 = vst [vmem:[#allocation2 + $0x20] sm:$0xff] %v4068
      %4085 = vst [vmem:[#allocation2 + $0x28] sm:$0xff] %v4069
      %4086 = vst [vmem:[#allocation2 + $0x30] sm:$0xff] %v4070
      %4087 = vst [vmem:[#allocation2 + $0x38] sm:$0xff] %v4071
      %4088 = vst [vmem:[#allocation2 + $0x40] sm:$0xff] %v4072
      %4089 = vst [vmem:[#allocation2 + $0x48] sm:$0xff] %v4073
      %4090 = vst [vmem:[#allocation2 + $0x50] sm:$0xff] %v4074
      %4091 = vst [vmem:[#allocation2 + $0x58] sm:$0xff] %v4075
      %4092 = vst [vmem:[#allocation2 + $0x60] sm:$0xff] %v4076
      %4093 = vst [vmem:[#allocation2 + $0x68] sm:$0xff] %v4077
      %4094 = vst [vmem:[#allocation2 + $0x70] sm:$0xff] %v4078
      %4095 = vst [vmem:[#allocation2 + $0x78] sm:$0xff] %v4079
      %p4096 = scmp.eq.s32.totalorder %s29, 3
      // Predicated region
      $region77: #{tpu_custom_call.1} parent=71 // pred_check
        %p4097 = pneg %p4096
      $region78: #{tpu_custom_call.1} parent=71 // pred_check_branch
        %4099 = sbr.rel (%p4097) target = $region80
      $region79: #{tpu_custom_call.1} parent=71 // pred_region
        %v4100 = vld [vmem:[#allocation2] sm:$0xff]
        %v4101 = vld [vmem:[#allocation2 + $0x8] sm:$0xff]
        %v4102 = vld [vmem:[#allocation2 + $0x10] sm:$0xff]
        %v4103 = vld [vmem:[#allocation2 + $0x18] sm:$0xff]
        %v4104 = vld [vmem:[#allocation2 + $0x20] sm:$0xff]
        %v4105 = vld [vmem:[#allocation2 + $0x28] sm:$0xff]
        %v4106 = vld [vmem:[#allocation2 + $0x30] sm:$0xff]
        %v4107 = vld [vmem:[#allocation2 + $0x38] sm:$0xff]
        %v4108 = vld [vmem:[#allocation2 + $0x40] sm:$0xff]
        %v4109 = vld [vmem:[#allocation2 + $0x48] sm:$0xff]
        %v4110 = vld [vmem:[#allocation2 + $0x50] sm:$0xff]
        %v4111 = vld [vmem:[#allocation2 + $0x58] sm:$0xff]
        %v4112 = vld [vmem:[#allocation2 + $0x60] sm:$0xff]
        %v4113 = vld [vmem:[#allocation2 + $0x68] sm:$0xff]
        %v4114 = vld [vmem:[#allocation2 + $0x70] sm:$0xff]
        %v4115 = vld [vmem:[#allocation2 + $0x78] sm:$0xff]
        %4116 = vmax.xlane.f32.xlu0 %v4100
        %v4117 = vpop.xlane.xlu0 %4116
        %4118 = vmax.xlane.f32.xlu0 %v4101
        %v4119 = vpop.xlane.xlu0 %4118
        %4120 = vmax.xlane.f32.xlu0 %v4102
        %v4121 = vpop.xlane.xlu0 %4120
        %4122 = vmax.xlane.f32.xlu0 %v4103
        %v4123 = vpop.xlane.xlu0 %4122
        %4124 = vmax.xlane.f32.xlu0 %v4104
        %v4125 = vpop.xlane.xlu0 %4124
        %4126 = vmax.xlane.f32.xlu0 %v4105
        %v4127 = vpop.xlane.xlu0 %4126
        %4128 = vmax.xlane.f32.xlu0 %v4106
        %v4129 = vpop.xlane.xlu0 %4128
        %4130 = vmax.xlane.f32.xlu0 %v4107
        %v4131 = vpop.xlane.xlu0 %4130
        %4132 = vmax.xlane.f32.xlu0 %v4108
        %v4133 = vpop.xlane.xlu0 %4132
        %4134 = vmax.xlane.f32.xlu0 %v4109
        %v4135 = vpop.xlane.xlu0 %4134
        %4136 = vmax.xlane.f32.xlu0 %v4110
        %v4137 = vpop.xlane.xlu0 %4136
        %4138 = vmax.xlane.f32.xlu0 %v4111
        %v4139 = vpop.xlane.xlu0 %4138
        %4140 = vmax.xlane.f32.xlu0 %v4112
        %v4141 = vpop.xlane.xlu0 %4140
        %4142 = vmax.xlane.f32.xlu0 %v4113
        %v4143 = vpop.xlane.xlu0 %4142
        %4144 = vmax.xlane.f32.xlu0 %v4114
        %v4145 = vpop.xlane.xlu0 %4144
        %4146 = vmax.xlane.f32.xlu0 %v4115
        %v4147 = vpop.xlane.xlu0 %4146
        %v4148 = vld [vmem:[%s6] sm:$0xff]
        %v4149 = vld [vmem:[%s6 + $0x8] sm:$0xff]
        %v4150 = vld [vmem:[%s6 + $0x10] sm:$0xff]
        %v4151 = vld [vmem:[%s6 + $0x18] sm:$0xff]
        %v4152 = vld [vmem:[%s6 + $0x20] sm:$0xff]
        %v4153 = vld [vmem:[%s6 + $0x28] sm:$0xff]
        %v4154 = vld [vmem:[%s6 + $0x30] sm:$0xff]
        %v4155 = vld [vmem:[%s6 + $0x38] sm:$0xff]
        %v4156 = vld [vmem:[%s6 + $0x40] sm:$0xff]
        %v4157 = vld [vmem:[%s6 + $0x48] sm:$0xff]
        %v4158 = vld [vmem:[%s6 + $0x50] sm:$0xff]
        %v4159 = vld [vmem:[%s6 + $0x58] sm:$0xff]
        %v4160 = vld [vmem:[%s6 + $0x60] sm:$0xff]
        %v4161 = vld [vmem:[%s6 + $0x68] sm:$0xff]
        %v4162 = vld [vmem:[%s6 + $0x70] sm:$0xff]
        %v4163 = vld [vmem:[%s6 + $0x78] sm:$0xff]
        %v4164 = vadd.f32 %v4117, %v4148
        %v4165 = vadd.f32 %v4119, %v4149
        %v4166 = vadd.f32 %v4121, %v4150
        %v4167 = vadd.f32 %v4123, %v4151
        %v4168 = vadd.f32 %v4125, %v4152
        %v4169 = vadd.f32 %v4127, %v4153
        %v4170 = vadd.f32 %v4129, %v4154
        %v4171 = vadd.f32 %v4131, %v4155
        %v4172 = vadd.f32 %v4133, %v4156
        %v4173 = vadd.f32 %v4135, %v4157
        %v4174 = vadd.f32 %v4137, %v4158
        %v4175 = vadd.f32 %v4139, %v4159
        %v4176 = vadd.f32 %v4141, %v4160
        %v4177 = vadd.f32 %v4143, %v4161
        %v4178 = vadd.f32 %v4145, %v4162
        %v4179 = vadd.f32 %v4147, %v4163
        %v4180 = vmax.f32 %v4164, 0.0
        %v4181 = vmax.f32 %v4165, 0.0
        %v4182 = vmax.f32 %v4166, 0.0
        %v4183 = vmax.f32 %v4167, 0.0
        %v4184 = vmax.f32 %v4168, 0.0
        %v4185 = vmax.f32 %v4169, 0.0
        %v4186 = vmax.f32 %v4170, 0.0
        %v4187 = vmax.f32 %v4171, 0.0
        %v4188 = vmax.f32 %v4172, 0.0
        %v4189 = vmax.f32 %v4173, 0.0
        %v4190 = vmax.f32 %v4174, 0.0
        %v4191 = vmax.f32 %v4175, 0.0
        %v4192 = vmax.f32 %v4176, 0.0
        %v4193 = vmax.f32 %v4177, 0.0
        %v4194 = vmax.f32 %v4178, 0.0
        %v4195 = vmax.f32 %v4179, 0.0
        %v4196 = vld [vmem:[%s7] sm:$0xff]
        %v4197 = vld [vmem:[%s7 + $0x8] sm:$0xff]
        %v4198 = vld [vmem:[%s7 + $0x10] sm:$0xff]
        %v4199 = vld [vmem:[%s7 + $0x18] sm:$0xff]
        %v4200 = vld [vmem:[%s7 + $0x20] sm:$0xff]
        %v4201 = vld [vmem:[%s7 + $0x28] sm:$0xff]
        %v4202 = vld [vmem:[%s7 + $0x30] sm:$0xff]
        %v4203 = vld [vmem:[%s7 + $0x38] sm:$0xff]
        %v4204 = vld [vmem:[%s7 + $0x40] sm:$0xff]
        %v4205 = vld [vmem:[%s7 + $0x48] sm:$0xff]
        %v4206 = vld [vmem:[%s7 + $0x50] sm:$0xff]
        %v4207 = vld [vmem:[%s7 + $0x58] sm:$0xff]
        %v4208 = vld [vmem:[%s7 + $0x60] sm:$0xff]
        %v4209 = vld [vmem:[%s7 + $0x68] sm:$0xff]
        %v4210 = vld [vmem:[%s7 + $0x70] sm:$0xff]
        %v4211 = vld [vmem:[%s7 + $0x78] sm:$0xff]
        %v4212 = vld [vmem:[%s8] sm:$0xff]
        %v4213 = vld [vmem:[%s8 + $0x8] sm:$0xff]
        %v4214 = vld [vmem:[%s8 + $0x10] sm:$0xff]
        %v4215 = vld [vmem:[%s8 + $0x18] sm:$0xff]
        %v4216 = vld [vmem:[%s8 + $0x20] sm:$0xff]
        %v4217 = vld [vmem:[%s8 + $0x28] sm:$0xff]
        %v4218 = vld [vmem:[%s8 + $0x30] sm:$0xff]
        %v4219 = vld [vmem:[%s8 + $0x38] sm:$0xff]
        %v4220 = vld [vmem:[%s8 + $0x40] sm:$0xff]
        %v4221 = vld [vmem:[%s8 + $0x48] sm:$0xff]
        %v4222 = vld [vmem:[%s8 + $0x50] sm:$0xff]
        %v4223 = vld [vmem:[%s8 + $0x58] sm:$0xff]
        %v4224 = vld [vmem:[%s8 + $0x60] sm:$0xff]
        %v4225 = vld [vmem:[%s8 + $0x68] sm:$0xff]
        %v4226 = vld [vmem:[%s8 + $0x70] sm:$0xff]
        %v4227 = vld [vmem:[%s8 + $0x78] sm:$0xff]
        %4228 = vmatprep.subr.mxu0 0.0
        %v4229 = vand.u32 %v4195, 4294901760
        %4230 = vmatpush1.msra.mxu0 %v4229
        %4231 = vmatprep.subr.mxu0 0.0
        %v4232 = vand.u32 %v4194, 4294901760
        %4233 = vmatpush1.msra.mxu0 %v4232
        %4234 = vmatprep.subr.mxu0 0.0
        %v4235 = vand.u32 %v4193, 4294901760
        %4236 = vmatpush1.msra.mxu0 %v4235
        %4237 = vmatprep.subr.mxu0 0.0
        %v4238 = vand.u32 %v4192, 4294901760
        %4239 = vmatpush1.msra.mxu0 %v4238
        %4240 = vmatprep.subr.mxu0 0.0
        %v4241 = vand.u32 %v4191, 4294901760
        %4242 = vmatpush1.msra.mxu0 %v4241
        %4243 = vmatprep.subr.mxu0 0.0
        %v4244 = vand.u32 %v4190, 4294901760
        %4245 = vmatpush1.msra.mxu0 %v4244
        %4246 = vmatprep.subr.mxu0 0.0
        %v4247 = vand.u32 %v4189, 4294901760
        %4248 = vmatpush1.msra.mxu0 %v4247
        %4249 = vmatprep.subr.mxu0 0.0
        %v4250 = vand.u32 %v4188, 4294901760
        %4251 = vmatpush1.msra.mxu0 %v4250
        %4252 = vmatprep.subr.mxu0 0.0
        %v4253 = vand.u32 %v4187, 4294901760
        %4254 = vmatpush1.msra.mxu0 %v4253
        %4255 = vmatprep.subr.mxu0 0.0
        %v4256 = vand.u32 %v4186, 4294901760
        %4257 = vmatpush1.msra.mxu0 %v4256
        %4258 = vmatprep.subr.mxu0 0.0
        %v4259 = vand.u32 %v4185, 4294901760
        %4260 = vmatpush1.msra.mxu0 %v4259
        %4261 = vmatprep.subr.mxu0 0.0
        %v4262 = vand.u32 %v4184, 4294901760
        %4263 = vmatpush1.msra.mxu0 %v4262
        %4264 = vmatprep.subr.mxu0 0.0
        %v4265 = vand.u32 %v4183, 4294901760
        %4266 = vmatpush1.msra.mxu0 %v4265
        %4267 = vmatprep.subr.mxu0 0.0
        %v4268 = vand.u32 %v4182, 4294901760
        %4269 = vmatpush1.msra.mxu0 %v4268
        %4270 = vmatprep.subr.mxu0 0.0
        %v4271 = vand.u32 %v4181, 4294901760
        %4272 = vmatpush1.msra.mxu0 %v4271
        %4273 = vmatprep.subr.mxu0 0.0
        %v4274 = vand.u32 %v4180, 4294901760
        %4275 = vmatpush1.msra.mxu0 %v4274
        %4276 = vmatprep.subr.mxu0 0.0
        %4277 = vmatpush2.msra.mxu0 0.0
        %4278 = vmatprep.subr.mxu0 0.0
        %4279 = vmatpush2.msra.mxu0 0.0
        %4280 = vmatprep.subr.mxu0 0.0
        %4281 = vmatpush2.msra.mxu0 0.0
        %4282 = vmatprep.subr.mxu0 0.0
        %4283 = vmatpush2.msra.mxu0 0.0
        %4284 = vmatprep.subr.mxu0 0.0
        %4285 = vmatpush2.msra.mxu0 0.0
        %4286 = vmatprep.subr.mxu0 0.0
        %4287 = vmatpush2.msra.mxu0 0.0
        %4288 = vmatprep.subr.mxu0 0.0
        %4289 = vmatpush2.msra.mxu0 0.0
        %4290 = vmatprep.subr.mxu0 0.0
        %4291 = vmatpush2.msra.mxu0 0.0
        %4292 = vmatprep.subr.mxu0 0.0
        %4293 = vmatpush2.msra.mxu0 0.0
        %4294 = vmatprep.subr.mxu0 0.0
        %4295 = vmatpush2.msra.mxu0 0.0
        %4296 = vmatprep.subr.mxu0 0.0
        %4297 = vmatpush2.msra.mxu0 0.0
        %4298 = vmatprep.subr.mxu0 0.0
        %4299 = vmatpush2.msra.mxu0 0.0
        %4300 = vmatprep.subr.mxu0 0.0
        %4301 = vmatpush2.msra.mxu0 0.0
        %4302 = vmatprep.subr.mxu0 0.0
        %4303 = vmatpush2.msra.mxu0 0.0
        %4304 = vmatprep.subr.mxu0 0.0
        %4305 = vmatpush2.msra.mxu0 0.0
        %4306 = vmatprep.subr.mxu0 0.0
        %4307 = vmatpush2.msra.mxu0 0.0
        %4308 = vmatprep.mubr.f32.mxu0 0.0
        %v4309 = vand.u32 %v4196, 4294901760
        %v4310 = vsub.f32 %v4196, %v4309
        %v4311 = vand.u32 %v4310, 4294901760
        %v4312 = vsub.f32 %v4310, %v4311
        %v4313 = vand.u32 %v4312, 4294901760
        %4314 = vmatmul.mubr.f32.gmra.mxu0 %v4313
        %v4315 = vpop.f32.mrf.mxu0
        %v4316 = vadd.f32 %v4212, %v4315
        %v4317 = vpop.f32.mrf.mxu0
        %4318 = vmatprep.mubr.f32.mxu0 0.0
        %v4319 = vand.u32 %v4197, 4294901760
        %v4320 = vsub.f32 %v4197, %v4319
        %v4321 = vand.u32 %v4320, 4294901760
        %v4322 = vsub.f32 %v4320, %v4321
        %v4323 = vand.u32 %v4322, 4294901760
        %4324 = vmatmul.mubr.f32.gmra.mxu0 %v4323
        %v4325 = vpop.f32.mrf.mxu0
        %v4326 = vadd.f32 %v4213, %v4325
        %v4327 = vpop.f32.mrf.mxu0
        %4328 = vmatprep.mubr.f32.mxu0 0.0
        %v4329 = vand.u32 %v4198, 4294901760
        %v4330 = vsub.f32 %v4198, %v4329
        %v4331 = vand.u32 %v4330, 4294901760
        %v4332 = vsub.f32 %v4330, %v4331
        %v4333 = vand.u32 %v4332, 4294901760
        %4334 = vmatmul.mubr.f32.gmra.mxu0 %v4333
        %v4335 = vpop.f32.mrf.mxu0
        %v4336 = vadd.f32 %v4214, %v4335
        %v4337 = vpop.f32.mrf.mxu0
        %4338 = vmatprep.mubr.f32.mxu0 0.0
        %v4339 = vand.u32 %v4199, 4294901760
        %v4340 = vsub.f32 %v4199, %v4339
        %v4341 = vand.u32 %v4340, 4294901760
        %v4342 = vsub.f32 %v4340, %v4341
        %v4343 = vand.u32 %v4342, 4294901760
        %4344 = vmatmul.mubr.f32.gmra.mxu0 %v4343
        %v4345 = vpop.f32.mrf.mxu0
        %v4346 = vadd.f32 %v4215, %v4345
        %v4347 = vpop.f32.mrf.mxu0
        %4348 = vmatprep.mubr.f32.mxu0 0.0
        %v4349 = vand.u32 %v4200, 4294901760
        %v4350 = vsub.f32 %v4200, %v4349
        %v4351 = vand.u32 %v4350, 4294901760
        %v4352 = vsub.f32 %v4350, %v4351
        %v4353 = vand.u32 %v4352, 4294901760
        %4354 = vmatmul.mubr.f32.gmra.mxu0 %v4353
        %v4355 = vpop.f32.mrf.mxu0
        %v4356 = vadd.f32 %v4216, %v4355
        %v4357 = vpop.f32.mrf.mxu0
        %4358 = vmatprep.mubr.f32.mxu0 0.0
        %v4359 = vand.u32 %v4201, 4294901760
        %v4360 = vsub.f32 %v4201, %v4359
        %v4361 = vand.u32 %v4360, 4294901760
        %v4362 = vsub.f32 %v4360, %v4361
        %v4363 = vand.u32 %v4362, 4294901760
        %4364 = vmatmul.mubr.f32.gmra.mxu0 %v4363
        %v4365 = vpop.f32.mrf.mxu0
        %v4366 = vadd.f32 %v4217, %v4365
        %v4367 = vpop.f32.mrf.mxu0
        %4368 = vmatprep.mubr.f32.mxu0 0.0
        %v4369 = vand.u32 %v4202, 4294901760
        %v4370 = vsub.f32 %v4202, %v4369
        %v4371 = vand.u32 %v4370, 4294901760
        %v4372 = vsub.f32 %v4370, %v4371
        %v4373 = vand.u32 %v4372, 4294901760
        %4374 = vmatmul.mubr.f32.gmra.mxu0 %v4373
        %v4375 = vpop.f32.mrf.mxu0
        %v4376 = vadd.f32 %v4218, %v4375
        %v4377 = vpop.f32.mrf.mxu0
        %4378 = vmatprep.mubr.f32.mxu0 0.0
        %v4379 = vand.u32 %v4203, 4294901760
        %v4380 = vsub.f32 %v4203, %v4379
        %v4381 = vand.u32 %v4380, 4294901760
        %v4382 = vsub.f32 %v4380, %v4381
        %v4383 = vand.u32 %v4382, 4294901760
        %4384 = vmatmul.mubr.f32.gmra.mxu0 %v4383
        %v4385 = vpop.f32.mrf.mxu0
        %v4386 = vadd.f32 %v4219, %v4385
        %v4387 = vpop.f32.mrf.mxu0
        %4388 = vmatprep.mubr.f32.mxu0 0.0
        %v4389 = vand.u32 %v4204, 4294901760
        %v4390 = vsub.f32 %v4204, %v4389
        %v4391 = vand.u32 %v4390, 4294901760
        %v4392 = vsub.f32 %v4390, %v4391
        %v4393 = vand.u32 %v4392, 4294901760
        %4394 = vmatmul.mubr.f32.gmra.mxu0 %v4393
        %v4395 = vpop.f32.mrf.mxu0
        %v4396 = vadd.f32 %v4220, %v4395
        %v4397 = vpop.f32.mrf.mxu0
        %4398 = vmatprep.mubr.f32.mxu0 0.0
        %v4399 = vand.u32 %v4205, 4294901760
        %v4400 = vsub.f32 %v4205, %v4399
        %v4401 = vand.u32 %v4400, 4294901760
        %v4402 = vsub.f32 %v4400, %v4401
        %v4403 = vand.u32 %v4402, 4294901760
        %4404 = vmatmul.mubr.f32.gmra.mxu0 %v4403
        %v4405 = vpop.f32.mrf.mxu0
        %v4406 = vadd.f32 %v4221, %v4405
        %v4407 = vpop.f32.mrf.mxu0
        %4408 = vmatprep.mubr.f32.mxu0 0.0
        %v4409 = vand.u32 %v4206, 4294901760
        %v4410 = vsub.f32 %v4206, %v4409
        %v4411 = vand.u32 %v4410, 4294901760
        %v4412 = vsub.f32 %v4410, %v4411
        %v4413 = vand.u32 %v4412, 4294901760
        %4414 = vmatmul.mubr.f32.gmra.mxu0 %v4413
        %v4415 = vpop.f32.mrf.mxu0
        %v4416 = vadd.f32 %v4222, %v4415
        %v4417 = vpop.f32.mrf.mxu0
        %4418 = vmatprep.mubr.f32.mxu0 0.0
        %v4419 = vand.u32 %v4207, 4294901760
        %v4420 = vsub.f32 %v4207, %v4419
        %v4421 = vand.u32 %v4420, 4294901760
        %v4422 = vsub.f32 %v4420, %v4421
        %v4423 = vand.u32 %v4422, 4294901760
        %4424 = vmatmul.mubr.f32.gmra.mxu0 %v4423
        %v4425 = vpop.f32.mrf.mxu0
        %v4426 = vadd.f32 %v4223, %v4425
        %v4427 = vpop.f32.mrf.mxu0
        %4428 = vmatprep.mubr.f32.mxu0 0.0
        %v4429 = vand.u32 %v4208, 4294901760
        %v4430 = vsub.f32 %v4208, %v4429
        %v4431 = vand.u32 %v4430, 4294901760
        %v4432 = vsub.f32 %v4430, %v4431
        %v4433 = vand.u32 %v4432, 4294901760
        %4434 = vmatmul.mubr.f32.gmra.mxu0 %v4433
        %v4435 = vpop.f32.mrf.mxu0
        %v4436 = vadd.f32 %v4224, %v4435
        %v4437 = vpop.f32.mrf.mxu0
        %4438 = vmatprep.mubr.f32.mxu0 0.0
        %v4439 = vand.u32 %v4209, 4294901760
        %v4440 = vsub.f32 %v4209, %v4439
        %v4441 = vand.u32 %v4440, 4294901760
        %v4442 = vsub.f32 %v4440, %v4441
        %v4443 = vand.u32 %v4442, 4294901760
        %4444 = vmatmul.mubr.f32.gmra.mxu0 %v4443
        %v4445 = vpop.f32.mrf.mxu0
        %v4446 = vadd.f32 %v4225, %v4445
        %v4447 = vpop.f32.mrf.mxu0
        %4448 = vmatprep.mubr.f32.mxu0 0.0
        %v4449 = vand.u32 %v4210, 4294901760
        %v4450 = vsub.f32 %v4210, %v4449
        %v4451 = vand.u32 %v4450, 4294901760
        %v4452 = vsub.f32 %v4450, %v4451
        %v4453 = vand.u32 %v4452, 4294901760
        %4454 = vmatmul.mubr.f32.gmra.mxu0 %v4453
        %v4455 = vpop.f32.mrf.mxu0
        %v4456 = vadd.f32 %v4226, %v4455
        %v4457 = vpop.f32.mrf.mxu0
        %4458 = vmatprep.mubr.f32.mxu0 0.0
        %v4459 = vand.u32 %v4211, 4294901760
        %v4460 = vsub.f32 %v4211, %v4459
        %v4461 = vand.u32 %v4460, 4294901760
        %v4462 = vsub.f32 %v4460, %v4461
        %v4463 = vand.u32 %v4462, 4294901760
        %4464 = vmatmul.mubr.f32.gmra.mxu0 %v4463
        %v4465 = vpop.f32.mrf.mxu0
        %v4466 = vadd.f32 %v4227, %v4465
        %v4467 = vpop.f32.mrf.mxu0
        %4468 = vdwg.mxu0
        %4469 = vmatprep.subr.mxu0 0.0
        %v4470 = vand.u32 %v4195, 4294901760
        %v4471 = vsub.f32 %v4195, %v4470
        %v4472 = vand.u32 %v4471, 4294901760
        %v4473 = vsub.f32 %v4471, %v4472
        %v4474 = vand.u32 %v4473, 4294901760
        %4475 = vmatpush1.msra.mxu0 %v4474
        %4476 = vmatprep.subr.mxu0 0.0
        %v4477 = vand.u32 %v4194, 4294901760
        %v4478 = vsub.f32 %v4194, %v4477
        %v4479 = vand.u32 %v4478, 4294901760
        %v4480 = vsub.f32 %v4478, %v4479
        %v4481 = vand.u32 %v4480, 4294901760
        %4482 = vmatpush1.msra.mxu0 %v4481
        %4483 = vmatprep.subr.mxu0 0.0
        %v4484 = vand.u32 %v4193, 4294901760
        %v4485 = vsub.f32 %v4193, %v4484
        %v4486 = vand.u32 %v4485, 4294901760
        %v4487 = vsub.f32 %v4485, %v4486
        %v4488 = vand.u32 %v4487, 4294901760
        %4489 = vmatpush1.msra.mxu0 %v4488
        %4490 = vmatprep.subr.mxu0 0.0
        %v4491 = vand.u32 %v4192, 4294901760
        %v4492 = vsub.f32 %v4192, %v4491
        %v4493 = vand.u32 %v4492, 4294901760
        %v4494 = vsub.f32 %v4492, %v4493
        %v4495 = vand.u32 %v4494, 4294901760
        %4496 = vmatpush1.msra.mxu0 %v4495
        %4497 = vmatprep.subr.mxu0 0.0
        %v4498 = vand.u32 %v4191, 4294901760
        %v4499 = vsub.f32 %v4191, %v4498
        %v4500 = vand.u32 %v4499, 4294901760
        %v4501 = vsub.f32 %v4499, %v4500
        %v4502 = vand.u32 %v4501, 4294901760
        %4503 = vmatpush1.msra.mxu0 %v4502
        %4504 = vmatprep.subr.mxu0 0.0
        %v4505 = vand.u32 %v4190, 4294901760
        %v4506 = vsub.f32 %v4190, %v4505
        %v4507 = vand.u32 %v4506, 4294901760
        %v4508 = vsub.f32 %v4506, %v4507
        %v4509 = vand.u32 %v4508, 4294901760
        %4510 = vmatpush1.msra.mxu0 %v4509
        %4511 = vmatprep.subr.mxu0 0.0
        %v4512 = vand.u32 %v4189, 4294901760
        %v4513 = vsub.f32 %v4189, %v4512
        %v4514 = vand.u32 %v4513, 4294901760
        %v4515 = vsub.f32 %v4513, %v4514
        %v4516 = vand.u32 %v4515, 4294901760
        %4517 = vmatpush1.msra.mxu0 %v4516
        %4518 = vmatprep.subr.mxu0 0.0
        %v4519 = vand.u32 %v4188, 4294901760
        %v4520 = vsub.f32 %v4188, %v4519
        %v4521 = vand.u32 %v4520, 4294901760
        %v4522 = vsub.f32 %v4520, %v4521
        %v4523 = vand.u32 %v4522, 4294901760
        %4524 = vmatpush1.msra.mxu0 %v4523
        %4525 = vmatprep.subr.mxu0 0.0
        %v4526 = vand.u32 %v4187, 4294901760
        %v4527 = vsub.f32 %v4187, %v4526
        %v4528 = vand.u32 %v4527, 4294901760
        %v4529 = vsub.f32 %v4527, %v4528
        %v4530 = vand.u32 %v4529, 4294901760
        %4531 = vmatpush1.msra.mxu0 %v4530
        %4532 = vmatprep.subr.mxu0 0.0
        %v4533 = vand.u32 %v4186, 4294901760
        %v4534 = vsub.f32 %v4186, %v4533
        %v4535 = vand.u32 %v4534, 4294901760
        %v4536 = vsub.f32 %v4534, %v4535
        %v4537 = vand.u32 %v4536, 4294901760
        %4538 = vmatpush1.msra.mxu0 %v4537
        %4539 = vmatprep.subr.mxu0 0.0
        %v4540 = vand.u32 %v4185, 4294901760
        %v4541 = vsub.f32 %v4185, %v4540
        %v4542 = vand.u32 %v4541, 4294901760
        %v4543 = vsub.f32 %v4541, %v4542
        %v4544 = vand.u32 %v4543, 4294901760
        %4545 = vmatpush1.msra.mxu0 %v4544
        %4546 = vmatprep.subr.mxu0 0.0
        %v4547 = vand.u32 %v4184, 4294901760
        %v4548 = vsub.f32 %v4184, %v4547
        %v4549 = vand.u32 %v4548, 4294901760
        %v4550 = vsub.f32 %v4548, %v4549
        %v4551 = vand.u32 %v4550, 4294901760
        %4552 = vmatpush1.msra.mxu0 %v4551
        %4553 = vmatprep.subr.mxu0 0.0
        %v4554 = vand.u32 %v4183, 4294901760
        %v4555 = vsub.f32 %v4183, %v4554
        %v4556 = vand.u32 %v4555, 4294901760
        %v4557 = vsub.f32 %v4555, %v4556
        %v4558 = vand.u32 %v4557, 4294901760
        %4559 = vmatpush1.msra.mxu0 %v4558
        %4560 = vmatprep.subr.mxu0 0.0
        %v4561 = vand.u32 %v4182, 4294901760
        %v4562 = vsub.f32 %v4182, %v4561
        %v4563 = vand.u32 %v4562, 4294901760
        %v4564 = vsub.f32 %v4562, %v4563
        %v4565 = vand.u32 %v4564, 4294901760
        %4566 = vmatpush1.msra.mxu0 %v4565
        %4567 = vmatprep.subr.mxu0 0.0
        %v4568 = vand.u32 %v4181, 4294901760
        %v4569 = vsub.f32 %v4181, %v4568
        %v4570 = vand.u32 %v4569, 4294901760
        %v4571 = vsub.f32 %v4569, %v4570
        %v4572 = vand.u32 %v4571, 4294901760
        %4573 = vmatpush1.msra.mxu0 %v4572
        %4574 = vmatprep.subr.mxu0 0.0
        %v4575 = vand.u32 %v4180, 4294901760
        %v4576 = vsub.f32 %v4180, %v4575
        %v4577 = vand.u32 %v4576, 4294901760
        %v4578 = vsub.f32 %v4576, %v4577
        %v4579 = vand.u32 %v4578, 4294901760
        %4580 = vmatpush1.msra.mxu0 %v4579
        %4581 = vmatprep.subr.mxu0 0.0
        %4582 = vmatpush2.msra.mxu0 0.0
        %4583 = vmatprep.subr.mxu0 0.0
        %4584 = vmatpush2.msra.mxu0 0.0
        %4585 = vmatprep.subr.mxu0 0.0
        %4586 = vmatpush2.msra.mxu0 0.0
        %4587 = vmatprep.subr.mxu0 0.0
        %4588 = vmatpush2.msra.mxu0 0.0
        %4589 = vmatprep.subr.mxu0 0.0
        %4590 = vmatpush2.msra.mxu0 0.0
        %4591 = vmatprep.subr.mxu0 0.0
        %4592 = vmatpush2.msra.mxu0 0.0
        %4593 = vmatprep.subr.mxu0 0.0
        %4594 = vmatpush2.msra.mxu0 0.0
        %4595 = vmatprep.subr.mxu0 0.0
        %4596 = vmatpush2.msra.mxu0 0.0
        %4597 = vmatprep.subr.mxu0 0.0
        %4598 = vmatpush2.msra.mxu0 0.0
        %4599 = vmatprep.subr.mxu0 0.0
        %4600 = vmatpush2.msra.mxu0 0.0
        %4601 = vmatprep.subr.mxu0 0.0
        %4602 = vmatpush2.msra.mxu0 0.0
        %4603 = vmatprep.subr.mxu0 0.0
        %4604 = vmatpush2.msra.mxu0 0.0
        %4605 = vmatprep.subr.mxu0 0.0
        %4606 = vmatpush2.msra.mxu0 0.0
        %4607 = vmatprep.subr.mxu0 0.0
        %4608 = vmatpush2.msra.mxu0 0.0
        %4609 = vmatprep.subr.mxu0 0.0
        %4610 = vmatpush2.msra.mxu0 0.0
        %4611 = vmatprep.subr.mxu0 0.0
        %4612 = vmatpush2.msra.mxu0 0.0
        %4613 = vmatprep.mubr.f32.mxu0 0.0
        %v4614 = vand.u32 %v4196, 4294901760
        %4615 = vmatmul.mubr.f32.gmra.mxu0 %v4614
        %v4616 = vpop.f32.mrf.mxu0
        %v4617 = vadd.f32 %v4316, %v4616
        %v4618 = vpop.f32.mrf.mxu0
        %4619 = vmatprep.mubr.f32.mxu0 0.0
        %v4620 = vand.u32 %v4197, 4294901760
        %4621 = vmatmul.mubr.f32.gmra.mxu0 %v4620
        %v4622 = vpop.f32.mrf.mxu0
        %v4623 = vadd.f32 %v4326, %v4622
        %v4624 = vpop.f32.mrf.mxu0
        %4625 = vmatprep.mubr.f32.mxu0 0.0
        %v4626 = vand.u32 %v4198, 4294901760
        %4627 = vmatmul.mubr.f32.gmra.mxu0 %v4626
        %v4628 = vpop.f32.mrf.mxu0
        %v4629 = vadd.f32 %v4336, %v4628
        %v4630 = vpop.f32.mrf.mxu0
        %4631 = vmatprep.mubr.f32.mxu0 0.0
        %v4632 = vand.u32 %v4199, 4294901760
        %4633 = vmatmul.mubr.f32.gmra.mxu0 %v4632
        %v4634 = vpop.f32.mrf.mxu0
        %v4635 = vadd.f32 %v4346, %v4634
        %v4636 = vpop.f32.mrf.mxu0
        %4637 = vmatprep.mubr.f32.mxu0 0.0
        %v4638 = vand.u32 %v4200, 4294901760
        %4639 = vmatmul.mubr.f32.gmra.mxu0 %v4638
        %v4640 = vpop.f32.mrf.mxu0
        %v4641 = vadd.f32 %v4356, %v4640
        %v4642 = vpop.f32.mrf.mxu0
        %4643 = vmatprep.mubr.f32.mxu0 0.0
        %v4644 = vand.u32 %v4201, 4294901760
        %4645 = vmatmul.mubr.f32.gmra.mxu0 %v4644
        %v4646 = vpop.f32.mrf.mxu0
        %v4647 = vadd.f32 %v4366, %v4646
        %v4648 = vpop.f32.mrf.mxu0
        %4649 = vmatprep.mubr.f32.mxu0 0.0
        %v4650 = vand.u32 %v4202, 4294901760
        %4651 = vmatmul.mubr.f32.gmra.mxu0 %v4650
        %v4652 = vpop.f32.mrf.mxu0
        %v4653 = vadd.f32 %v4376, %v4652
        %v4654 = vpop.f32.mrf.mxu0
        %4655 = vmatprep.mubr.f32.mxu0 0.0
        %v4656 = vand.u32 %v4203, 4294901760
        %4657 = vmatmul.mubr.f32.gmra.mxu0 %v4656
        %v4658 = vpop.f32.mrf.mxu0
        %v4659 = vadd.f32 %v4386, %v4658
        %v4660 = vpop.f32.mrf.mxu0
        %4661 = vmatprep.mubr.f32.mxu0 0.0
        %v4662 = vand.u32 %v4204, 4294901760
        %4663 = vmatmul.mubr.f32.gmra.mxu0 %v4662
        %v4664 = vpop.f32.mrf.mxu0
        %v4665 = vadd.f32 %v4396, %v4664
        %v4666 = vpop.f32.mrf.mxu0
        %4667 = vmatprep.mubr.f32.mxu0 0.0
        %v4668 = vand.u32 %v4205, 4294901760
        %4669 = vmatmul.mubr.f32.gmra.mxu0 %v4668
        %v4670 = vpop.f32.mrf.mxu0
        %v4671 = vadd.f32 %v4406, %v4670
        %v4672 = vpop.f32.mrf.mxu0
        %4673 = vmatprep.mubr.f32.mxu0 0.0
        %v4674 = vand.u32 %v4206, 4294901760
        %4675 = vmatmul.mubr.f32.gmra.mxu0 %v4674
        %v4676 = vpop.f32.mrf.mxu0
        %v4677 = vadd.f32 %v4416, %v4676
        %v4678 = vpop.f32.mrf.mxu0
        %4679 = vmatprep.mubr.f32.mxu0 0.0
        %v4680 = vand.u32 %v4207, 4294901760
        %4681 = vmatmul.mubr.f32.gmra.mxu0 %v4680
        %v4682 = vpop.f32.mrf.mxu0
        %v4683 = vadd.f32 %v4426, %v4682
        %v4684 = vpop.f32.mrf.mxu0
        %4685 = vmatprep.mubr.f32.mxu0 0.0
        %v4686 = vand.u32 %v4208, 4294901760
        %4687 = vmatmul.mubr.f32.gmra.mxu0 %v4686
        %v4688 = vpop.f32.mrf.mxu0
        %v4689 = vadd.f32 %v4436, %v4688
        %v4690 = vpop.f32.mrf.mxu0
        %4691 = vmatprep.mubr.f32.mxu0 0.0
        %v4692 = vand.u32 %v4209, 4294901760
        %4693 = vmatmul.mubr.f32.gmra.mxu0 %v4692
        %v4694 = vpop.f32.mrf.mxu0
        %v4695 = vadd.f32 %v4446, %v4694
        %v4696 = vpop.f32.mrf.mxu0
        %4697 = vmatprep.mubr.f32.mxu0 0.0
        %v4698 = vand.u32 %v4210, 4294901760
        %4699 = vmatmul.mubr.f32.gmra.mxu0 %v4698
        %v4700 = vpop.f32.mrf.mxu0
        %v4701 = vadd.f32 %v4456, %v4700
        %v4702 = vpop.f32.mrf.mxu0
        %4703 = vmatprep.mubr.f32.mxu0 0.0
        %v4704 = vand.u32 %v4211, 4294901760
        %4705 = vmatmul.mubr.f32.gmra.mxu0 %v4704
        %v4706 = vpop.f32.mrf.mxu0
        %v4707 = vadd.f32 %v4466, %v4706
        %v4708 = vpop.f32.mrf.mxu0
        %4709 = vdwg.mxu0
        %4710 = vmatprep.subr.mxu0 0.0
        %v4711 = vand.u32 %v4195, 4294901760
        %v4712 = vsub.f32 %v4195, %v4711
        %4713 = vmatpush1.msra.mxu0 %v4712
        %4714 = vmatprep.subr.mxu0 0.0
        %v4715 = vand.u32 %v4194, 4294901760
        %v4716 = vsub.f32 %v4194, %v4715
        %4717 = vmatpush1.msra.mxu0 %v4716
        %4718 = vmatprep.subr.mxu0 0.0
        %v4719 = vand.u32 %v4193, 4294901760
        %v4720 = vsub.f32 %v4193, %v4719
        %4721 = vmatpush1.msra.mxu0 %v4720
        %4722 = vmatprep.subr.mxu0 0.0
        %v4723 = vand.u32 %v4192, 4294901760
        %v4724 = vsub.f32 %v4192, %v4723
        %4725 = vmatpush1.msra.mxu0 %v4724
        %4726 = vmatprep.subr.mxu0 0.0
        %v4727 = vand.u32 %v4191, 4294901760
        %v4728 = vsub.f32 %v4191, %v4727
        %4729 = vmatpush1.msra.mxu0 %v4728
        %4730 = vmatprep.subr.mxu0 0.0
        %v4731 = vand.u32 %v4190, 4294901760
        %v4732 = vsub.f32 %v4190, %v4731
        %4733 = vmatpush1.msra.mxu0 %v4732
        %4734 = vmatprep.subr.mxu0 0.0
        %v4735 = vand.u32 %v4189, 4294901760
        %v4736 = vsub.f32 %v4189, %v4735
        %4737 = vmatpush1.msra.mxu0 %v4736
        %4738 = vmatprep.subr.mxu0 0.0
        %v4739 = vand.u32 %v4188, 4294901760
        %v4740 = vsub.f32 %v4188, %v4739
        %4741 = vmatpush1.msra.mxu0 %v4740
        %4742 = vmatprep.subr.mxu0 0.0
        %v4743 = vand.u32 %v4187, 4294901760
        %v4744 = vsub.f32 %v4187, %v4743
        %4745 = vmatpush1.msra.mxu0 %v4744
        %4746 = vmatprep.subr.mxu0 0.0
        %v4747 = vand.u32 %v4186, 4294901760
        %v4748 = vsub.f32 %v4186, %v4747
        %4749 = vmatpush1.msra.mxu0 %v4748
        %4750 = vmatprep.subr.mxu0 0.0
        %v4751 = vand.u32 %v4185, 4294901760
        %v4752 = vsub.f32 %v4185, %v4751
        %4753 = vmatpush1.msra.mxu0 %v4752
        %4754 = vmatprep.subr.mxu0 0.0
        %v4755 = vand.u32 %v4184, 4294901760
        %v4756 = vsub.f32 %v4184, %v4755
        %4757 = vmatpush1.msra.mxu0 %v4756
        %4758 = vmatprep.subr.mxu0 0.0
        %v4759 = vand.u32 %v4183, 4294901760
        %v4760 = vsub.f32 %v4183, %v4759
        %4761 = vmatpush1.msra.mxu0 %v4760
        %4762 = vmatprep.subr.mxu0 0.0
        %v4763 = vand.u32 %v4182, 4294901760
        %v4764 = vsub.f32 %v4182, %v4763
        %4765 = vmatpush1.msra.mxu0 %v4764
        %4766 = vmatprep.subr.mxu0 0.0
        %v4767 = vand.u32 %v4181, 4294901760
        %v4768 = vsub.f32 %v4181, %v4767
        %4769 = vmatpush1.msra.mxu0 %v4768
        %4770 = vmatprep.subr.mxu0 0.0
        %v4771 = vand.u32 %v4180, 4294901760
        %v4772 = vsub.f32 %v4180, %v4771
        %4773 = vmatpush1.msra.mxu0 %v4772
        %4774 = vmatprep.subr.mxu0 0.0
        %4775 = vmatpush2.msra.mxu0 0.0
        %4776 = vmatprep.subr.mxu0 0.0
        %4777 = vmatpush2.msra.mxu0 0.0
        %4778 = vmatprep.subr.mxu0 0.0
        %4779 = vmatpush2.msra.mxu0 0.0
        %4780 = vmatprep.subr.mxu0 0.0
        %4781 = vmatpush2.msra.mxu0 0.0
        %4782 = vmatprep.subr.mxu0 0.0
        %4783 = vmatpush2.msra.mxu0 0.0
        %4784 = vmatprep.subr.mxu0 0.0
        %4785 = vmatpush2.msra.mxu0 0.0
        %4786 = vmatprep.subr.mxu0 0.0
        %4787 = vmatpush2.msra.mxu0 0.0
        %4788 = vmatprep.subr.mxu0 0.0
        %4789 = vmatpush2.msra.mxu0 0.0
        %4790 = vmatprep.subr.mxu0 0.0
        %4791 = vmatpush2.msra.mxu0 0.0
        %4792 = vmatprep.subr.mxu0 0.0
        %4793 = vmatpush2.msra.mxu0 0.0
        %4794 = vmatprep.subr.mxu0 0.0
        %4795 = vmatpush2.msra.mxu0 0.0
        %4796 = vmatprep.subr.mxu0 0.0
        %4797 = vmatpush2.msra.mxu0 0.0
        %4798 = vmatprep.subr.mxu0 0.0
        %4799 = vmatpush2.msra.mxu0 0.0
        %4800 = vmatprep.subr.mxu0 0.0
        %4801 = vmatpush2.msra.mxu0 0.0
        %4802 = vmatprep.subr.mxu0 0.0
        %4803 = vmatpush2.msra.mxu0 0.0
        %4804 = vmatprep.subr.mxu0 0.0
        %4805 = vmatpush2.msra.mxu0 0.0
        %4806 = vmatprep.mubr.f32.mxu0 0.0
        %v4807 = vand.u32 %v4196, 4294901760
        %v4808 = vsub.f32 %v4196, %v4807
        %4809 = vmatmul.mubr.f32.gmra.mxu0 %v4808
        %v4810 = vpop.f32.mrf.mxu0
        %v4811 = vadd.f32 %v4617, %v4810
        %v4812 = vpop.f32.mrf.mxu0
        %4813 = vmatprep.mubr.f32.mxu0 0.0
        %v4814 = vand.u32 %v4197, 4294901760
        %v4815 = vsub.f32 %v4197, %v4814
        %4816 = vmatmul.mubr.f32.gmra.mxu0 %v4815
        %v4817 = vpop.f32.mrf.mxu0
        %v4818 = vadd.f32 %v4623, %v4817
        %v4819 = vpop.f32.mrf.mxu0
        %4820 = vmatprep.mubr.f32.mxu0 0.0
        %v4821 = vand.u32 %v4198, 4294901760
        %v4822 = vsub.f32 %v4198, %v4821
        %4823 = vmatmul.mubr.f32.gmra.mxu0 %v4822
        %v4824 = vpop.f32.mrf.mxu0
        %v4825 = vadd.f32 %v4629, %v4824
        %v4826 = vpop.f32.mrf.mxu0
        %4827 = vmatprep.mubr.f32.mxu0 0.0
        %v4828 = vand.u32 %v4199, 4294901760
        %v4829 = vsub.f32 %v4199, %v4828
        %4830 = vmatmul.mubr.f32.gmra.mxu0 %v4829
        %v4831 = vpop.f32.mrf.mxu0
        %v4832 = vadd.f32 %v4635, %v4831
        %v4833 = vpop.f32.mrf.mxu0
        %4834 = vmatprep.mubr.f32.mxu0 0.0
        %v4835 = vand.u32 %v4200, 4294901760
        %v4836 = vsub.f32 %v4200, %v4835
        %4837 = vmatmul.mubr.f32.gmra.mxu0 %v4836
        %v4838 = vpop.f32.mrf.mxu0
        %v4839 = vadd.f32 %v4641, %v4838
        %v4840 = vpop.f32.mrf.mxu0
        %4841 = vmatprep.mubr.f32.mxu0 0.0
        %v4842 = vand.u32 %v4201, 4294901760
        %v4843 = vsub.f32 %v4201, %v4842
        %4844 = vmatmul.mubr.f32.gmra.mxu0 %v4843
        %v4845 = vpop.f32.mrf.mxu0
        %v4846 = vadd.f32 %v4647, %v4845
        %v4847 = vpop.f32.mrf.mxu0
        %4848 = vmatprep.mubr.f32.mxu0 0.0
        %v4849 = vand.u32 %v4202, 4294901760
        %v4850 = vsub.f32 %v4202, %v4849
        %4851 = vmatmul.mubr.f32.gmra.mxu0 %v4850
        %v4852 = vpop.f32.mrf.mxu0
        %v4853 = vadd.f32 %v4653, %v4852
        %v4854 = vpop.f32.mrf.mxu0
        %4855 = vmatprep.mubr.f32.mxu0 0.0
        %v4856 = vand.u32 %v4203, 4294901760
        %v4857 = vsub.f32 %v4203, %v4856
        %4858 = vmatmul.mubr.f32.gmra.mxu0 %v4857
        %v4859 = vpop.f32.mrf.mxu0
        %v4860 = vadd.f32 %v4659, %v4859
        %v4861 = vpop.f32.mrf.mxu0
        %4862 = vmatprep.mubr.f32.mxu0 0.0
        %v4863 = vand.u32 %v4204, 4294901760
        %v4864 = vsub.f32 %v4204, %v4863
        %4865 = vmatmul.mubr.f32.gmra.mxu0 %v4864
        %v4866 = vpop.f32.mrf.mxu0
        %v4867 = vadd.f32 %v4665, %v4866
        %v4868 = vpop.f32.mrf.mxu0
        %4869 = vmatprep.mubr.f32.mxu0 0.0
        %v4870 = vand.u32 %v4205, 4294901760
        %v4871 = vsub.f32 %v4205, %v4870
        %4872 = vmatmul.mubr.f32.gmra.mxu0 %v4871
        %v4873 = vpop.f32.mrf.mxu0
        %v4874 = vadd.f32 %v4671, %v4873
        %v4875 = vpop.f32.mrf.mxu0
        %4876 = vmatprep.mubr.f32.mxu0 0.0
        %v4877 = vand.u32 %v4206, 4294901760
        %v4878 = vsub.f32 %v4206, %v4877
        %4879 = vmatmul.mubr.f32.gmra.mxu0 %v4878
        %v4880 = vpop.f32.mrf.mxu0
        %v4881 = vadd.f32 %v4677, %v4880
        %v4882 = vpop.f32.mrf.mxu0
        %4883 = vmatprep.mubr.f32.mxu0 0.0
        %v4884 = vand.u32 %v4207, 4294901760
        %v4885 = vsub.f32 %v4207, %v4884
        %4886 = vmatmul.mubr.f32.gmra.mxu0 %v4885
        %v4887 = vpop.f32.mrf.mxu0
        %v4888 = vadd.f32 %v4683, %v4887
        %v4889 = vpop.f32.mrf.mxu0
        %4890 = vmatprep.mubr.f32.mxu0 0.0
        %v4891 = vand.u32 %v4208, 4294901760
        %v4892 = vsub.f32 %v4208, %v4891
        %4893 = vmatmul.mubr.f32.gmra.mxu0 %v4892
        %v4894 = vpop.f32.mrf.mxu0
        %v4895 = vadd.f32 %v4689, %v4894
        %v4896 = vpop.f32.mrf.mxu0
        %4897 = vmatprep.mubr.f32.mxu0 0.0
        %v4898 = vand.u32 %v4209, 4294901760
        %v4899 = vsub.f32 %v4209, %v4898
        %4900 = vmatmul.mubr.f32.gmra.mxu0 %v4899
        %v4901 = vpop.f32.mrf.mxu0
        %v4902 = vadd.f32 %v4695, %v4901
        %v4903 = vpop.f32.mrf.mxu0
        %4904 = vmatprep.mubr.f32.mxu0 0.0
        %v4905 = vand.u32 %v4210, 4294901760
        %v4906 = vsub.f32 %v4210, %v4905
        %4907 = vmatmul.mubr.f32.gmra.mxu0 %v4906
        %v4908 = vpop.f32.mrf.mxu0
        %v4909 = vadd.f32 %v4701, %v4908
        %v4910 = vpop.f32.mrf.mxu0
        %4911 = vmatprep.mubr.f32.mxu0 0.0
        %v4912 = vand.u32 %v4211, 4294901760
        %v4913 = vsub.f32 %v4211, %v4912
        %4914 = vmatmul.mubr.f32.gmra.mxu0 %v4913
        %v4915 = vpop.f32.mrf.mxu0
        %v4916 = vadd.f32 %v4707, %v4915
        %v4917 = vpop.f32.mrf.mxu0
        %4918 = vdwg.mxu0
        %4919 = vmatprep.subr.mxu0 0.0
        %v4920 = vand.u32 %v4195, 4294901760
        %4921 = vmatpush1.msra.mxu0 %v4920
        %4922 = vmatprep.subr.mxu0 0.0
        %v4923 = vand.u32 %v4194, 4294901760
        %4924 = vmatpush1.msra.mxu0 %v4923
        %4925 = vmatprep.subr.mxu0 0.0
        %v4926 = vand.u32 %v4193, 4294901760
        %4927 = vmatpush1.msra.mxu0 %v4926
        %4928 = vmatprep.subr.mxu0 0.0
        %v4929 = vand.u32 %v4192, 4294901760
        %4930 = vmatpush1.msra.mxu0 %v4929
        %4931 = vmatprep.subr.mxu0 0.0
        %v4932 = vand.u32 %v4191, 4294901760
        %4933 = vmatpush1.msra.mxu0 %v4932
        %4934 = vmatprep.subr.mxu0 0.0
        %v4935 = vand.u32 %v4190, 4294901760
        %4936 = vmatpush1.msra.mxu0 %v4935
        %4937 = vmatprep.subr.mxu0 0.0
        %v4938 = vand.u32 %v4189, 4294901760
        %4939 = vmatpush1.msra.mxu0 %v4938
        %4940 = vmatprep.subr.mxu0 0.0
        %v4941 = vand.u32 %v4188, 4294901760
        %4942 = vmatpush1.msra.mxu0 %v4941
        %4943 = vmatprep.subr.mxu0 0.0
        %v4944 = vand.u32 %v4187, 4294901760
        %4945 = vmatpush1.msra.mxu0 %v4944
        %4946 = vmatprep.subr.mxu0 0.0
        %v4947 = vand.u32 %v4186, 4294901760
        %4948 = vmatpush1.msra.mxu0 %v4947
        %4949 = vmatprep.subr.mxu0 0.0
        %v4950 = vand.u32 %v4185, 4294901760
        %4951 = vmatpush1.msra.mxu0 %v4950
        %4952 = vmatprep.subr.mxu0 0.0
        %v4953 = vand.u32 %v4184, 4294901760
        %4954 = vmatpush1.msra.mxu0 %v4953
        %4955 = vmatprep.subr.mxu0 0.0
        %v4956 = vand.u32 %v4183, 4294901760
        %4957 = vmatpush1.msra.mxu0 %v4956
        %4958 = vmatprep.subr.mxu0 0.0
        %v4959 = vand.u32 %v4182, 4294901760
        %4960 = vmatpush1.msra.mxu0 %v4959
        %4961 = vmatprep.subr.mxu0 0.0
        %v4962 = vand.u32 %v4181, 4294901760
        %4963 = vmatpush1.msra.mxu0 %v4962
        %4964 = vmatprep.subr.mxu0 0.0
        %v4965 = vand.u32 %v4180, 4294901760
        %4966 = vmatpush1.msra.mxu0 %v4965
        %4967 = vmatprep.subr.mxu0 0.0
        %4968 = vmatpush2.msra.mxu0 0.0
        %4969 = vmatprep.subr.mxu0 0.0
        %4970 = vmatpush2.msra.mxu0 0.0
        %4971 = vmatprep.subr.mxu0 0.0
        %4972 = vmatpush2.msra.mxu0 0.0
        %4973 = vmatprep.subr.mxu0 0.0
        %4974 = vmatpush2.msra.mxu0 0.0
        %4975 = vmatprep.subr.mxu0 0.0
        %4976 = vmatpush2.msra.mxu0 0.0
        %4977 = vmatprep.subr.mxu0 0.0
        %4978 = vmatpush2.msra.mxu0 0.0
        %4979 = vmatprep.subr.mxu0 0.0
        %4980 = vmatpush2.msra.mxu0 0.0
        %4981 = vmatprep.subr.mxu0 0.0
        %4982 = vmatpush2.msra.mxu0 0.0
        %4983 = vmatprep.subr.mxu0 0.0
        %4984 = vmatpush2.msra.mxu0 0.0
        %4985 = vmatprep.subr.mxu0 0.0
        %4986 = vmatpush2.msra.mxu0 0.0
        %4987 = vmatprep.subr.mxu0 0.0
        %4988 = vmatpush2.msra.mxu0 0.0
        %4989 = vmatprep.subr.mxu0 0.0
        %4990 = vmatpush2.msra.mxu0 0.0
        %4991 = vmatprep.subr.mxu0 0.0
        %4992 = vmatpush2.msra.mxu0 0.0
        %4993 = vmatprep.subr.mxu0 0.0
        %4994 = vmatpush2.msra.mxu0 0.0
        %4995 = vmatprep.subr.mxu0 0.0
        %4996 = vmatpush2.msra.mxu0 0.0
        %4997 = vmatprep.subr.mxu0 0.0
        %4998 = vmatpush2.msra.mxu0 0.0
        %4999 = vmatprep.mubr.f32.mxu0 0.0
        %v5000 = vand.u32 %v4196, 4294901760
        %v5001 = vsub.f32 %v4196, %v5000
        %v5002 = vand.u32 %v5001, 4294901760
        %5003 = vmatmul.mubr.f32.gmra.mxu0 %v5002
        %v5004 = vpop.f32.mrf.mxu0
        %v5005 = vadd.f32 %v4811, %v5004
        %v5006 = vpop.f32.mrf.mxu0
        %5007 = vmatprep.mubr.f32.mxu0 0.0
        %v5008 = vand.u32 %v4197, 4294901760
        %v5009 = vsub.f32 %v4197, %v5008
        %v5010 = vand.u32 %v5009, 4294901760
        %5011 = vmatmul.mubr.f32.gmra.mxu0 %v5010
        %v5012 = vpop.f32.mrf.mxu0
        %v5013 = vadd.f32 %v4818, %v5012
        %v5014 = vpop.f32.mrf.mxu0
        %5015 = vmatprep.mubr.f32.mxu0 0.0
        %v5016 = vand.u32 %v4198, 4294901760
        %v5017 = vsub.f32 %v4198, %v5016
        %v5018 = vand.u32 %v5017, 4294901760
        %5019 = vmatmul.mubr.f32.gmra.mxu0 %v5018
        %v5020 = vpop.f32.mrf.mxu0
        %v5021 = vadd.f32 %v4825, %v5020
        %v5022 = vpop.f32.mrf.mxu0
        %5023 = vmatprep.mubr.f32.mxu0 0.0
        %v5024 = vand.u32 %v4199, 4294901760
        %v5025 = vsub.f32 %v4199, %v5024
        %v5026 = vand.u32 %v5025, 4294901760
        %5027 = vmatmul.mubr.f32.gmra.mxu0 %v5026
        %v5028 = vpop.f32.mrf.mxu0
        %v5029 = vadd.f32 %v4832, %v5028
        %v5030 = vpop.f32.mrf.mxu0
        %5031 = vmatprep.mubr.f32.mxu0 0.0
        %v5032 = vand.u32 %v4200, 4294901760
        %v5033 = vsub.f32 %v4200, %v5032
        %v5034 = vand.u32 %v5033, 4294901760
        %5035 = vmatmul.mubr.f32.gmra.mxu0 %v5034
        %v5036 = vpop.f32.mrf.mxu0
        %v5037 = vadd.f32 %v4839, %v5036
        %v5038 = vpop.f32.mrf.mxu0
        %5039 = vmatprep.mubr.f32.mxu0 0.0
        %v5040 = vand.u32 %v4201, 4294901760
        %v5041 = vsub.f32 %v4201, %v5040
        %v5042 = vand.u32 %v5041, 4294901760
        %5043 = vmatmul.mubr.f32.gmra.mxu0 %v5042
        %v5044 = vpop.f32.mrf.mxu0
        %v5045 = vadd.f32 %v4846, %v5044
        %v5046 = vpop.f32.mrf.mxu0
        %5047 = vmatprep.mubr.f32.mxu0 0.0
        %v5048 = vand.u32 %v4202, 4294901760
        %v5049 = vsub.f32 %v4202, %v5048
        %v5050 = vand.u32 %v5049, 4294901760
        %5051 = vmatmul.mubr.f32.gmra.mxu0 %v5050
        %v5052 = vpop.f32.mrf.mxu0
        %v5053 = vadd.f32 %v4853, %v5052
        %v5054 = vpop.f32.mrf.mxu0
        %5055 = vmatprep.mubr.f32.mxu0 0.0
        %v5056 = vand.u32 %v4203, 4294901760
        %v5057 = vsub.f32 %v4203, %v5056
        %v5058 = vand.u32 %v5057, 4294901760
        %5059 = vmatmul.mubr.f32.gmra.mxu0 %v5058
        %v5060 = vpop.f32.mrf.mxu0
        %v5061 = vadd.f32 %v4860, %v5060
        %v5062 = vpop.f32.mrf.mxu0
        %5063 = vmatprep.mubr.f32.mxu0 0.0
        %v5064 = vand.u32 %v4204, 4294901760
        %v5065 = vsub.f32 %v4204, %v5064
        %v5066 = vand.u32 %v5065, 4294901760
        %5067 = vmatmul.mubr.f32.gmra.mxu0 %v5066
        %v5068 = vpop.f32.mrf.mxu0
        %v5069 = vadd.f32 %v4867, %v5068
        %v5070 = vpop.f32.mrf.mxu0
        %5071 = vmatprep.mubr.f32.mxu0 0.0
        %v5072 = vand.u32 %v4205, 4294901760
        %v5073 = vsub.f32 %v4205, %v5072
        %v5074 = vand.u32 %v5073, 4294901760
        %5075 = vmatmul.mubr.f32.gmra.mxu0 %v5074
        %v5076 = vpop.f32.mrf.mxu0
        %v5077 = vadd.f32 %v4874, %v5076
        %v5078 = vpop.f32.mrf.mxu0
        %5079 = vmatprep.mubr.f32.mxu0 0.0
        %v5080 = vand.u32 %v4206, 4294901760
        %v5081 = vsub.f32 %v4206, %v5080
        %v5082 = vand.u32 %v5081, 4294901760
        %5083 = vmatmul.mubr.f32.gmra.mxu0 %v5082
        %v5084 = vpop.f32.mrf.mxu0
        %v5085 = vadd.f32 %v4881, %v5084
        %v5086 = vpop.f32.mrf.mxu0
        %5087 = vmatprep.mubr.f32.mxu0 0.0
        %v5088 = vand.u32 %v4207, 4294901760
        %v5089 = vsub.f32 %v4207, %v5088
        %v5090 = vand.u32 %v5089, 4294901760
        %5091 = vmatmul.mubr.f32.gmra.mxu0 %v5090
        %v5092 = vpop.f32.mrf.mxu0
        %v5093 = vadd.f32 %v4888, %v5092
        %v5094 = vpop.f32.mrf.mxu0
        %5095 = vmatprep.mubr.f32.mxu0 0.0
        %v5096 = vand.u32 %v4208, 4294901760
        %v5097 = vsub.f32 %v4208, %v5096
        %v5098 = vand.u32 %v5097, 4294901760
        %5099 = vmatmul.mubr.f32.gmra.mxu0 %v5098
        %v5100 = vpop.f32.mrf.mxu0
        %v5101 = vadd.f32 %v4895, %v5100
        %v5102 = vpop.f32.mrf.mxu0
        %5103 = vmatprep.mubr.f32.mxu0 0.0
        %v5104 = vand.u32 %v4209, 4294901760
        %v5105 = vsub.f32 %v4209, %v5104
        %v5106 = vand.u32 %v5105, 4294901760
        %5107 = vmatmul.mubr.f32.gmra.mxu0 %v5106
        %v5108 = vpop.f32.mrf.mxu0
        %v5109 = vadd.f32 %v4902, %v5108
        %v5110 = vpop.f32.mrf.mxu0
        %5111 = vmatprep.mubr.f32.mxu0 0.0
        %v5112 = vand.u32 %v4210, 4294901760
        %v5113 = vsub.f32 %v4210, %v5112
        %v5114 = vand.u32 %v5113, 4294901760
        %5115 = vmatmul.mubr.f32.gmra.mxu0 %v5114
        %v5116 = vpop.f32.mrf.mxu0
        %v5117 = vadd.f32 %v4909, %v5116
        %v5118 = vpop.f32.mrf.mxu0
        %5119 = vmatprep.mubr.f32.mxu0 0.0
        %v5120 = vand.u32 %v4211, 4294901760
        %v5121 = vsub.f32 %v4211, %v5120
        %v5122 = vand.u32 %v5121, 4294901760
        %5123 = vmatmul.mubr.f32.gmra.mxu0 %v5122
        %v5124 = vpop.f32.mrf.mxu0
        %v5125 = vadd.f32 %v4916, %v5124
        %v5126 = vpop.f32.mrf.mxu0
        %5127 = vdwg.mxu0
        %5128 = vmatprep.subr.mxu0 0.0
        %v5129 = vand.u32 %v4195, 4294901760
        %v5130 = vsub.f32 %v4195, %v5129
        %v5131 = vand.u32 %v5130, 4294901760
        %5132 = vmatpush1.msra.mxu0 %v5131
        %5133 = vmatprep.subr.mxu0 0.0
        %v5134 = vand.u32 %v4194, 4294901760
        %v5135 = vsub.f32 %v4194, %v5134
        %v5136 = vand.u32 %v5135, 4294901760
        %5137 = vmatpush1.msra.mxu0 %v5136
        %5138 = vmatprep.subr.mxu0 0.0
        %v5139 = vand.u32 %v4193, 4294901760
        %v5140 = vsub.f32 %v4193, %v5139
        %v5141 = vand.u32 %v5140, 4294901760
        %5142 = vmatpush1.msra.mxu0 %v5141
        %5143 = vmatprep.subr.mxu0 0.0
        %v5144 = vand.u32 %v4192, 4294901760
        %v5145 = vsub.f32 %v4192, %v5144
        %v5146 = vand.u32 %v5145, 4294901760
        %5147 = vmatpush1.msra.mxu0 %v5146
        %5148 = vmatprep.subr.mxu0 0.0
        %v5149 = vand.u32 %v4191, 4294901760
        %v5150 = vsub.f32 %v4191, %v5149
        %v5151 = vand.u32 %v5150, 4294901760
        %5152 = vmatpush1.msra.mxu0 %v5151
        %5153 = vmatprep.subr.mxu0 0.0
        %v5154 = vand.u32 %v4190, 4294901760
        %v5155 = vsub.f32 %v4190, %v5154
        %v5156 = vand.u32 %v5155, 4294901760
        %5157 = vmatpush1.msra.mxu0 %v5156
        %5158 = vmatprep.subr.mxu0 0.0
        %v5159 = vand.u32 %v4189, 4294901760
        %v5160 = vsub.f32 %v4189, %v5159
        %v5161 = vand.u32 %v5160, 4294901760
        %5162 = vmatpush1.msra.mxu0 %v5161
        %5163 = vmatprep.subr.mxu0 0.0
        %v5164 = vand.u32 %v4188, 4294901760
        %v5165 = vsub.f32 %v4188, %v5164
        %v5166 = vand.u32 %v5165, 4294901760
        %5167 = vmatpush1.msra.mxu0 %v5166
        %5168 = vmatprep.subr.mxu0 0.0
        %v5169 = vand.u32 %v4187, 4294901760
        %v5170 = vsub.f32 %v4187, %v5169
        %v5171 = vand.u32 %v5170, 4294901760
        %5172 = vmatpush1.msra.mxu0 %v5171
        %5173 = vmatprep.subr.mxu0 0.0
        %v5174 = vand.u32 %v4186, 4294901760
        %v5175 = vsub.f32 %v4186, %v5174
        %v5176 = vand.u32 %v5175, 4294901760
        %5177 = vmatpush1.msra.mxu0 %v5176
        %5178 = vmatprep.subr.mxu0 0.0
        %v5179 = vand.u32 %v4185, 4294901760
        %v5180 = vsub.f32 %v4185, %v5179
        %v5181 = vand.u32 %v5180, 4294901760
        %5182 = vmatpush1.msra.mxu0 %v5181
        %5183 = vmatprep.subr.mxu0 0.0
        %v5184 = vand.u32 %v4184, 4294901760
        %v5185 = vsub.f32 %v4184, %v5184
        %v5186 = vand.u32 %v5185, 4294901760
        %5187 = vmatpush1.msra.mxu0 %v5186
        %5188 = vmatprep.subr.mxu0 0.0
        %v5189 = vand.u32 %v4183, 4294901760
        %v5190 = vsub.f32 %v4183, %v5189
        %v5191 = vand.u32 %v5190, 4294901760
        %5192 = vmatpush1.msra.mxu0 %v5191
        %5193 = vmatprep.subr.mxu0 0.0
        %v5194 = vand.u32 %v4182, 4294901760
        %v5195 = vsub.f32 %v4182, %v5194
        %v5196 = vand.u32 %v5195, 4294901760
        %5197 = vmatpush1.msra.mxu0 %v5196
        %5198 = vmatprep.subr.mxu0 0.0
        %v5199 = vand.u32 %v4181, 4294901760
        %v5200 = vsub.f32 %v4181, %v5199
        %v5201 = vand.u32 %v5200, 4294901760
        %5202 = vmatpush1.msra.mxu0 %v5201
        %5203 = vmatprep.subr.mxu0 0.0
        %v5204 = vand.u32 %v4180, 4294901760
        %v5205 = vsub.f32 %v4180, %v5204
        %v5206 = vand.u32 %v5205, 4294901760
        %5207 = vmatpush1.msra.mxu0 %v5206
        %5208 = vmatprep.subr.mxu0 0.0
        %5209 = vmatpush2.msra.mxu0 0.0
        %5210 = vmatprep.subr.mxu0 0.0
        %5211 = vmatpush2.msra.mxu0 0.0
        %5212 = vmatprep.subr.mxu0 0.0
        %5213 = vmatpush2.msra.mxu0 0.0
        %5214 = vmatprep.subr.mxu0 0.0
        %5215 = vmatpush2.msra.mxu0 0.0
        %5216 = vmatprep.subr.mxu0 0.0
        %5217 = vmatpush2.msra.mxu0 0.0
        %5218 = vmatprep.subr.mxu0 0.0
        %5219 = vmatpush2.msra.mxu0 0.0
        %5220 = vmatprep.subr.mxu0 0.0
        %5221 = vmatpush2.msra.mxu0 0.0
        %5222 = vmatprep.subr.mxu0 0.0
        %5223 = vmatpush2.msra.mxu0 0.0
        %5224 = vmatprep.subr.mxu0 0.0
        %5225 = vmatpush2.msra.mxu0 0.0
        %5226 = vmatprep.subr.mxu0 0.0
        %5227 = vmatpush2.msra.mxu0 0.0
        %5228 = vmatprep.subr.mxu0 0.0
        %5229 = vmatpush2.msra.mxu0 0.0
        %5230 = vmatprep.subr.mxu0 0.0
        %5231 = vmatpush2.msra.mxu0 0.0
        %5232 = vmatprep.subr.mxu0 0.0
        %5233 = vmatpush2.msra.mxu0 0.0
        %5234 = vmatprep.subr.mxu0 0.0
        %5235 = vmatpush2.msra.mxu0 0.0
        %5236 = vmatprep.subr.mxu0 0.0
        %5237 = vmatpush2.msra.mxu0 0.0
        %5238 = vmatprep.subr.mxu0 0.0
        %5239 = vmatpush2.msra.mxu0 0.0
        %5240 = vmatprep.mubr.f32.mxu0 0.0
        %v5241 = vand.u32 %v4196, 4294901760
        %5242 = vmatmul.mubr.f32.gmra.mxu0 %v5241
        %v5243 = vpop.f32.mrf.mxu0
        %v5244 = vadd.f32 %v5005, %v5243
        %v5245 = vpop.f32.mrf.mxu0
        %5246 = vmatprep.mubr.f32.mxu0 0.0
        %v5247 = vand.u32 %v4197, 4294901760
        %5248 = vmatmul.mubr.f32.gmra.mxu0 %v5247
        %v5249 = vpop.f32.mrf.mxu0
        %v5250 = vadd.f32 %v5013, %v5249
        %v5251 = vpop.f32.mrf.mxu0
        %5252 = vmatprep.mubr.f32.mxu0 0.0
        %v5253 = vand.u32 %v4198, 4294901760
        %5254 = vmatmul.mubr.f32.gmra.mxu0 %v5253
        %v5255 = vpop.f32.mrf.mxu0
        %v5256 = vadd.f32 %v5021, %v5255
        %v5257 = vpop.f32.mrf.mxu0
        %5258 = vmatprep.mubr.f32.mxu0 0.0
        %v5259 = vand.u32 %v4199, 4294901760
        %5260 = vmatmul.mubr.f32.gmra.mxu0 %v5259
        %v5261 = vpop.f32.mrf.mxu0
        %v5262 = vadd.f32 %v5029, %v5261
        %v5263 = vpop.f32.mrf.mxu0
        %5264 = vmatprep.mubr.f32.mxu0 0.0
        %v5265 = vand.u32 %v4200, 4294901760
        %5266 = vmatmul.mubr.f32.gmra.mxu0 %v5265
        %v5267 = vpop.f32.mrf.mxu0
        %v5268 = vadd.f32 %v5037, %v5267
        %v5269 = vpop.f32.mrf.mxu0
        %5270 = vmatprep.mubr.f32.mxu0 0.0
        %v5271 = vand.u32 %v4201, 4294901760
        %5272 = vmatmul.mubr.f32.gmra.mxu0 %v5271
        %v5273 = vpop.f32.mrf.mxu0
        %v5274 = vadd.f32 %v5045, %v5273
        %v5275 = vpop.f32.mrf.mxu0
        %5276 = vmatprep.mubr.f32.mxu0 0.0
        %v5277 = vand.u32 %v4202, 4294901760
        %5278 = vmatmul.mubr.f32.gmra.mxu0 %v5277
        %v5279 = vpop.f32.mrf.mxu0
        %v5280 = vadd.f32 %v5053, %v5279
        %v5281 = vpop.f32.mrf.mxu0
        %5282 = vmatprep.mubr.f32.mxu0 0.0
        %v5283 = vand.u32 %v4203, 4294901760
        %5284 = vmatmul.mubr.f32.gmra.mxu0 %v5283
        %v5285 = vpop.f32.mrf.mxu0
        %v5286 = vadd.f32 %v5061, %v5285
        %v5287 = vpop.f32.mrf.mxu0
        %5288 = vmatprep.mubr.f32.mxu0 0.0
        %v5289 = vand.u32 %v4204, 4294901760
        %5290 = vmatmul.mubr.f32.gmra.mxu0 %v5289
        %v5291 = vpop.f32.mrf.mxu0
        %v5292 = vadd.f32 %v5069, %v5291
        %v5293 = vpop.f32.mrf.mxu0
        %5294 = vmatprep.mubr.f32.mxu0 0.0
        %v5295 = vand.u32 %v4205, 4294901760
        %5296 = vmatmul.mubr.f32.gmra.mxu0 %v5295
        %v5297 = vpop.f32.mrf.mxu0
        %v5298 = vadd.f32 %v5077, %v5297
        %v5299 = vpop.f32.mrf.mxu0
        %5300 = vmatprep.mubr.f32.mxu0 0.0
        %v5301 = vand.u32 %v4206, 4294901760
        %5302 = vmatmul.mubr.f32.gmra.mxu0 %v5301
        %v5303 = vpop.f32.mrf.mxu0
        %v5304 = vadd.f32 %v5085, %v5303
        %v5305 = vpop.f32.mrf.mxu0
        %5306 = vmatprep.mubr.f32.mxu0 0.0
        %v5307 = vand.u32 %v4207, 4294901760
        %5308 = vmatmul.mubr.f32.gmra.mxu0 %v5307
        %v5309 = vpop.f32.mrf.mxu0
        %v5310 = vadd.f32 %v5093, %v5309
        %v5311 = vpop.f32.mrf.mxu0
        %5312 = vmatprep.mubr.f32.mxu0 0.0
        %v5313 = vand.u32 %v4208, 4294901760
        %5314 = vmatmul.mubr.f32.gmra.mxu0 %v5313
        %v5315 = vpop.f32.mrf.mxu0
        %v5316 = vadd.f32 %v5101, %v5315
        %v5317 = vpop.f32.mrf.mxu0
        %5318 = vmatprep.mubr.f32.mxu0 0.0
        %v5319 = vand.u32 %v4209, 4294901760
        %5320 = vmatmul.mubr.f32.gmra.mxu0 %v5319
        %v5321 = vpop.f32.mrf.mxu0
        %v5322 = vadd.f32 %v5109, %v5321
        %v5323 = vpop.f32.mrf.mxu0
        %5324 = vmatprep.mubr.f32.mxu0 0.0
        %v5325 = vand.u32 %v4210, 4294901760
        %5326 = vmatmul.mubr.f32.gmra.mxu0 %v5325
        %v5327 = vpop.f32.mrf.mxu0
        %v5328 = vadd.f32 %v5117, %v5327
        %v5329 = vpop.f32.mrf.mxu0
        %5330 = vmatprep.mubr.f32.mxu0 0.0
        %v5331 = vand.u32 %v4211, 4294901760
        %5332 = vmatmul.mubr.f32.gmra.mxu0 %v5331
        %v5333 = vpop.f32.mrf.mxu0
        %v5334 = vadd.f32 %v5125, %v5333
        %v5335 = vpop.f32.mrf.mxu0
        %5336 = vdwg.mxu0
        %5337 = vmatprep.subr.mxu0 0.0
        %v5338 = vand.u32 %v4195, 4294901760
        %5339 = vmatpush1.msra.mxu0 %v5338
        %5340 = vmatprep.subr.mxu0 0.0
        %v5341 = vand.u32 %v4194, 4294901760
        %5342 = vmatpush1.msra.mxu0 %v5341
        %5343 = vmatprep.subr.mxu0 0.0
        %v5344 = vand.u32 %v4193, 4294901760
        %5345 = vmatpush1.msra.mxu0 %v5344
        %5346 = vmatprep.subr.mxu0 0.0
        %v5347 = vand.u32 %v4192, 4294901760
        %5348 = vmatpush1.msra.mxu0 %v5347
        %5349 = vmatprep.subr.mxu0 0.0
        %v5350 = vand.u32 %v4191, 4294901760
        %5351 = vmatpush1.msra.mxu0 %v5350
        %5352 = vmatprep.subr.mxu0 0.0
        %v5353 = vand.u32 %v4190, 4294901760
        %5354 = vmatpush1.msra.mxu0 %v5353
        %5355 = vmatprep.subr.mxu0 0.0
        %v5356 = vand.u32 %v4189, 4294901760
        %5357 = vmatpush1.msra.mxu0 %v5356
        %5358 = vmatprep.subr.mxu0 0.0
        %v5359 = vand.u32 %v4188, 4294901760
        %5360 = vmatpush1.msra.mxu0 %v5359
        %5361 = vmatprep.subr.mxu0 0.0
        %v5362 = vand.u32 %v4187, 4294901760
        %5363 = vmatpush1.msra.mxu0 %v5362
        %5364 = vmatprep.subr.mxu0 0.0
        %v5365 = vand.u32 %v4186, 4294901760
        %5366 = vmatpush1.msra.mxu0 %v5365
        %5367 = vmatprep.subr.mxu0 0.0
        %v5368 = vand.u32 %v4185, 4294901760
        %5369 = vmatpush1.msra.mxu0 %v5368
        %5370 = vmatprep.subr.mxu0 0.0
        %v5371 = vand.u32 %v4184, 4294901760
        %5372 = vmatpush1.msra.mxu0 %v5371
        %5373 = vmatprep.subr.mxu0 0.0
        %v5374 = vand.u32 %v4183, 4294901760
        %5375 = vmatpush1.msra.mxu0 %v5374
        %5376 = vmatprep.subr.mxu0 0.0
        %v5377 = vand.u32 %v4182, 4294901760
        %5378 = vmatpush1.msra.mxu0 %v5377
        %5379 = vmatprep.subr.mxu0 0.0
        %v5380 = vand.u32 %v4181, 4294901760
        %5381 = vmatpush1.msra.mxu0 %v5380
        %5382 = vmatprep.subr.mxu0 0.0
        %v5383 = vand.u32 %v4180, 4294901760
        %5384 = vmatpush1.msra.mxu0 %v5383
        %5385 = vmatprep.subr.mxu0 0.0
        %5386 = vmatpush2.msra.mxu0 0.0
        %5387 = vmatprep.subr.mxu0 0.0
        %5388 = vmatpush2.msra.mxu0 0.0
        %5389 = vmatprep.subr.mxu0 0.0
        %5390 = vmatpush2.msra.mxu0 0.0
        %5391 = vmatprep.subr.mxu0 0.0
        %5392 = vmatpush2.msra.mxu0 0.0
        %5393 = vmatprep.subr.mxu0 0.0
        %5394 = vmatpush2.msra.mxu0 0.0
        %5395 = vmatprep.subr.mxu0 0.0
        %5396 = vmatpush2.msra.mxu0 0.0
        %5397 = vmatprep.subr.mxu0 0.0
        %5398 = vmatpush2.msra.mxu0 0.0
        %5399 = vmatprep.subr.mxu0 0.0
        %5400 = vmatpush2.msra.mxu0 0.0
        %5401 = vmatprep.subr.mxu0 0.0
        %5402 = vmatpush2.msra.mxu0 0.0
        %5403 = vmatprep.subr.mxu0 0.0
        %5404 = vmatpush2.msra.mxu0 0.0
        %5405 = vmatprep.subr.mxu0 0.0
        %5406 = vmatpush2.msra.mxu0 0.0
        %5407 = vmatprep.subr.mxu0 0.0
        %5408 = vmatpush2.msra.mxu0 0.0
        %5409 = vmatprep.subr.mxu0 0.0
        %5410 = vmatpush2.msra.mxu0 0.0
        %5411 = vmatprep.subr.mxu0 0.0
        %5412 = vmatpush2.msra.mxu0 0.0
        %5413 = vmatprep.subr.mxu0 0.0
        %5414 = vmatpush2.msra.mxu0 0.0
        %5415 = vmatprep.subr.mxu0 0.0
        %5416 = vmatpush2.msra.mxu0 0.0
        %5417 = vmatprep.mubr.f32.mxu0 0.0
        %v5418 = vand.u32 %v4196, 4294901760
        %5419 = vmatmul.mubr.f32.gmra.mxu0 %v5418
        %v5420 = vpop.f32.mrf.mxu0
        %v5421 = vadd.f32 %v5244, %v5420
        %v5422 = vpop.f32.mrf.mxu0
        %5423 = vmatprep.mubr.f32.mxu0 0.0
        %v5424 = vand.u32 %v4197, 4294901760
        %5425 = vmatmul.mubr.f32.gmra.mxu0 %v5424
        %v5426 = vpop.f32.mrf.mxu0
        %v5427 = vadd.f32 %v5250, %v5426
        %v5428 = vpop.f32.mrf.mxu0
        %5429 = vmatprep.mubr.f32.mxu0 0.0
        %v5430 = vand.u32 %v4198, 4294901760
        %5431 = vmatmul.mubr.f32.gmra.mxu0 %v5430
        %v5432 = vpop.f32.mrf.mxu0
        %v5433 = vadd.f32 %v5256, %v5432
        %v5434 = vpop.f32.mrf.mxu0
        %5435 = vmatprep.mubr.f32.mxu0 0.0
        %v5436 = vand.u32 %v4199, 4294901760
        %5437 = vmatmul.mubr.f32.gmra.mxu0 %v5436
        %v5438 = vpop.f32.mrf.mxu0
        %v5439 = vadd.f32 %v5262, %v5438
        %v5440 = vpop.f32.mrf.mxu0
        %5441 = vmatprep.mubr.f32.mxu0 0.0
        %v5442 = vand.u32 %v4200, 4294901760
        %5443 = vmatmul.mubr.f32.gmra.mxu0 %v5442
        %v5444 = vpop.f32.mrf.mxu0
        %v5445 = vadd.f32 %v5268, %v5444
        %v5446 = vpop.f32.mrf.mxu0
        %5447 = vmatprep.mubr.f32.mxu0 0.0
        %v5448 = vand.u32 %v4201, 4294901760
        %5449 = vmatmul.mubr.f32.gmra.mxu0 %v5448
        %v5450 = vpop.f32.mrf.mxu0
        %v5451 = vadd.f32 %v5274, %v5450
        %v5452 = vpop.f32.mrf.mxu0
        %5453 = vmatprep.mubr.f32.mxu0 0.0
        %v5454 = vand.u32 %v4202, 4294901760
        %5455 = vmatmul.mubr.f32.gmra.mxu0 %v5454
        %v5456 = vpop.f32.mrf.mxu0
        %v5457 = vadd.f32 %v5280, %v5456
        %v5458 = vpop.f32.mrf.mxu0
        %5459 = vmatprep.mubr.f32.mxu0 0.0
        %v5460 = vand.u32 %v4203, 4294901760
        %5461 = vmatmul.mubr.f32.gmra.mxu0 %v5460
        %v5462 = vpop.f32.mrf.mxu0
        %v5463 = vadd.f32 %v5286, %v5462
        %v5464 = vpop.f32.mrf.mxu0
        %5465 = vmatprep.mubr.f32.mxu0 0.0
        %v5466 = vand.u32 %v4204, 4294901760
        %5467 = vmatmul.mubr.f32.gmra.mxu0 %v5466
        %v5468 = vpop.f32.mrf.mxu0
        %v5469 = vadd.f32 %v5292, %v5468
        %v5470 = vpop.f32.mrf.mxu0
        %5471 = vmatprep.mubr.f32.mxu0 0.0
        %v5472 = vand.u32 %v4205, 4294901760
        %5473 = vmatmul.mubr.f32.gmra.mxu0 %v5472
        %v5474 = vpop.f32.mrf.mxu0
        %v5475 = vadd.f32 %v5298, %v5474
        %v5476 = vpop.f32.mrf.mxu0
        %5477 = vmatprep.mubr.f32.mxu0 0.0
        %v5478 = vand.u32 %v4206, 4294901760
        %5479 = vmatmul.mubr.f32.gmra.mxu0 %v5478
        %v5480 = vpop.f32.mrf.mxu0
        %v5481 = vadd.f32 %v5304, %v5480
        %v5482 = vpop.f32.mrf.mxu0
        %5483 = vmatprep.mubr.f32.mxu0 0.0
        %v5484 = vand.u32 %v4207, 4294901760
        %5485 = vmatmul.mubr.f32.gmra.mxu0 %v5484
        %v5486 = vpop.f32.mrf.mxu0
        %v5487 = vadd.f32 %v5310, %v5486
        %v5488 = vpop.f32.mrf.mxu0
        %5489 = vmatprep.mubr.f32.mxu0 0.0
        %v5490 = vand.u32 %v4208, 4294901760
        %5491 = vmatmul.mubr.f32.gmra.mxu0 %v5490
        %v5492 = vpop.f32.mrf.mxu0
        %v5493 = vadd.f32 %v5316, %v5492
        %v5494 = vpop.f32.mrf.mxu0
        %5495 = vmatprep.mubr.f32.mxu0 0.0
        %v5496 = vand.u32 %v4209, 4294901760
        %5497 = vmatmul.mubr.f32.gmra.mxu0 %v5496
        %v5498 = vpop.f32.mrf.mxu0
        %v5499 = vadd.f32 %v5322, %v5498
        %v5500 = vpop.f32.mrf.mxu0
        %5501 = vmatprep.mubr.f32.mxu0 0.0
        %v5502 = vand.u32 %v4210, 4294901760
        %5503 = vmatmul.mubr.f32.gmra.mxu0 %v5502
        %v5504 = vpop.f32.mrf.mxu0
        %v5505 = vadd.f32 %v5328, %v5504
        %v5506 = vpop.f32.mrf.mxu0
        %5507 = vmatprep.mubr.f32.mxu0 0.0
        %v5508 = vand.u32 %v4211, 4294901760
        %5509 = vmatmul.mubr.f32.gmra.mxu0 %v5508
        %v5510 = vpop.f32.mrf.mxu0
        %v5511 = vadd.f32 %v5334, %v5510
        %v5512 = vpop.f32.mrf.mxu0
        %5513 = vdwg.mxu0
        %v5514 = vmax.f32 %v5421, 0.0
        %v5515 = vmax.f32 %v5427, 0.0
        %v5516 = vmax.f32 %v5433, 0.0
        %v5517 = vmax.f32 %v5439, 0.0
        %v5518 = vmax.f32 %v5445, 0.0
        %v5519 = vmax.f32 %v5451, 0.0
        %v5520 = vmax.f32 %v5457, 0.0
        %v5521 = vmax.f32 %v5463, 0.0
        %v5522 = vmax.f32 %v5469, 0.0
        %v5523 = vmax.f32 %v5475, 0.0
        %v5524 = vmax.f32 %v5481, 0.0
        %v5525 = vmax.f32 %v5487, 0.0
        %v5526 = vmax.f32 %v5493, 0.0
        %v5527 = vmax.f32 %v5499, 0.0
        %v5528 = vmax.f32 %v5505, 0.0
        %v5529 = vmax.f32 %v5511, 0.0
        %v5530 = vld [vmem:[%s9] sm:$0xff]
        %v5531 = vld [vmem:[%s9 + $0x8] sm:$0xff]
        %v5532 = vld [vmem:[%s9 + $0x10] sm:$0xff]
        %v5533 = vld [vmem:[%s9 + $0x18] sm:$0xff]
        %v5534 = vld [vmem:[%s9 + $0x20] sm:$0xff]
        %v5535 = vld [vmem:[%s9 + $0x28] sm:$0xff]
        %v5536 = vld [vmem:[%s9 + $0x30] sm:$0xff]
        %v5537 = vld [vmem:[%s9 + $0x38] sm:$0xff]
        %v5538 = vld [vmem:[%s9 + $0x40] sm:$0xff]
        %v5539 = vld [vmem:[%s9 + $0x48] sm:$0xff]
        %v5540 = vld [vmem:[%s9 + $0x50] sm:$0xff]
        %v5541 = vld [vmem:[%s9 + $0x58] sm:$0xff]
        %v5542 = vld [vmem:[%s9 + $0x60] sm:$0xff]
        %v5543 = vld [vmem:[%s9 + $0x68] sm:$0xff]
        %v5544 = vld [vmem:[%s9 + $0x70] sm:$0xff]
        %v5545 = vld [vmem:[%s9 + $0x78] sm:$0xff]
        %v5546 = vld [vmem:[%s10] sm:$0xff]
        %v5547 = vld [vmem:[%s10 + $0x8] sm:$0xff]
        %v5548 = vld [vmem:[%s10 + $0x10] sm:$0xff]
        %v5549 = vld [vmem:[%s10 + $0x18] sm:$0xff]
        %v5550 = vld [vmem:[%s10 + $0x20] sm:$0xff]
        %v5551 = vld [vmem:[%s10 + $0x28] sm:$0xff]
        %v5552 = vld [vmem:[%s10 + $0x30] sm:$0xff]
        %v5553 = vld [vmem:[%s10 + $0x38] sm:$0xff]
        %v5554 = vld [vmem:[%s10 + $0x40] sm:$0xff]
        %v5555 = vld [vmem:[%s10 + $0x48] sm:$0xff]
        %v5556 = vld [vmem:[%s10 + $0x50] sm:$0xff]
        %v5557 = vld [vmem:[%s10 + $0x58] sm:$0xff]
        %v5558 = vld [vmem:[%s10 + $0x60] sm:$0xff]
        %v5559 = vld [vmem:[%s10 + $0x68] sm:$0xff]
        %v5560 = vld [vmem:[%s10 + $0x70] sm:$0xff]
        %v5561 = vld [vmem:[%s10 + $0x78] sm:$0xff]
        %5562 = vmatprep.subr.mxu0 0.0
        %v5563 = vand.u32 %v5529, 4294901760
        %5564 = vmatpush1.msra.mxu0 %v5563
        %5565 = vmatprep.subr.mxu0 0.0
        %v5566 = vand.u32 %v5528, 4294901760
        %5567 = vmatpush1.msra.mxu0 %v5566
        %5568 = vmatprep.subr.mxu0 0.0
        %v5569 = vand.u32 %v5527, 4294901760
        %5570 = vmatpush1.msra.mxu0 %v5569
        %5571 = vmatprep.subr.mxu0 0.0
        %v5572 = vand.u32 %v5526, 4294901760
        %5573 = vmatpush1.msra.mxu0 %v5572
        %5574 = vmatprep.subr.mxu0 0.0
        %v5575 = vand.u32 %v5525, 4294901760
        %5576 = vmatpush1.msra.mxu0 %v5575
        %5577 = vmatprep.subr.mxu0 0.0
        %v5578 = vand.u32 %v5524, 4294901760
        %5579 = vmatpush1.msra.mxu0 %v5578
        %5580 = vmatprep.subr.mxu0 0.0
        %v5581 = vand.u32 %v5523, 4294901760
        %5582 = vmatpush1.msra.mxu0 %v5581
        %5583 = vmatprep.subr.mxu0 0.0
        %v5584 = vand.u32 %v5522, 4294901760
        %5585 = vmatpush1.msra.mxu0 %v5584
        %5586 = vmatprep.subr.mxu0 0.0
        %v5587 = vand.u32 %v5521, 4294901760
        %5588 = vmatpush1.msra.mxu0 %v5587
        %5589 = vmatprep.subr.mxu0 0.0
        %v5590 = vand.u32 %v5520, 4294901760
        %5591 = vmatpush1.msra.mxu0 %v5590
        %5592 = vmatprep.subr.mxu0 0.0
        %v5593 = vand.u32 %v5519, 4294901760
        %5594 = vmatpush1.msra.mxu0 %v5593
        %5595 = vmatprep.subr.mxu0 0.0
        %v5596 = vand.u32 %v5518, 4294901760
        %5597 = vmatpush1.msra.mxu0 %v5596
        %5598 = vmatprep.subr.mxu0 0.0
        %v5599 = vand.u32 %v5517, 4294901760
        %5600 = vmatpush1.msra.mxu0 %v5599
        %5601 = vmatprep.subr.mxu0 0.0
        %v5602 = vand.u32 %v5516, 4294901760
        %5603 = vmatpush1.msra.mxu0 %v5602
        %5604 = vmatprep.subr.mxu0 0.0
        %v5605 = vand.u32 %v5515, 4294901760
        %5606 = vmatpush1.msra.mxu0 %v5605
        %5607 = vmatprep.subr.mxu0 0.0
        %v5608 = vand.u32 %v5514, 4294901760
        %5609 = vmatpush1.msra.mxu0 %v5608
        %5610 = vmatprep.subr.mxu0 0.0
        %5611 = vmatpush2.msra.mxu0 0.0
        %5612 = vmatprep.subr.mxu0 0.0
        %5613 = vmatpush2.msra.mxu0 0.0
        %5614 = vmatprep.subr.mxu0 0.0
        %5615 = vmatpush2.msra.mxu0 0.0
        %5616 = vmatprep.subr.mxu0 0.0
        %5617 = vmatpush2.msra.mxu0 0.0
        %5618 = vmatprep.subr.mxu0 0.0
        %5619 = vmatpush2.msra.mxu0 0.0
        %5620 = vmatprep.subr.mxu0 0.0
        %5621 = vmatpush2.msra.mxu0 0.0
        %5622 = vmatprep.subr.mxu0 0.0
        %5623 = vmatpush2.msra.mxu0 0.0
        %5624 = vmatprep.subr.mxu0 0.0
        %5625 = vmatpush2.msra.mxu0 0.0
        %5626 = vmatprep.subr.mxu0 0.0
        %5627 = vmatpush2.msra.mxu0 0.0
        %5628 = vmatprep.subr.mxu0 0.0
        %5629 = vmatpush2.msra.mxu0 0.0
        %5630 = vmatprep.subr.mxu0 0.0
        %5631 = vmatpush2.msra.mxu0 0.0
        %5632 = vmatprep.subr.mxu0 0.0
        %5633 = vmatpush2.msra.mxu0 0.0
        %5634 = vmatprep.subr.mxu0 0.0
        %5635 = vmatpush2.msra.mxu0 0.0
        %5636 = vmatprep.subr.mxu0 0.0
        %5637 = vmatpush2.msra.mxu0 0.0
        %5638 = vmatprep.subr.mxu0 0.0
        %5639 = vmatpush2.msra.mxu0 0.0
        %5640 = vmatprep.subr.mxu0 0.0
        %5641 = vmatpush2.msra.mxu0 0.0
        %5642 = vmatprep.mubr.f32.mxu0 0.0
        %v5643 = vand.u32 %v5530, 4294901760
        %v5644 = vsub.f32 %v5530, %v5643
        %v5645 = vand.u32 %v5644, 4294901760
        %v5646 = vsub.f32 %v5644, %v5645
        %v5647 = vand.u32 %v5646, 4294901760
        %5648 = vmatmul.mubr.f32.gmra.mxu0 %v5647
        %v5649 = vpop.f32.mrf.mxu0
        %v5650 = vadd.f32 %v5546, %v5649
        %v5651 = vpop.f32.mrf.mxu0
        %5652 = vmatprep.mubr.f32.mxu0 0.0
        %v5653 = vand.u32 %v5531, 4294901760
        %v5654 = vsub.f32 %v5531, %v5653
        %v5655 = vand.u32 %v5654, 4294901760
        %v5656 = vsub.f32 %v5654, %v5655
        %v5657 = vand.u32 %v5656, 4294901760
        %5658 = vmatmul.mubr.f32.gmra.mxu0 %v5657
        %v5659 = vpop.f32.mrf.mxu0
        %v5660 = vadd.f32 %v5547, %v5659
        %v5661 = vpop.f32.mrf.mxu0
        %5662 = vmatprep.mubr.f32.mxu0 0.0
        %v5663 = vand.u32 %v5532, 4294901760
        %v5664 = vsub.f32 %v5532, %v5663
        %v5665 = vand.u32 %v5664, 4294901760
        %v5666 = vsub.f32 %v5664, %v5665
        %v5667 = vand.u32 %v5666, 4294901760
        %5668 = vmatmul.mubr.f32.gmra.mxu0 %v5667
        %v5669 = vpop.f32.mrf.mxu0
        %v5670 = vadd.f32 %v5548, %v5669
        %v5671 = vpop.f32.mrf.mxu0
        %5672 = vmatprep.mubr.f32.mxu0 0.0
        %v5673 = vand.u32 %v5533, 4294901760
        %v5674 = vsub.f32 %v5533, %v5673
        %v5675 = vand.u32 %v5674, 4294901760
        %v5676 = vsub.f32 %v5674, %v5675
        %v5677 = vand.u32 %v5676, 4294901760
        %5678 = vmatmul.mubr.f32.gmra.mxu0 %v5677
        %v5679 = vpop.f32.mrf.mxu0
        %v5680 = vadd.f32 %v5549, %v5679
        %v5681 = vpop.f32.mrf.mxu0
        %5682 = vmatprep.mubr.f32.mxu0 0.0
        %v5683 = vand.u32 %v5534, 4294901760
        %v5684 = vsub.f32 %v5534, %v5683
        %v5685 = vand.u32 %v5684, 4294901760
        %v5686 = vsub.f32 %v5684, %v5685
        %v5687 = vand.u32 %v5686, 4294901760
        %5688 = vmatmul.mubr.f32.gmra.mxu0 %v5687
        %v5689 = vpop.f32.mrf.mxu0
        %v5690 = vadd.f32 %v5550, %v5689
        %v5691 = vpop.f32.mrf.mxu0
        %5692 = vmatprep.mubr.f32.mxu0 0.0
        %v5693 = vand.u32 %v5535, 4294901760
        %v5694 = vsub.f32 %v5535, %v5693
        %v5695 = vand.u32 %v5694, 4294901760
        %v5696 = vsub.f32 %v5694, %v5695
        %v5697 = vand.u32 %v5696, 4294901760
        %5698 = vmatmul.mubr.f32.gmra.mxu0 %v5697
        %v5699 = vpop.f32.mrf.mxu0
        %v5700 = vadd.f32 %v5551, %v5699
        %v5701 = vpop.f32.mrf.mxu0
        %5702 = vmatprep.mubr.f32.mxu0 0.0
        %v5703 = vand.u32 %v5536, 4294901760
        %v5704 = vsub.f32 %v5536, %v5703
        %v5705 = vand.u32 %v5704, 4294901760
        %v5706 = vsub.f32 %v5704, %v5705
        %v5707 = vand.u32 %v5706, 4294901760
        %5708 = vmatmul.mubr.f32.gmra.mxu0 %v5707
        %v5709 = vpop.f32.mrf.mxu0
        %v5710 = vadd.f32 %v5552, %v5709
        %v5711 = vpop.f32.mrf.mxu0
        %5712 = vmatprep.mubr.f32.mxu0 0.0
        %v5713 = vand.u32 %v5537, 4294901760
        %v5714 = vsub.f32 %v5537, %v5713
        %v5715 = vand.u32 %v5714, 4294901760
        %v5716 = vsub.f32 %v5714, %v5715
        %v5717 = vand.u32 %v5716, 4294901760
        %5718 = vmatmul.mubr.f32.gmra.mxu0 %v5717
        %v5719 = vpop.f32.mrf.mxu0
        %v5720 = vadd.f32 %v5553, %v5719
        %v5721 = vpop.f32.mrf.mxu0
        %5722 = vmatprep.mubr.f32.mxu0 0.0
        %v5723 = vand.u32 %v5538, 4294901760
        %v5724 = vsub.f32 %v5538, %v5723
        %v5725 = vand.u32 %v5724, 4294901760
        %v5726 = vsub.f32 %v5724, %v5725
        %v5727 = vand.u32 %v5726, 4294901760
        %5728 = vmatmul.mubr.f32.gmra.mxu0 %v5727
        %v5729 = vpop.f32.mrf.mxu0
        %v5730 = vadd.f32 %v5554, %v5729
        %v5731 = vpop.f32.mrf.mxu0
        %5732 = vmatprep.mubr.f32.mxu0 0.0
        %v5733 = vand.u32 %v5539, 4294901760
        %v5734 = vsub.f32 %v5539, %v5733
        %v5735 = vand.u32 %v5734, 4294901760
        %v5736 = vsub.f32 %v5734, %v5735
        %v5737 = vand.u32 %v5736, 4294901760
        %5738 = vmatmul.mubr.f32.gmra.mxu0 %v5737
        %v5739 = vpop.f32.mrf.mxu0
        %v5740 = vadd.f32 %v5555, %v5739
        %v5741 = vpop.f32.mrf.mxu0
        %5742 = vmatprep.mubr.f32.mxu0 0.0
        %v5743 = vand.u32 %v5540, 4294901760
        %v5744 = vsub.f32 %v5540, %v5743
        %v5745 = vand.u32 %v5744, 4294901760
        %v5746 = vsub.f32 %v5744, %v5745
        %v5747 = vand.u32 %v5746, 4294901760
        %5748 = vmatmul.mubr.f32.gmra.mxu0 %v5747
        %v5749 = vpop.f32.mrf.mxu0
        %v5750 = vadd.f32 %v5556, %v5749
        %v5751 = vpop.f32.mrf.mxu0
        %5752 = vmatprep.mubr.f32.mxu0 0.0
        %v5753 = vand.u32 %v5541, 4294901760
        %v5754 = vsub.f32 %v5541, %v5753
        %v5755 = vand.u32 %v5754, 4294901760
        %v5756 = vsub.f32 %v5754, %v5755
        %v5757 = vand.u32 %v5756, 4294901760
        %5758 = vmatmul.mubr.f32.gmra.mxu0 %v5757
        %v5759 = vpop.f32.mrf.mxu0
        %v5760 = vadd.f32 %v5557, %v5759
        %v5761 = vpop.f32.mrf.mxu0
        %5762 = vmatprep.mubr.f32.mxu0 0.0
        %v5763 = vand.u32 %v5542, 4294901760
        %v5764 = vsub.f32 %v5542, %v5763
        %v5765 = vand.u32 %v5764, 4294901760
        %v5766 = vsub.f32 %v5764, %v5765
        %v5767 = vand.u32 %v5766, 4294901760
        %5768 = vmatmul.mubr.f32.gmra.mxu0 %v5767
        %v5769 = vpop.f32.mrf.mxu0
        %v5770 = vadd.f32 %v5558, %v5769
        %v5771 = vpop.f32.mrf.mxu0
        %5772 = vmatprep.mubr.f32.mxu0 0.0
        %v5773 = vand.u32 %v5543, 4294901760
        %v5774 = vsub.f32 %v5543, %v5773
        %v5775 = vand.u32 %v5774, 4294901760
        %v5776 = vsub.f32 %v5774, %v5775
        %v5777 = vand.u32 %v5776, 4294901760
        %5778 = vmatmul.mubr.f32.gmra.mxu0 %v5777
        %v5779 = vpop.f32.mrf.mxu0
        %v5780 = vadd.f32 %v5559, %v5779
        %v5781 = vpop.f32.mrf.mxu0
        %5782 = vmatprep.mubr.f32.mxu0 0.0
        %v5783 = vand.u32 %v5544, 4294901760
        %v5784 = vsub.f32 %v5544, %v5783
        %v5785 = vand.u32 %v5784, 4294901760
        %v5786 = vsub.f32 %v5784, %v5785
        %v5787 = vand.u32 %v5786, 4294901760
        %5788 = vmatmul.mubr.f32.gmra.mxu0 %v5787
        %v5789 = vpop.f32.mrf.mxu0
        %v5790 = vadd.f32 %v5560, %v5789
        %v5791 = vpop.f32.mrf.mxu0
        %5792 = vmatprep.mubr.f32.mxu0 0.0
        %v5793 = vand.u32 %v5545, 4294901760
        %v5794 = vsub.f32 %v5545, %v5793
        %v5795 = vand.u32 %v5794, 4294901760
        %v5796 = vsub.f32 %v5794, %v5795
        %v5797 = vand.u32 %v5796, 4294901760
        %5798 = vmatmul.mubr.f32.gmra.mxu0 %v5797
        %v5799 = vpop.f32.mrf.mxu0
        %v5800 = vadd.f32 %v5561, %v5799
        %v5801 = vpop.f32.mrf.mxu0
        %5802 = vdwg.mxu0
        %5803 = vmatprep.subr.mxu0 0.0
        %v5804 = vand.u32 %v5529, 4294901760
        %v5805 = vsub.f32 %v5529, %v5804
        %v5806 = vand.u32 %v5805, 4294901760
        %v5807 = vsub.f32 %v5805, %v5806
        %v5808 = vand.u32 %v5807, 4294901760
        %5809 = vmatpush1.msra.mxu0 %v5808
        %5810 = vmatprep.subr.mxu0 0.0
        %v5811 = vand.u32 %v5528, 4294901760
        %v5812 = vsub.f32 %v5528, %v5811
        %v5813 = vand.u32 %v5812, 4294901760
        %v5814 = vsub.f32 %v5812, %v5813
        %v5815 = vand.u32 %v5814, 4294901760
        %5816 = vmatpush1.msra.mxu0 %v5815
        %5817 = vmatprep.subr.mxu0 0.0
        %v5818 = vand.u32 %v5527, 4294901760
        %v5819 = vsub.f32 %v5527, %v5818
        %v5820 = vand.u32 %v5819, 4294901760
        %v5821 = vsub.f32 %v5819, %v5820
        %v5822 = vand.u32 %v5821, 4294901760
        %5823 = vmatpush1.msra.mxu0 %v5822
        %5824 = vmatprep.subr.mxu0 0.0
        %v5825 = vand.u32 %v5526, 4294901760
        %v5826 = vsub.f32 %v5526, %v5825
        %v5827 = vand.u32 %v5826, 4294901760
        %v5828 = vsub.f32 %v5826, %v5827
        %v5829 = vand.u32 %v5828, 4294901760
        %5830 = vmatpush1.msra.mxu0 %v5829
        %5831 = vmatprep.subr.mxu0 0.0
        %v5832 = vand.u32 %v5525, 4294901760
        %v5833 = vsub.f32 %v5525, %v5832
        %v5834 = vand.u32 %v5833, 4294901760
        %v5835 = vsub.f32 %v5833, %v5834
        %v5836 = vand.u32 %v5835, 4294901760
        %5837 = vmatpush1.msra.mxu0 %v5836
        %5838 = vmatprep.subr.mxu0 0.0
        %v5839 = vand.u32 %v5524, 4294901760
        %v5840 = vsub.f32 %v5524, %v5839
        %v5841 = vand.u32 %v5840, 4294901760
        %v5842 = vsub.f32 %v5840, %v5841
        %v5843 = vand.u32 %v5842, 4294901760
        %5844 = vmatpush1.msra.mxu0 %v5843
        %5845 = vmatprep.subr.mxu0 0.0
        %v5846 = vand.u32 %v5523, 4294901760
        %v5847 = vsub.f32 %v5523, %v5846
        %v5848 = vand.u32 %v5847, 4294901760
        %v5849 = vsub.f32 %v5847, %v5848
        %v5850 = vand.u32 %v5849, 4294901760
        %5851 = vmatpush1.msra.mxu0 %v5850
        %5852 = vmatprep.subr.mxu0 0.0
        %v5853 = vand.u32 %v5522, 4294901760
        %v5854 = vsub.f32 %v5522, %v5853
        %v5855 = vand.u32 %v5854, 4294901760
        %v5856 = vsub.f32 %v5854, %v5855
        %v5857 = vand.u32 %v5856, 4294901760
        %5858 = vmatpush1.msra.mxu0 %v5857
        %5859 = vmatprep.subr.mxu0 0.0
        %v5860 = vand.u32 %v5521, 4294901760
        %v5861 = vsub.f32 %v5521, %v5860
        %v5862 = vand.u32 %v5861, 4294901760
        %v5863 = vsub.f32 %v5861, %v5862
        %v5864 = vand.u32 %v5863, 4294901760
        %5865 = vmatpush1.msra.mxu0 %v5864
        %5866 = vmatprep.subr.mxu0 0.0
        %v5867 = vand.u32 %v5520, 4294901760
        %v5868 = vsub.f32 %v5520, %v5867
        %v5869 = vand.u32 %v5868, 4294901760
        %v5870 = vsub.f32 %v5868, %v5869
        %v5871 = vand.u32 %v5870, 4294901760
        %5872 = vmatpush1.msra.mxu0 %v5871
        %5873 = vmatprep.subr.mxu0 0.0
        %v5874 = vand.u32 %v5519, 4294901760
        %v5875 = vsub.f32 %v5519, %v5874
        %v5876 = vand.u32 %v5875, 4294901760
        %v5877 = vsub.f32 %v5875, %v5876
        %v5878 = vand.u32 %v5877, 4294901760
        %5879 = vmatpush1.msra.mxu0 %v5878
        %5880 = vmatprep.subr.mxu0 0.0
        %v5881 = vand.u32 %v5518, 4294901760
        %v5882 = vsub.f32 %v5518, %v5881
        %v5883 = vand.u32 %v5882, 4294901760
        %v5884 = vsub.f32 %v5882, %v5883
        %v5885 = vand.u32 %v5884, 4294901760
        %5886 = vmatpush1.msra.mxu0 %v5885
        %5887 = vmatprep.subr.mxu0 0.0
        %v5888 = vand.u32 %v5517, 4294901760
        %v5889 = vsub.f32 %v5517, %v5888
        %v5890 = vand.u32 %v5889, 4294901760
        %v5891 = vsub.f32 %v5889, %v5890
        %v5892 = vand.u32 %v5891, 4294901760
        %5893 = vmatpush1.msra.mxu0 %v5892
        %5894 = vmatprep.subr.mxu0 0.0
        %v5895 = vand.u32 %v5516, 4294901760
        %v5896 = vsub.f32 %v5516, %v5895
        %v5897 = vand.u32 %v5896, 4294901760
        %v5898 = vsub.f32 %v5896, %v5897
        %v5899 = vand.u32 %v5898, 4294901760
        %5900 = vmatpush1.msra.mxu0 %v5899
        %5901 = vmatprep.subr.mxu0 0.0
        %v5902 = vand.u32 %v5515, 4294901760
        %v5903 = vsub.f32 %v5515, %v5902
        %v5904 = vand.u32 %v5903, 4294901760
        %v5905 = vsub.f32 %v5903, %v5904
        %v5906 = vand.u32 %v5905, 4294901760
        %5907 = vmatpush1.msra.mxu0 %v5906
        %5908 = vmatprep.subr.mxu0 0.0
        %v5909 = vand.u32 %v5514, 4294901760
        %v5910 = vsub.f32 %v5514, %v5909
        %v5911 = vand.u32 %v5910, 4294901760
        %v5912 = vsub.f32 %v5910, %v5911
        %v5913 = vand.u32 %v5912, 4294901760
        %5914 = vmatpush1.msra.mxu0 %v5913
        %5915 = vmatprep.subr.mxu0 0.0
        %5916 = vmatpush2.msra.mxu0 0.0
        %5917 = vmatprep.subr.mxu0 0.0
        %5918 = vmatpush2.msra.mxu0 0.0
        %5919 = vmatprep.subr.mxu0 0.0
        %5920 = vmatpush2.msra.mxu0 0.0
        %5921 = vmatprep.subr.mxu0 0.0
        %5922 = vmatpush2.msra.mxu0 0.0
        %5923 = vmatprep.subr.mxu0 0.0
        %5924 = vmatpush2.msra.mxu0 0.0
        %5925 = vmatprep.subr.mxu0 0.0
        %5926 = vmatpush2.msra.mxu0 0.0
        %5927 = vmatprep.subr.mxu0 0.0
        %5928 = vmatpush2.msra.mxu0 0.0
        %5929 = vmatprep.subr.mxu0 0.0
        %5930 = vmatpush2.msra.mxu0 0.0
        %5931 = vmatprep.subr.mxu0 0.0
        %5932 = vmatpush2.msra.mxu0 0.0
        %5933 = vmatprep.subr.mxu0 0.0
        %5934 = vmatpush2.msra.mxu0 0.0
        %5935 = vmatprep.subr.mxu0 0.0
        %5936 = vmatpush2.msra.mxu0 0.0
        %5937 = vmatprep.subr.mxu0 0.0
        %5938 = vmatpush2.msra.mxu0 0.0
        %5939 = vmatprep.subr.mxu0 0.0
        %5940 = vmatpush2.msra.mxu0 0.0
        %5941 = vmatprep.subr.mxu0 0.0
        %5942 = vmatpush2.msra.mxu0 0.0
        %5943 = vmatprep.subr.mxu0 0.0
        %5944 = vmatpush2.msra.mxu0 0.0
        %5945 = vmatprep.subr.mxu0 0.0
        %5946 = vmatpush2.msra.mxu0 0.0
        %5947 = vmatprep.mubr.f32.mxu0 0.0
        %v5948 = vand.u32 %v5530, 4294901760
        %5949 = vmatmul.mubr.f32.gmra.mxu0 %v5948
        %v5950 = vpop.f32.mrf.mxu0
        %v5951 = vadd.f32 %v5650, %v5950
        %v5952 = vpop.f32.mrf.mxu0
        %5953 = vmatprep.mubr.f32.mxu0 0.0
        %v5954 = vand.u32 %v5531, 4294901760
        %5955 = vmatmul.mubr.f32.gmra.mxu0 %v5954
        %v5956 = vpop.f32.mrf.mxu0
        %v5957 = vadd.f32 %v5660, %v5956
        %v5958 = vpop.f32.mrf.mxu0
        %5959 = vmatprep.mubr.f32.mxu0 0.0
        %v5960 = vand.u32 %v5532, 4294901760
        %5961 = vmatmul.mubr.f32.gmra.mxu0 %v5960
        %v5962 = vpop.f32.mrf.mxu0
        %v5963 = vadd.f32 %v5670, %v5962
        %v5964 = vpop.f32.mrf.mxu0
        %5965 = vmatprep.mubr.f32.mxu0 0.0
        %v5966 = vand.u32 %v5533, 4294901760
        %5967 = vmatmul.mubr.f32.gmra.mxu0 %v5966
        %v5968 = vpop.f32.mrf.mxu0
        %v5969 = vadd.f32 %v5680, %v5968
        %v5970 = vpop.f32.mrf.mxu0
        %5971 = vmatprep.mubr.f32.mxu0 0.0
        %v5972 = vand.u32 %v5534, 4294901760
        %5973 = vmatmul.mubr.f32.gmra.mxu0 %v5972
        %v5974 = vpop.f32.mrf.mxu0
        %v5975 = vadd.f32 %v5690, %v5974
        %v5976 = vpop.f32.mrf.mxu0
        %5977 = vmatprep.mubr.f32.mxu0 0.0
        %v5978 = vand.u32 %v5535, 4294901760
        %5979 = vmatmul.mubr.f32.gmra.mxu0 %v5978
        %v5980 = vpop.f32.mrf.mxu0
        %v5981 = vadd.f32 %v5700, %v5980
        %v5982 = vpop.f32.mrf.mxu0
        %5983 = vmatprep.mubr.f32.mxu0 0.0
        %v5984 = vand.u32 %v5536, 4294901760
        %5985 = vmatmul.mubr.f32.gmra.mxu0 %v5984
        %v5986 = vpop.f32.mrf.mxu0
        %v5987 = vadd.f32 %v5710, %v5986
        %v5988 = vpop.f32.mrf.mxu0
        %5989 = vmatprep.mubr.f32.mxu0 0.0
        %v5990 = vand.u32 %v5537, 4294901760
        %5991 = vmatmul.mubr.f32.gmra.mxu0 %v5990
        %v5992 = vpop.f32.mrf.mxu0
        %v5993 = vadd.f32 %v5720, %v5992
        %v5994 = vpop.f32.mrf.mxu0
        %5995 = vmatprep.mubr.f32.mxu0 0.0
        %v5996 = vand.u32 %v5538, 4294901760
        %5997 = vmatmul.mubr.f32.gmra.mxu0 %v5996
        %v5998 = vpop.f32.mrf.mxu0
        %v5999 = vadd.f32 %v5730, %v5998
        %v6000 = vpop.f32.mrf.mxu0
        %6001 = vmatprep.mubr.f32.mxu0 0.0
        %v6002 = vand.u32 %v5539, 4294901760
        %6003 = vmatmul.mubr.f32.gmra.mxu0 %v6002
        %v6004 = vpop.f32.mrf.mxu0
        %v6005 = vadd.f32 %v5740, %v6004
        %v6006 = vpop.f32.mrf.mxu0
        %6007 = vmatprep.mubr.f32.mxu0 0.0
        %v6008 = vand.u32 %v5540, 4294901760
        %6009 = vmatmul.mubr.f32.gmra.mxu0 %v6008
        %v6010 = vpop.f32.mrf.mxu0
        %v6011 = vadd.f32 %v5750, %v6010
        %v6012 = vpop.f32.mrf.mxu0
        %6013 = vmatprep.mubr.f32.mxu0 0.0
        %v6014 = vand.u32 %v5541, 4294901760
        %6015 = vmatmul.mubr.f32.gmra.mxu0 %v6014
        %v6016 = vpop.f32.mrf.mxu0
        %v6017 = vadd.f32 %v5760, %v6016
        %v6018 = vpop.f32.mrf.mxu0
        %6019 = vmatprep.mubr.f32.mxu0 0.0
        %v6020 = vand.u32 %v5542, 4294901760
        %6021 = vmatmul.mubr.f32.gmra.mxu0 %v6020
        %v6022 = vpop.f32.mrf.mxu0
        %v6023 = vadd.f32 %v5770, %v6022
        %v6024 = vpop.f32.mrf.mxu0
        %6025 = vmatprep.mubr.f32.mxu0 0.0
        %v6026 = vand.u32 %v5543, 4294901760
        %6027 = vmatmul.mubr.f32.gmra.mxu0 %v6026
        %v6028 = vpop.f32.mrf.mxu0
        %v6029 = vadd.f32 %v5780, %v6028
        %v6030 = vpop.f32.mrf.mxu0
        %6031 = vmatprep.mubr.f32.mxu0 0.0
        %v6032 = vand.u32 %v5544, 4294901760
        %6033 = vmatmul.mubr.f32.gmra.mxu0 %v6032
        %v6034 = vpop.f32.mrf.mxu0
        %v6035 = vadd.f32 %v5790, %v6034
        %v6036 = vpop.f32.mrf.mxu0
        %6037 = vmatprep.mubr.f32.mxu0 0.0
        %v6038 = vand.u32 %v5545, 4294901760
        %6039 = vmatmul.mubr.f32.gmra.mxu0 %v6038
        %v6040 = vpop.f32.mrf.mxu0
        %v6041 = vadd.f32 %v5800, %v6040
        %v6042 = vpop.f32.mrf.mxu0
        %6043 = vdwg.mxu0
        %6044 = vmatprep.subr.mxu0 0.0
        %v6045 = vand.u32 %v5529, 4294901760
        %v6046 = vsub.f32 %v5529, %v6045
        %6047 = vmatpush1.msra.mxu0 %v6046
        %6048 = vmatprep.subr.mxu0 0.0
        %v6049 = vand.u32 %v5528, 4294901760
        %v6050 = vsub.f32 %v5528, %v6049
        %6051 = vmatpush1.msra.mxu0 %v6050
        %6052 = vmatprep.subr.mxu0 0.0
        %v6053 = vand.u32 %v5527, 4294901760
        %v6054 = vsub.f32 %v5527, %v6053
        %6055 = vmatpush1.msra.mxu0 %v6054
        %6056 = vmatprep.subr.mxu0 0.0
        %v6057 = vand.u32 %v5526, 4294901760
        %v6058 = vsub.f32 %v5526, %v6057
        %6059 = vmatpush1.msra.mxu0 %v6058
        %6060 = vmatprep.subr.mxu0 0.0
        %v6061 = vand.u32 %v5525, 4294901760
        %v6062 = vsub.f32 %v5525, %v6061
        %6063 = vmatpush1.msra.mxu0 %v6062
        %6064 = vmatprep.subr.mxu0 0.0
        %v6065 = vand.u32 %v5524, 4294901760
        %v6066 = vsub.f32 %v5524, %v6065
        %6067 = vmatpush1.msra.mxu0 %v6066
        %6068 = vmatprep.subr.mxu0 0.0
        %v6069 = vand.u32 %v5523, 4294901760
        %v6070 = vsub.f32 %v5523, %v6069
        %6071 = vmatpush1.msra.mxu0 %v6070
        %6072 = vmatprep.subr.mxu0 0.0
        %v6073 = vand.u32 %v5522, 4294901760
        %v6074 = vsub.f32 %v5522, %v6073
        %6075 = vmatpush1.msra.mxu0 %v6074
        %6076 = vmatprep.subr.mxu0 0.0
        %v6077 = vand.u32 %v5521, 4294901760
        %v6078 = vsub.f32 %v5521, %v6077
        %6079 = vmatpush1.msra.mxu0 %v6078
        %6080 = vmatprep.subr.mxu0 0.0
        %v6081 = vand.u32 %v5520, 4294901760
        %v6082 = vsub.f32 %v5520, %v6081
        %6083 = vmatpush1.msra.mxu0 %v6082
        %6084 = vmatprep.subr.mxu0 0.0
        %v6085 = vand.u32 %v5519, 4294901760
        %v6086 = vsub.f32 %v5519, %v6085
        %6087 = vmatpush1.msra.mxu0 %v6086
        %6088 = vmatprep.subr.mxu0 0.0
        %v6089 = vand.u32 %v5518, 4294901760
        %v6090 = vsub.f32 %v5518, %v6089
        %6091 = vmatpush1.msra.mxu0 %v6090
        %6092 = vmatprep.subr.mxu0 0.0
        %v6093 = vand.u32 %v5517, 4294901760
        %v6094 = vsub.f32 %v5517, %v6093
        %6095 = vmatpush1.msra.mxu0 %v6094
        %6096 = vmatprep.subr.mxu0 0.0
        %v6097 = vand.u32 %v5516, 4294901760
        %v6098 = vsub.f32 %v5516, %v6097
        %6099 = vmatpush1.msra.mxu0 %v6098
        %6100 = vmatprep.subr.mxu0 0.0
        %v6101 = vand.u32 %v5515, 4294901760
        %v6102 = vsub.f32 %v5515, %v6101
        %6103 = vmatpush1.msra.mxu0 %v6102
        %6104 = vmatprep.subr.mxu0 0.0
        %v6105 = vand.u32 %v5514, 4294901760
        %v6106 = vsub.f32 %v5514, %v6105
        %6107 = vmatpush1.msra.mxu0 %v6106
        %6108 = vmatprep.subr.mxu0 0.0
        %6109 = vmatpush2.msra.mxu0 0.0
        %6110 = vmatprep.subr.mxu0 0.0
        %6111 = vmatpush2.msra.mxu0 0.0
        %6112 = vmatprep.subr.mxu0 0.0
        %6113 = vmatpush2.msra.mxu0 0.0
        %6114 = vmatprep.subr.mxu0 0.0
        %6115 = vmatpush2.msra.mxu0 0.0
        %6116 = vmatprep.subr.mxu0 0.0
        %6117 = vmatpush2.msra.mxu0 0.0
        %6118 = vmatprep.subr.mxu0 0.0
        %6119 = vmatpush2.msra.mxu0 0.0
        %6120 = vmatprep.subr.mxu0 0.0
        %6121 = vmatpush2.msra.mxu0 0.0
        %6122 = vmatprep.subr.mxu0 0.0
        %6123 = vmatpush2.msra.mxu0 0.0
        %6124 = vmatprep.subr.mxu0 0.0
        %6125 = vmatpush2.msra.mxu0 0.0
        %6126 = vmatprep.subr.mxu0 0.0
        %6127 = vmatpush2.msra.mxu0 0.0
        %6128 = vmatprep.subr.mxu0 0.0
        %6129 = vmatpush2.msra.mxu0 0.0
        %6130 = vmatprep.subr.mxu0 0.0
        %6131 = vmatpush2.msra.mxu0 0.0
        %6132 = vmatprep.subr.mxu0 0.0
        %6133 = vmatpush2.msra.mxu0 0.0
        %6134 = vmatprep.subr.mxu0 0.0
        %6135 = vmatpush2.msra.mxu0 0.0
        %6136 = vmatprep.subr.mxu0 0.0
        %6137 = vmatpush2.msra.mxu0 0.0
        %6138 = vmatprep.subr.mxu0 0.0
        %6139 = vmatpush2.msra.mxu0 0.0
        %6140 = vmatprep.mubr.f32.mxu0 0.0
        %v6141 = vand.u32 %v5530, 4294901760
        %v6142 = vsub.f32 %v5530, %v6141
        %6143 = vmatmul.mubr.f32.gmra.mxu0 %v6142
        %v6144 = vpop.f32.mrf.mxu0
        %v6145 = vadd.f32 %v5951, %v6144
        %v6146 = vpop.f32.mrf.mxu0
        %6147 = vmatprep.mubr.f32.mxu0 0.0
        %v6148 = vand.u32 %v5531, 4294901760
        %v6149 = vsub.f32 %v5531, %v6148
        %6150 = vmatmul.mubr.f32.gmra.mxu0 %v6149
        %v6151 = vpop.f32.mrf.mxu0
        %v6152 = vadd.f32 %v5957, %v6151
        %v6153 = vpop.f32.mrf.mxu0
        %6154 = vmatprep.mubr.f32.mxu0 0.0
        %v6155 = vand.u32 %v5532, 4294901760
        %v6156 = vsub.f32 %v5532, %v6155
        %6157 = vmatmul.mubr.f32.gmra.mxu0 %v6156
        %v6158 = vpop.f32.mrf.mxu0
        %v6159 = vadd.f32 %v5963, %v6158
        %v6160 = vpop.f32.mrf.mxu0
        %6161 = vmatprep.mubr.f32.mxu0 0.0
        %v6162 = vand.u32 %v5533, 4294901760
        %v6163 = vsub.f32 %v5533, %v6162
        %6164 = vmatmul.mubr.f32.gmra.mxu0 %v6163
        %v6165 = vpop.f32.mrf.mxu0
        %v6166 = vadd.f32 %v5969, %v6165
        %v6167 = vpop.f32.mrf.mxu0
        %6168 = vmatprep.mubr.f32.mxu0 0.0
        %v6169 = vand.u32 %v5534, 4294901760
        %v6170 = vsub.f32 %v5534, %v6169
        %6171 = vmatmul.mubr.f32.gmra.mxu0 %v6170
        %v6172 = vpop.f32.mrf.mxu0
        %v6173 = vadd.f32 %v5975, %v6172
        %v6174 = vpop.f32.mrf.mxu0
        %6175 = vmatprep.mubr.f32.mxu0 0.0
        %v6176 = vand.u32 %v5535, 4294901760
        %v6177 = vsub.f32 %v5535, %v6176
        %6178 = vmatmul.mubr.f32.gmra.mxu0 %v6177
        %v6179 = vpop.f32.mrf.mxu0
        %v6180 = vadd.f32 %v5981, %v6179
        %v6181 = vpop.f32.mrf.mxu0
        %6182 = vmatprep.mubr.f32.mxu0 0.0
        %v6183 = vand.u32 %v5536, 4294901760
        %v6184 = vsub.f32 %v5536, %v6183
        %6185 = vmatmul.mubr.f32.gmra.mxu0 %v6184
        %v6186 = vpop.f32.mrf.mxu0
        %v6187 = vadd.f32 %v5987, %v6186
        %v6188 = vpop.f32.mrf.mxu0
        %6189 = vmatprep.mubr.f32.mxu0 0.0
        %v6190 = vand.u32 %v5537, 4294901760
        %v6191 = vsub.f32 %v5537, %v6190
        %6192 = vmatmul.mubr.f32.gmra.mxu0 %v6191
        %v6193 = vpop.f32.mrf.mxu0
        %v6194 = vadd.f32 %v5993, %v6193
        %v6195 = vpop.f32.mrf.mxu0
        %6196 = vmatprep.mubr.f32.mxu0 0.0
        %v6197 = vand.u32 %v5538, 4294901760
        %v6198 = vsub.f32 %v5538, %v6197
        %6199 = vmatmul.mubr.f32.gmra.mxu0 %v6198
        %v6200 = vpop.f32.mrf.mxu0
        %v6201 = vadd.f32 %v5999, %v6200
        %v6202 = vpop.f32.mrf.mxu0
        %6203 = vmatprep.mubr.f32.mxu0 0.0
        %v6204 = vand.u32 %v5539, 4294901760
        %v6205 = vsub.f32 %v5539, %v6204
        %6206 = vmatmul.mubr.f32.gmra.mxu0 %v6205
        %v6207 = vpop.f32.mrf.mxu0
        %v6208 = vadd.f32 %v6005, %v6207
        %v6209 = vpop.f32.mrf.mxu0
        %6210 = vmatprep.mubr.f32.mxu0 0.0
        %v6211 = vand.u32 %v5540, 4294901760
        %v6212 = vsub.f32 %v5540, %v6211
        %6213 = vmatmul.mubr.f32.gmra.mxu0 %v6212
        %v6214 = vpop.f32.mrf.mxu0
        %v6215 = vadd.f32 %v6011, %v6214
        %v6216 = vpop.f32.mrf.mxu0
        %6217 = vmatprep.mubr.f32.mxu0 0.0
        %v6218 = vand.u32 %v5541, 4294901760
        %v6219 = vsub.f32 %v5541, %v6218
        %6220 = vmatmul.mubr.f32.gmra.mxu0 %v6219
        %v6221 = vpop.f32.mrf.mxu0
        %v6222 = vadd.f32 %v6017, %v6221
        %v6223 = vpop.f32.mrf.mxu0
        %6224 = vmatprep.mubr.f32.mxu0 0.0
        %v6225 = vand.u32 %v5542, 4294901760
        %v6226 = vsub.f32 %v5542, %v6225
        %6227 = vmatmul.mubr.f32.gmra.mxu0 %v6226
        %v6228 = vpop.f32.mrf.mxu0
        %v6229 = vadd.f32 %v6023, %v6228
        %v6230 = vpop.f32.mrf.mxu0
        %6231 = vmatprep.mubr.f32.mxu0 0.0
        %v6232 = vand.u32 %v5543, 4294901760
        %v6233 = vsub.f32 %v5543, %v6232
        %6234 = vmatmul.mubr.f32.gmra.mxu0 %v6233
        %v6235 = vpop.f32.mrf.mxu0
        %v6236 = vadd.f32 %v6029, %v6235
        %v6237 = vpop.f32.mrf.mxu0
        %6238 = vmatprep.mubr.f32.mxu0 0.0
        %v6239 = vand.u32 %v5544, 4294901760
        %v6240 = vsub.f32 %v5544, %v6239
        %6241 = vmatmul.mubr.f32.gmra.mxu0 %v6240
        %v6242 = vpop.f32.mrf.mxu0
        %v6243 = vadd.f32 %v6035, %v6242
        %v6244 = vpop.f32.mrf.mxu0
        %6245 = vmatprep.mubr.f32.mxu0 0.0
        %v6246 = vand.u32 %v5545, 4294901760
        %v6247 = vsub.f32 %v5545, %v6246
        %6248 = vmatmul.mubr.f32.gmra.mxu0 %v6247
        %v6249 = vpop.f32.mrf.mxu0
        %v6250 = vadd.f32 %v6041, %v6249
        %v6251 = vpop.f32.mrf.mxu0
        %6252 = vdwg.mxu0
        %6253 = vmatprep.subr.mxu0 0.0
        %v6254 = vand.u32 %v5529, 4294901760
        %6255 = vmatpush1.msra.mxu0 %v6254
        %6256 = vmatprep.subr.mxu0 0.0
        %v6257 = vand.u32 %v5528, 4294901760
        %6258 = vmatpush1.msra.mxu0 %v6257
        %6259 = vmatprep.subr.mxu0 0.0
        %v6260 = vand.u32 %v5527, 4294901760
        %6261 = vmatpush1.msra.mxu0 %v6260
        %6262 = vmatprep.subr.mxu0 0.0
        %v6263 = vand.u32 %v5526, 4294901760
        %6264 = vmatpush1.msra.mxu0 %v6263
        %6265 = vmatprep.subr.mxu0 0.0
        %v6266 = vand.u32 %v5525, 4294901760
        %6267 = vmatpush1.msra.mxu0 %v6266
        %6268 = vmatprep.subr.mxu0 0.0
        %v6269 = vand.u32 %v5524, 4294901760
        %6270 = vmatpush1.msra.mxu0 %v6269
        %6271 = vmatprep.subr.mxu0 0.0
        %v6272 = vand.u32 %v5523, 4294901760
        %6273 = vmatpush1.msra.mxu0 %v6272
        %6274 = vmatprep.subr.mxu0 0.0
        %v6275 = vand.u32 %v5522, 4294901760
        %6276 = vmatpush1.msra.mxu0 %v6275
        %6277 = vmatprep.subr.mxu0 0.0
        %v6278 = vand.u32 %v5521, 4294901760
        %6279 = vmatpush1.msra.mxu0 %v6278
        %6280 = vmatprep.subr.mxu0 0.0
        %v6281 = vand.u32 %v5520, 4294901760
        %6282 = vmatpush1.msra.mxu0 %v6281
        %6283 = vmatprep.subr.mxu0 0.0
        %v6284 = vand.u32 %v5519, 4294901760
        %6285 = vmatpush1.msra.mxu0 %v6284
        %6286 = vmatprep.subr.mxu0 0.0
        %v6287 = vand.u32 %v5518, 4294901760
        %6288 = vmatpush1.msra.mxu0 %v6287
        %6289 = vmatprep.subr.mxu0 0.0
        %v6290 = vand.u32 %v5517, 4294901760
        %6291 = vmatpush1.msra.mxu0 %v6290
        %6292 = vmatprep.subr.mxu0 0.0
        %v6293 = vand.u32 %v5516, 4294901760
        %6294 = vmatpush1.msra.mxu0 %v6293
        %6295 = vmatprep.subr.mxu0 0.0
        %v6296 = vand.u32 %v5515, 4294901760
        %6297 = vmatpush1.msra.mxu0 %v6296
        %6298 = vmatprep.subr.mxu0 0.0
        %v6299 = vand.u32 %v5514, 4294901760
        %6300 = vmatpush1.msra.mxu0 %v6299
        %6301 = vmatprep.subr.mxu0 0.0
        %6302 = vmatpush2.msra.mxu0 0.0
        %6303 = vmatprep.subr.mxu0 0.0
        %6304 = vmatpush2.msra.mxu0 0.0
        %6305 = vmatprep.subr.mxu0 0.0
        %6306 = vmatpush2.msra.mxu0 0.0
        %6307 = vmatprep.subr.mxu0 0.0
        %6308 = vmatpush2.msra.mxu0 0.0
        %6309 = vmatprep.subr.mxu0 0.0
        %6310 = vmatpush2.msra.mxu0 0.0
        %6311 = vmatprep.subr.mxu0 0.0
        %6312 = vmatpush2.msra.mxu0 0.0
        %6313 = vmatprep.subr.mxu0 0.0
        %6314 = vmatpush2.msra.mxu0 0.0
        %6315 = vmatprep.subr.mxu0 0.0
        %6316 = vmatpush2.msra.mxu0 0.0
        %6317 = vmatprep.subr.mxu0 0.0
        %6318 = vmatpush2.msra.mxu0 0.0
        %6319 = vmatprep.subr.mxu0 0.0
        %6320 = vmatpush2.msra.mxu0 0.0
        %6321 = vmatprep.subr.mxu0 0.0
        %6322 = vmatpush2.msra.mxu0 0.0
        %6323 = vmatprep.subr.mxu0 0.0
        %6324 = vmatpush2.msra.mxu0 0.0
        %6325 = vmatprep.subr.mxu0 0.0
        %6326 = vmatpush2.msra.mxu0 0.0
        %6327 = vmatprep.subr.mxu0 0.0
        %6328 = vmatpush2.msra.mxu0 0.0
        %6329 = vmatprep.subr.mxu0 0.0
        %6330 = vmatpush2.msra.mxu0 0.0
        %6331 = vmatprep.subr.mxu0 0.0
        %6332 = vmatpush2.msra.mxu0 0.0
        %6333 = vmatprep.mubr.f32.mxu0 0.0
        %v6334 = vand.u32 %v5530, 4294901760
        %v6335 = vsub.f32 %v5530, %v6334
        %v6336 = vand.u32 %v6335, 4294901760
        %6337 = vmatmul.mubr.f32.gmra.mxu0 %v6336
        %v6338 = vpop.f32.mrf.mxu0
        %v6339 = vadd.f32 %v6145, %v6338
        %v6340 = vpop.f32.mrf.mxu0
        %6341 = vmatprep.mubr.f32.mxu0 0.0
        %v6342 = vand.u32 %v5531, 4294901760
        %v6343 = vsub.f32 %v5531, %v6342
        %v6344 = vand.u32 %v6343, 4294901760
        %6345 = vmatmul.mubr.f32.gmra.mxu0 %v6344
        %v6346 = vpop.f32.mrf.mxu0
        %v6347 = vadd.f32 %v6152, %v6346
        %v6348 = vpop.f32.mrf.mxu0
        %6349 = vmatprep.mubr.f32.mxu0 0.0
        %v6350 = vand.u32 %v5532, 4294901760
        %v6351 = vsub.f32 %v5532, %v6350
        %v6352 = vand.u32 %v6351, 4294901760
        %6353 = vmatmul.mubr.f32.gmra.mxu0 %v6352
        %v6354 = vpop.f32.mrf.mxu0
        %v6355 = vadd.f32 %v6159, %v6354
        %v6356 = vpop.f32.mrf.mxu0
        %6357 = vmatprep.mubr.f32.mxu0 0.0
        %v6358 = vand.u32 %v5533, 4294901760
        %v6359 = vsub.f32 %v5533, %v6358
        %v6360 = vand.u32 %v6359, 4294901760
        %6361 = vmatmul.mubr.f32.gmra.mxu0 %v6360
        %v6362 = vpop.f32.mrf.mxu0
        %v6363 = vadd.f32 %v6166, %v6362
        %v6364 = vpop.f32.mrf.mxu0
        %6365 = vmatprep.mubr.f32.mxu0 0.0
        %v6366 = vand.u32 %v5534, 4294901760
        %v6367 = vsub.f32 %v5534, %v6366
        %v6368 = vand.u32 %v6367, 4294901760
        %6369 = vmatmul.mubr.f32.gmra.mxu0 %v6368
        %v6370 = vpop.f32.mrf.mxu0
        %v6371 = vadd.f32 %v6173, %v6370
        %v6372 = vpop.f32.mrf.mxu0
        %6373 = vmatprep.mubr.f32.mxu0 0.0
        %v6374 = vand.u32 %v5535, 4294901760
        %v6375 = vsub.f32 %v5535, %v6374
        %v6376 = vand.u32 %v6375, 4294901760
        %6377 = vmatmul.mubr.f32.gmra.mxu0 %v6376
        %v6378 = vpop.f32.mrf.mxu0
        %v6379 = vadd.f32 %v6180, %v6378
        %v6380 = vpop.f32.mrf.mxu0
        %6381 = vmatprep.mubr.f32.mxu0 0.0
        %v6382 = vand.u32 %v5536, 4294901760
        %v6383 = vsub.f32 %v5536, %v6382
        %v6384 = vand.u32 %v6383, 4294901760
        %6385 = vmatmul.mubr.f32.gmra.mxu0 %v6384
        %v6386 = vpop.f32.mrf.mxu0
        %v6387 = vadd.f32 %v6187, %v6386
        %v6388 = vpop.f32.mrf.mxu0
        %6389 = vmatprep.mubr.f32.mxu0 0.0
        %v6390 = vand.u32 %v5537, 4294901760
        %v6391 = vsub.f32 %v5537, %v6390
        %v6392 = vand.u32 %v6391, 4294901760
        %6393 = vmatmul.mubr.f32.gmra.mxu0 %v6392
        %v6394 = vpop.f32.mrf.mxu0
        %v6395 = vadd.f32 %v6194, %v6394
        %v6396 = vpop.f32.mrf.mxu0
        %6397 = vmatprep.mubr.f32.mxu0 0.0
        %v6398 = vand.u32 %v5538, 4294901760
        %v6399 = vsub.f32 %v5538, %v6398
        %v6400 = vand.u32 %v6399, 4294901760
        %6401 = vmatmul.mubr.f32.gmra.mxu0 %v6400
        %v6402 = vpop.f32.mrf.mxu0
        %v6403 = vadd.f32 %v6201, %v6402
        %v6404 = vpop.f32.mrf.mxu0
        %6405 = vmatprep.mubr.f32.mxu0 0.0
        %v6406 = vand.u32 %v5539, 4294901760
        %v6407 = vsub.f32 %v5539, %v6406
        %v6408 = vand.u32 %v6407, 4294901760
        %6409 = vmatmul.mubr.f32.gmra.mxu0 %v6408
        %v6410 = vpop.f32.mrf.mxu0
        %v6411 = vadd.f32 %v6208, %v6410
        %v6412 = vpop.f32.mrf.mxu0
        %6413 = vmatprep.mubr.f32.mxu0 0.0
        %v6414 = vand.u32 %v5540, 4294901760
        %v6415 = vsub.f32 %v5540, %v6414
        %v6416 = vand.u32 %v6415, 4294901760
        %6417 = vmatmul.mubr.f32.gmra.mxu0 %v6416
        %v6418 = vpop.f32.mrf.mxu0
        %v6419 = vadd.f32 %v6215, %v6418
        %v6420 = vpop.f32.mrf.mxu0
        %6421 = vmatprep.mubr.f32.mxu0 0.0
        %v6422 = vand.u32 %v5541, 4294901760
        %v6423 = vsub.f32 %v5541, %v6422
        %v6424 = vand.u32 %v6423, 4294901760
        %6425 = vmatmul.mubr.f32.gmra.mxu0 %v6424
        %v6426 = vpop.f32.mrf.mxu0
        %v6427 = vadd.f32 %v6222, %v6426
        %v6428 = vpop.f32.mrf.mxu0
        %6429 = vmatprep.mubr.f32.mxu0 0.0
        %v6430 = vand.u32 %v5542, 4294901760
        %v6431 = vsub.f32 %v5542, %v6430
        %v6432 = vand.u32 %v6431, 4294901760
        %6433 = vmatmul.mubr.f32.gmra.mxu0 %v6432
        %v6434 = vpop.f32.mrf.mxu0
        %v6435 = vadd.f32 %v6229, %v6434
        %v6436 = vpop.f32.mrf.mxu0
        %6437 = vmatprep.mubr.f32.mxu0 0.0
        %v6438 = vand.u32 %v5543, 4294901760
        %v6439 = vsub.f32 %v5543, %v6438
        %v6440 = vand.u32 %v6439, 4294901760
        %6441 = vmatmul.mubr.f32.gmra.mxu0 %v6440
        %v6442 = vpop.f32.mrf.mxu0
        %v6443 = vadd.f32 %v6236, %v6442
        %v6444 = vpop.f32.mrf.mxu0
        %6445 = vmatprep.mubr.f32.mxu0 0.0
        %v6446 = vand.u32 %v5544, 4294901760
        %v6447 = vsub.f32 %v5544, %v6446
        %v6448 = vand.u32 %v6447, 4294901760
        %6449 = vmatmul.mubr.f32.gmra.mxu0 %v6448
        %v6450 = vpop.f32.mrf.mxu0
        %v6451 = vadd.f32 %v6243, %v6450
        %v6452 = vpop.f32.mrf.mxu0
        %6453 = vmatprep.mubr.f32.mxu0 0.0
        %v6454 = vand.u32 %v5545, 4294901760
        %v6455 = vsub.f32 %v5545, %v6454
        %v6456 = vand.u32 %v6455, 4294901760
        %6457 = vmatmul.mubr.f32.gmra.mxu0 %v6456
        %v6458 = vpop.f32.mrf.mxu0
        %v6459 = vadd.f32 %v6250, %v6458
        %v6460 = vpop.f32.mrf.mxu0
        %6461 = vdwg.mxu0
        %6462 = vmatprep.subr.mxu0 0.0
        %v6463 = vand.u32 %v5529, 4294901760
        %v6464 = vsub.f32 %v5529, %v6463
        %v6465 = vand.u32 %v6464, 4294901760
        %6466 = vmatpush1.msra.mxu0 %v6465
        %6467 = vmatprep.subr.mxu0 0.0
        %v6468 = vand.u32 %v5528, 4294901760
        %v6469 = vsub.f32 %v5528, %v6468
        %v6470 = vand.u32 %v6469, 4294901760
        %6471 = vmatpush1.msra.mxu0 %v6470
        %6472 = vmatprep.subr.mxu0 0.0
        %v6473 = vand.u32 %v5527, 4294901760
        %v6474 = vsub.f32 %v5527, %v6473
        %v6475 = vand.u32 %v6474, 4294901760
        %6476 = vmatpush1.msra.mxu0 %v6475
        %6477 = vmatprep.subr.mxu0 0.0
        %v6478 = vand.u32 %v5526, 4294901760
        %v6479 = vsub.f32 %v5526, %v6478
        %v6480 = vand.u32 %v6479, 4294901760
        %6481 = vmatpush1.msra.mxu0 %v6480
        %6482 = vmatprep.subr.mxu0 0.0
        %v6483 = vand.u32 %v5525, 4294901760
        %v6484 = vsub.f32 %v5525, %v6483
        %v6485 = vand.u32 %v6484, 4294901760
        %6486 = vmatpush1.msra.mxu0 %v6485
        %6487 = vmatprep.subr.mxu0 0.0
        %v6488 = vand.u32 %v5524, 4294901760
        %v6489 = vsub.f32 %v5524, %v6488
        %v6490 = vand.u32 %v6489, 4294901760
        %6491 = vmatpush1.msra.mxu0 %v6490
        %6492 = vmatprep.subr.mxu0 0.0
        %v6493 = vand.u32 %v5523, 4294901760
        %v6494 = vsub.f32 %v5523, %v6493
        %v6495 = vand.u32 %v6494, 4294901760
        %6496 = vmatpush1.msra.mxu0 %v6495
        %6497 = vmatprep.subr.mxu0 0.0
        %v6498 = vand.u32 %v5522, 4294901760
        %v6499 = vsub.f32 %v5522, %v6498
        %v6500 = vand.u32 %v6499, 4294901760
        %6501 = vmatpush1.msra.mxu0 %v6500
        %6502 = vmatprep.subr.mxu0 0.0
        %v6503 = vand.u32 %v5521, 4294901760
        %v6504 = vsub.f32 %v5521, %v6503
        %v6505 = vand.u32 %v6504, 4294901760
        %6506 = vmatpush1.msra.mxu0 %v6505
        %6507 = vmatprep.subr.mxu0 0.0
        %v6508 = vand.u32 %v5520, 4294901760
        %v6509 = vsub.f32 %v5520, %v6508
        %v6510 = vand.u32 %v6509, 4294901760
        %6511 = vmatpush1.msra.mxu0 %v6510
        %6512 = vmatprep.subr.mxu0 0.0
        %v6513 = vand.u32 %v5519, 4294901760
        %v6514 = vsub.f32 %v5519, %v6513
        %v6515 = vand.u32 %v6514, 4294901760
        %6516 = vmatpush1.msra.mxu0 %v6515
        %6517 = vmatprep.subr.mxu0 0.0
        %v6518 = vand.u32 %v5518, 4294901760
        %v6519 = vsub.f32 %v5518, %v6518
        %v6520 = vand.u32 %v6519, 4294901760
        %6521 = vmatpush1.msra.mxu0 %v6520
        %6522 = vmatprep.subr.mxu0 0.0
        %v6523 = vand.u32 %v5517, 4294901760
        %v6524 = vsub.f32 %v5517, %v6523
        %v6525 = vand.u32 %v6524, 4294901760
        %6526 = vmatpush1.msra.mxu0 %v6525
        %6527 = vmatprep.subr.mxu0 0.0
        %v6528 = vand.u32 %v5516, 4294901760
        %v6529 = vsub.f32 %v5516, %v6528
        %v6530 = vand.u32 %v6529, 4294901760
        %6531 = vmatpush1.msra.mxu0 %v6530
        %6532 = vmatprep.subr.mxu0 0.0
        %v6533 = vand.u32 %v5515, 4294901760
        %v6534 = vsub.f32 %v5515, %v6533
        %v6535 = vand.u32 %v6534, 4294901760
        %6536 = vmatpush1.msra.mxu0 %v6535
        %6537 = vmatprep.subr.mxu0 0.0
        %v6538 = vand.u32 %v5514, 4294901760
        %v6539 = vsub.f32 %v5514, %v6538
        %v6540 = vand.u32 %v6539, 4294901760
        %6541 = vmatpush1.msra.mxu0 %v6540
        %6542 = vmatprep.subr.mxu0 0.0
        %6543 = vmatpush2.msra.mxu0 0.0
        %6544 = vmatprep.subr.mxu0 0.0
        %6545 = vmatpush2.msra.mxu0 0.0
        %6546 = vmatprep.subr.mxu0 0.0
        %6547 = vmatpush2.msra.mxu0 0.0
        %6548 = vmatprep.subr.mxu0 0.0
        %6549 = vmatpush2.msra.mxu0 0.0
        %6550 = vmatprep.subr.mxu0 0.0
        %6551 = vmatpush2.msra.mxu0 0.0
        %6552 = vmatprep.subr.mxu0 0.0
        %6553 = vmatpush2.msra.mxu0 0.0
        %6554 = vmatprep.subr.mxu0 0.0
        %6555 = vmatpush2.msra.mxu0 0.0
        %6556 = vmatprep.subr.mxu0 0.0
        %6557 = vmatpush2.msra.mxu0 0.0
        %6558 = vmatprep.subr.mxu0 0.0
        %6559 = vmatpush2.msra.mxu0 0.0
        %6560 = vmatprep.subr.mxu0 0.0
        %6561 = vmatpush2.msra.mxu0 0.0
        %6562 = vmatprep.subr.mxu0 0.0
        %6563 = vmatpush2.msra.mxu0 0.0
        %6564 = vmatprep.subr.mxu0 0.0
        %6565 = vmatpush2.msra.mxu0 0.0
        %6566 = vmatprep.subr.mxu0 0.0
        %6567 = vmatpush2.msra.mxu0 0.0
        %6568 = vmatprep.subr.mxu0 0.0
        %6569 = vmatpush2.msra.mxu0 0.0
        %6570 = vmatprep.subr.mxu0 0.0
        %6571 = vmatpush2.msra.mxu0 0.0
        %6572 = vmatprep.subr.mxu0 0.0
        %6573 = vmatpush2.msra.mxu0 0.0
        %6574 = vmatprep.mubr.f32.mxu0 0.0
        %v6575 = vand.u32 %v5530, 4294901760
        %6576 = vmatmul.mubr.f32.gmra.mxu0 %v6575
        %v6577 = vpop.f32.mrf.mxu0
        %v6578 = vadd.f32 %v6339, %v6577
        %v6579 = vpop.f32.mrf.mxu0
        %6580 = vmatprep.mubr.f32.mxu0 0.0
        %v6581 = vand.u32 %v5531, 4294901760
        %6582 = vmatmul.mubr.f32.gmra.mxu0 %v6581
        %v6583 = vpop.f32.mrf.mxu0
        %v6584 = vadd.f32 %v6347, %v6583
        %v6585 = vpop.f32.mrf.mxu0
        %6586 = vmatprep.mubr.f32.mxu0 0.0
        %v6587 = vand.u32 %v5532, 4294901760
        %6588 = vmatmul.mubr.f32.gmra.mxu0 %v6587
        %v6589 = vpop.f32.mrf.mxu0
        %v6590 = vadd.f32 %v6355, %v6589
        %v6591 = vpop.f32.mrf.mxu0
        %6592 = vmatprep.mubr.f32.mxu0 0.0
        %v6593 = vand.u32 %v5533, 4294901760
        %6594 = vmatmul.mubr.f32.gmra.mxu0 %v6593
        %v6595 = vpop.f32.mrf.mxu0
        %v6596 = vadd.f32 %v6363, %v6595
        %v6597 = vpop.f32.mrf.mxu0
        %6598 = vmatprep.mubr.f32.mxu0 0.0
        %v6599 = vand.u32 %v5534, 4294901760
        %6600 = vmatmul.mubr.f32.gmra.mxu0 %v6599
        %v6601 = vpop.f32.mrf.mxu0
        %v6602 = vadd.f32 %v6371, %v6601
        %v6603 = vpop.f32.mrf.mxu0
        %6604 = vmatprep.mubr.f32.mxu0 0.0
        %v6605 = vand.u32 %v5535, 4294901760
        %6606 = vmatmul.mubr.f32.gmra.mxu0 %v6605
        %v6607 = vpop.f32.mrf.mxu0
        %v6608 = vadd.f32 %v6379, %v6607
        %v6609 = vpop.f32.mrf.mxu0
        %6610 = vmatprep.mubr.f32.mxu0 0.0
        %v6611 = vand.u32 %v5536, 4294901760
        %6612 = vmatmul.mubr.f32.gmra.mxu0 %v6611
        %v6613 = vpop.f32.mrf.mxu0
        %v6614 = vadd.f32 %v6387, %v6613
        %v6615 = vpop.f32.mrf.mxu0
        %6616 = vmatprep.mubr.f32.mxu0 0.0
        %v6617 = vand.u32 %v5537, 4294901760
        %6618 = vmatmul.mubr.f32.gmra.mxu0 %v6617
        %v6619 = vpop.f32.mrf.mxu0
        %v6620 = vadd.f32 %v6395, %v6619
        %v6621 = vpop.f32.mrf.mxu0
        %6622 = vmatprep.mubr.f32.mxu0 0.0
        %v6623 = vand.u32 %v5538, 4294901760
        %6624 = vmatmul.mubr.f32.gmra.mxu0 %v6623
        %v6625 = vpop.f32.mrf.mxu0
        %v6626 = vadd.f32 %v6403, %v6625
        %v6627 = vpop.f32.mrf.mxu0
        %6628 = vmatprep.mubr.f32.mxu0 0.0
        %v6629 = vand.u32 %v5539, 4294901760
        %6630 = vmatmul.mubr.f32.gmra.mxu0 %v6629
        %v6631 = vpop.f32.mrf.mxu0
        %v6632 = vadd.f32 %v6411, %v6631
        %v6633 = vpop.f32.mrf.mxu0
        %6634 = vmatprep.mubr.f32.mxu0 0.0
        %v6635 = vand.u32 %v5540, 4294901760
        %6636 = vmatmul.mubr.f32.gmra.mxu0 %v6635
        %v6637 = vpop.f32.mrf.mxu0
        %v6638 = vadd.f32 %v6419, %v6637
        %v6639 = vpop.f32.mrf.mxu0
        %6640 = vmatprep.mubr.f32.mxu0 0.0
        %v6641 = vand.u32 %v5541, 4294901760
        %6642 = vmatmul.mubr.f32.gmra.mxu0 %v6641
        %v6643 = vpop.f32.mrf.mxu0
        %v6644 = vadd.f32 %v6427, %v6643
        %v6645 = vpop.f32.mrf.mxu0
        %6646 = vmatprep.mubr.f32.mxu0 0.0
        %v6647 = vand.u32 %v5542, 4294901760
        %6648 = vmatmul.mubr.f32.gmra.mxu0 %v6647
        %v6649 = vpop.f32.mrf.mxu0
        %v6650 = vadd.f32 %v6435, %v6649
        %v6651 = vpop.f32.mrf.mxu0
        %6652 = vmatprep.mubr.f32.mxu0 0.0
        %v6653 = vand.u32 %v5543, 4294901760
        %6654 = vmatmul.mubr.f32.gmra.mxu0 %v6653
        %v6655 = vpop.f32.mrf.mxu0
        %v6656 = vadd.f32 %v6443, %v6655
        %v6657 = vpop.f32.mrf.mxu0
        %6658 = vmatprep.mubr.f32.mxu0 0.0
        %v6659 = vand.u32 %v5544, 4294901760
        %6660 = vmatmul.mubr.f32.gmra.mxu0 %v6659
        %v6661 = vpop.f32.mrf.mxu0
        %v6662 = vadd.f32 %v6451, %v6661
        %v6663 = vpop.f32.mrf.mxu0
        %6664 = vmatprep.mubr.f32.mxu0 0.0
        %v6665 = vand.u32 %v5545, 4294901760
        %6666 = vmatmul.mubr.f32.gmra.mxu0 %v6665
        %v6667 = vpop.f32.mrf.mxu0
        %v6668 = vadd.f32 %v6459, %v6667
        %v6669 = vpop.f32.mrf.mxu0
        %6670 = vdwg.mxu0
        %6671 = vmatprep.subr.mxu0 0.0
        %v6672 = vand.u32 %v5529, 4294901760
        %6673 = vmatpush1.msra.mxu0 %v6672
        %6674 = vmatprep.subr.mxu0 0.0
        %v6675 = vand.u32 %v5528, 4294901760
        %6676 = vmatpush1.msra.mxu0 %v6675
        %6677 = vmatprep.subr.mxu0 0.0
        %v6678 = vand.u32 %v5527, 4294901760
        %6679 = vmatpush1.msra.mxu0 %v6678
        %6680 = vmatprep.subr.mxu0 0.0
        %v6681 = vand.u32 %v5526, 4294901760
        %6682 = vmatpush1.msra.mxu0 %v6681
        %6683 = vmatprep.subr.mxu0 0.0
        %v6684 = vand.u32 %v5525, 4294901760
        %6685 = vmatpush1.msra.mxu0 %v6684
        %6686 = vmatprep.subr.mxu0 0.0
        %v6687 = vand.u32 %v5524, 4294901760
        %6688 = vmatpush1.msra.mxu0 %v6687
        %6689 = vmatprep.subr.mxu0 0.0
        %v6690 = vand.u32 %v5523, 4294901760
        %6691 = vmatpush1.msra.mxu0 %v6690
        %6692 = vmatprep.subr.mxu0 0.0
        %v6693 = vand.u32 %v5522, 4294901760
        %6694 = vmatpush1.msra.mxu0 %v6693
        %6695 = vmatprep.subr.mxu0 0.0
        %v6696 = vand.u32 %v5521, 4294901760
        %6697 = vmatpush1.msra.mxu0 %v6696
        %6698 = vmatprep.subr.mxu0 0.0
        %v6699 = vand.u32 %v5520, 4294901760
        %6700 = vmatpush1.msra.mxu0 %v6699
        %6701 = vmatprep.subr.mxu0 0.0
        %v6702 = vand.u32 %v5519, 4294901760
        %6703 = vmatpush1.msra.mxu0 %v6702
        %6704 = vmatprep.subr.mxu0 0.0
        %v6705 = vand.u32 %v5518, 4294901760
        %6706 = vmatpush1.msra.mxu0 %v6705
        %6707 = vmatprep.subr.mxu0 0.0
        %v6708 = vand.u32 %v5517, 4294901760
        %6709 = vmatpush1.msra.mxu0 %v6708
        %6710 = vmatprep.subr.mxu0 0.0
        %v6711 = vand.u32 %v5516, 4294901760
        %6712 = vmatpush1.msra.mxu0 %v6711
        %6713 = vmatprep.subr.mxu0 0.0
        %v6714 = vand.u32 %v5515, 4294901760
        %6715 = vmatpush1.msra.mxu0 %v6714
        %6716 = vmatprep.subr.mxu0 0.0
        %v6717 = vand.u32 %v5514, 4294901760
        %6718 = vmatpush1.msra.mxu0 %v6717
        %6719 = vmatprep.subr.mxu0 0.0
        %6720 = vmatpush2.msra.mxu0 0.0
        %6721 = vmatprep.subr.mxu0 0.0
        %6722 = vmatpush2.msra.mxu0 0.0
        %6723 = vmatprep.subr.mxu0 0.0
        %6724 = vmatpush2.msra.mxu0 0.0
        %6725 = vmatprep.subr.mxu0 0.0
        %6726 = vmatpush2.msra.mxu0 0.0
        %6727 = vmatprep.subr.mxu0 0.0
        %6728 = vmatpush2.msra.mxu0 0.0
        %6729 = vmatprep.subr.mxu0 0.0
        %6730 = vmatpush2.msra.mxu0 0.0
        %6731 = vmatprep.subr.mxu0 0.0
        %6732 = vmatpush2.msra.mxu0 0.0
        %6733 = vmatprep.subr.mxu0 0.0
        %6734 = vmatpush2.msra.mxu0 0.0
        %6735 = vmatprep.subr.mxu0 0.0
        %6736 = vmatpush2.msra.mxu0 0.0
        %6737 = vmatprep.subr.mxu0 0.0
        %6738 = vmatpush2.msra.mxu0 0.0
        %6739 = vmatprep.subr.mxu0 0.0
        %6740 = vmatpush2.msra.mxu0 0.0
        %6741 = vmatprep.subr.mxu0 0.0
        %6742 = vmatpush2.msra.mxu0 0.0
        %6743 = vmatprep.subr.mxu0 0.0
        %6744 = vmatpush2.msra.mxu0 0.0
        %6745 = vmatprep.subr.mxu0 0.0
        %6746 = vmatpush2.msra.mxu0 0.0
        %6747 = vmatprep.subr.mxu0 0.0
        %6748 = vmatpush2.msra.mxu0 0.0
        %6749 = vmatprep.subr.mxu0 0.0
        %6750 = vmatpush2.msra.mxu0 0.0
        %6751 = vmatprep.mubr.f32.mxu0 0.0
        %v6752 = vand.u32 %v5530, 4294901760
        %6753 = vmatmul.mubr.f32.gmra.mxu0 %v6752
        %v6754 = vpop.f32.mrf.mxu0
        %v6755 = vadd.f32 %v6578, %v6754
        %v6756 = vpop.f32.mrf.mxu0
        %6757 = vmatprep.mubr.f32.mxu0 0.0
        %v6758 = vand.u32 %v5531, 4294901760
        %6759 = vmatmul.mubr.f32.gmra.mxu0 %v6758
        %v6760 = vpop.f32.mrf.mxu0
        %v6761 = vadd.f32 %v6584, %v6760
        %v6762 = vpop.f32.mrf.mxu0
        %6763 = vmatprep.mubr.f32.mxu0 0.0
        %v6764 = vand.u32 %v5532, 4294901760
        %6765 = vmatmul.mubr.f32.gmra.mxu0 %v6764
        %v6766 = vpop.f32.mrf.mxu0
        %v6767 = vadd.f32 %v6590, %v6766
        %v6768 = vpop.f32.mrf.mxu0
        %6769 = vmatprep.mubr.f32.mxu0 0.0
        %v6770 = vand.u32 %v5533, 4294901760
        %6771 = vmatmul.mubr.f32.gmra.mxu0 %v6770
        %v6772 = vpop.f32.mrf.mxu0
        %v6773 = vadd.f32 %v6596, %v6772
        %v6774 = vpop.f32.mrf.mxu0
        %6775 = vmatprep.mubr.f32.mxu0 0.0
        %v6776 = vand.u32 %v5534, 4294901760
        %6777 = vmatmul.mubr.f32.gmra.mxu0 %v6776
        %v6778 = vpop.f32.mrf.mxu0
        %v6779 = vadd.f32 %v6602, %v6778
        %v6780 = vpop.f32.mrf.mxu0
        %6781 = vmatprep.mubr.f32.mxu0 0.0
        %v6782 = vand.u32 %v5535, 4294901760
        %6783 = vmatmul.mubr.f32.gmra.mxu0 %v6782
        %v6784 = vpop.f32.mrf.mxu0
        %v6785 = vadd.f32 %v6608, %v6784
        %v6786 = vpop.f32.mrf.mxu0
        %6787 = vmatprep.mubr.f32.mxu0 0.0
        %v6788 = vand.u32 %v5536, 4294901760
        %6789 = vmatmul.mubr.f32.gmra.mxu0 %v6788
        %v6790 = vpop.f32.mrf.mxu0
        %v6791 = vadd.f32 %v6614, %v6790
        %v6792 = vpop.f32.mrf.mxu0
        %6793 = vmatprep.mubr.f32.mxu0 0.0
        %v6794 = vand.u32 %v5537, 4294901760
        %6795 = vmatmul.mubr.f32.gmra.mxu0 %v6794
        %v6796 = vpop.f32.mrf.mxu0
        %v6797 = vadd.f32 %v6620, %v6796
        %v6798 = vpop.f32.mrf.mxu0
        %6799 = vmatprep.mubr.f32.mxu0 0.0
        %v6800 = vand.u32 %v5538, 4294901760
        %6801 = vmatmul.mubr.f32.gmra.mxu0 %v6800
        %v6802 = vpop.f32.mrf.mxu0
        %v6803 = vadd.f32 %v6626, %v6802
        %v6804 = vpop.f32.mrf.mxu0
        %6805 = vmatprep.mubr.f32.mxu0 0.0
        %v6806 = vand.u32 %v5539, 4294901760
        %6807 = vmatmul.mubr.f32.gmra.mxu0 %v6806
        %v6808 = vpop.f32.mrf.mxu0
        %v6809 = vadd.f32 %v6632, %v6808
        %v6810 = vpop.f32.mrf.mxu0
        %6811 = vmatprep.mubr.f32.mxu0 0.0
        %v6812 = vand.u32 %v5540, 4294901760
        %6813 = vmatmul.mubr.f32.gmra.mxu0 %v6812
        %v6814 = vpop.f32.mrf.mxu0
        %v6815 = vadd.f32 %v6638, %v6814
        %v6816 = vpop.f32.mrf.mxu0
        %6817 = vmatprep.mubr.f32.mxu0 0.0
        %v6818 = vand.u32 %v5541, 4294901760
        %6819 = vmatmul.mubr.f32.gmra.mxu0 %v6818
        %v6820 = vpop.f32.mrf.mxu0
        %v6821 = vadd.f32 %v6644, %v6820
        %v6822 = vpop.f32.mrf.mxu0
        %6823 = vmatprep.mubr.f32.mxu0 0.0
        %v6824 = vand.u32 %v5542, 4294901760
        %6825 = vmatmul.mubr.f32.gmra.mxu0 %v6824
        %v6826 = vpop.f32.mrf.mxu0
        %v6827 = vadd.f32 %v6650, %v6826
        %v6828 = vpop.f32.mrf.mxu0
        %6829 = vmatprep.mubr.f32.mxu0 0.0
        %v6830 = vand.u32 %v5543, 4294901760
        %6831 = vmatmul.mubr.f32.gmra.mxu0 %v6830
        %v6832 = vpop.f32.mrf.mxu0
        %v6833 = vadd.f32 %v6656, %v6832
        %v6834 = vpop.f32.mrf.mxu0
        %6835 = vmatprep.mubr.f32.mxu0 0.0
        %v6836 = vand.u32 %v5544, 4294901760
        %6837 = vmatmul.mubr.f32.gmra.mxu0 %v6836
        %v6838 = vpop.f32.mrf.mxu0
        %v6839 = vadd.f32 %v6662, %v6838
        %v6840 = vpop.f32.mrf.mxu0
        %6841 = vmatprep.mubr.f32.mxu0 0.0
        %v6842 = vand.u32 %v5545, 4294901760
        %6843 = vmatmul.mubr.f32.gmra.mxu0 %v6842
        %v6844 = vpop.f32.mrf.mxu0
        %v6845 = vadd.f32 %v6668, %v6844
        %v6846 = vpop.f32.mrf.mxu0
        %6847 = vdwg.mxu0
        %v6848 = vmax.f32 %v6755, 0.0
        %v6849 = vmax.f32 %v6761, 0.0
        %v6850 = vmax.f32 %v6767, 0.0
        %v6851 = vmax.f32 %v6773, 0.0
        %v6852 = vmax.f32 %v6779, 0.0
        %v6853 = vmax.f32 %v6785, 0.0
        %v6854 = vmax.f32 %v6791, 0.0
        %v6855 = vmax.f32 %v6797, 0.0
        %v6856 = vmax.f32 %v6803, 0.0
        %v6857 = vmax.f32 %v6809, 0.0
        %v6858 = vmax.f32 %v6815, 0.0
        %v6859 = vmax.f32 %v6821, 0.0
        %v6860 = vmax.f32 %v6827, 0.0
        %v6861 = vmax.f32 %v6833, 0.0
        %v6862 = vmax.f32 %v6839, 0.0
        %v6863 = vmax.f32 %v6845, 0.0
        %v6864 = vld [vmem:[%s11] sm:$0xff]
        %v6865 = vld [vmem:[%s11 + $0x8] sm:$0xf]
        %v6866 = vld [vmem:[%s12] sm:$0xff]
        %v6867 = vld [vmem:[%s12 + $0x8] sm:$0xf]
        %6868 = vmatprep.subr.mxu0 0.0
        %v6869 = vand.u32 %v6863, 4294901760
        %6870 = vmatpush1.msra.mxu0 %v6869
        %6871 = vmatprep.subr.mxu0 0.0
        %v6872 = vand.u32 %v6862, 4294901760
        %6873 = vmatpush1.msra.mxu0 %v6872
        %6874 = vmatprep.subr.mxu0 0.0
        %v6875 = vand.u32 %v6861, 4294901760
        %6876 = vmatpush1.msra.mxu0 %v6875
        %6877 = vmatprep.subr.mxu0 0.0
        %v6878 = vand.u32 %v6860, 4294901760
        %6879 = vmatpush1.msra.mxu0 %v6878
        %6880 = vmatprep.subr.mxu0 0.0
        %v6881 = vand.u32 %v6859, 4294901760
        %6882 = vmatpush1.msra.mxu0 %v6881
        %6883 = vmatprep.subr.mxu0 0.0
        %v6884 = vand.u32 %v6858, 4294901760
        %6885 = vmatpush1.msra.mxu0 %v6884
        %6886 = vmatprep.subr.mxu0 0.0
        %v6887 = vand.u32 %v6857, 4294901760
        %6888 = vmatpush1.msra.mxu0 %v6887
        %6889 = vmatprep.subr.mxu0 0.0
        %v6890 = vand.u32 %v6856, 4294901760
        %6891 = vmatpush1.msra.mxu0 %v6890
        %6892 = vmatprep.subr.mxu0 0.0
        %v6893 = vand.u32 %v6855, 4294901760
        %6894 = vmatpush1.msra.mxu0 %v6893
        %6895 = vmatprep.subr.mxu0 0.0
        %v6896 = vand.u32 %v6854, 4294901760
        %6897 = vmatpush1.msra.mxu0 %v6896
        %6898 = vmatprep.subr.mxu0 0.0
        %v6899 = vand.u32 %v6853, 4294901760
        %6900 = vmatpush1.msra.mxu0 %v6899
        %6901 = vmatprep.subr.mxu0 0.0
        %v6902 = vand.u32 %v6852, 4294901760
        %6903 = vmatpush1.msra.mxu0 %v6902
        %6904 = vmatprep.subr.mxu0 0.0
        %v6905 = vand.u32 %v6851, 4294901760
        %6906 = vmatpush1.msra.mxu0 %v6905
        %6907 = vmatprep.subr.mxu0 0.0
        %v6908 = vand.u32 %v6850, 4294901760
        %6909 = vmatpush1.msra.mxu0 %v6908
        %6910 = vmatprep.subr.mxu0 0.0
        %v6911 = vand.u32 %v6849, 4294901760
        %6912 = vmatpush1.msra.mxu0 %v6911
        %6913 = vmatprep.subr.mxu0 0.0
        %v6914 = vand.u32 %v6848, 4294901760
        %6915 = vmatpush1.msra.mxu0 %v6914
        %6916 = vmatprep.subr.mxu0 0.0
        %6917 = vmatpush2.msra.mxu0 0.0
        %6918 = vmatprep.subr.mxu0 0.0
        %6919 = vmatpush2.msra.mxu0 0.0
        %6920 = vmatprep.subr.mxu0 0.0
        %6921 = vmatpush2.msra.mxu0 0.0
        %6922 = vmatprep.subr.mxu0 0.0
        %6923 = vmatpush2.msra.mxu0 0.0
        %6924 = vmatprep.subr.mxu0 0.0
        %6925 = vmatpush2.msra.mxu0 0.0
        %6926 = vmatprep.subr.mxu0 0.0
        %6927 = vmatpush2.msra.mxu0 0.0
        %6928 = vmatprep.subr.mxu0 0.0
        %6929 = vmatpush2.msra.mxu0 0.0
        %6930 = vmatprep.subr.mxu0 0.0
        %6931 = vmatpush2.msra.mxu0 0.0
        %6932 = vmatprep.subr.mxu0 0.0
        %6933 = vmatpush2.msra.mxu0 0.0
        %6934 = vmatprep.subr.mxu0 0.0
        %6935 = vmatpush2.msra.mxu0 0.0
        %6936 = vmatprep.subr.mxu0 0.0
        %6937 = vmatpush2.msra.mxu0 0.0
        %6938 = vmatprep.subr.mxu0 0.0
        %6939 = vmatpush2.msra.mxu0 0.0
        %6940 = vmatprep.subr.mxu0 0.0
        %6941 = vmatpush2.msra.mxu0 0.0
        %6942 = vmatprep.subr.mxu0 0.0
        %6943 = vmatpush2.msra.mxu0 0.0
        %6944 = vmatprep.subr.mxu0 0.0
        %6945 = vmatpush2.msra.mxu0 0.0
        %6946 = vmatprep.subr.mxu0 0.0
        %6947 = vmatpush2.msra.mxu0 0.0
        %6948 = vmatprep.mubr.f32.mxu0 0.0
        %v6949 = vand.u32 %v6864, 4294901760
        %v6950 = vsub.f32 %v6864, %v6949
        %v6951 = vand.u32 %v6950, 4294901760
        %v6952 = vsub.f32 %v6950, %v6951
        %v6953 = vand.u32 %v6952, 4294901760
        %6954 = vmatmul.mubr.f32.gmra.mxu0 %v6953
        %v6955 = vpop.f32.mrf.mxu0
        %v6956 = vadd.f32 %v6866, %v6955
        %v6957 = vpop.f32.mrf.mxu0
        %6958 = vmatprep.mubr.f32.mxu0 0.0
        %v6959 = vand.u32 %v6865, 4294901760
        %v6960 = vsub.f32 %v6865, %v6959
        %v6961 = vand.u32 %v6960, 4294901760
        %v6962 = vsub.f32 %v6960, %v6961
        %v6963 = vand.u32 %v6962, 4294901760
        %6964 = vmatmul.mubr.f32.gmra.mxu0 %v6963
        %v6965 = vpop.f32.mrf.mxu0
        %v6966 = vadd.f32 %v6867, %v6965
        %v6967 = vpop.f32.mrf.mxu0
        %6968 = vdwg.mxu0
        %6969 = vmatprep.subr.mxu0 0.0
        %v6970 = vand.u32 %v6863, 4294901760
        %v6971 = vsub.f32 %v6863, %v6970
        %v6972 = vand.u32 %v6971, 4294901760
        %v6973 = vsub.f32 %v6971, %v6972
        %v6974 = vand.u32 %v6973, 4294901760
        %6975 = vmatpush1.msra.mxu0 %v6974
        %6976 = vmatprep.subr.mxu0 0.0
        %v6977 = vand.u32 %v6862, 4294901760
        %v6978 = vsub.f32 %v6862, %v6977
        %v6979 = vand.u32 %v6978, 4294901760
        %v6980 = vsub.f32 %v6978, %v6979
        %v6981 = vand.u32 %v6980, 4294901760
        %6982 = vmatpush1.msra.mxu0 %v6981
        %6983 = vmatprep.subr.mxu0 0.0
        %v6984 = vand.u32 %v6861, 4294901760
        %v6985 = vsub.f32 %v6861, %v6984
        %v6986 = vand.u32 %v6985, 4294901760
        %v6987 = vsub.f32 %v6985, %v6986
        %v6988 = vand.u32 %v6987, 4294901760
        %6989 = vmatpush1.msra.mxu0 %v6988
        %6990 = vmatprep.subr.mxu0 0.0
        %v6991 = vand.u32 %v6860, 4294901760
        %v6992 = vsub.f32 %v6860, %v6991
        %v6993 = vand.u32 %v6992, 4294901760
        %v6994 = vsub.f32 %v6992, %v6993
        %v6995 = vand.u32 %v6994, 4294901760
        %6996 = vmatpush1.msra.mxu0 %v6995
        %6997 = vmatprep.subr.mxu0 0.0
        %v6998 = vand.u32 %v6859, 4294901760
        %v6999 = vsub.f32 %v6859, %v6998
        %v7000 = vand.u32 %v6999, 4294901760
        %v7001 = vsub.f32 %v6999, %v7000
        %v7002 = vand.u32 %v7001, 4294901760
        %7003 = vmatpush1.msra.mxu0 %v7002
        %7004 = vmatprep.subr.mxu0 0.0
        %v7005 = vand.u32 %v6858, 4294901760
        %v7006 = vsub.f32 %v6858, %v7005
        %v7007 = vand.u32 %v7006, 4294901760
        %v7008 = vsub.f32 %v7006, %v7007
        %v7009 = vand.u32 %v7008, 4294901760
        %7010 = vmatpush1.msra.mxu0 %v7009
        %7011 = vmatprep.subr.mxu0 0.0
        %v7012 = vand.u32 %v6857, 4294901760
        %v7013 = vsub.f32 %v6857, %v7012
        %v7014 = vand.u32 %v7013, 4294901760
        %v7015 = vsub.f32 %v7013, %v7014
        %v7016 = vand.u32 %v7015, 4294901760
        %7017 = vmatpush1.msra.mxu0 %v7016
        %7018 = vmatprep.subr.mxu0 0.0
        %v7019 = vand.u32 %v6856, 4294901760
        %v7020 = vsub.f32 %v6856, %v7019
        %v7021 = vand.u32 %v7020, 4294901760
        %v7022 = vsub.f32 %v7020, %v7021
        %v7023 = vand.u32 %v7022, 4294901760
        %7024 = vmatpush1.msra.mxu0 %v7023
        %7025 = vmatprep.subr.mxu0 0.0
        %v7026 = vand.u32 %v6855, 4294901760
        %v7027 = vsub.f32 %v6855, %v7026
        %v7028 = vand.u32 %v7027, 4294901760
        %v7029 = vsub.f32 %v7027, %v7028
        %v7030 = vand.u32 %v7029, 4294901760
        %7031 = vmatpush1.msra.mxu0 %v7030
        %7032 = vmatprep.subr.mxu0 0.0
        %v7033 = vand.u32 %v6854, 4294901760
        %v7034 = vsub.f32 %v6854, %v7033
        %v7035 = vand.u32 %v7034, 4294901760
        %v7036 = vsub.f32 %v7034, %v7035
        %v7037 = vand.u32 %v7036, 4294901760
        %7038 = vmatpush1.msra.mxu0 %v7037
        %7039 = vmatprep.subr.mxu0 0.0
        %v7040 = vand.u32 %v6853, 4294901760
        %v7041 = vsub.f32 %v6853, %v7040
        %v7042 = vand.u32 %v7041, 4294901760
        %v7043 = vsub.f32 %v7041, %v7042
        %v7044 = vand.u32 %v7043, 4294901760
        %7045 = vmatpush1.msra.mxu0 %v7044
        %7046 = vmatprep.subr.mxu0 0.0
        %v7047 = vand.u32 %v6852, 4294901760
        %v7048 = vsub.f32 %v6852, %v7047
        %v7049 = vand.u32 %v7048, 4294901760
        %v7050 = vsub.f32 %v7048, %v7049
        %v7051 = vand.u32 %v7050, 4294901760
        %7052 = vmatpush1.msra.mxu0 %v7051
        %7053 = vmatprep.subr.mxu0 0.0
        %v7054 = vand.u32 %v6851, 4294901760
        %v7055 = vsub.f32 %v6851, %v7054
        %v7056 = vand.u32 %v7055, 4294901760
        %v7057 = vsub.f32 %v7055, %v7056
        %v7058 = vand.u32 %v7057, 4294901760
        %7059 = vmatpush1.msra.mxu0 %v7058
        %7060 = vmatprep.subr.mxu0 0.0
        %v7061 = vand.u32 %v6850, 4294901760
        %v7062 = vsub.f32 %v6850, %v7061
        %v7063 = vand.u32 %v7062, 4294901760
        %v7064 = vsub.f32 %v7062, %v7063
        %v7065 = vand.u32 %v7064, 4294901760
        %7066 = vmatpush1.msra.mxu0 %v7065
        %7067 = vmatprep.subr.mxu0 0.0
        %v7068 = vand.u32 %v6849, 4294901760
        %v7069 = vsub.f32 %v6849, %v7068
        %v7070 = vand.u32 %v7069, 4294901760
        %v7071 = vsub.f32 %v7069, %v7070
        %v7072 = vand.u32 %v7071, 4294901760
        %7073 = vmatpush1.msra.mxu0 %v7072
        %7074 = vmatprep.subr.mxu0 0.0
        %v7075 = vand.u32 %v6848, 4294901760
        %v7076 = vsub.f32 %v6848, %v7075
        %v7077 = vand.u32 %v7076, 4294901760
        %v7078 = vsub.f32 %v7076, %v7077
        %v7079 = vand.u32 %v7078, 4294901760
        %7080 = vmatpush1.msra.mxu0 %v7079
        %7081 = vmatprep.subr.mxu0 0.0
        %7082 = vmatpush2.msra.mxu0 0.0
        %7083 = vmatprep.subr.mxu0 0.0
        %7084 = vmatpush2.msra.mxu0 0.0
        %7085 = vmatprep.subr.mxu0 0.0
        %7086 = vmatpush2.msra.mxu0 0.0
        %7087 = vmatprep.subr.mxu0 0.0
        %7088 = vmatpush2.msra.mxu0 0.0
        %7089 = vmatprep.subr.mxu0 0.0
        %7090 = vmatpush2.msra.mxu0 0.0
        %7091 = vmatprep.subr.mxu0 0.0
        %7092 = vmatpush2.msra.mxu0 0.0
        %7093 = vmatprep.subr.mxu0 0.0
        %7094 = vmatpush2.msra.mxu0 0.0
        %7095 = vmatprep.subr.mxu0 0.0
        %7096 = vmatpush2.msra.mxu0 0.0
        %7097 = vmatprep.subr.mxu0 0.0
        %7098 = vmatpush2.msra.mxu0 0.0
        %7099 = vmatprep.subr.mxu0 0.0
        %7100 = vmatpush2.msra.mxu0 0.0
        %7101 = vmatprep.subr.mxu0 0.0
        %7102 = vmatpush2.msra.mxu0 0.0
        %7103 = vmatprep.subr.mxu0 0.0
        %7104 = vmatpush2.msra.mxu0 0.0
        %7105 = vmatprep.subr.mxu0 0.0
        %7106 = vmatpush2.msra.mxu0 0.0
        %7107 = vmatprep.subr.mxu0 0.0
        %7108 = vmatpush2.msra.mxu0 0.0
        %7109 = vmatprep.subr.mxu0 0.0
        %7110 = vmatpush2.msra.mxu0 0.0
        %7111 = vmatprep.subr.mxu0 0.0
        %7112 = vmatpush2.msra.mxu0 0.0
        %7113 = vmatprep.mubr.f32.mxu0 0.0
        %v7114 = vand.u32 %v6864, 4294901760
        %7115 = vmatmul.mubr.f32.gmra.mxu0 %v7114
        %v7116 = vpop.f32.mrf.mxu0
        %v7117 = vadd.f32 %v6956, %v7116
        %v7118 = vpop.f32.mrf.mxu0
        %7119 = vmatprep.mubr.f32.mxu0 0.0
        %v7120 = vand.u32 %v6865, 4294901760
        %7121 = vmatmul.mubr.f32.gmra.mxu0 %v7120
        %v7122 = vpop.f32.mrf.mxu0
        %v7123 = vadd.f32 %v6966, %v7122
        %v7124 = vpop.f32.mrf.mxu0
        %7125 = vdwg.mxu0
        %7126 = vmatprep.subr.mxu0 0.0
        %v7127 = vand.u32 %v6863, 4294901760
        %v7128 = vsub.f32 %v6863, %v7127
        %7129 = vmatpush1.msra.mxu0 %v7128
        %7130 = vmatprep.subr.mxu0 0.0
        %v7131 = vand.u32 %v6862, 4294901760
        %v7132 = vsub.f32 %v6862, %v7131
        %7133 = vmatpush1.msra.mxu0 %v7132
        %7134 = vmatprep.subr.mxu0 0.0
        %v7135 = vand.u32 %v6861, 4294901760
        %v7136 = vsub.f32 %v6861, %v7135
        %7137 = vmatpush1.msra.mxu0 %v7136
        %7138 = vmatprep.subr.mxu0 0.0
        %v7139 = vand.u32 %v6860, 4294901760
        %v7140 = vsub.f32 %v6860, %v7139
        %7141 = vmatpush1.msra.mxu0 %v7140
        %7142 = vmatprep.subr.mxu0 0.0
        %v7143 = vand.u32 %v6859, 4294901760
        %v7144 = vsub.f32 %v6859, %v7143
        %7145 = vmatpush1.msra.mxu0 %v7144
        %7146 = vmatprep.subr.mxu0 0.0
        %v7147 = vand.u32 %v6858, 4294901760
        %v7148 = vsub.f32 %v6858, %v7147
        %7149 = vmatpush1.msra.mxu0 %v7148
        %7150 = vmatprep.subr.mxu0 0.0
        %v7151 = vand.u32 %v6857, 4294901760
        %v7152 = vsub.f32 %v6857, %v7151
        %7153 = vmatpush1.msra.mxu0 %v7152
        %7154 = vmatprep.subr.mxu0 0.0
        %v7155 = vand.u32 %v6856, 4294901760
        %v7156 = vsub.f32 %v6856, %v7155
        %7157 = vmatpush1.msra.mxu0 %v7156
        %7158 = vmatprep.subr.mxu0 0.0
        %v7159 = vand.u32 %v6855, 4294901760
        %v7160 = vsub.f32 %v6855, %v7159
        %7161 = vmatpush1.msra.mxu0 %v7160
        %7162 = vmatprep.subr.mxu0 0.0
        %v7163 = vand.u32 %v6854, 4294901760
        %v7164 = vsub.f32 %v6854, %v7163
        %7165 = vmatpush1.msra.mxu0 %v7164
        %7166 = vmatprep.subr.mxu0 0.0
        %v7167 = vand.u32 %v6853, 4294901760
        %v7168 = vsub.f32 %v6853, %v7167
        %7169 = vmatpush1.msra.mxu0 %v7168
        %7170 = vmatprep.subr.mxu0 0.0
        %v7171 = vand.u32 %v6852, 4294901760
        %v7172 = vsub.f32 %v6852, %v7171
        %7173 = vmatpush1.msra.mxu0 %v7172
        %7174 = vmatprep.subr.mxu0 0.0
        %v7175 = vand.u32 %v6851, 4294901760
        %v7176 = vsub.f32 %v6851, %v7175
        %7177 = vmatpush1.msra.mxu0 %v7176
        %7178 = vmatprep.subr.mxu0 0.0
        %v7179 = vand.u32 %v6850, 4294901760
        %v7180 = vsub.f32 %v6850, %v7179
        %7181 = vmatpush1.msra.mxu0 %v7180
        %7182 = vmatprep.subr.mxu0 0.0
        %v7183 = vand.u32 %v6849, 4294901760
        %v7184 = vsub.f32 %v6849, %v7183
        %7185 = vmatpush1.msra.mxu0 %v7184
        %7186 = vmatprep.subr.mxu0 0.0
        %v7187 = vand.u32 %v6848, 4294901760
        %v7188 = vsub.f32 %v6848, %v7187
        %7189 = vmatpush1.msra.mxu0 %v7188
        %7190 = vmatprep.subr.mxu0 0.0
        %7191 = vmatpush2.msra.mxu0 0.0
        %7192 = vmatprep.subr.mxu0 0.0
        %7193 = vmatpush2.msra.mxu0 0.0
        %7194 = vmatprep.subr.mxu0 0.0
        %7195 = vmatpush2.msra.mxu0 0.0
        %7196 = vmatprep.subr.mxu0 0.0
        %7197 = vmatpush2.msra.mxu0 0.0
        %7198 = vmatprep.subr.mxu0 0.0
        %7199 = vmatpush2.msra.mxu0 0.0
        %7200 = vmatprep.subr.mxu0 0.0
        %7201 = vmatpush2.msra.mxu0 0.0
        %7202 = vmatprep.subr.mxu0 0.0
        %7203 = vmatpush2.msra.mxu0 0.0
        %7204 = vmatprep.subr.mxu0 0.0
        %7205 = vmatpush2.msra.mxu0 0.0
        %7206 = vmatprep.subr.mxu0 0.0
        %7207 = vmatpush2.msra.mxu0 0.0
        %7208 = vmatprep.subr.mxu0 0.0
        %7209 = vmatpush2.msra.mxu0 0.0
        %7210 = vmatprep.subr.mxu0 0.0
        %7211 = vmatpush2.msra.mxu0 0.0
        %7212 = vmatprep.subr.mxu0 0.0
        %7213 = vmatpush2.msra.mxu0 0.0
        %7214 = vmatprep.subr.mxu0 0.0
        %7215 = vmatpush2.msra.mxu0 0.0
        %7216 = vmatprep.subr.mxu0 0.0
        %7217 = vmatpush2.msra.mxu0 0.0
        %7218 = vmatprep.subr.mxu0 0.0
        %7219 = vmatpush2.msra.mxu0 0.0
        %7220 = vmatprep.subr.mxu0 0.0
        %7221 = vmatpush2.msra.mxu0 0.0
        %7222 = vmatprep.mubr.f32.mxu0 0.0
        %v7223 = vand.u32 %v6864, 4294901760
        %v7224 = vsub.f32 %v6864, %v7223
        %7225 = vmatmul.mubr.f32.gmra.mxu0 %v7224
        %v7226 = vpop.f32.mrf.mxu0
        %v7227 = vadd.f32 %v7117, %v7226
        %v7228 = vpop.f32.mrf.mxu0
        %7229 = vmatprep.mubr.f32.mxu0 0.0
        %v7230 = vand.u32 %v6865, 4294901760
        %v7231 = vsub.f32 %v6865, %v7230
        %7232 = vmatmul.mubr.f32.gmra.mxu0 %v7231
        %v7233 = vpop.f32.mrf.mxu0
        %v7234 = vadd.f32 %v7123, %v7233
        %v7235 = vpop.f32.mrf.mxu0
        %7236 = vdwg.mxu0
        %7237 = vmatprep.subr.mxu0 0.0
        %v7238 = vand.u32 %v6863, 4294901760
        %7239 = vmatpush1.msra.mxu0 %v7238
        %7240 = vmatprep.subr.mxu0 0.0
        %v7241 = vand.u32 %v6862, 4294901760
        %7242 = vmatpush1.msra.mxu0 %v7241
        %7243 = vmatprep.subr.mxu0 0.0
        %v7244 = vand.u32 %v6861, 4294901760
        %7245 = vmatpush1.msra.mxu0 %v7244
        %7246 = vmatprep.subr.mxu0 0.0
        %v7247 = vand.u32 %v6860, 4294901760
        %7248 = vmatpush1.msra.mxu0 %v7247
        %7249 = vmatprep.subr.mxu0 0.0
        %v7250 = vand.u32 %v6859, 4294901760
        %7251 = vmatpush1.msra.mxu0 %v7250
        %7252 = vmatprep.subr.mxu0 0.0
        %v7253 = vand.u32 %v6858, 4294901760
        %7254 = vmatpush1.msra.mxu0 %v7253
        %7255 = vmatprep.subr.mxu0 0.0
        %v7256 = vand.u32 %v6857, 4294901760
        %7257 = vmatpush1.msra.mxu0 %v7256
        %7258 = vmatprep.subr.mxu0 0.0
        %v7259 = vand.u32 %v6856, 4294901760
        %7260 = vmatpush1.msra.mxu0 %v7259
        %7261 = vmatprep.subr.mxu0 0.0
        %v7262 = vand.u32 %v6855, 4294901760
        %7263 = vmatpush1.msra.mxu0 %v7262
        %7264 = vmatprep.subr.mxu0 0.0
        %v7265 = vand.u32 %v6854, 4294901760
        %7266 = vmatpush1.msra.mxu0 %v7265
        %7267 = vmatprep.subr.mxu0 0.0
        %v7268 = vand.u32 %v6853, 4294901760
        %7269 = vmatpush1.msra.mxu0 %v7268
        %7270 = vmatprep.subr.mxu0 0.0
        %v7271 = vand.u32 %v6852, 4294901760
        %7272 = vmatpush1.msra.mxu0 %v7271
        %7273 = vmatprep.subr.mxu0 0.0
        %v7274 = vand.u32 %v6851, 4294901760
        %7275 = vmatpush1.msra.mxu0 %v7274
        %7276 = vmatprep.subr.mxu0 0.0
        %v7277 = vand.u32 %v6850, 4294901760
        %7278 = vmatpush1.msra.mxu0 %v7277
        %7279 = vmatprep.subr.mxu0 0.0
        %v7280 = vand.u32 %v6849, 4294901760
        %7281 = vmatpush1.msra.mxu0 %v7280
        %7282 = vmatprep.subr.mxu0 0.0
        %v7283 = vand.u32 %v6848, 4294901760
        %7284 = vmatpush1.msra.mxu0 %v7283
        %7285 = vmatprep.subr.mxu0 0.0
        %7286 = vmatpush2.msra.mxu0 0.0
        %7287 = vmatprep.subr.mxu0 0.0
        %7288 = vmatpush2.msra.mxu0 0.0
        %7289 = vmatprep.subr.mxu0 0.0
        %7290 = vmatpush2.msra.mxu0 0.0
        %7291 = vmatprep.subr.mxu0 0.0
        %7292 = vmatpush2.msra.mxu0 0.0
        %7293 = vmatprep.subr.mxu0 0.0
        %7294 = vmatpush2.msra.mxu0 0.0
        %7295 = vmatprep.subr.mxu0 0.0
        %7296 = vmatpush2.msra.mxu0 0.0
        %7297 = vmatprep.subr.mxu0 0.0
        %7298 = vmatpush2.msra.mxu0 0.0
        %7299 = vmatprep.subr.mxu0 0.0
        %7300 = vmatpush2.msra.mxu0 0.0
        %7301 = vmatprep.subr.mxu0 0.0
        %7302 = vmatpush2.msra.mxu0 0.0
        %7303 = vmatprep.subr.mxu0 0.0
        %7304 = vmatpush2.msra.mxu0 0.0
        %7305 = vmatprep.subr.mxu0 0.0
        %7306 = vmatpush2.msra.mxu0 0.0
        %7307 = vmatprep.subr.mxu0 0.0
        %7308 = vmatpush2.msra.mxu0 0.0
        %7309 = vmatprep.subr.mxu0 0.0
        %7310 = vmatpush2.msra.mxu0 0.0
        %7311 = vmatprep.subr.mxu0 0.0
        %7312 = vmatpush2.msra.mxu0 0.0
        %7313 = vmatprep.subr.mxu0 0.0
        %7314 = vmatpush2.msra.mxu0 0.0
        %7315 = vmatprep.subr.mxu0 0.0
        %7316 = vmatpush2.msra.mxu0 0.0
        %7317 = vmatprep.mubr.f32.mxu0 0.0
        %v7318 = vand.u32 %v6864, 4294901760
        %v7319 = vsub.f32 %v6864, %v7318
        %v7320 = vand.u32 %v7319, 4294901760
        %7321 = vmatmul.mubr.f32.gmra.mxu0 %v7320
        %v7322 = vpop.f32.mrf.mxu0
        %v7323 = vadd.f32 %v7227, %v7322
        %v7324 = vpop.f32.mrf.mxu0
        %7325 = vmatprep.mubr.f32.mxu0 0.0
        %v7326 = vand.u32 %v6865, 4294901760
        %v7327 = vsub.f32 %v6865, %v7326
        %v7328 = vand.u32 %v7327, 4294901760
        %7329 = vmatmul.mubr.f32.gmra.mxu0 %v7328
        %v7330 = vpop.f32.mrf.mxu0
        %v7331 = vadd.f32 %v7234, %v7330
        %v7332 = vpop.f32.mrf.mxu0
        %7333 = vdwg.mxu0
        %7334 = vmatprep.subr.mxu0 0.0
        %v7335 = vand.u32 %v6863, 4294901760
        %v7336 = vsub.f32 %v6863, %v7335
        %v7337 = vand.u32 %v7336, 4294901760
        %7338 = vmatpush1.msra.mxu0 %v7337
        %7339 = vmatprep.subr.mxu0 0.0
        %v7340 = vand.u32 %v6862, 4294901760
        %v7341 = vsub.f32 %v6862, %v7340
        %v7342 = vand.u32 %v7341, 4294901760
        %7343 = vmatpush1.msra.mxu0 %v7342
        %7344 = vmatprep.subr.mxu0 0.0
        %v7345 = vand.u32 %v6861, 4294901760
        %v7346 = vsub.f32 %v6861, %v7345
        %v7347 = vand.u32 %v7346, 4294901760
        %7348 = vmatpush1.msra.mxu0 %v7347
        %7349 = vmatprep.subr.mxu0 0.0
        %v7350 = vand.u32 %v6860, 4294901760
        %v7351 = vsub.f32 %v6860, %v7350
        %v7352 = vand.u32 %v7351, 4294901760
        %7353 = vmatpush1.msra.mxu0 %v7352
        %7354 = vmatprep.subr.mxu0 0.0
        %v7355 = vand.u32 %v6859, 4294901760
        %v7356 = vsub.f32 %v6859, %v7355
        %v7357 = vand.u32 %v7356, 4294901760
        %7358 = vmatpush1.msra.mxu0 %v7357
        %7359 = vmatprep.subr.mxu0 0.0
        %v7360 = vand.u32 %v6858, 4294901760
        %v7361 = vsub.f32 %v6858, %v7360
        %v7362 = vand.u32 %v7361, 4294901760
        %7363 = vmatpush1.msra.mxu0 %v7362
        %7364 = vmatprep.subr.mxu0 0.0
        %v7365 = vand.u32 %v6857, 4294901760
        %v7366 = vsub.f32 %v6857, %v7365
        %v7367 = vand.u32 %v7366, 4294901760
        %7368 = vmatpush1.msra.mxu0 %v7367
        %7369 = vmatprep.subr.mxu0 0.0
        %v7370 = vand.u32 %v6856, 4294901760
        %v7371 = vsub.f32 %v6856, %v7370
        %v7372 = vand.u32 %v7371, 4294901760
        %7373 = vmatpush1.msra.mxu0 %v7372
        %7374 = vmatprep.subr.mxu0 0.0
        %v7375 = vand.u32 %v6855, 4294901760
        %v7376 = vsub.f32 %v6855, %v7375
        %v7377 = vand.u32 %v7376, 4294901760
        %7378 = vmatpush1.msra.mxu0 %v7377
        %7379 = vmatprep.subr.mxu0 0.0
        %v7380 = vand.u32 %v6854, 4294901760
        %v7381 = vsub.f32 %v6854, %v7380
        %v7382 = vand.u32 %v7381, 4294901760
        %7383 = vmatpush1.msra.mxu0 %v7382
        %7384 = vmatprep.subr.mxu0 0.0
        %v7385 = vand.u32 %v6853, 4294901760
        %v7386 = vsub.f32 %v6853, %v7385
        %v7387 = vand.u32 %v7386, 4294901760
        %7388 = vmatpush1.msra.mxu0 %v7387
        %7389 = vmatprep.subr.mxu0 0.0
        %v7390 = vand.u32 %v6852, 4294901760
        %v7391 = vsub.f32 %v6852, %v7390
        %v7392 = vand.u32 %v7391, 4294901760
        %7393 = vmatpush1.msra.mxu0 %v7392
        %7394 = vmatprep.subr.mxu0 0.0
        %v7395 = vand.u32 %v6851, 4294901760
        %v7396 = vsub.f32 %v6851, %v7395
        %v7397 = vand.u32 %v7396, 4294901760
        %7398 = vmatpush1.msra.mxu0 %v7397
        %7399 = vmatprep.subr.mxu0 0.0
        %v7400 = vand.u32 %v6850, 4294901760
        %v7401 = vsub.f32 %v6850, %v7400
        %v7402 = vand.u32 %v7401, 4294901760
        %7403 = vmatpush1.msra.mxu0 %v7402
        %7404 = vmatprep.subr.mxu0 0.0
        %v7405 = vand.u32 %v6849, 4294901760
        %v7406 = vsub.f32 %v6849, %v7405
        %v7407 = vand.u32 %v7406, 4294901760
        %7408 = vmatpush1.msra.mxu0 %v7407
        %7409 = vmatprep.subr.mxu0 0.0
        %v7410 = vand.u32 %v6848, 4294901760
        %v7411 = vsub.f32 %v6848, %v7410
        %v7412 = vand.u32 %v7411, 4294901760
        %7413 = vmatpush1.msra.mxu0 %v7412
        %7414 = vmatprep.subr.mxu0 0.0
        %7415 = vmatpush2.msra.mxu0 0.0
        %7416 = vmatprep.subr.mxu0 0.0
        %7417 = vmatpush2.msra.mxu0 0.0
        %7418 = vmatprep.subr.mxu0 0.0
        %7419 = vmatpush2.msra.mxu0 0.0
        %7420 = vmatprep.subr.mxu0 0.0
        %7421 = vmatpush2.msra.mxu0 0.0
        %7422 = vmatprep.subr.mxu0 0.0
        %7423 = vmatpush2.msra.mxu0 0.0
        %7424 = vmatprep.subr.mxu0 0.0
        %7425 = vmatpush2.msra.mxu0 0.0
        %7426 = vmatprep.subr.mxu0 0.0
        %7427 = vmatpush2.msra.mxu0 0.0
        %7428 = vmatprep.subr.mxu0 0.0
        %7429 = vmatpush2.msra.mxu0 0.0
        %7430 = vmatprep.subr.mxu0 0.0
        %7431 = vmatpush2.msra.mxu0 0.0
        %7432 = vmatprep.subr.mxu0 0.0
        %7433 = vmatpush2.msra.mxu0 0.0
        %7434 = vmatprep.subr.mxu0 0.0
        %7435 = vmatpush2.msra.mxu0 0.0
        %7436 = vmatprep.subr.mxu0 0.0
        %7437 = vmatpush2.msra.mxu0 0.0
        %7438 = vmatprep.subr.mxu0 0.0
        %7439 = vmatpush2.msra.mxu0 0.0
        %7440 = vmatprep.subr.mxu0 0.0
        %7441 = vmatpush2.msra.mxu0 0.0
        %7442 = vmatprep.subr.mxu0 0.0
        %7443 = vmatpush2.msra.mxu0 0.0
        %7444 = vmatprep.subr.mxu0 0.0
        %7445 = vmatpush2.msra.mxu0 0.0
        %7446 = vmatprep.mubr.f32.mxu0 0.0
        %v7447 = vand.u32 %v6864, 4294901760
        %7448 = vmatmul.mubr.f32.gmra.mxu0 %v7447
        %v7449 = vpop.f32.mrf.mxu0
        %v7450 = vadd.f32 %v7323, %v7449
        %v7451 = vpop.f32.mrf.mxu0
        %7452 = vmatprep.mubr.f32.mxu0 0.0
        %v7453 = vand.u32 %v6865, 4294901760
        %7454 = vmatmul.mubr.f32.gmra.mxu0 %v7453
        %v7455 = vpop.f32.mrf.mxu0
        %v7456 = vadd.f32 %v7331, %v7455
        %v7457 = vpop.f32.mrf.mxu0
        %7458 = vdwg.mxu0
        %7459 = vmatprep.subr.mxu0 0.0
        %v7460 = vand.u32 %v6863, 4294901760
        %7461 = vmatpush1.msra.mxu0 %v7460
        %7462 = vmatprep.subr.mxu0 0.0
        %v7463 = vand.u32 %v6862, 4294901760
        %7464 = vmatpush1.msra.mxu0 %v7463
        %7465 = vmatprep.subr.mxu0 0.0
        %v7466 = vand.u32 %v6861, 4294901760
        %7467 = vmatpush1.msra.mxu0 %v7466
        %7468 = vmatprep.subr.mxu0 0.0
        %v7469 = vand.u32 %v6860, 4294901760
        %7470 = vmatpush1.msra.mxu0 %v7469
        %7471 = vmatprep.subr.mxu0 0.0
        %v7472 = vand.u32 %v6859, 4294901760
        %7473 = vmatpush1.msra.mxu0 %v7472
        %7474 = vmatprep.subr.mxu0 0.0
        %v7475 = vand.u32 %v6858, 4294901760
        %7476 = vmatpush1.msra.mxu0 %v7475
        %7477 = vmatprep.subr.mxu0 0.0
        %v7478 = vand.u32 %v6857, 4294901760
        %7479 = vmatpush1.msra.mxu0 %v7478
        %7480 = vmatprep.subr.mxu0 0.0
        %v7481 = vand.u32 %v6856, 4294901760
        %7482 = vmatpush1.msra.mxu0 %v7481
        %7483 = vmatprep.subr.mxu0 0.0
        %v7484 = vand.u32 %v6855, 4294901760
        %7485 = vmatpush1.msra.mxu0 %v7484
        %7486 = vmatprep.subr.mxu0 0.0
        %v7487 = vand.u32 %v6854, 4294901760
        %7488 = vmatpush1.msra.mxu0 %v7487
        %7489 = vmatprep.subr.mxu0 0.0
        %v7490 = vand.u32 %v6853, 4294901760
        %7491 = vmatpush1.msra.mxu0 %v7490
        %7492 = vmatprep.subr.mxu0 0.0
        %v7493 = vand.u32 %v6852, 4294901760
        %7494 = vmatpush1.msra.mxu0 %v7493
        %7495 = vmatprep.subr.mxu0 0.0
        %v7496 = vand.u32 %v6851, 4294901760
        %7497 = vmatpush1.msra.mxu0 %v7496
        %7498 = vmatprep.subr.mxu0 0.0
        %v7499 = vand.u32 %v6850, 4294901760
        %7500 = vmatpush1.msra.mxu0 %v7499
        %7501 = vmatprep.subr.mxu0 0.0
        %v7502 = vand.u32 %v6849, 4294901760
        %7503 = vmatpush1.msra.mxu0 %v7502
        %7504 = vmatprep.subr.mxu0 0.0
        %v7505 = vand.u32 %v6848, 4294901760
        %7506 = vmatpush1.msra.mxu0 %v7505
        %7507 = vmatprep.subr.mxu0 0.0
        %7508 = vmatpush2.msra.mxu0 0.0
        %7509 = vmatprep.subr.mxu0 0.0
        %7510 = vmatpush2.msra.mxu0 0.0
        %7511 = vmatprep.subr.mxu0 0.0
        %7512 = vmatpush2.msra.mxu0 0.0
        %7513 = vmatprep.subr.mxu0 0.0
        %7514 = vmatpush2.msra.mxu0 0.0
        %7515 = vmatprep.subr.mxu0 0.0
        %7516 = vmatpush2.msra.mxu0 0.0
        %7517 = vmatprep.subr.mxu0 0.0
        %7518 = vmatpush2.msra.mxu0 0.0
        %7519 = vmatprep.subr.mxu0 0.0
        %7520 = vmatpush2.msra.mxu0 0.0
        %7521 = vmatprep.subr.mxu0 0.0
        %7522 = vmatpush2.msra.mxu0 0.0
        %7523 = vmatprep.subr.mxu0 0.0
        %7524 = vmatpush2.msra.mxu0 0.0
        %7525 = vmatprep.subr.mxu0 0.0
        %7526 = vmatpush2.msra.mxu0 0.0
        %7527 = vmatprep.subr.mxu0 0.0
        %7528 = vmatpush2.msra.mxu0 0.0
        %7529 = vmatprep.subr.mxu0 0.0
        %7530 = vmatpush2.msra.mxu0 0.0
        %7531 = vmatprep.subr.mxu0 0.0
        %7532 = vmatpush2.msra.mxu0 0.0
        %7533 = vmatprep.subr.mxu0 0.0
        %7534 = vmatpush2.msra.mxu0 0.0
        %7535 = vmatprep.subr.mxu0 0.0
        %7536 = vmatpush2.msra.mxu0 0.0
        %7537 = vmatprep.subr.mxu0 0.0
        %7538 = vmatpush2.msra.mxu0 0.0
        %7539 = vmatprep.mubr.f32.mxu0 0.0
        %v7540 = vand.u32 %v6864, 4294901760
        %7541 = vmatmul.mubr.f32.gmra.mxu0 %v7540
        %v7542 = vpop.f32.mrf.mxu0
        %v7543 = vadd.f32 %v7450, %v7542
        %v7544 = vpop.f32.mrf.mxu0
        %7545 = vmatprep.mubr.f32.mxu0 0.0
        %v7546 = vand.u32 %v6865, 4294901760
        %7547 = vmatmul.mubr.f32.gmra.mxu0 %v7546
        %v7548 = vpop.f32.mrf.mxu0
        %v7549 = vadd.f32 %v7456, %v7548
        %v7550 = vpop.f32.mrf.mxu0
        %7551 = vdwg.mxu0
        %v7552 = vlaneseq
        %v7553 = vshrl.u32 %v7552, 7
        %v7554 = vadd.s32 %v7553, 8
        %vm7555 = vcmp.lt.s32.totalorder %v7553, 6
        %vm7556 = vcmp.lt.s32.totalorder %v7554, 6
        %v7557 = vsel %vm7555, 3.1415927, 1.0471976
        %v7558 = vsel %vm7556, 3.1415927, 1.0471976
        %v7559 = vtanh.pop %v7543
        %v7560 = vtanh.pop %v7549
        %v7561 = vmul.f32 %v7559, %v7557
        %v7562 = vmul.f32 %v7560, %v7558
        %vm7563 = vcmask 7168
        %7564 = vst.msk [vmem:[%s468] sm:$0xff] %vm7563, %v7561
        %vm7565 = vcmask 3072
        %7566 = vst.msk [vmem:[%s468 + $0x8] sm:$0xf] %vm7565, %v7562
      $region80: #{tpu_custom_call.1} parent=71 // pred_fallthru
        _
      %p7567 = scmp.lt.s32.totalorder %s28, 1
      %s7568 = scalar_select %p7567, %s28, 1
      %s7569 = smul.addr %s7568, 2
      %s7570 = smul.addr %s7569, 8
      %s7571 = scalar_lea.vmem %s13, %s7570
      // Predicated region
      $region81: #{tpu_custom_call.1} parent=71 // pred_check
        %p7572 = pneg %p334
      $region82: #{tpu_custom_call.1} parent=71 // pred_check_branch
        %7574 = sbr.rel (%p7572) target = $region84
      $region83: #{tpu_custom_call.1} parent=71 // pred_region
        _
      $region84: #{tpu_custom_call.1} parent=71 // pred_fallthru
        _
    $region72: #{tpu_custom_call.1} parent=5 // pred_fallthru
      _
    %p7575 = scmp.le.s32.totalorder 2, %s19
    // Predicated region
    $region85: #{tpu_custom_call.1} parent=5 // pred_check
      %p7576 = pneg %p7575
    $region86: #{tpu_custom_call.1} parent=5 // pred_check_branch
      %7578 = sbr.rel (%p7576) target = $region88
    $region87: #{tpu_custom_call.1} parent=5 // pred_region
      %s7579 = ssub.s32 %s19, 2
      // Predicated region
      $region89: #{tpu_custom_call.1} parent=87 // pred_check
        %p7580 = pneg %p340
      $region90: #{tpu_custom_call.1} parent=87 // pred_check_branch
        %7582 = sbr.rel (%p7580) target = $region92
      $region91: #{tpu_custom_call.1} parent=87 // pred_region
        %p7583 = scmp.lt.s32.totalorder %s30, 1
        %s7584 = scalar_select %p7583, %s30, 1
        %s7585 = smul.addr %s7584, 2
        %s7586 = smul.addr %s7585, 8
        %s7587 = scalar_lea.vmem %s13, %s7586
      $region92: #{tpu_custom_call.1} parent=87 // pred_fallthru
        _
    $region88: #{tpu_custom_call.1} parent=5 // pred_fallthru
      _
  $region6: #{tpu_custom_call.1} parent=0 // loop_footer
    %s23 = sadd.s32 1, %s19
  $region7: #{tpu_custom_call.1} parent=0 // loop_footer_branch
    %18 = sbr.rel target = $region3
  $region8: #{tpu_custom_call.1} parent=0 // loop_exit
    _

</llo_original>
